<compile_context>
chip_gen: v6e
topology: v6e:2x2x1
jax: 0.10.0
libtpu: 0.0.40
codegen_flags: <defaults>
</compile_context>

<pallas_src>
import jax
import jax.numpy as jnp
from jax.experimental import pallas as pl
from jax.experimental.pallas import tpu as pltpu

FEATURES = 1
HIDDEN = 60
DEPTH = 3
HP = 128            # hidden padded to a full lane register (lane-dense stores)
G = 3 * HP          # fused gate width: [ r | z | n ], each HP lanes


# ---------------------------------------------------------------------------
# Fused kernel: 3 GRU layers + Linear, everything VMEM-resident, no grid.
# PyTorch GRU cell (gate order r, z, n):
#   r = sigmoid(x W_ir + b_ir + h W_hr + b_hr)
#   z = sigmoid(x W_iz + b_iz + h W_hz + b_hz)
#   n = tanh   (x W_in + b_in + r * (h W_hn + b_hn))
#   h' = (1 - z) * n + z * h
# ---------------------------------------------------------------------------
def _make_kernel(T, BP):
    def kernel(x_ref,
               wi0_ref, wh0_ref, bi0_ref, bh0_ref,
               wi1_ref, wh1_ref, bi1_ref, bh1_ref,
               wi2_ref, wh2_ref, bi2_ref, bh2_ref,
               lw_ref, lb_ref,
               out_ref,
               gi_scr, seq_a, seq_b):

        def run_layer(x_in_ref, seq_out_ref, wi_ref, wh_ref, bi_ref, bh_ref):
            # Hoisted input projection for all T timesteps at once:
            # (T*BP, D_in) @ (D_in, 3*HP) + b_i   -> no h dependence, off the serial path.
            gi_scr[...] = (jnp.dot(x_in_ref[...], wi_ref[...],
                                   preferred_element_type=jnp.float32)
                           + bi_ref[...])

            h = jnp.zeros((BP, HP), jnp.float32)
            for t in range(T):  # fully unrolled static recurrence (T is small)
                row = t * BP
                gi_t = gi_scr[pl.ds(row, BP), :]                       # (BP, 3*HP)
                gh = (jnp.dot(h, wh_ref[...],
                              preferred_element_type=jnp.float32)
                      + bh_ref[...])                                   # (BP, 3*HP)
                r = jax.nn.sigmoid(gi_t[:, 0:HP] + gh[:, 0:HP])
                z = jax.nn.sigmoid(gi_t[:, HP:2 * HP] + gh[:, HP:2 * HP])
                n = jnp.tanh(gi_t[:, 2 * HP:3 * HP] + r * gh[:, 2 * HP:3 * HP])
                h = (1.0 - z) * n + z * h
                seq_out_ref[pl.ds(row, BP), :] = h                     # lane-dense store

        run_layer(x_ref, seq_a, wi0_ref, wh0_ref, bi0_ref, bh0_ref)
        run_layer(seq_a, seq_b, wi1_ref, wh1_ref, bi1_ref, bh1_ref)
        run_layer(seq_b, seq_a, wi2_ref, wh2_ref, bi2_ref, bh2_ref)

        # Final linear on the whole (T*BP, HP) sequence in one matmul.
        out_ref[...] = (jnp.dot(seq_a[...], lw_ref[...],
                                preferred_element_type=jnp.float32)
                        + lb_ref[...])
    return kernel


# ---------------------------------------------------------------------------
# Parameter init (deterministic, PyTorch-style uniform(-1/sqrt(H), 1/sqrt(H))),
# assembled directly into the fused, zero-padded layout the kernel consumes.
# Padded lanes/rows are exactly 0, so padded hidden lanes remain exactly 0
# through the recurrence (sigmoid(0)=0.5 gates a 0 hidden state -> stays 0).
# ---------------------------------------------------------------------------
def init_params(key, nb_classes):
    bound = 1.0 / (HIDDEN ** 0.5)
    layers = []
    d_in = FEATURES
    for _ in range(DEPTH):
        key, k1, k2, k3, k4 = jax.random.split(key, 5)
        w_ih = jax.random.uniform(k1, (3 * HIDDEN, d_in), jnp.float32, -bound, bound)
        w_hh = jax.random.uniform(k2, (3 * HIDDEN, HIDDEN), jnp.float32, -bound, bound)
        b_ih = jax.random.uniform(k3, (3 * HIDDEN,), jnp.float32, -bound, bound)
        b_hh = jax.random.uniform(k4, (3 * HIDDEN,), jnp.float32, -bound, bound)

        d_in_pad = FEATURES if d_in == FEATURES else HP
        wi = jnp.zeros((d_in_pad, G), jnp.float32)
        wh = jnp.zeros((HP, G), jnp.float32)
        bi = jnp.zeros((1, G), jnp.float32)
        bh = jnp.zeros((1, G), jnp.float32)
        for g in range(3):  # PyTorch gate order: r, z, n
            wi = wi.at[:d_in, g * HP:g * HP + HIDDEN].set(
                w_ih[g * HIDDEN:(g + 1) * HIDDEN, :].T)
            wh = wh.at[:HIDDEN, g * HP:g * HP + HIDDEN].set(
                w_hh[g * HIDDEN:(g + 1) * HIDDEN, :].T)
            bi = bi.at[0, g * HP:g * HP + HIDDEN].set(b_ih[g * HIDDEN:(g + 1) * HIDDEN])
            bh = bh.at[0, g * HP:g * HP + HIDDEN].set(b_hh[g * HIDDEN:(g + 1) * HIDDEN])
        layers.append((wi, wh, bi, bh))
        d_in = HIDDEN

    key, k1, k2 = jax.random.split(key, 3)
    lin_w = jax.random.uniform(k1, (nb_classes, HIDDEN), jnp.float32, -bound, bound)
    lin_b = jax.random.uniform(k2, (nb_classes,), jnp.float32, -bound, bound)
    lw = jnp.zeros((HP, nb_classes), jnp.float32).at[:HIDDEN, :].set(lin_w.T)
    lb = lin_b.reshape(1, nb_classes)
    return {"gru": layers, "lin_w": lw, "lin_b": lb}


# ---------------------------------------------------------------------------
# Forward pass (matches model.forward semantics).
# ---------------------------------------------------------------------------
def model_forward(params, inputs, outputs):
    # `outputs` is only transposed in the reference forward; result is unused.
    del outputs
    B, T, F = inputs.shape
    BP = ((B + 7) // 8) * 8                 # pad batch to a sublane multiple
    C = params["lin_w"].shape[1]

    x = jnp.transpose(inputs.astype(jnp.float32), (1, 0, 2))   # (T, B, F) time-major
    x = jnp.pad(x, ((0, 0), (0, BP - B), (0, 0)))              # (T, BP, F)
    x_flat = x.reshape(T * BP, F)

    flat_w = []
    for (wi, wh, bi, bh) in params["gru"]:
        flat_w += [wi, wh, bi, bh]
    flat_w += [params["lin_w"], params["lin_b"]]

    y_flat = pl.pallas_call(
        _make_kernel(T, BP),
        out_shape=jax.ShapeDtypeStruct((T * BP, C), jnp.float32),
        scratch_shapes=[
            pltpu.VMEM((T * BP, G), jnp.float32),    # gi: hoisted input projection
            pltpu.VMEM((T * BP, HP), jnp.float32),   # seq buffer A (ping)
            pltpu.VMEM((T * BP, HP), jnp.float32),   # seq buffer B (pong)
        ],
    )(x_flat, *flat_w)

    y = y_flat.reshape(T, BP, C)[:, :B, :]           # drop padded batch rows -> (T, B, C)
    return jnp.transpose(y, (1, 2, 0))               # (B, C, T) == permute(0, 2, 1)


if __name__ == "__main__":
    B, T, NB_CLASSES = 2, 8, 5
    key = jax.random.PRNGKey(0)
    key, k_in, k_out, k_par = jax.random.split(key, 4)
    inputs = jax.random.normal(k_in, (B, T, FEATURES), jnp.float32)
    outputs = jax.random.normal(k_out, (B, T, NB_CLASSES), jnp.float32)  # unused by forward

    params = init_params(k_par, NB_CLASSES)

    fwd = jax.jit(model_forward)
    result = jax.block_until_ready(fwd(params, inputs, outputs))
    assert result.shape == (B, NB_CLASSES, T), result.shape
    print("KERNEL_OK")
</pallas_src>

<mosaic_0001>
module attributes {stable_mosaic.version = 11 : i64} {
  func.func @kernel(%arg0: memref<64x1xf32, #tpu.memory_space<vmem>>, %arg1: memref<1x384xf32, #tpu.memory_space<vmem>>, %arg2: memref<128x384xf32, #tpu.memory_space<vmem>>, %arg3: memref<1x384xf32, #tpu.memory_space<vmem>>, %arg4: memref<1x384xf32, #tpu.memory_space<vmem>>, %arg5: memref<128x384xf32, #tpu.memory_space<vmem>>, %arg6: memref<128x384xf32, #tpu.memory_space<vmem>>, %arg7: memref<1x384xf32, #tpu.memory_space<vmem>>, %arg8: memref<1x384xf32, #tpu.memory_space<vmem>>, %arg9: memref<128x384xf32, #tpu.memory_space<vmem>>, %arg10: memref<128x384xf32, #tpu.memory_space<vmem>>, %arg11: memref<1x384xf32, #tpu.memory_space<vmem>>, %arg12: memref<1x384xf32, #tpu.memory_space<vmem>>, %arg13: memref<128x5xf32, #tpu.memory_space<vmem>>, %arg14: memref<1x5xf32, #tpu.memory_space<vmem>>, %arg15: memref<64x5xf32, #tpu.memory_space<vmem>>, %arg16: memref<64x384xf32, #tpu.memory_space<vmem>>, %arg17: memref<64x128xf32, #tpu.memory_space<vmem>>, %arg18: memref<64x128xf32, #tpu.memory_space<vmem>>) attributes {dimension_semantics = [], scalar_prefetch = 0 : i64, scratch_operands = 3 : i64, tpu.core_type = #tpu.core_type<tc>} {
    %c0 = arith.constant 0 : index
    %c0_0 = arith.constant 0 : index
    %0 = vector.load %arg0[%c0, %c0_0] : memref<64x1xf32, #tpu.memory_space<vmem>>, vector<64x1xf32>
    %c0_1 = arith.constant 0 : index
    %c0_2 = arith.constant 0 : index
    %1 = vector.load %arg1[%c0_1, %c0_2] : memref<1x384xf32, #tpu.memory_space<vmem>>, vector<1x384xf32>
    %cst = arith.constant dense<0.000000e+00> : vector<64x384xf32>
    %2 = tpu.matmul %0, %1, %cst {dimension_numbers = #tpu.dot_dimension_numbers<[1], [0], [0], [1], [0, 0, 1, 1], [], []>} : vector<64x1xf32>, vector<1x384xf32>, vector<64x384xf32> -> vector<64x384xf32>
    %c0_3 = arith.constant 0 : index
    %c0_4 = arith.constant 0 : index
    %3 = vector.load %arg3[%c0_3, %c0_4] : memref<1x384xf32, #tpu.memory_space<vmem>>, vector<1x384xf32>
    %4 = vector.broadcast %3 : vector<1x384xf32> to vector<64x384xf32>
    %5 = arith.addf %2, %4 : vector<64x384xf32>
    %c0_5 = arith.constant 0 : index
    %c0_6 = arith.constant 0 : index
    %6 = vector.load %arg16[%c0_5, %c0_6] : memref<64x384xf32, #tpu.memory_space<vmem>>, vector<64x384xf32>
    tpu.vector_store %arg16[%c0_5, %c0_6], %5 {strides = array<i32>} : memref<64x384xf32, #tpu.memory_space<vmem>>, vector<64x384xf32>,
    %cst_7 = arith.constant 0.000000e+00 : f32
    %7 = vector.broadcast %cst_7 : f32 to vector<8x128xf32>
    %c0_8 = arith.constant 0 : index
    %c0_9 = arith.constant 0 : index
    %8 = vector.load %arg16[%c0_8, %c0_9] : memref<64x384xf32, #tpu.memory_space<vmem>>, vector<8x384xf32>
    %c0_10 = arith.constant 0 : index
    %c0_11 = arith.constant 0 : index
    %9 = vector.load %arg2[%c0_10, %c0_11] : memref<128x384xf32, #tpu.memory_space<vmem>>, vector<128x384xf32>
    %cst_12 = arith.constant dense<0.000000e+00> : vector<8x384xf32>
    %10 = tpu.matmul %7, %9, %cst_12 {dimension_numbers = #tpu.dot_dimension_numbers<[1], [0], [0], [1], [0, 0, 1, 1], [], []>} : vector<8x128xf32>, vector<128x384xf32>, vector<8x384xf32> -> vector<8x384xf32>
    %c0_13 = arith.constant 0 : index
    %c0_14 = arith.constant 0 : index
    %11 = vector.load %arg4[%c0_13, %c0_14] : memref<1x384xf32, #tpu.memory_space<vmem>>, vector<1x384xf32>
    %12 = vector.broadcast %11 : vector<1x384xf32> to vector<8x384xf32>
    %13 = arith.addf %10, %12 : vector<8x384xf32>
    %14 = vector.extract_strided_slice %8 {offsets = [0, 0], sizes = [8, 128], strides = [1, 1]} : vector<8x384xf32> to vector<8x128xf32>
    %15 = vector.extract_strided_slice %13 {offsets = [0, 0], sizes = [8, 128], strides = [1, 1]} : vector<8x384xf32> to vector<8x128xf32>
    %16 = arith.addf %14, %15 : vector<8x128xf32>
    %17 = arith.negf %16 : vector<8x128xf32>
    %18 = math.exp %17 : vector<8x128xf32>
    %cst_15 = arith.constant 1.000000e+00 : f32
    %19 = vector.broadcast %cst_15 : f32 to vector<8x128xf32>
    %20 = arith.addf %19, %18 : vector<8x128xf32>
    %21 = arith.divf %19, %20 : vector<8x128xf32>
    %22 = vector.extract_strided_slice %8 {offsets = [0, 128], sizes = [8, 128], strides = [1, 1]} : vector<8x384xf32> to vector<8x128xf32>
    %23 = vector.extract_strided_slice %13 {offsets = [0, 128], sizes = [8, 128], strides = [1, 1]} : vector<8x384xf32> to vector<8x128xf32>
    %24 = arith.addf %22, %23 : vector<8x128xf32>
    %25 = arith.negf %24 : vector<8x128xf32>
    %26 = math.exp %25 : vector<8x128xf32>
    %cst_16 = arith.constant 1.000000e+00 : f32
    %27 = vector.broadcast %cst_16 : f32 to vector<8x128xf32>
    %28 = arith.addf %27, %26 : vector<8x128xf32>
    %29 = arith.divf %27, %28 : vector<8x128xf32>
    %30 = vector.extract_strided_slice %8 {offsets = [0, 256], sizes = [8, 128], strides = [1, 1]} : vector<8x384xf32> to vector<8x128xf32>
    %31 = vector.extract_strided_slice %13 {offsets = [0, 256], sizes = [8, 128], strides = [1, 1]} : vector<8x384xf32> to vector<8x128xf32>
    %32 = arith.mulf %21, %31 : vector<8x128xf32>
    %33 = arith.addf %30, %32 : vector<8x128xf32>
    %34 = math.tanh %33 : vector<8x128xf32>
    %cst_17 = arith.constant 1.000000e+00 : f32
    %35 = vector.broadcast %cst_17 : f32 to vector<8x128xf32>
    %36 = arith.subf %35, %29 : vector<8x128xf32>
    %37 = arith.mulf %36, %34 : vector<8x128xf32>
    %38 = arith.mulf %29, %7 : vector<8x128xf32>
    %39 = arith.addf %37, %38 : vector<8x128xf32>
    %c0_18 = arith.constant 0 : index
    %c0_19 = arith.constant 0 : index
    %40 = vector.load %arg17[%c0_18, %c0_19] : memref<64x128xf32, #tpu.memory_space<vmem>>, vector<8x128xf32>
    tpu.vector_store %arg17[%c0_18, %c0_19], %39 {strides = array<i32>} : memref<64x128xf32, #tpu.memory_space<vmem>>, vector<8x128xf32>,
    %c8 = arith.constant 8 : index
    %c0_20 = arith.constant 0 : index
    %41 = vector.load %arg16[%c8, %c0_20] : memref<64x384xf32, #tpu.memory_space<vmem>>, vector<8x384xf32>
    %c0_21 = arith.constant 0 : index
    %c0_22 = arith.constant 0 : index
    %42 = vector.load %arg2[%c0_21, %c0_22] : memref<128x384xf32, #tpu.memory_space<vmem>>, vector<128x384xf32>
    %cst_23 = arith.constant dense<0.000000e+00> : vector<8x384xf32>
    %43 = tpu.matmul %39, %42, %cst_23 {dimension_numbers = #tpu.dot_dimension_numbers<[1], [0], [0], [1], [0, 0, 1, 1], [], []>} : vector<8x128xf32>, vector<128x384xf32>, vector<8x384xf32> -> vector<8x384xf32>
    %c0_24 = arith.constant 0 : index
    %c0_25 = arith.constant 0 : index
    %44 = vector.load %arg4[%c0_24, %c0_25] : memref<1x384xf32, #tpu.memory_space<vmem>>, vector<1x384xf32>
    %45 = vector.broadcast %44 : vector<1x384xf32> to vector<8x384xf32>
    %46 = arith.addf %43, %45 : vector<8x384xf32>
    %47 = vector.extract_strided_slice %41 {offsets = [0, 0], sizes = [8, 128], strides = [1, 1]} : vector<8x384xf32> to vector<8x128xf32>
    %48 = vector.extract_strided_slice %46 {offsets = [0, 0], sizes = [8, 128], strides = [1, 1]} : vector<8x384xf32> to vector<8x128xf32>
    %49 = arith.addf %47, %48 : vector<8x128xf32>
    %50 = arith.negf %49 : vector<8x128xf32>
    %51 = math.exp %50 : vector<8x128xf32>
    %cst_26 = arith.constant 1.000000e+00 : f32
    %52 = vector.broadcast %cst_26 : f32 to vector<8x128xf32>
    %53 = arith.addf %52, %51 : vector<8x128xf32>
    %54 = arith.divf %52, %53 : vector<8x128xf32>
    %55 = vector.extract_strided_slice %41 {offsets = [0, 128], sizes = [8, 128], strides = [1, 1]} : vector<8x384xf32> to vector<8x128xf32>
    %56 = vector.extract_strided_slice %46 {offsets = [0, 128], sizes = [8, 128], strides = [1, 1]} : vector<8x384xf32> to vector<8x128xf32>
    %57 = arith.addf %55, %56 : vector<8x128xf32>
    %58 = arith.negf %57 : vector<8x128xf32>
    %59 = math.exp %58 : vector<8x128xf32>
    %cst_27 = arith.constant 1.000000e+00 : f32
    %60 = vector.broadcast %cst_27 : f32 to vector<8x128xf32>
    %61 = arith.addf %60, %59 : vector<8x128xf32>
    %62 = arith.divf %60, %61 : vector<8x128xf32>
    %63 = vector.extract_strided_slice %41 {offsets = [0, 256], sizes = [8, 128], strides = [1, 1]} : vector<8x384xf32> to vector<8x128xf32>
    %64 = vector.extract_strided_slice %46 {offsets = [0, 256], sizes = [8, 128], strides = [1, 1]} : vector<8x384xf32> to vector<8x128xf32>
    %65 = arith.mulf %54, %64 : vector<8x128xf32>
    %66 = arith.addf %63, %65 : vector<8x128xf32>
    %67 = math.tanh %66 : vector<8x128xf32>
    %cst_28 = arith.constant 1.000000e+00 : f32
    %68 = vector.broadcast %cst_28 : f32 to vector<8x128xf32>
    %69 = arith.subf %68, %62 : vector<8x128xf32>
    %70 = arith.mulf %69, %67 : vector<8x128xf32>
    %71 = arith.mulf %62, %39 : vector<8x128xf32>
    %72 = arith.addf %70, %71 : vector<8x128xf32>
    %c8_29 = arith.constant 8 : index
    %c0_30 = arith.constant 0 : index
    %73 = vector.load %arg17[%c8_29, %c0_30] : memref<64x128xf32, #tpu.memory_space<vmem>>, vector<8x128xf32>
    tpu.vector_store %arg17[%c8_29, %c0_30], %72 {strides = array<i32>} : memref<64x128xf32, #tpu.memory_space<vmem>>, vector<8x128xf32>,
    %c16 = arith.constant 16 : index
    %c0_31 = arith.constant 0 : index
    %74 = vector.load %arg16[%c16, %c0_31] : memref<64x384xf32, #tpu.memory_space<vmem>>, vector<8x384xf32>
    %c0_32 = arith.constant 0 : index
    %c0_33 = arith.constant 0 : index
    %75 = vector.load %arg2[%c0_32, %c0_33] : memref<128x384xf32, #tpu.memory_space<vmem>>, vector<128x384xf32>
    %cst_34 = arith.constant dense<0.000000e+00> : vector<8x384xf32>
    %76 = tpu.matmul %72, %75, %cst_34 {dimension_numbers = #tpu.dot_dimension_numbers<[1], [0], [0], [1], [0, 0, 1, 1], [], []>} : vector<8x128xf32>, vector<128x384xf32>, vector<8x384xf32> -> vector<8x384xf32>
    %c0_35 = arith.constant 0 : index
    %c0_36 = arith.constant 0 : index
    %77 = vector.load %arg4[%c0_35, %c0_36] : memref<1x384xf32, #tpu.memory_space<vmem>>, vector<1x384xf32>
    %78 = vector.broadcast %77 : vector<1x384xf32> to vector<8x384xf32>
    %79 = arith.addf %76, %78 : vector<8x384xf32>
    %80 = vector.extract_strided_slice %74 {offsets = [0, 0], sizes = [8, 128], strides = [1, 1]} : vector<8x384xf32> to vector<8x128xf32>
    %81 = vector.extract_strided_slice %79 {offsets = [0, 0], sizes = [8, 128], strides = [1, 1]} : vector<8x384xf32> to vector<8x128xf32>
    %82 = arith.addf %80, %81 : vector<8x128xf32>
    %83 = arith.negf %82 : vector<8x128xf32>
    %84 = math.exp %83 : vector<8x128xf32>
    %cst_37 = arith.constant 1.000000e+00 : f32
    %85 = vector.broadcast %cst_37 : f32 to vector<8x128xf32>
    %86 = arith.addf %85, %84 : vector<8x128xf32>
    %87 = arith.divf %85, %86 : vector<8x128xf32>
    %88 = vector.extract_strided_slice %74 {offsets = [0, 128], sizes = [8, 128], strides = [1, 1]} : vector<8x384xf32> to vector<8x128xf32>
    %89 = vector.extract_strided_slice %79 {offsets = [0, 128], sizes = [8, 128], strides = [1, 1]} : vector<8x384xf32> to vector<8x128xf32>
    %90 = arith.addf %88, %89 : vector<8x128xf32>
    %91 = arith.negf %90 : vector<8x128xf32>
    %92 = math.exp %91 : vector<8x128xf32>
    %cst_38 = arith.constant 1.000000e+00 : f32
    %93 = vector.broadcast %cst_38 : f32 to vector<8x128xf32>
    %94 = arith.addf %93, %92 : vector<8x128xf32>
    %95 = arith.divf %93, %94 : vector<8x128xf32>
    %96 = vector.extract_strided_slice %74 {offsets = [0, 256], sizes = [8, 128], strides = [1, 1]} : vector<8x384xf32> to vector<8x128xf32>
    %97 = vector.extract_strided_slice %79 {offsets = [0, 256], sizes = [8, 128], strides = [1, 1]} : vector<8x384xf32> to vector<8x128xf32>
    %98 = arith.mulf %87, %97 : vector<8x128xf32>
    %99 = arith.addf %96, %98 : vector<8x128xf32>
    %100 = math.tanh %99 : vector<8x128xf32>
    %cst_39 = arith.constant 1.000000e+00 : f32
    %101 = vector.broadcast %cst_39 : f32 to vector<8x128xf32>
    %102 = arith.subf %101, %95 : vector<8x128xf32>
    %103 = arith.mulf %102, %100 : vector<8x128xf32>
    %104 = arith.mulf %95, %72 : vector<8x128xf32>
    %105 = arith.addf %103, %104 : vector<8x128xf32>
    %c16_40 = arith.constant 16 : index
    %c0_41 = arith.constant 0 : index
    %106 = vector.load %arg17[%c16_40, %c0_41] : memref<64x128xf32, #tpu.memory_space<vmem>>, vector<8x128xf32>
    tpu.vector_store %arg17[%c16_40, %c0_41], %105 {strides = array<i32>} : memref<64x128xf32, #tpu.memory_space<vmem>>, vector<8x128xf32>,
    %c24 = arith.constant 24 : index
    %c0_42 = arith.constant 0 : index
    %107 = vector.load %arg16[%c24, %c0_42] : memref<64x384xf32, #tpu.memory_space<vmem>>, vector<8x384xf32>
    %c0_43 = arith.constant 0 : index
    %c0_44 = arith.constant 0 : index
    %108 = vector.load %arg2[%c0_43, %c0_44] : memref<128x384xf32, #tpu.memory_space<vmem>>, vector<128x384xf32>
    %cst_45 = arith.constant dense<0.000000e+00> : vector<8x384xf32>
    %109 = tpu.matmul %105, %108, %cst_45 {dimension_numbers = #tpu.dot_dimension_numbers<[1], [0], [0], [1], [0, 0, 1, 1], [], []>} : vector<8x128xf32>, vector<128x384xf32>, vector<8x384xf32> -> vector<8x384xf32>
    %c0_46 = arith.constant 0 : index
    %c0_47 = arith.constant 0 : index
    %110 = vector.load %arg4[%c0_46, %c0_47] : memref<1x384xf32, #tpu.memory_space<vmem>>, vector<1x384xf32>
    %111 = vector.broadcast %110 : vector<1x384xf32> to vector<8x384xf32>
    %112 = arith.addf %109, %111 : vector<8x384xf32>
    %113 = vector.extract_strided_slice %107 {offsets = [0, 0], sizes = [8, 128], strides = [1, 1]} : vector<8x384xf32> to vector<8x128xf32>
    %114 = vector.extract_strided_slice %112 {offsets = [0, 0], sizes = [8, 128], strides = [1, 1]} : vector<8x384xf32> to vector<8x128xf32>
    %115 = arith.addf %113, %114 : vector<8x128xf32>
    %116 = arith.negf %115 : vector<8x128xf32>
    %117 = math.exp %116 : vector<8x128xf32>
    %cst_48 = arith.constant 1.000000e+00 : f32
    %118 = vector.broadcast %cst_48 : f32 to vector<8x128xf32>
    %119 = arith.addf %118, %117 : vector<8x128xf32>
    %120 = arith.divf %118, %119 : vector<8x128xf32>
    %121 = vector.extract_strided_slice %107 {offsets = [0, 128], sizes = [8, 128], strides = [1, 1]} : vector<8x384xf32> to vector<8x128xf32>
    %122 = vector.extract_strided_slice %112 {offsets = [0, 128], sizes = [8, 128], strides = [1, 1]} : vector<8x384xf32> to vector<8x128xf32>
    %123 = arith.addf %121, %122 : vector<8x128xf32>
    %124 = arith.negf %123 : vector<8x128xf32>
    %125 = math.exp %124 : vector<8x128xf32>
    %cst_49 = arith.constant 1.000000e+00 : f32
    %126 = vector.broadcast %cst_49 : f32 to vector<8x128xf32>
    %127 = arith.addf %126, %125 : vector<8x128xf32>
    %128 = arith.divf %126, %127 : vector<8x128xf32>
    %129 = vector.extract_strided_slice %107 {offsets = [0, 256], sizes = [8, 128], strides = [1, 1]} : vector<8x384xf32> to vector<8x128xf32>
    %130 = vector.extract_strided_slice %112 {offsets = [0, 256], sizes = [8, 128], strides = [1, 1]} : vector<8x384xf32> to vector<8x128xf32>
    %131 = arith.mulf %120, %130 : vector<8x128xf32>
    %132 = arith.addf %129, %131 : vector<8x128xf32>
    %133 = math.tanh %132 : vector<8x128xf32>
    %cst_50 = arith.constant 1.000000e+00 : f32
    %134 = vector.broadcast %cst_50 : f32 to vector<8x128xf32>
    %135 = arith.subf %134, %128 : vector<8x128xf32>
    %136 = arith.mulf %135, %133 : vector<8x128xf32>
    %137 = arith.mulf %128, %105 : vector<8x128xf32>
    %138 = arith.addf %136, %137 : vector<8x128xf32>
    %c24_51 = arith.constant 24 : index
    %c0_52 = arith.constant 0 : index
    %139 = vector.load %arg17[%c24_51, %c0_52] : memref<64x128xf32, #tpu.memory_space<vmem>>, vector<8x128xf32>
    tpu.vector_store %arg17[%c24_51, %c0_52], %138 {strides = array<i32>} : memref<64x128xf32, #tpu.memory_space<vmem>>, vector<8x128xf32>,
    %c32 = arith.constant 32 : index
    %c0_53 = arith.constant 0 : index
    %140 = vector.load %arg16[%c32, %c0_53] : memref<64x384xf32, #tpu.memory_space<vmem>>, vector<8x384xf32>
    %c0_54 = arith.constant 0 : index
    %c0_55 = arith.constant 0 : index
    %141 = vector.load %arg2[%c0_54, %c0_55] : memref<128x384xf32, #tpu.memory_space<vmem>>, vector<128x384xf32>
    %cst_56 = arith.constant dense<0.000000e+00> : vector<8x384xf32>
    %142 = tpu.matmul %138, %141, %cst_56 {dimension_numbers = #tpu.dot_dimension_numbers<[1], [0], [0], [1], [0, 0, 1, 1], [], []>} : vector<8x128xf32>, vector<128x384xf32>, vector<8x384xf32> -> vector<8x384xf32>
    %c0_57 = arith.constant 0 : index
    %c0_58 = arith.constant 0 : index
    %143 = vector.load %arg4[%c0_57, %c0_58] : memref<1x384xf32, #tpu.memory_space<vmem>>, vector<1x384xf32>
    %144 = vector.broadcast %143 : vector<1x384xf32> to vector<8x384xf32>
    %145 = arith.addf %142, %144 : vector<8x384xf32>
    %146 = vector.extract_strided_slice %140 {offsets = [0, 0], sizes = [8, 128], strides = [1, 1]} : vector<8x384xf32> to vector<8x128xf32>
    %147 = vector.extract_strided_slice %145 {offsets = [0, 0], sizes = [8, 128], strides = [1, 1]} : vector<8x384xf32> to vector<8x128xf32>
    %148 = arith.addf %146, %147 : vector<8x128xf32>
    %149 = arith.negf %148 : vector<8x128xf32>
    %150 = math.exp %149 : vector<8x128xf32>
    %cst_59 = arith.constant 1.000000e+00 : f32
    %151 = vector.broadcast %cst_59 : f32 to vector<8x128xf32>
    %152 = arith.addf %151, %150 : vector<8x128xf32>
    %153 = arith.divf %151, %152 : vector<8x128xf32>
    %154 = vector.extract_strided_slice %140 {offsets = [0, 128], sizes = [8, 128], strides = [1, 1]} : vector<8x384xf32> to vector<8x128xf32>
    %155 = vector.extract_strided_slice %145 {offsets = [0, 128], sizes = [8, 128], strides = [1, 1]} : vector<8x384xf32> to vector<8x128xf32>
    %156 = arith.addf %154, %155 : vector<8x128xf32>
    %157 = arith.negf %156 : vector<8x128xf32>
    %158 = math.exp %157 : vector<8x128xf32>
    %cst_60 = arith.constant 1.000000e+00 : f32
    %159 = vector.broadcast %cst_60 : f32 to vector<8x128xf32>
    %160 = arith.addf %159, %158 : vector<8x128xf32>
    %161 = arith.divf %159, %160 : vector<8x128xf32>
    %162 = vector.extract_strided_slice %140 {offsets = [0, 256], sizes = [8, 128], strides = [1, 1]} : vector<8x384xf32> to vector<8x128xf32>
    %163 = vector.extract_strided_slice %145 {offsets = [0, 256], sizes = [8, 128], strides = [1, 1]} : vector<8x384xf32> to vector<8x128xf32>
    %164 = arith.mulf %153, %163 : vector<8x128xf32>
    %165 = arith.addf %162, %164 : vector<8x128xf32>
    %166 = math.tanh %165 : vector<8x128xf32>
    %cst_61 = arith.constant 1.000000e+00 : f32
    %167 = vector.broadcast %cst_61 : f32 to vector<8x128xf32>
    %168 = arith.subf %167, %161 : vector<8x128xf32>
    %169 = arith.mulf %168, %166 : vector<8x128xf32>
    %170 = arith.mulf %161, %138 : vector<8x128xf32>
    %171 = arith.addf %169, %170 : vector<8x128xf32>
    %c32_62 = arith.constant 32 : index
    %c0_63 = arith.constant 0 : index
    %172 = vector.load %arg17[%c32_62, %c0_63] : memref<64x128xf32, #tpu.memory_space<vmem>>, vector<8x128xf32>
    tpu.vector_store %arg17[%c32_62, %c0_63], %171 {strides = array<i32>} : memref<64x128xf32, #tpu.memory_space<vmem>>, vector<8x128xf32>,
    %c40 = arith.constant 40 : index
    %c0_64 = arith.constant 0 : index
    %173 = vector.load %arg16[%c40, %c0_64] : memref<64x384xf32, #tpu.memory_space<vmem>>, vector<8x384xf32>
    %c0_65 = arith.constant 0 : index
    %c0_66 = arith.constant 0 : index
    %174 = vector.load %arg2[%c0_65, %c0_66] : memref<128x384xf32, #tpu.memory_space<vmem>>, vector<128x384xf32>
    %cst_67 = arith.constant dense<0.000000e+00> : vector<8x384xf32>
    %175 = tpu.matmul %171, %174, %cst_67 {dimension_numbers = #tpu.dot_dimension_numbers<[1], [0], [0], [1], [0, 0, 1, 1], [], []>} : vector<8x128xf32>, vector<128x384xf32>, vector<8x384xf32> -> vector<8x384xf32>
    %c0_68 = arith.constant 0 : index
    %c0_69 = arith.constant 0 : index
    %176 = vector.load %arg4[%c0_68, %c0_69] : memref<1x384xf32, #tpu.memory_space<vmem>>, vector<1x384xf32>
    %177 = vector.broadcast %176 : vector<1x384xf32> to vector<8x384xf32>
    %178 = arith.addf %175, %177 : vector<8x384xf32>
    %179 = vector.extract_strided_slice %173 {offsets = [0, 0], sizes = [8, 128], strides = [1, 1]} : vector<8x384xf32> to vector<8x128xf32>
    %180 = vector.extract_strided_slice %178 {offsets = [0, 0], sizes = [8, 128], strides = [1, 1]} : vector<8x384xf32> to vector<8x128xf32>
    %181 = arith.addf %179, %180 : vector<8x128xf32>
    %182 = arith.negf %181 : vector<8x128xf32>
    %183 = math.exp %182 : vector<8x128xf32>
    %cst_70 = arith.constant 1.000000e+00 : f32
    %184 = vector.broadcast %cst_70 : f32 to vector<8x128xf32>
    %185 = arith.addf %184, %183 : vector<8x128xf32>
    %186 = arith.divf %184, %185 : vector<8x128xf32>
    %187 = vector.extract_strided_slice %173 {offsets = [0, 128], sizes = [8, 128], strides = [1, 1]} : vector<8x384xf32> to vector<8x128xf32>
    %188 = vector.extract_strided_slice %178 {offsets = [0, 128], sizes = [8, 128], strides = [1, 1]} : vector<8x384xf32> to vector<8x128xf32>
    %189 = arith.addf %187, %188 : vector<8x128xf32>
    %190 = arith.negf %189 : vector<8x128xf32>
    %191 = math.exp %190 : vector<8x128xf32>
    %cst_71 = arith.constant 1.000000e+00 : f32
    %192 = vector.broadcast %cst_71 : f32 to vector<8x128xf32>
    %193 = arith.addf %192, %191 : vector<8x128xf32>
    %194 = arith.divf %192, %193 : vector<8x128xf32>
    %195 = vector.extract_strided_slice %173 {offsets = [0, 256], sizes = [8, 128], strides = [1, 1]} : vector<8x384xf32> to vector<8x128xf32>
    %196 = vector.extract_strided_slice %178 {offsets = [0, 256], sizes = [8, 128], strides = [1, 1]} : vector<8x384xf32> to vector<8x128xf32>
    %197 = arith.mulf %186, %196 : vector<8x128xf32>
    %198 = arith.addf %195, %197 : vector<8x128xf32>
    %199 = math.tanh %198 : vector<8x128xf32>
    %cst_72 = arith.constant 1.000000e+00 : f32
    %200 = vector.broadcast %cst_72 : f32 to vector<8x128xf32>
    %201 = arith.subf %200, %194 : vector<8x128xf32>
    %202 = arith.mulf %201, %199 : vector<8x128xf32>
    %203 = arith.mulf %194, %171 : vector<8x128xf32>
    %204 = arith.addf %202, %203 : vector<8x128xf32>
    %c40_73 = arith.constant 40 : index
    %c0_74 = arith.constant 0 : index
    %205 = vector.load %arg17[%c40_73, %c0_74] : memref<64x128xf32, #tpu.memory_space<vmem>>, vector<8x128xf32>
    tpu.vector_store %arg17[%c40_73, %c0_74], %204 {strides = array<i32>} : memref<64x128xf32, #tpu.memory_space<vmem>>, vector<8x128xf32>,
    %c48 = arith.constant 48 : index
    %c0_75 = arith.constant 0 : index
    %206 = vector.load %arg16[%c48, %c0_75] : memref<64x384xf32, #tpu.memory_space<vmem>>, vector<8x384xf32>
    %c0_76 = arith.constant 0 : index
    %c0_77 = arith.constant 0 : index
    %207 = vector.load %arg2[%c0_76, %c0_77] : memref<128x384xf32, #tpu.memory_space<vmem>>, vector<128x384xf32>
    %cst_78 = arith.constant dense<0.000000e+00> : vector<8x384xf32>
    %208 = tpu.matmul %204, %207, %cst_78 {dimension_numbers = #tpu.dot_dimension_numbers<[1], [0], [0], [1], [0, 0, 1, 1], [], []>} : vector<8x128xf32>, vector<128x384xf32>, vector<8x384xf32> -> vector<8x384xf32>
    %c0_79 = arith.constant 0 : index
    %c0_80 = arith.constant 0 : index
    %209 = vector.load %arg4[%c0_79, %c0_80] : memref<1x384xf32, #tpu.memory_space<vmem>>, vector<1x384xf32>
    %210 = vector.broadcast %209 : vector<1x384xf32> to vector<8x384xf32>
    %211 = arith.addf %208, %210 : vector<8x384xf32>
    %212 = vector.extract_strided_slice %206 {offsets = [0, 0], sizes = [8, 128], strides = [1, 1]} : vector<8x384xf32> to vector<8x128xf32>
    %213 = vector.extract_strided_slice %211 {offsets = [0, 0], sizes = [8, 128], strides = [1, 1]} : vector<8x384xf32> to vector<8x128xf32>
    %214 = arith.addf %212, %213 : vector<8x128xf32>
    %215 = arith.negf %214 : vector<8x128xf32>
    %216 = math.exp %215 : vector<8x128xf32>
    %cst_81 = arith.constant 1.000000e+00 : f32
    %217 = vector.broadcast %cst_81 : f32 to vector<8x128xf32>
    %218 = arith.addf %217, %216 : vector<8x128xf32>
    %219 = arith.divf %217, %218 : vector<8x128xf32>
    %220 = vector.extract_strided_slice %206 {offsets = [0, 128], sizes = [8, 128], strides = [1, 1]} : vector<8x384xf32> to vector<8x128xf32>
    %221 = vector.extract_strided_slice %211 {offsets = [0, 128], sizes = [8, 128], strides = [1, 1]} : vector<8x384xf32> to vector<8x128xf32>
    %222 = arith.addf %220, %221 : vector<8x128xf32>
    %223 = arith.negf %222 : vector<8x128xf32>
    %224 = math.exp %223 : vector<8x128xf32>
    %cst_82 = arith.constant 1.000000e+00 : f32
    %225 = vector.broadcast %cst_82 : f32 to vector<8x128xf32>
    %226 = arith.addf %225, %224 : vector<8x128xf32>
    %227 = arith.divf %225, %226 : vector<8x128xf32>
    %228 = vector.extract_strided_slice %206 {offsets = [0, 256], sizes = [8, 128], strides = [1, 1]} : vector<8x384xf32> to vector<8x128xf32>
    %229 = vector.extract_strided_slice %211 {offsets = [0, 256], sizes = [8, 128], strides = [1, 1]} : vector<8x384xf32> to vector<8x128xf32>
    %230 = arith.mulf %219, %229 : vector<8x128xf32>
    %231 = arith.addf %228, %230 : vector<8x128xf32>
    %232 = math.tanh %231 : vector<8x128xf32>
    %cst_83 = arith.constant 1.000000e+00 : f32
    %233 = vector.broadcast %cst_83 : f32 to vector<8x128xf32>
    %234 = arith.subf %233, %227 : vector<8x128xf32>
    %235 = arith.mulf %234, %232 : vector<8x128xf32>
    %236 = arith.mulf %227, %204 : vector<8x128xf32>
    %237 = arith.addf %235, %236 : vector<8x128xf32>
    %c48_84 = arith.constant 48 : index
    %c0_85 = arith.constant 0 : index
    %238 = vector.load %arg17[%c48_84, %c0_85] : memref<64x128xf32, #tpu.memory_space<vmem>>, vector<8x128xf32>
    tpu.vector_store %arg17[%c48_84, %c0_85], %237 {strides = array<i32>} : memref<64x128xf32, #tpu.memory_space<vmem>>, vector<8x128xf32>,
    %c56 = arith.constant 56 : index
    %c0_86 = arith.constant 0 : index
    %239 = vector.load %arg16[%c56, %c0_86] : memref<64x384xf32, #tpu.memory_space<vmem>>, vector<8x384xf32>
    %c0_87 = arith.constant 0 : index
    %c0_88 = arith.constant 0 : index
    %240 = vector.load %arg2[%c0_87, %c0_88] : memref<128x384xf32, #tpu.memory_space<vmem>>, vector<128x384xf32>
    %cst_89 = arith.constant dense<0.000000e+00> : vector<8x384xf32>
    %241 = tpu.matmul %237, %240, %cst_89 {dimension_numbers = #tpu.dot_dimension_numbers<[1], [0], [0], [1], [0, 0, 1, 1], [], []>} : vector<8x128xf32>, vector<128x384xf32>, vector<8x384xf32> -> vector<8x384xf32>
    %c0_90 = arith.constant 0 : index
    %c0_91 = arith.constant 0 : index
    %242 = vector.load %arg4[%c0_90, %c0_91] : memref<1x384xf32, #tpu.memory_space<vmem>>, vector<1x384xf32>
    %243 = vector.broadcast %242 : vector<1x384xf32> to vector<8x384xf32>
    %244 = arith.addf %241, %243 : vector<8x384xf32>
    %245 = vector.extract_strided_slice %239 {offsets = [0, 0], sizes = [8, 128], strides = [1, 1]} : vector<8x384xf32> to vector<8x128xf32>
    %246 = vector.extract_strided_slice %244 {offsets = [0, 0], sizes = [8, 128], strides = [1, 1]} : vector<8x384xf32> to vector<8x128xf32>
    %247 = arith.addf %245, %246 : vector<8x128xf32>
    %248 = arith.negf %247 : vector<8x128xf32>
    %249 = math.exp %248 : vector<8x128xf32>
    %cst_92 = arith.constant 1.000000e+00 : f32
    %250 = vector.broadcast %cst_92 : f32 to vector<8x128xf32>
    %251 = arith.addf %250, %249 : vector<8x128xf32>
    %252 = arith.divf %250, %251 : vector<8x128xf32>
    %253 = vector.extract_strided_slice %239 {offsets = [0, 128], sizes = [8, 128], strides = [1, 1]} : vector<8x384xf32> to vector<8x128xf32>
    %254 = vector.extract_strided_slice %244 {offsets = [0, 128], sizes = [8, 128], strides = [1, 1]} : vector<8x384xf32> to vector<8x128xf32>
    %255 = arith.addf %253, %254 : vector<8x128xf32>
    %256 = arith.negf %255 : vector<8x128xf32>
    %257 = math.exp %256 : vector<8x128xf32>
    %cst_93 = arith.constant 1.000000e+00 : f32
    %258 = vector.broadcast %cst_93 : f32 to vector<8x128xf32>
    %259 = arith.addf %258, %257 : vector<8x128xf32>
    %260 = arith.divf %258, %259 : vector<8x128xf32>
    %261 = vector.extract_strided_slice %239 {offsets = [0, 256], sizes = [8, 128], strides = [1, 1]} : vector<8x384xf32> to vector<8x128xf32>
    %262 = vector.extract_strided_slice %244 {offsets = [0, 256], sizes = [8, 128], strides = [1, 1]} : vector<8x384xf32> to vector<8x128xf32>
    %263 = arith.mulf %252, %262 : vector<8x128xf32>
    %264 = arith.addf %261, %263 : vector<8x128xf32>
    %265 = math.tanh %264 : vector<8x128xf32>
    %cst_94 = arith.constant 1.000000e+00 : f32
    %266 = vector.broadcast %cst_94 : f32 to vector<8x128xf32>
    %267 = arith.subf %266, %260 : vector<8x128xf32>
    %268 = arith.mulf %267, %265 : vector<8x128xf32>
    %269 = arith.mulf %260, %237 : vector<8x128xf32>
    %270 = arith.addf %268, %269 : vector<8x128xf32>
    %c56_95 = arith.constant 56 : index
    %c0_96 = arith.constant 0 : index
    %271 = vector.load %arg17[%c56_95, %c0_96] : memref<64x128xf32, #tpu.memory_space<vmem>>, vector<8x128xf32>
    tpu.vector_store %arg17[%c56_95, %c0_96], %270 {strides = array<i32>} : memref<64x128xf32, #tpu.memory_space<vmem>>, vector<8x128xf32>,
    %c0_97 = arith.constant 0 : index
    %c0_98 = arith.constant 0 : index
    %272 = vector.load %arg17[%c0_97, %c0_98] : memref<64x128xf32, #tpu.memory_space<vmem>>, vector<64x128xf32>
    %c0_99 = arith.constant 0 : index
    %c0_100 = arith.constant 0 : index
    %273 = vector.load %arg5[%c0_99, %c0_100] : memref<128x384xf32, #tpu.memory_space<vmem>>, vector<128x384xf32>
    %cst_101 = arith.constant dense<0.000000e+00> : vector<64x384xf32>
    %274 = tpu.matmul %272, %273, %cst_101 {dimension_numbers = #tpu.dot_dimension_numbers<[1], [0], [0], [1], [0, 0, 1, 1], [], []>} : vector<64x128xf32>, vector<128x384xf32>, vector<64x384xf32> -> vector<64x384xf32>
    %c0_102 = arith.constant 0 : index
    %c0_103 = arith.constant 0 : index
    %275 = vector.load %arg7[%c0_102, %c0_103] : memref<1x384xf32, #tpu.memory_space<vmem>>, vector<1x384xf32>
    %276 = vector.broadcast %275 : vector<1x384xf32> to vector<64x384xf32>
    %277 = arith.addf %274, %276 : vector<64x384xf32>
    %c0_104 = arith.constant 0 : index
    %c0_105 = arith.constant 0 : index
    %278 = vector.load %arg16[%c0_104, %c0_105] : memref<64x384xf32, #tpu.memory_space<vmem>>, vector<64x384xf32>
    tpu.vector_store %arg16[%c0_104, %c0_105], %277 {strides = array<i32>} : memref<64x384xf32, #tpu.memory_space<vmem>>, vector<64x384xf32>,
    %cst_106 = arith.constant 0.000000e+00 : f32
    %279 = vector.broadcast %cst_106 : f32 to vector<8x128xf32>
    %c0_107 = arith.constant 0 : index
    %c0_108 = arith.constant 0 : index
    %280 = vector.load %arg16[%c0_107, %c0_108] : memref<64x384xf32, #tpu.memory_space<vmem>>, vector<8x384xf32>
    %c0_109 = arith.constant 0 : index
    %c0_110 = arith.constant 0 : index
    %281 = vector.load %arg6[%c0_109, %c0_110] : memref<128x384xf32, #tpu.memory_space<vmem>>, vector<128x384xf32>
    %cst_111 = arith.constant dense<0.000000e+00> : vector<8x384xf32>
    %282 = tpu.matmul %279, %281, %cst_111 {dimension_numbers = #tpu.dot_dimension_numbers<[1], [0], [0], [1], [0, 0, 1, 1], [], []>} : vector<8x128xf32>, vector<128x384xf32>, vector<8x384xf32> -> vector<8x384xf32>
    %c0_112 = arith.constant 0 : index
    %c0_113 = arith.constant 0 : index
    %283 = vector.load %arg8[%c0_112, %c0_113] : memref<1x384xf32, #tpu.memory_space<vmem>>, vector<1x384xf32>
    %284 = vector.broadcast %283 : vector<1x384xf32> to vector<8x384xf32>
    %285 = arith.addf %282, %284 : vector<8x384xf32>
    %286 = vector.extract_strided_slice %280 {offsets = [0, 0], sizes = [8, 128], strides = [1, 1]} : vector<8x384xf32> to vector<8x128xf32>
    %287 = vector.extract_strided_slice %285 {offsets = [0, 0], sizes = [8, 128], strides = [1, 1]} : vector<8x384xf32> to vector<8x128xf32>
    %288 = arith.addf %286, %287 : vector<8x128xf32>
    %289 = arith.negf %288 : vector<8x128xf32>
    %290 = math.exp %289 : vector<8x128xf32>
    %cst_114 = arith.constant 1.000000e+00 : f32
    %291 = vector.broadcast %cst_114 : f32 to vector<8x128xf32>
    %292 = arith.addf %291, %290 : vector<8x128xf32>
    %293 = arith.divf %291, %292 : vector<8x128xf32>
    %294 = vector.extract_strided_slice %280 {offsets = [0, 128], sizes = [8, 128], strides = [1, 1]} : vector<8x384xf32> to vector<8x128xf32>
    %295 = vector.extract_strided_slice %285 {offsets = [0, 128], sizes = [8, 128], strides = [1, 1]} : vector<8x384xf32> to vector<8x128xf32>
    %296 = arith.addf %294, %295 : vector<8x128xf32>
    %297 = arith.negf %296 : vector<8x128xf32>
    %298 = math.exp %297 : vector<8x128xf32>
    %cst_115 = arith.constant 1.000000e+00 : f32
    %299 = vector.broadcast %cst_115 : f32 to vector<8x128xf32>
    %300 = arith.addf %299, %298 : vector<8x128xf32>
    %301 = arith.divf %299, %300 : vector<8x128xf32>
    %302 = vector.extract_strided_slice %280 {offsets = [0, 256], sizes = [8, 128], strides = [1, 1]} : vector<8x384xf32> to vector<8x128xf32>
    %303 = vector.extract_strided_slice %285 {offsets = [0, 256], sizes = [8, 128], strides = [1, 1]} : vector<8x384xf32> to vector<8x128xf32>
    %304 = arith.mulf %293, %303 : vector<8x128xf32>
    %305 = arith.addf %302, %304 : vector<8x128xf32>
    %306 = math.tanh %305 : vector<8x128xf32>
    %cst_116 = arith.constant 1.000000e+00 : f32
    %307 = vector.broadcast %cst_116 : f32 to vector<8x128xf32>
    %308 = arith.subf %307, %301 : vector<8x128xf32>
    %309 = arith.mulf %308, %306 : vector<8x128xf32>
    %310 = arith.mulf %301, %279 : vector<8x128xf32>
    %311 = arith.addf %309, %310 : vector<8x128xf32>
    %c0_117 = arith.constant 0 : index
    %c0_118 = arith.constant 0 : index
    %312 = vector.load %arg18[%c0_117, %c0_118] : memref<64x128xf32, #tpu.memory_space<vmem>>, vector<8x128xf32>
    tpu.vector_store %arg18[%c0_117, %c0_118], %311 {strides = array<i32>} : memref<64x128xf32, #tpu.memory_space<vmem>>, vector<8x128xf32>,
    %c8_119 = arith.constant 8 : index
    %c0_120 = arith.constant 0 : index
    %313 = vector.load %arg16[%c8_119, %c0_120] : memref<64x384xf32, #tpu.memory_space<vmem>>, vector<8x384xf32>
    %c0_121 = arith.constant 0 : index
    %c0_122 = arith.constant 0 : index
    %314 = vector.load %arg6[%c0_121, %c0_122] : memref<128x384xf32, #tpu.memory_space<vmem>>, vector<128x384xf32>
    %cst_123 = arith.constant dense<0.000000e+00> : vector<8x384xf32>
    %315 = tpu.matmul %311, %314, %cst_123 {dimension_numbers = #tpu.dot_dimension_numbers<[1], [0], [0], [1], [0, 0, 1, 1], [], []>} : vector<8x128xf32>, vector<128x384xf32>, vector<8x384xf32> -> vector<8x384xf32>
    %c0_124 = arith.constant 0 : index
    %c0_125 = arith.constant 0 : index
    %316 = vector.load %arg8[%c0_124, %c0_125] : memref<1x384xf32, #tpu.memory_space<vmem>>, vector<1x384xf32>
    %317 = vector.broadcast %316 : vector<1x384xf32> to vector<8x384xf32>
    %318 = arith.addf %315, %317 : vector<8x384xf32>
    %319 = vector.extract_strided_slice %313 {offsets = [0, 0], sizes = [8, 128], strides = [1, 1]} : vector<8x384xf32> to vector<8x128xf32>
    %320 = vector.extract_strided_slice %318 {offsets = [0, 0], sizes = [8, 128], strides = [1, 1]} : vector<8x384xf32> to vector<8x128xf32>
    %321 = arith.addf %319, %320 : vector<8x128xf32>
    %322 = arith.negf %321 : vector<8x128xf32>
    %323 = math.exp %322 : vector<8x128xf32>
    %cst_126 = arith.constant 1.000000e+00 : f32
    %324 = vector.broadcast %cst_126 : f32 to vector<8x128xf32>
    %325 = arith.addf %324, %323 : vector<8x128xf32>
    %326 = arith.divf %324, %325 : vector<8x128xf32>
    %327 = vector.extract_strided_slice %313 {offsets = [0, 128], sizes = [8, 128], strides = [1, 1]} : vector<8x384xf32> to vector<8x128xf32>
    %328 = vector.extract_strided_slice %318 {offsets = [0, 128], sizes = [8, 128], strides = [1, 1]} : vector<8x384xf32> to vector<8x128xf32>
    %329 = arith.addf %327, %328 : vector<8x128xf32>
    %330 = arith.negf %329 : vector<8x128xf32>
    %331 = math.exp %330 : vector<8x128xf32>
    %cst_127 = arith.constant 1.000000e+00 : f32
    %332 = vector.broadcast %cst_127 : f32 to vector<8x128xf32>
    %333 = arith.addf %332, %331 : vector<8x128xf32>
    %334 = arith.divf %332, %333 : vector<8x128xf32>
    %335 = vector.extract_strided_slice %313 {offsets = [0, 256], sizes = [8, 128], strides = [1, 1]} : vector<8x384xf32> to vector<8x128xf32>
    %336 = vector.extract_strided_slice %318 {offsets = [0, 256], sizes = [8, 128], strides = [1, 1]} : vector<8x384xf32> to vector<8x128xf32>
    %337 = arith.mulf %326, %336 : vector<8x128xf32>
    %338 = arith.addf %335, %337 : vector<8x128xf32>
    %339 = math.tanh %338 : vector<8x128xf32>
    %cst_128 = arith.constant 1.000000e+00 : f32
    %340 = vector.broadcast %cst_128 : f32 to vector<8x128xf32>
    %341 = arith.subf %340, %334 : vector<8x128xf32>
    %342 = arith.mulf %341, %339 : vector<8x128xf32>
    %343 = arith.mulf %334, %311 : vector<8x128xf32>
    %344 = arith.addf %342, %343 : vector<8x128xf32>
    %c8_129 = arith.constant 8 : index
    %c0_130 = arith.constant 0 : index
    %345 = vector.load %arg18[%c8_129, %c0_130] : memref<64x128xf32, #tpu.memory_space<vmem>>, vector<8x128xf32>
    tpu.vector_store %arg18[%c8_129, %c0_130], %344 {strides = array<i32>} : memref<64x128xf32, #tpu.memory_space<vmem>>, vector<8x128xf32>,
    %c16_131 = arith.constant 16 : index
    %c0_132 = arith.constant 0 : index
    %346 = vector.load %arg16[%c16_131, %c0_132] : memref<64x384xf32, #tpu.memory_space<vmem>>, vector<8x384xf32>
    %c0_133 = arith.constant 0 : index
    %c0_134 = arith.constant 0 : index
    %347 = vector.load %arg6[%c0_133, %c0_134] : memref<128x384xf32, #tpu.memory_space<vmem>>, vector<128x384xf32>
    %cst_135 = arith.constant dense<0.000000e+00> : vector<8x384xf32>
    %348 = tpu.matmul %344, %347, %cst_135 {dimension_numbers = #tpu.dot_dimension_numbers<[1], [0], [0], [1], [0, 0, 1, 1], [], []>} : vector<8x128xf32>, vector<128x384xf32>, vector<8x384xf32> -> vector<8x384xf32>
    %c0_136 = arith.constant 0 : index
    %c0_137 = arith.constant 0 : index
    %349 = vector.load %arg8[%c0_136, %c0_137] : memref<1x384xf32, #tpu.memory_space<vmem>>, vector<1x384xf32>
    %350 = vector.broadcast %349 : vector<1x384xf32> to vector<8x384xf32>
    %351 = arith.addf %348, %350 : vector<8x384xf32>
    %352 = vector.extract_strided_slice %346 {offsets = [0, 0], sizes = [8, 128], strides = [1, 1]} : vector<8x384xf32> to vector<8x128xf32>
    %353 = vector.extract_strided_slice %351 {offsets = [0, 0], sizes = [8, 128], strides = [1, 1]} : vector<8x384xf32> to vector<8x128xf32>
    %354 = arith.addf %352, %353 : vector<8x128xf32>
    %355 = arith.negf %354 : vector<8x128xf32>
    %356 = math.exp %355 : vector<8x128xf32>
    %cst_138 = arith.constant 1.000000e+00 : f32
    %357 = vector.broadcast %cst_138 : f32 to vector<8x128xf32>
    %358 = arith.addf %357, %356 : vector<8x128xf32>
    %359 = arith.divf %357, %358 : vector<8x128xf32>
    %360 = vector.extract_strided_slice %346 {offsets = [0, 128], sizes = [8, 128], strides = [1, 1]} : vector<8x384xf32> to vector<8x128xf32>
    %361 = vector.extract_strided_slice %351 {offsets = [0, 128], sizes = [8, 128], strides = [1, 1]} : vector<8x384xf32> to vector<8x128xf32>
    %362 = arith.addf %360, %361 : vector<8x128xf32>
    %363 = arith.negf %362 : vector<8x128xf32>
    %364 = math.exp %363 : vector<8x128xf32>
    %cst_139 = arith.constant 1.000000e+00 : f32
    %365 = vector.broadcast %cst_139 : f32 to vector<8x128xf32>
    %366 = arith.addf %365, %364 : vector<8x128xf32>
    %367 = arith.divf %365, %366 : vector<8x128xf32>
    %368 = vector.extract_strided_slice %346 {offsets = [0, 256], sizes = [8, 128], strides = [1, 1]} : vector<8x384xf32> to vector<8x128xf32>
    %369 = vector.extract_strided_slice %351 {offsets = [0, 256], sizes = [8, 128], strides = [1, 1]} : vector<8x384xf32> to vector<8x128xf32>
    %370 = arith.mulf %359, %369 : vector<8x128xf32>
    %371 = arith.addf %368, %370 : vector<8x128xf32>
    %372 = math.tanh %371 : vector<8x128xf32>
    %cst_140 = arith.constant 1.000000e+00 : f32
    %373 = vector.broadcast %cst_140 : f32 to vector<8x128xf32>
    %374 = arith.subf %373, %367 : vector<8x128xf32>
    %375 = arith.mulf %374, %372 : vector<8x128xf32>
    %376 = arith.mulf %367, %344 : vector<8x128xf32>
    %377 = arith.addf %375, %376 : vector<8x128xf32>
    %c16_141 = arith.constant 16 : index
    %c0_142 = arith.constant 0 : index
    %378 = vector.load %arg18[%c16_141, %c0_142] : memref<64x128xf32, #tpu.memory_space<vmem>>, vector<8x128xf32>
    tpu.vector_store %arg18[%c16_141, %c0_142], %377 {strides = array<i32>} : memref<64x128xf32, #tpu.memory_space<vmem>>, vector<8x128xf32>,
    %c24_143 = arith.constant 24 : index
    %c0_144 = arith.constant 0 : index
    %379 = vector.load %arg16[%c24_143, %c0_144] : memref<64x384xf32, #tpu.memory_space<vmem>>, vector<8x384xf32>
    %c0_145 = arith.constant 0 : index
    %c0_146 = arith.constant 0 : index
    %380 = vector.load %arg6[%c0_145, %c0_146] : memref<128x384xf32, #tpu.memory_space<vmem>>, vector<128x384xf32>
    %cst_147 = arith.constant dense<0.000000e+00> : vector<8x384xf32>
    %381 = tpu.matmul %377, %380, %cst_147 {dimension_numbers = #tpu.dot_dimension_numbers<[1], [0], [0], [1], [0, 0, 1, 1], [], []>} : vector<8x128xf32>, vector<128x384xf32>, vector<8x384xf32> -> vector<8x384xf32>
    %c0_148 = arith.constant 0 : index
    %c0_149 = arith.constant 0 : index
    %382 = vector.load %arg8[%c0_148, %c0_149] : memref<1x384xf32, #tpu.memory_space<vmem>>, vector<1x384xf32>
    %383 = vector.broadcast %382 : vector<1x384xf32> to vector<8x384xf32>
    %384 = arith.addf %381, %383 : vector<8x384xf32>
    %385 = vector.extract_strided_slice %379 {offsets = [0, 0], sizes = [8, 128], strides = [1, 1]} : vector<8x384xf32> to vector<8x128xf32>
    %386 = vector.extract_strided_slice %384 {offsets = [0, 0], sizes = [8, 128], strides = [1, 1]} : vector<8x384xf32> to vector<8x128xf32>
    %387 = arith.addf %385, %386 : vector<8x128xf32>
    %388 = arith.negf %387 : vector<8x128xf32>
    %389 = math.exp %388 : vector<8x128xf32>
    %cst_150 = arith.constant 1.000000e+00 : f32
    %390 = vector.broadcast %cst_150 : f32 to vector<8x128xf32>
    %391 = arith.addf %390, %389 : vector<8x128xf32>
    %392 = arith.divf %390, %391 : vector<8x128xf32>
    %393 = vector.extract_strided_slice %379 {offsets = [0, 128], sizes = [8, 128], strides = [1, 1]} : vector<8x384xf32> to vector<8x128xf32>
    %394 = vector.extract_strided_slice %384 {offsets = [0, 128], sizes = [8, 128], strides = [1, 1]} : vector<8x384xf32> to vector<8x128xf32>
    %395 = arith.addf %393, %394 : vector<8x128xf32>
    %396 = arith.negf %395 : vector<8x128xf32>
    %397 = math.exp %396 : vector<8x128xf32>
    %cst_151 = arith.constant 1.000000e+00 : f32
    %398 = vector.broadcast %cst_151 : f32 to vector<8x128xf32>
    %399 = arith.addf %398, %397 : vector<8x128xf32>
    %400 = arith.divf %398, %399 : vector<8x128xf32>
    %401 = vector.extract_strided_slice %379 {offsets = [0, 256], sizes = [8, 128], strides = [1, 1]} : vector<8x384xf32> to vector<8x128xf32>
    %402 = vector.extract_strided_slice %384 {offsets = [0, 256], sizes = [8, 128], strides = [1, 1]} : vector<8x384xf32> to vector<8x128xf32>
    %403 = arith.mulf %392, %402 : vector<8x128xf32>
    %404 = arith.addf %401, %403 : vector<8x128xf32>
    %405 = math.tanh %404 : vector<8x128xf32>
    %cst_152 = arith.constant 1.000000e+00 : f32
    %406 = vector.broadcast %cst_152 : f32 to vector<8x128xf32>
    %407 = arith.subf %406, %400 : vector<8x128xf32>
    %408 = arith.mulf %407, %405 : vector<8x128xf32>
    %409 = arith.mulf %400, %377 : vector<8x128xf32>
    %410 = arith.addf %408, %409 : vector<8x128xf32>
    %c24_153 = arith.constant 24 : index
    %c0_154 = arith.constant 0 : index
    %411 = vector.load %arg18[%c24_153, %c0_154] : memref<64x128xf32, #tpu.memory_space<vmem>>, vector<8x128xf32>
    tpu.vector_store %arg18[%c24_153, %c0_154], %410 {strides = array<i32>} : memref<64x128xf32, #tpu.memory_space<vmem>>, vector<8x128xf32>,
    %c32_155 = arith.constant 32 : index
    %c0_156 = arith.constant 0 : index
    %412 = vector.load %arg16[%c32_155, %c0_156] : memref<64x384xf32, #tpu.memory_space<vmem>>, vector<8x384xf32>
    %c0_157 = arith.constant 0 : index
    %c0_158 = arith.constant 0 : index
    %413 = vector.load %arg6[%c0_157, %c0_158] : memref<128x384xf32, #tpu.memory_space<vmem>>, vector<128x384xf32>
    %cst_159 = arith.constant dense<0.000000e+00> : vector<8x384xf32>
    %414 = tpu.matmul %410, %413, %cst_159 {dimension_numbers = #tpu.dot_dimension_numbers<[1], [0], [0], [1], [0, 0, 1, 1], [], []>} : vector<8x128xf32>, vector<128x384xf32>, vector<8x384xf32> -> vector<8x384xf32>
    %c0_160 = arith.constant 0 : index
    %c0_161 = arith.constant 0 : index
    %415 = vector.load %arg8[%c0_160, %c0_161] : memref<1x384xf32, #tpu.memory_space<vmem>>, vector<1x384xf32>
    %416 = vector.broadcast %415 : vector<1x384xf32> to vector<8x384xf32>
    %417 = arith.addf %414, %416 : vector<8x384xf32>
    %418 = vector.extract_strided_slice %412 {offsets = [0, 0], sizes = [8, 128], strides = [1, 1]} : vector<8x384xf32> to vector<8x128xf32>
    %419 = vector.extract_strided_slice %417 {offsets = [0, 0], sizes = [8, 128], strides = [1, 1]} : vector<8x384xf32> to vector<8x128xf32>
    %420 = arith.addf %418, %419 : vector<8x128xf32>
    %421 = arith.negf %420 : vector<8x128xf32>
    %422 = math.exp %421 : vector<8x128xf32>
    %cst_162 = arith.constant 1.000000e+00 : f32
    %423 = vector.broadcast %cst_162 : f32 to vector<8x128xf32>
    %424 = arith.addf %423, %422 : vector<8x128xf32>
    %425 = arith.divf %423, %424 : vector<8x128xf32>
    %426 = vector.extract_strided_slice %412 {offsets = [0, 128], sizes = [8, 128], strides = [1, 1]} : vector<8x384xf32> to vector<8x128xf32>
    %427 = vector.extract_strided_slice %417 {offsets = [0, 128], sizes = [8, 128], strides = [1, 1]} : vector<8x384xf32> to vector<8x128xf32>
    %428 = arith.addf %426, %427 : vector<8x128xf32>
    %429 = arith.negf %428 : vector<8x128xf32>
    %430 = math.exp %429 : vector<8x128xf32>
    %cst_163 = arith.constant 1.000000e+00 : f32
    %431 = vector.broadcast %cst_163 : f32 to vector<8x128xf32>
    %432 = arith.addf %431, %430 : vector<8x128xf32>
    %433 = arith.divf %431, %432 : vector<8x128xf32>
    %434 = vector.extract_strided_slice %412 {offsets = [0, 256], sizes = [8, 128], strides = [1, 1]} : vector<8x384xf32> to vector<8x128xf32>
    %435 = vector.extract_strided_slice %417 {offsets = [0, 256], sizes = [8, 128], strides = [1, 1]} : vector<8x384xf32> to vector<8x128xf32>
    %436 = arith.mulf %425, %435 : vector<8x128xf32>
    %437 = arith.addf %434, %436 : vector<8x128xf32>
    %438 = math.tanh %437 : vector<8x128xf32>
    %cst_164 = arith.constant 1.000000e+00 : f32
    %439 = vector.broadcast %cst_164 : f32 to vector<8x128xf32>
    %440 = arith.subf %439, %433 : vector<8x128xf32>
    %441 = arith.mulf %440, %438 : vector<8x128xf32>
    %442 = arith.mulf %433, %410 : vector<8x128xf32>
    %443 = arith.addf %441, %442 : vector<8x128xf32>
    %c32_165 = arith.constant 32 : index
    %c0_166 = arith.constant 0 : index
    %444 = vector.load %arg18[%c32_165, %c0_166] : memref<64x128xf32, #tpu.memory_space<vmem>>, vector<8x128xf32>
    tpu.vector_store %arg18[%c32_165, %c0_166], %443 {strides = array<i32>} : memref<64x128xf32, #tpu.memory_space<vmem>>, vector<8x128xf32>,
    %c40_167 = arith.constant 40 : index
    %c0_168 = arith.constant 0 : index
    %445 = vector.load %arg16[%c40_167, %c0_168] : memref<64x384xf32, #tpu.memory_space<vmem>>, vector<8x384xf32>
    %c0_169 = arith.constant 0 : index
    %c0_170 = arith.constant 0 : index
    %446 = vector.load %arg6[%c0_169, %c0_170] : memref<128x384xf32, #tpu.memory_space<vmem>>, vector<128x384xf32>
    %cst_171 = arith.constant dense<0.000000e+00> : vector<8x384xf32>
    %447 = tpu.matmul %443, %446, %cst_171 {dimension_numbers = #tpu.dot_dimension_numbers<[1], [0], [0], [1], [0, 0, 1, 1], [], []>} : vector<8x128xf32>, vector<128x384xf32>, vector<8x384xf32> -> vector<8x384xf32>
    %c0_172 = arith.constant 0 : index
    %c0_173 = arith.constant 0 : index
    %448 = vector.load %arg8[%c0_172, %c0_173] : memref<1x384xf32, #tpu.memory_space<vmem>>, vector<1x384xf32>
    %449 = vector.broadcast %448 : vector<1x384xf32> to vector<8x384xf32>
    %450 = arith.addf %447, %449 : vector<8x384xf32>
    %451 = vector.extract_strided_slice %445 {offsets = [0, 0], sizes = [8, 128], strides = [1, 1]} : vector<8x384xf32> to vector<8x128xf32>
    %452 = vector.extract_strided_slice %450 {offsets = [0, 0], sizes = [8, 128], strides = [1, 1]} : vector<8x384xf32> to vector<8x128xf32>
    %453 = arith.addf %451, %452 : vector<8x128xf32>
    %454 = arith.negf %453 : vector<8x128xf32>
    %455 = math.exp %454 : vector<8x128xf32>
    %cst_174 = arith.constant 1.000000e+00 : f32
    %456 = vector.broadcast %cst_174 : f32 to vector<8x128xf32>
    %457 = arith.addf %456, %455 : vector<8x128xf32>
    %458 = arith.divf %456, %457 : vector<8x128xf32>
    %459 = vector.extract_strided_slice %445 {offsets = [0, 128], sizes = [8, 128], strides = [1, 1]} : vector<8x384xf32> to vector<8x128xf32>
    %460 = vector.extract_strided_slice %450 {offsets = [0, 128], sizes = [8, 128], strides = [1, 1]} : vector<8x384xf32> to vector<8x128xf32>
    %461 = arith.addf %459, %460 : vector<8x128xf32>
    %462 = arith.negf %461 : vector<8x128xf32>
    %463 = math.exp %462 : vector<8x128xf32>
    %cst_175 = arith.constant 1.000000e+00 : f32
    %464 = vector.broadcast %cst_175 : f32 to vector<8x128xf32>
    %465 = arith.addf %464, %463 : vector<8x128xf32>
    %466 = arith.divf %464, %465 : vector<8x128xf32>
    %467 = vector.extract_strided_slice %445 {offsets = [0, 256], sizes = [8, 128], strides = [1, 1]} : vector<8x384xf32> to vector<8x128xf32>
    %468 = vector.extract_strided_slice %450 {offsets = [0, 256], sizes = [8, 128], strides = [1, 1]} : vector<8x384xf32> to vector<8x128xf32>
    %469 = arith.mulf %458, %468 : vector<8x128xf32>
    %470 = arith.addf %467, %469 : vector<8x128xf32>
    %471 = math.tanh %470 : vector<8x128xf32>
    %cst_176 = arith.constant 1.000000e+00 : f32
    %472 = vector.broadcast %cst_176 : f32 to vector<8x128xf32>
    %473 = arith.subf %472, %466 : vector<8x128xf32>
    %474 = arith.mulf %473, %471 : vector<8x128xf32>
    %475 = arith.mulf %466, %443 : vector<8x128xf32>
    %476 = arith.addf %474, %475 : vector<8x128xf32>
    %c40_177 = arith.constant 40 : index
    %c0_178 = arith.constant 0 : index
    %477 = vector.load %arg18[%c40_177, %c0_178] : memref<64x128xf32, #tpu.memory_space<vmem>>, vector<8x128xf32>
    tpu.vector_store %arg18[%c40_177, %c0_178], %476 {strides = array<i32>} : memref<64x128xf32, #tpu.memory_space<vmem>>, vector<8x128xf32>,
    %c48_179 = arith.constant 48 : index
    %c0_180 = arith.constant 0 : index
    %478 = vector.load %arg16[%c48_179, %c0_180] : memref<64x384xf32, #tpu.memory_space<vmem>>, vector<8x384xf32>
    %c0_181 = arith.constant 0 : index
    %c0_182 = arith.constant 0 : index
    %479 = vector.load %arg6[%c0_181, %c0_182] : memref<128x384xf32, #tpu.memory_space<vmem>>, vector<128x384xf32>
    %cst_183 = arith.constant dense<0.000000e+00> : vector<8x384xf32>
    %480 = tpu.matmul %476, %479, %cst_183 {dimension_numbers = #tpu.dot_dimension_numbers<[1], [0], [0], [1], [0, 0, 1, 1], [], []>} : vector<8x128xf32>, vector<128x384xf32>, vector<8x384xf32> -> vector<8x384xf32>
    %c0_184 = arith.constant 0 : index
    %c0_185 = arith.constant 0 : index
    %481 = vector.load %arg8[%c0_184, %c0_185] : memref<1x384xf32, #tpu.memory_space<vmem>>, vector<1x384xf32>
    %482 = vector.broadcast %481 : vector<1x384xf32> to vector<8x384xf32>
    %483 = arith.addf %480, %482 : vector<8x384xf32>
    %484 = vector.extract_strided_slice %478 {offsets = [0, 0], sizes = [8, 128], strides = [1, 1]} : vector<8x384xf32> to vector<8x128xf32>
    %485 = vector.extract_strided_slice %483 {offsets = [0, 0], sizes = [8, 128], strides = [1, 1]} : vector<8x384xf32> to vector<8x128xf32>
    %486 = arith.addf %484, %485 : vector<8x128xf32>
    %487 = arith.negf %486 : vector<8x128xf32>
    %488 = math.exp %487 : vector<8x128xf32>
    %cst_186 = arith.constant 1.000000e+00 : f32
    %489 = vector.broadcast %cst_186 : f32 to vector<8x128xf32>
    %490 = arith.addf %489, %488 : vector<8x128xf32>
    %491 = arith.divf %489, %490 : vector<8x128xf32>
    %492 = vector.extract_strided_slice %478 {offsets = [0, 128], sizes = [8, 128], strides = [1, 1]} : vector<8x384xf32> to vector<8x128xf32>
    %493 = vector.extract_strided_slice %483 {offsets = [0, 128], sizes = [8, 128], strides = [1, 1]} : vector<8x384xf32> to vector<8x128xf32>
    %494 = arith.addf %492, %493 : vector<8x128xf32>
    %495 = arith.negf %494 : vector<8x128xf32>
    %496 = math.exp %495 : vector<8x128xf32>
    %cst_187 = arith.constant 1.000000e+00 : f32
    %497 = vector.broadcast %cst_187 : f32 to vector<8x128xf32>
    %498 = arith.addf %497, %496 : vector<8x128xf32>
    %499 = arith.divf %497, %498 : vector<8x128xf32>
    %500 = vector.extract_strided_slice %478 {offsets = [0, 256], sizes = [8, 128], strides = [1, 1]} : vector<8x384xf32> to vector<8x128xf32>
    %501 = vector.extract_strided_slice %483 {offsets = [0, 256], sizes = [8, 128], strides = [1, 1]} : vector<8x384xf32> to vector<8x128xf32>
    %502 = arith.mulf %491, %501 : vector<8x128xf32>
    %503 = arith.addf %500, %502 : vector<8x128xf32>
    %504 = math.tanh %503 : vector<8x128xf32>
    %cst_188 = arith.constant 1.000000e+00 : f32
    %505 = vector.broadcast %cst_188 : f32 to vector<8x128xf32>
    %506 = arith.subf %505, %499 : vector<8x128xf32>
    %507 = arith.mulf %506, %504 : vector<8x128xf32>
    %508 = arith.mulf %499, %476 : vector<8x128xf32>
    %509 = arith.addf %507, %508 : vector<8x128xf32>
    %c48_189 = arith.constant 48 : index
    %c0_190 = arith.constant 0 : index
    %510 = vector.load %arg18[%c48_189, %c0_190] : memref<64x128xf32, #tpu.memory_space<vmem>>, vector<8x128xf32>
    tpu.vector_store %arg18[%c48_189, %c0_190], %509 {strides = array<i32>} : memref<64x128xf32, #tpu.memory_space<vmem>>, vector<8x128xf32>,
    %c56_191 = arith.constant 56 : index
    %c0_192 = arith.constant 0 : index
    %511 = vector.load %arg16[%c56_191, %c0_192] : memref<64x384xf32, #tpu.memory_space<vmem>>, vector<8x384xf32>
    %c0_193 = arith.constant 0 : index
    %c0_194 = arith.constant 0 : index
    %512 = vector.load %arg6[%c0_193, %c0_194] : memref<128x384xf32, #tpu.memory_space<vmem>>, vector<128x384xf32>
    %cst_195 = arith.constant dense<0.000000e+00> : vector<8x384xf32>
    %513 = tpu.matmul %509, %512, %cst_195 {dimension_numbers = #tpu.dot_dimension_numbers<[1], [0], [0], [1], [0, 0, 1, 1], [], []>} : vector<8x128xf32>, vector<128x384xf32>, vector<8x384xf32> -> vector<8x384xf32>
    %c0_196 = arith.constant 0 : index
    %c0_197 = arith.constant 0 : index
    %514 = vector.load %arg8[%c0_196, %c0_197] : memref<1x384xf32, #tpu.memory_space<vmem>>, vector<1x384xf32>
    %515 = vector.broadcast %514 : vector<1x384xf32> to vector<8x384xf32>
    %516 = arith.addf %513, %515 : vector<8x384xf32>
    %517 = vector.extract_strided_slice %511 {offsets = [0, 0], sizes = [8, 128], strides = [1, 1]} : vector<8x384xf32> to vector<8x128xf32>
    %518 = vector.extract_strided_slice %516 {offsets = [0, 0], sizes = [8, 128], strides = [1, 1]} : vector<8x384xf32> to vector<8x128xf32>
    %519 = arith.addf %517, %518 : vector<8x128xf32>
    %520 = arith.negf %519 : vector<8x128xf32>
    %521 = math.exp %520 : vector<8x128xf32>
    %cst_198 = arith.constant 1.000000e+00 : f32
    %522 = vector.broadcast %cst_198 : f32 to vector<8x128xf32>
    %523 = arith.addf %522, %521 : vector<8x128xf32>
    %524 = arith.divf %522, %523 : vector<8x128xf32>
    %525 = vector.extract_strided_slice %511 {offsets = [0, 128], sizes = [8, 128], strides = [1, 1]} : vector<8x384xf32> to vector<8x128xf32>
    %526 = vector.extract_strided_slice %516 {offsets = [0, 128], sizes = [8, 128], strides = [1, 1]} : vector<8x384xf32> to vector<8x128xf32>
    %527 = arith.addf %525, %526 : vector<8x128xf32>
    %528 = arith.negf %527 : vector<8x128xf32>
    %529 = math.exp %528 : vector<8x128xf32>
    %cst_199 = arith.constant 1.000000e+00 : f32
    %530 = vector.broadcast %cst_199 : f32 to vector<8x128xf32>
    %531 = arith.addf %530, %529 : vector<8x128xf32>
    %532 = arith.divf %530, %531 : vector<8x128xf32>
    %533 = vector.extract_strided_slice %511 {offsets = [0, 256], sizes = [8, 128], strides = [1, 1]} : vector<8x384xf32> to vector<8x128xf32>
    %534 = vector.extract_strided_slice %516 {offsets = [0, 256], sizes = [8, 128], strides = [1, 1]} : vector<8x384xf32> to vector<8x128xf32>
    %535 = arith.mulf %524, %534 : vector<8x128xf32>
    %536 = arith.addf %533, %535 : vector<8x128xf32>
    %537 = math.tanh %536 : vector<8x128xf32>
    %cst_200 = arith.constant 1.000000e+00 : f32
    %538 = vector.broadcast %cst_200 : f32 to vector<8x128xf32>
    %539 = arith.subf %538, %532 : vector<8x128xf32>
    %540 = arith.mulf %539, %537 : vector<8x128xf32>
    %541 = arith.mulf %532, %509 : vector<8x128xf32>
    %542 = arith.addf %540, %541 : vector<8x128xf32>
    %c56_201 = arith.constant 56 : index
    %c0_202 = arith.constant 0 : index
    %543 = vector.load %arg18[%c56_201, %c0_202] : memref<64x128xf32, #tpu.memory_space<vmem>>, vector<8x128xf32>
    tpu.vector_store %arg18[%c56_201, %c0_202], %542 {strides = array<i32>} : memref<64x128xf32, #tpu.memory_space<vmem>>, vector<8x128xf32>,
    %c0_203 = arith.constant 0 : index
    %c0_204 = arith.constant 0 : index
    %544 = vector.load %arg18[%c0_203, %c0_204] : memref<64x128xf32, #tpu.memory_space<vmem>>, vector<64x128xf32>
    %c0_205 = arith.constant 0 : index
    %c0_206 = arith.constant 0 : index
    %545 = vector.load %arg9[%c0_205, %c0_206] : memref<128x384xf32, #tpu.memory_space<vmem>>, vector<128x384xf32>
    %cst_207 = arith.constant dense<0.000000e+00> : vector<64x384xf32>
    %546 = tpu.matmul %544, %545, %cst_207 {dimension_numbers = #tpu.dot_dimension_numbers<[1], [0], [0], [1], [0, 0, 1, 1], [], []>} : vector<64x128xf32>, vector<128x384xf32>, vector<64x384xf32> -> vector<64x384xf32>
    %c0_208 = arith.constant 0 : index
    %c0_209 = arith.constant 0 : index
    %547 = vector.load %arg11[%c0_208, %c0_209] : memref<1x384xf32, #tpu.memory_space<vmem>>, vector<1x384xf32>
    %548 = vector.broadcast %547 : vector<1x384xf32> to vector<64x384xf32>
    %549 = arith.addf %546, %548 : vector<64x384xf32>
    %c0_210 = arith.constant 0 : index
    %c0_211 = arith.constant 0 : index
    %550 = vector.load %arg16[%c0_210, %c0_211] : memref<64x384xf32, #tpu.memory_space<vmem>>, vector<64x384xf32>
    tpu.vector_store %arg16[%c0_210, %c0_211], %549 {strides = array<i32>} : memref<64x384xf32, #tpu.memory_space<vmem>>, vector<64x384xf32>,
    %cst_212 = arith.constant 0.000000e+00 : f32
    %551 = vector.broadcast %cst_212 : f32 to vector<8x128xf32>
    %c0_213 = arith.constant 0 : index
    %c0_214 = arith.constant 0 : index
    %552 = vector.load %arg16[%c0_213, %c0_214] : memref<64x384xf32, #tpu.memory_space<vmem>>, vector<8x384xf32>
    %c0_215 = arith.constant 0 : index
    %c0_216 = arith.constant 0 : index
    %553 = vector.load %arg10[%c0_215, %c0_216] : memref<128x384xf32, #tpu.memory_space<vmem>>, vector<128x384xf32>
    %cst_217 = arith.constant dense<0.000000e+00> : vector<8x384xf32>
    %554 = tpu.matmul %551, %553, %cst_217 {dimension_numbers = #tpu.dot_dimension_numbers<[1], [0], [0], [1], [0, 0, 1, 1], [], []>} : vector<8x128xf32>, vector<128x384xf32>, vector<8x384xf32> -> vector<8x384xf32>
    %c0_218 = arith.constant 0 : index
    %c0_219 = arith.constant 0 : index
    %555 = vector.load %arg12[%c0_218, %c0_219] : memref<1x384xf32, #tpu.memory_space<vmem>>, vector<1x384xf32>
    %556 = vector.broadcast %555 : vector<1x384xf32> to vector<8x384xf32>
    %557 = arith.addf %554, %556 : vector<8x384xf32>
    %558 = vector.extract_strided_slice %552 {offsets = [0, 0], sizes = [8, 128], strides = [1, 1]} : vector<8x384xf32> to vector<8x128xf32>
    %559 = vector.extract_strided_slice %557 {offsets = [0, 0], sizes = [8, 128], strides = [1, 1]} : vector<8x384xf32> to vector<8x128xf32>
    %560 = arith.addf %558, %559 : vector<8x128xf32>
    %561 = arith.negf %560 : vector<8x128xf32>
    %562 = math.exp %561 : vector<8x128xf32>
    %cst_220 = arith.constant 1.000000e+00 : f32
    %563 = vector.broadcast %cst_220 : f32 to vector<8x128xf32>
    %564 = arith.addf %563, %562 : vector<8x128xf32>
    %565 = arith.divf %563, %564 : vector<8x128xf32>
    %566 = vector.extract_strided_slice %552 {offsets = [0, 128], sizes = [8, 128], strides = [1, 1]} : vector<8x384xf32> to vector<8x128xf32>
    %567 = vector.extract_strided_slice %557 {offsets = [0, 128], sizes = [8, 128], strides = [1, 1]} : vector<8x384xf32> to vector<8x128xf32>
    %568 = arith.addf %566, %567 : vector<8x128xf32>
    %569 = arith.negf %568 : vector<8x128xf32>
    %570 = math.exp %569 : vector<8x128xf32>
    %cst_221 = arith.constant 1.000000e+00 : f32
    %571 = vector.broadcast %cst_221 : f32 to vector<8x128xf32>
    %572 = arith.addf %571, %570 : vector<8x128xf32>
    %573 = arith.divf %571, %572 : vector<8x128xf32>
    %574 = vector.extract_strided_slice %552 {offsets = [0, 256], sizes = [8, 128], strides = [1, 1]} : vector<8x384xf32> to vector<8x128xf32>
    %575 = vector.extract_strided_slice %557 {offsets = [0, 256], sizes = [8, 128], strides = [1, 1]} : vector<8x384xf32> to vector<8x128xf32>
    %576 = arith.mulf %565, %575 : vector<8x128xf32>
    %577 = arith.addf %574, %576 : vector<8x128xf32>
    %578 = math.tanh %577 : vector<8x128xf32>
    %cst_222 = arith.constant 1.000000e+00 : f32
    %579 = vector.broadcast %cst_222 : f32 to vector<8x128xf32>
    %580 = arith.subf %579, %573 : vector<8x128xf32>
    %581 = arith.mulf %580, %578 : vector<8x128xf32>
    %582 = arith.mulf %573, %551 : vector<8x128xf32>
    %583 = arith.addf %581, %582 : vector<8x128xf32>
    %c0_223 = arith.constant 0 : index
    %c0_224 = arith.constant 0 : index
    %584 = vector.load %arg17[%c0_223, %c0_224] : memref<64x128xf32, #tpu.memory_space<vmem>>, vector<8x128xf32>
    tpu.vector_store %arg17[%c0_223, %c0_224], %583 {strides = array<i32>} : memref<64x128xf32, #tpu.memory_space<vmem>>, vector<8x128xf32>,
    %c8_225 = arith.constant 8 : index
    %c0_226 = arith.constant 0 : index
    %585 = vector.load %arg16[%c8_225, %c0_226] : memref<64x384xf32, #tpu.memory_space<vmem>>, vector<8x384xf32>
    %c0_227 = arith.constant 0 : index
    %c0_228 = arith.constant 0 : index
    %586 = vector.load %arg10[%c0_227, %c0_228] : memref<128x384xf32, #tpu.memory_space<vmem>>, vector<128x384xf32>
    %cst_229 = arith.constant dense<0.000000e+00> : vector<8x384xf32>
    %587 = tpu.matmul %583, %586, %cst_229 {dimension_numbers = #tpu.dot_dimension_numbers<[1], [0], [0], [1], [0, 0, 1, 1], [], []>} : vector<8x128xf32>, vector<128x384xf32>, vector<8x384xf32> -> vector<8x384xf32>
    %c0_230 = arith.constant 0 : index
    %c0_231 = arith.constant 0 : index
    %588 = vector.load %arg12[%c0_230, %c0_231] : memref<1x384xf32, #tpu.memory_space<vmem>>, vector<1x384xf32>
    %589 = vector.broadcast %588 : vector<1x384xf32> to vector<8x384xf32>
    %590 = arith.addf %587, %589 : vector<8x384xf32>
    %591 = vector.extract_strided_slice %585 {offsets = [0, 0], sizes = [8, 128], strides = [1, 1]} : vector<8x384xf32> to vector<8x128xf32>
    %592 = vector.extract_strided_slice %590 {offsets = [0, 0], sizes = [8, 128], strides = [1, 1]} : vector<8x384xf32> to vector<8x128xf32>
    %593 = arith.addf %591, %592 : vector<8x128xf32>
    %594 = arith.negf %593 : vector<8x128xf32>
    %595 = math.exp %594 : vector<8x128xf32>
    %cst_232 = arith.constant 1.000000e+00 : f32
    %596 = vector.broadcast %cst_232 : f32 to vector<8x128xf32>
    %597 = arith.addf %596, %595 : vector<8x128xf32>
    %598 = arith.divf %596, %597 : vector<8x128xf32>
    %599 = vector.extract_strided_slice %585 {offsets = [0, 128], sizes = [8, 128], strides = [1, 1]} : vector<8x384xf32> to vector<8x128xf32>
    %600 = vector.extract_strided_slice %590 {offsets = [0, 128], sizes = [8, 128], strides = [1, 1]} : vector<8x384xf32> to vector<8x128xf32>
    %601 = arith.addf %599, %600 : vector<8x128xf32>
    %602 = arith.negf %601 : vector<8x128xf32>
    %603 = math.exp %602 : vector<8x128xf32>
    %cst_233 = arith.constant 1.000000e+00 : f32
    %604 = vector.broadcast %cst_233 : f32 to vector<8x128xf32>
    %605 = arith.addf %604, %603 : vector<8x128xf32>
    %606 = arith.divf %604, %605 : vector<8x128xf32>
    %607 = vector.extract_strided_slice %585 {offsets = [0, 256], sizes = [8, 128], strides = [1, 1]} : vector<8x384xf32> to vector<8x128xf32>
    %608 = vector.extract_strided_slice %590 {offsets = [0, 256], sizes = [8, 128], strides = [1, 1]} : vector<8x384xf32> to vector<8x128xf32>
    %609 = arith.mulf %598, %608 : vector<8x128xf32>
    %610 = arith.addf %607, %609 : vector<8x128xf32>
    %611 = math.tanh %610 : vector<8x128xf32>
    %cst_234 = arith.constant 1.000000e+00 : f32
    %612 = vector.broadcast %cst_234 : f32 to vector<8x128xf32>
    %613 = arith.subf %612, %606 : vector<8x128xf32>
    %614 = arith.mulf %613, %611 : vector<8x128xf32>
    %615 = arith.mulf %606, %583 : vector<8x128xf32>
    %616 = arith.addf %614, %615 : vector<8x128xf32>
    %c8_235 = arith.constant 8 : index
    %c0_236 = arith.constant 0 : index
    %617 = vector.load %arg17[%c8_235, %c0_236] : memref<64x128xf32, #tpu.memory_space<vmem>>, vector<8x128xf32>
    tpu.vector_store %arg17[%c8_235, %c0_236], %616 {strides = array<i32>} : memref<64x128xf32, #tpu.memory_space<vmem>>, vector<8x128xf32>,
    %c16_237 = arith.constant 16 : index
    %c0_238 = arith.constant 0 : index
    %618 = vector.load %arg16[%c16_237, %c0_238] : memref<64x384xf32, #tpu.memory_space<vmem>>, vector<8x384xf32>
    %c0_239 = arith.constant 0 : index
    %c0_240 = arith.constant 0 : index
    %619 = vector.load %arg10[%c0_239, %c0_240] : memref<128x384xf32, #tpu.memory_space<vmem>>, vector<128x384xf32>
    %cst_241 = arith.constant dense<0.000000e+00> : vector<8x384xf32>
    %620 = tpu.matmul %616, %619, %cst_241 {dimension_numbers = #tpu.dot_dimension_numbers<[1], [0], [0], [1], [0, 0, 1, 1], [], []>} : vector<8x128xf32>, vector<128x384xf32>, vector<8x384xf32> -> vector<8x384xf32>
    %c0_242 = arith.constant 0 : index
    %c0_243 = arith.constant 0 : index
    %621 = vector.load %arg12[%c0_242, %c0_243] : memref<1x384xf32, #tpu.memory_space<vmem>>, vector<1x384xf32>
    %622 = vector.broadcast %621 : vector<1x384xf32> to vector<8x384xf32>
    %623 = arith.addf %620, %622 : vector<8x384xf32>
    %624 = vector.extract_strided_slice %618 {offsets = [0, 0], sizes = [8, 128], strides = [1, 1]} : vector<8x384xf32> to vector<8x128xf32>
    %625 = vector.extract_strided_slice %623 {offsets = [0, 0], sizes = [8, 128], strides = [1, 1]} : vector<8x384xf32> to vector<8x128xf32>
    %626 = arith.addf %624, %625 : vector<8x128xf32>
    %627 = arith.negf %626 : vector<8x128xf32>
    %628 = math.exp %627 : vector<8x128xf32>
    %cst_244 = arith.constant 1.000000e+00 : f32
    %629 = vector.broadcast %cst_244 : f32 to vector<8x128xf32>
    %630 = arith.addf %629, %628 : vector<8x128xf32>
    %631 = arith.divf %629, %630 : vector<8x128xf32>
    %632 = vector.extract_strided_slice %618 {offsets = [0, 128], sizes = [8, 128], strides = [1, 1]} : vector<8x384xf32> to vector<8x128xf32>
    %633 = vector.extract_strided_slice %623 {offsets = [0, 128], sizes = [8, 128], strides = [1, 1]} : vector<8x384xf32> to vector<8x128xf32>
    %634 = arith.addf %632, %633 : vector<8x128xf32>
    %635 = arith.negf %634 : vector<8x128xf32>
    %636 = math.exp %635 : vector<8x128xf32>
    %cst_245 = arith.constant 1.000000e+00 : f32
    %637 = vector.broadcast %cst_245 : f32 to vector<8x128xf32>
    %638 = arith.addf %637, %636 : vector<8x128xf32>
    %639 = arith.divf %637, %638 : vector<8x128xf32>
    %640 = vector.extract_strided_slice %618 {offsets = [0, 256], sizes = [8, 128], strides = [1, 1]} : vector<8x384xf32> to vector<8x128xf32>
    %641 = vector.extract_strided_slice %623 {offsets = [0, 256], sizes = [8, 128], strides = [1, 1]} : vector<8x384xf32> to vector<8x128xf32>
    %642 = arith.mulf %631, %641 : vector<8x128xf32>
    %643 = arith.addf %640, %642 : vector<8x128xf32>
    %644 = math.tanh %643 : vector<8x128xf32>
    %cst_246 = arith.constant 1.000000e+00 : f32
    %645 = vector.broadcast %cst_246 : f32 to vector<8x128xf32>
    %646 = arith.subf %645, %639 : vector<8x128xf32>
    %647 = arith.mulf %646, %644 : vector<8x128xf32>
    %648 = arith.mulf %639, %616 : vector<8x128xf32>
    %649 = arith.addf %647, %648 : vector<8x128xf32>
    %c16_247 = arith.constant 16 : index
    %c0_248 = arith.constant 0 : index
    %650 = vector.load %arg17[%c16_247, %c0_248] : memref<64x128xf32, #tpu.memory_space<vmem>>, vector<8x128xf32>
    tpu.vector_store %arg17[%c16_247, %c0_248], %649 {strides = array<i32>} : memref<64x128xf32, #tpu.memory_space<vmem>>, vector<8x128xf32>,
    %c24_249 = arith.constant 24 : index
    %c0_250 = arith.constant 0 : index
    %651 = vector.load %arg16[%c24_249, %c0_250] : memref<64x384xf32, #tpu.memory_space<vmem>>, vector<8x384xf32>
    %c0_251 = arith.constant 0 : index
    %c0_252 = arith.constant 0 : index
    %652 = vector.load %arg10[%c0_251, %c0_252] : memref<128x384xf32, #tpu.memory_space<vmem>>, vector<128x384xf32>
    %cst_253 = arith.constant dense<0.000000e+00> : vector<8x384xf32>
    %653 = tpu.matmul %649, %652, %cst_253 {dimension_numbers = #tpu.dot_dimension_numbers<[1], [0], [0], [1], [0, 0, 1, 1], [], []>} : vector<8x128xf32>, vector<128x384xf32>, vector<8x384xf32> -> vector<8x384xf32>
    %c0_254 = arith.constant 0 : index
    %c0_255 = arith.constant 0 : index
    %654 = vector.load %arg12[%c0_254, %c0_255] : memref<1x384xf32, #tpu.memory_space<vmem>>, vector<1x384xf32>
    %655 = vector.broadcast %654 : vector<1x384xf32> to vector<8x384xf32>
    %656 = arith.addf %653, %655 : vector<8x384xf32>
    %657 = vector.extract_strided_slice %651 {offsets = [0, 0], sizes = [8, 128], strides = [1, 1]} : vector<8x384xf32> to vector<8x128xf32>
    %658 = vector.extract_strided_slice %656 {offsets = [0, 0], sizes = [8, 128], strides = [1, 1]} : vector<8x384xf32> to vector<8x128xf32>
    %659 = arith.addf %657, %658 : vector<8x128xf32>
    %660 = arith.negf %659 : vector<8x128xf32>
    %661 = math.exp %660 : vector<8x128xf32>
    %cst_256 = arith.constant 1.000000e+00 : f32
    %662 = vector.broadcast %cst_256 : f32 to vector<8x128xf32>
    %663 = arith.addf %662, %661 : vector<8x128xf32>
    %664 = arith.divf %662, %663 : vector<8x128xf32>
    %665 = vector.extract_strided_slice %651 {offsets = [0, 128], sizes = [8, 128], strides = [1, 1]} : vector<8x384xf32> to vector<8x128xf32>
    %666 = vector.extract_strided_slice %656 {offsets = [0, 128], sizes = [8, 128], strides = [1, 1]} : vector<8x384xf32> to vector<8x128xf32>
    %667 = arith.addf %665, %666 : vector<8x128xf32>
    %668 = arith.negf %667 : vector<8x128xf32>
    %669 = math.exp %668 : vector<8x128xf32>
    %cst_257 = arith.constant 1.000000e+00 : f32
    %670 = vector.broadcast %cst_257 : f32 to vector<8x128xf32>
    %671 = arith.addf %670, %669 : vector<8x128xf32>
    %672 = arith.divf %670, %671 : vector<8x128xf32>
    %673 = vector.extract_strided_slice %651 {offsets = [0, 256], sizes = [8, 128], strides = [1, 1]} : vector<8x384xf32> to vector<8x128xf32>
    %674 = vector.extract_strided_slice %656 {offsets = [0, 256], sizes = [8, 128], strides = [1, 1]} : vector<8x384xf32> to vector<8x128xf32>
    %675 = arith.mulf %664, %674 : vector<8x128xf32>
    %676 = arith.addf %673, %675 : vector<8x128xf32>
    %677 = math.tanh %676 : vector<8x128xf32>
    %cst_258 = arith.constant 1.000000e+00 : f32
    %678 = vector.broadcast %cst_258 : f32 to vector<8x128xf32>
    %679 = arith.subf %678, %672 : vector<8x128xf32>
    %680 = arith.mulf %679, %677 : vector<8x128xf32>
    %681 = arith.mulf %672, %649 : vector<8x128xf32>
    %682 = arith.addf %680, %681 : vector<8x128xf32>
    %c24_259 = arith.constant 24 : index
    %c0_260 = arith.constant 0 : index
    %683 = vector.load %arg17[%c24_259, %c0_260] : memref<64x128xf32, #tpu.memory_space<vmem>>, vector<8x128xf32>
    tpu.vector_store %arg17[%c24_259, %c0_260], %682 {strides = array<i32>} : memref<64x128xf32, #tpu.memory_space<vmem>>, vector<8x128xf32>,
    %c32_261 = arith.constant 32 : index
    %c0_262 = arith.constant 0 : index
    %684 = vector.load %arg16[%c32_261, %c0_262] : memref<64x384xf32, #tpu.memory_space<vmem>>, vector<8x384xf32>
    %c0_263 = arith.constant 0 : index
    %c0_264 = arith.constant 0 : index
    %685 = vector.load %arg10[%c0_263, %c0_264] : memref<128x384xf32, #tpu.memory_space<vmem>>, vector<128x384xf32>
    %cst_265 = arith.constant dense<0.000000e+00> : vector<8x384xf32>
    %686 = tpu.matmul %682, %685, %cst_265 {dimension_numbers = #tpu.dot_dimension_numbers<[1], [0], [0], [1], [0, 0, 1, 1], [], []>} : vector<8x128xf32>, vector<128x384xf32>, vector<8x384xf32> -> vector<8x384xf32>
    %c0_266 = arith.constant 0 : index
    %c0_267 = arith.constant 0 : index
    %687 = vector.load %arg12[%c0_266, %c0_267] : memref<1x384xf32, #tpu.memory_space<vmem>>, vector<1x384xf32>
    %688 = vector.broadcast %687 : vector<1x384xf32> to vector<8x384xf32>
    %689 = arith.addf %686, %688 : vector<8x384xf32>
    %690 = vector.extract_strided_slice %684 {offsets = [0, 0], sizes = [8, 128], strides = [1, 1]} : vector<8x384xf32> to vector<8x128xf32>
    %691 = vector.extract_strided_slice %689 {offsets = [0, 0], sizes = [8, 128], strides = [1, 1]} : vector<8x384xf32> to vector<8x128xf32>
    %692 = arith.addf %690, %691 : vector<8x128xf32>
    %693 = arith.negf %692 : vector<8x128xf32>
    %694 = math.exp %693 : vector<8x128xf32>
    %cst_268 = arith.constant 1.000000e+00 : f32
    %695 = vector.broadcast %cst_268 : f32 to vector<8x128xf32>
    %696 = arith.addf %695, %694 : vector<8x128xf32>
    %697 = arith.divf %695, %696 : vector<8x128xf32>
    %698 = vector.extract_strided_slice %684 {offsets = [0, 128], sizes = [8, 128], strides = [1, 1]} : vector<8x384xf32> to vector<8x128xf32>
    %699 = vector.extract_strided_slice %689 {offsets = [0, 128], sizes = [8, 128], strides = [1, 1]} : vector<8x384xf32> to vector<8x128xf32>
    %700 = arith.addf %698, %699 : vector<8x128xf32>
    %701 = arith.negf %700 : vector<8x128xf32>
    %702 = math.exp %701 : vector<8x128xf32>
    %cst_269 = arith.constant 1.000000e+00 : f32
    %703 = vector.broadcast %cst_269 : f32 to vector<8x128xf32>
    %704 = arith.addf %703, %702 : vector<8x128xf32>
    %705 = arith.divf %703, %704 : vector<8x128xf32>
    %706 = vector.extract_strided_slice %684 {offsets = [0, 256], sizes = [8, 128], strides = [1, 1]} : vector<8x384xf32> to vector<8x128xf32>
    %707 = vector.extract_strided_slice %689 {offsets = [0, 256], sizes = [8, 128], strides = [1, 1]} : vector<8x384xf32> to vector<8x128xf32>
    %708 = arith.mulf %697, %707 : vector<8x128xf32>
    %709 = arith.addf %706, %708 : vector<8x128xf32>
    %710 = math.tanh %709 : vector<8x128xf32>
    %cst_270 = arith.constant 1.000000e+00 : f32
    %711 = vector.broadcast %cst_270 : f32 to vector<8x128xf32>
    %712 = arith.subf %711, %705 : vector<8x128xf32>
    %713 = arith.mulf %712, %710 : vector<8x128xf32>
    %714 = arith.mulf %705, %682 : vector<8x128xf32>
    %715 = arith.addf %713, %714 : vector<8x128xf32>
    %c32_271 = arith.constant 32 : index
    %c0_272 = arith.constant 0 : index
    %716 = vector.load %arg17[%c32_271, %c0_272] : memref<64x128xf32, #tpu.memory_space<vmem>>, vector<8x128xf32>
    tpu.vector_store %arg17[%c32_271, %c0_272], %715 {strides = array<i32>} : memref<64x128xf32, #tpu.memory_space<vmem>>, vector<8x128xf32>,
    %c40_273 = arith.constant 40 : index
    %c0_274 = arith.constant 0 : index
    %717 = vector.load %arg16[%c40_273, %c0_274] : memref<64x384xf32, #tpu.memory_space<vmem>>, vector<8x384xf32>
    %c0_275 = arith.constant 0 : index
    %c0_276 = arith.constant 0 : index
    %718 = vector.load %arg10[%c0_275, %c0_276] : memref<128x384xf32, #tpu.memory_space<vmem>>, vector<128x384xf32>
    %cst_277 = arith.constant dense<0.000000e+00> : vector<8x384xf32>
    %719 = tpu.matmul %715, %718, %cst_277 {dimension_numbers = #tpu.dot_dimension_numbers<[1], [0], [0], [1], [0, 0, 1, 1], [], []>} : vector<8x128xf32>, vector<128x384xf32>, vector<8x384xf32> -> vector<8x384xf32>
    %c0_278 = arith.constant 0 : index
    %c0_279 = arith.constant 0 : index
    %720 = vector.load %arg12[%c0_278, %c0_279] : memref<1x384xf32, #tpu.memory_space<vmem>>, vector<1x384xf32>
    %721 = vector.broadcast %720 : vector<1x384xf32> to vector<8x384xf32>
    %722 = arith.addf %719, %721 : vector<8x384xf32>
    %723 = vector.extract_strided_slice %717 {offsets = [0, 0], sizes = [8, 128], strides = [1, 1]} : vector<8x384xf32> to vector<8x128xf32>
    %724 = vector.extract_strided_slice %722 {offsets = [0, 0], sizes = [8, 128], strides = [1, 1]} : vector<8x384xf32> to vector<8x128xf32>
    %725 = arith.addf %723, %724 : vector<8x128xf32>
    %726 = arith.negf %725 : vector<8x128xf32>
    %727 = math.exp %726 : vector<8x128xf32>
    %cst_280 = arith.constant 1.000000e+00 : f32
    %728 = vector.broadcast %cst_280 : f32 to vector<8x128xf32>
    %729 = arith.addf %728, %727 : vector<8x128xf32>
    %730 = arith.divf %728, %729 : vector<8x128xf32>
    %731 = vector.extract_strided_slice %717 {offsets = [0, 128], sizes = [8, 128], strides = [1, 1]} : vector<8x384xf32> to vector<8x128xf32>
    %732 = vector.extract_strided_slice %722 {offsets = [0, 128], sizes = [8, 128], strides = [1, 1]} : vector<8x384xf32> to vector<8x128xf32>
    %733 = arith.addf %731, %732 : vector<8x128xf32>
    %734 = arith.negf %733 : vector<8x128xf32>
    %735 = math.exp %734 : vector<8x128xf32>
    %cst_281 = arith.constant 1.000000e+00 : f32
    %736 = vector.broadcast %cst_281 : f32 to vector<8x128xf32>
    %737 = arith.addf %736, %735 : vector<8x128xf32>
    %738 = arith.divf %736, %737 : vector<8x128xf32>
    %739 = vector.extract_strided_slice %717 {offsets = [0, 256], sizes = [8, 128], strides = [1, 1]} : vector<8x384xf32> to vector<8x128xf32>
    %740 = vector.extract_strided_slice %722 {offsets = [0, 256], sizes = [8, 128], strides = [1, 1]} : vector<8x384xf32> to vector<8x128xf32>
    %741 = arith.mulf %730, %740 : vector<8x128xf32>
    %742 = arith.addf %739, %741 : vector<8x128xf32>
    %743 = math.tanh %742 : vector<8x128xf32>
    %cst_282 = arith.constant 1.000000e+00 : f32
    %744 = vector.broadcast %cst_282 : f32 to vector<8x128xf32>
    %745 = arith.subf %744, %738 : vector<8x128xf32>
    %746 = arith.mulf %745, %743 : vector<8x128xf32>
    %747 = arith.mulf %738, %715 : vector<8x128xf32>
    %748 = arith.addf %746, %747 : vector<8x128xf32>
    %c40_283 = arith.constant 40 : index
    %c0_284 = arith.constant 0 : index
    %749 = vector.load %arg17[%c40_283, %c0_284] : memref<64x128xf32, #tpu.memory_space<vmem>>, vector<8x128xf32>
    tpu.vector_store %arg17[%c40_283, %c0_284], %748 {strides = array<i32>} : memref<64x128xf32, #tpu.memory_space<vmem>>, vector<8x128xf32>,
    %c48_285 = arith.constant 48 : index
    %c0_286 = arith.constant 0 : index
    %750 = vector.load %arg16[%c48_285, %c0_286] : memref<64x384xf32, #tpu.memory_space<vmem>>, vector<8x384xf32>
    %c0_287 = arith.constant 0 : index
    %c0_288 = arith.constant 0 : index
    %751 = vector.load %arg10[%c0_287, %c0_288] : memref<128x384xf32, #tpu.memory_space<vmem>>, vector<128x384xf32>
    %cst_289 = arith.constant dense<0.000000e+00> : vector<8x384xf32>
    %752 = tpu.matmul %748, %751, %cst_289 {dimension_numbers = #tpu.dot_dimension_numbers<[1], [0], [0], [1], [0, 0, 1, 1], [], []>} : vector<8x128xf32>, vector<128x384xf32>, vector<8x384xf32> -> vector<8x384xf32>
    %c0_290 = arith.constant 0 : index
    %c0_291 = arith.constant 0 : index
    %753 = vector.load %arg12[%c0_290, %c0_291] : memref<1x384xf32, #tpu.memory_space<vmem>>, vector<1x384xf32>
    %754 = vector.broadcast %753 : vector<1x384xf32> to vector<8x384xf32>
    %755 = arith.addf %752, %754 : vector<8x384xf32>
    %756 = vector.extract_strided_slice %750 {offsets = [0, 0], sizes = [8, 128], strides = [1, 1]} : vector<8x384xf32> to vector<8x128xf32>
    %757 = vector.extract_strided_slice %755 {offsets = [0, 0], sizes = [8, 128], strides = [1, 1]} : vector<8x384xf32> to vector<8x128xf32>
    %758 = arith.addf %756, %757 : vector<8x128xf32>
    %759 = arith.negf %758 : vector<8x128xf32>
    %760 = math.exp %759 : vector<8x128xf32>
    %cst_292 = arith.constant 1.000000e+00 : f32
    %761 = vector.broadcast %cst_292 : f32 to vector<8x128xf32>
    %762 = arith.addf %761, %760 : vector<8x128xf32>
    %763 = arith.divf %761, %762 : vector<8x128xf32>
    %764 = vector.extract_strided_slice %750 {offsets = [0, 128], sizes = [8, 128], strides = [1, 1]} : vector<8x384xf32> to vector<8x128xf32>
    %765 = vector.extract_strided_slice %755 {offsets = [0, 128], sizes = [8, 128], strides = [1, 1]} : vector<8x384xf32> to vector<8x128xf32>
    %766 = arith.addf %764, %765 : vector<8x128xf32>
    %767 = arith.negf %766 : vector<8x128xf32>
    %768 = math.exp %767 : vector<8x128xf32>
    %cst_293 = arith.constant 1.000000e+00 : f32
    %769 = vector.broadcast %cst_293 : f32 to vector<8x128xf32>
    %770 = arith.addf %769, %768 : vector<8x128xf32>
    %771 = arith.divf %769, %770 : vector<8x128xf32>
    %772 = vector.extract_strided_slice %750 {offsets = [0, 256], sizes = [8, 128], strides = [1, 1]} : vector<8x384xf32> to vector<8x128xf32>
    %773 = vector.extract_strided_slice %755 {offsets = [0, 256], sizes = [8, 128], strides = [1, 1]} : vector<8x384xf32> to vector<8x128xf32>
    %774 = arith.mulf %763, %773 : vector<8x128xf32>
    %775 = arith.addf %772, %774 : vector<8x128xf32>
    %776 = math.tanh %775 : vector<8x128xf32>
    %cst_294 = arith.constant 1.000000e+00 : f32
    %777 = vector.broadcast %cst_294 : f32 to vector<8x128xf32>
    %778 = arith.subf %777, %771 : vector<8x128xf32>
    %779 = arith.mulf %778, %776 : vector<8x128xf32>
    %780 = arith.mulf %771, %748 : vector<8x128xf32>
    %781 = arith.addf %779, %780 : vector<8x128xf32>
    %c48_295 = arith.constant 48 : index
    %c0_296 = arith.constant 0 : index
    %782 = vector.load %arg17[%c48_295, %c0_296] : memref<64x128xf32, #tpu.memory_space<vmem>>, vector<8x128xf32>
    tpu.vector_store %arg17[%c48_295, %c0_296], %781 {strides = array<i32>} : memref<64x128xf32, #tpu.memory_space<vmem>>, vector<8x128xf32>,
    %c56_297 = arith.constant 56 : index
    %c0_298 = arith.constant 0 : index
    %783 = vector.load %arg16[%c56_297, %c0_298] : memref<64x384xf32, #tpu.memory_space<vmem>>, vector<8x384xf32>
    %c0_299 = arith.constant 0 : index
    %c0_300 = arith.constant 0 : index
    %784 = vector.load %arg10[%c0_299, %c0_300] : memref<128x384xf32, #tpu.memory_space<vmem>>, vector<128x384xf32>
    %cst_301 = arith.constant dense<0.000000e+00> : vector<8x384xf32>
    %785 = tpu.matmul %781, %784, %cst_301 {dimension_numbers = #tpu.dot_dimension_numbers<[1], [0], [0], [1], [0, 0, 1, 1], [], []>} : vector<8x128xf32>, vector<128x384xf32>, vector<8x384xf32> -> vector<8x384xf32>
    %c0_302 = arith.constant 0 : index
    %c0_303 = arith.constant 0 : index
    %786 = vector.load %arg12[%c0_302, %c0_303] : memref<1x384xf32, #tpu.memory_space<vmem>>, vector<1x384xf32>
    %787 = vector.broadcast %786 : vector<1x384xf32> to vector<8x384xf32>
    %788 = arith.addf %785, %787 : vector<8x384xf32>
    %789 = vector.extract_strided_slice %783 {offsets = [0, 0], sizes = [8, 128], strides = [1, 1]} : vector<8x384xf32> to vector<8x128xf32>
    %790 = vector.extract_strided_slice %788 {offsets = [0, 0], sizes = [8, 128], strides = [1, 1]} : vector<8x384xf32> to vector<8x128xf32>
    %791 = arith.addf %789, %790 : vector<8x128xf32>
    %792 = arith.negf %791 : vector<8x128xf32>
    %793 = math.exp %792 : vector<8x128xf32>
    %cst_304 = arith.constant 1.000000e+00 : f32
    %794 = vector.broadcast %cst_304 : f32 to vector<8x128xf32>
    %795 = arith.addf %794, %793 : vector<8x128xf32>
    %796 = arith.divf %794, %795 : vector<8x128xf32>
    %797 = vector.extract_strided_slice %783 {offsets = [0, 128], sizes = [8, 128], strides = [1, 1]} : vector<8x384xf32> to vector<8x128xf32>
    %798 = vector.extract_strided_slice %788 {offsets = [0, 128], sizes = [8, 128], strides = [1, 1]} : vector<8x384xf32> to vector<8x128xf32>
    %799 = arith.addf %797, %798 : vector<8x128xf32>
    %800 = arith.negf %799 : vector<8x128xf32>
    %801 = math.exp %800 : vector<8x128xf32>
    %cst_305 = arith.constant 1.000000e+00 : f32
    %802 = vector.broadcast %cst_305 : f32 to vector<8x128xf32>
    %803 = arith.addf %802, %801 : vector<8x128xf32>
    %804 = arith.divf %802, %803 : vector<8x128xf32>
    %805 = vector.extract_strided_slice %783 {offsets = [0, 256], sizes = [8, 128], strides = [1, 1]} : vector<8x384xf32> to vector<8x128xf32>
    %806 = vector.extract_strided_slice %788 {offsets = [0, 256], sizes = [8, 128], strides = [1, 1]} : vector<8x384xf32> to vector<8x128xf32>
    %807 = arith.mulf %796, %806 : vector<8x128xf32>
    %808 = arith.addf %805, %807 : vector<8x128xf32>
    %809 = math.tanh %808 : vector<8x128xf32>
    %cst_306 = arith.constant 1.000000e+00 : f32
    %810 = vector.broadcast %cst_306 : f32 to vector<8x128xf32>
    %811 = arith.subf %810, %804 : vector<8x128xf32>
    %812 = arith.mulf %811, %809 : vector<8x128xf32>
    %813 = arith.mulf %804, %781 : vector<8x128xf32>
    %814 = arith.addf %812, %813 : vector<8x128xf32>
    %c56_307 = arith.constant 56 : index
    %c0_308 = arith.constant 0 : index
    %815 = vector.load %arg17[%c56_307, %c0_308] : memref<64x128xf32, #tpu.memory_space<vmem>>, vector<8x128xf32>
    tpu.vector_store %arg17[%c56_307, %c0_308], %814 {strides = array<i32>} : memref<64x128xf32, #tpu.memory_space<vmem>>, vector<8x128xf32>,
    %c0_309 = arith.constant 0 : index
    %c0_310 = arith.constant 0 : index
    %816 = vector.load %arg17[%c0_309, %c0_310] : memref<64x128xf32, #tpu.memory_space<vmem>>, vector<64x128xf32>
    %c0_311 = arith.constant 0 : index
    %c0_312 = arith.constant 0 : index
    %817 = vector.load %arg13[%c0_311, %c0_312] : memref<128x5xf32, #tpu.memory_space<vmem>>, vector<128x5xf32>
    %cst_313 = arith.constant dense<0.000000e+00> : vector<64x5xf32>
    %818 = tpu.matmul %816, %817, %cst_313 {dimension_numbers = #tpu.dot_dimension_numbers<[1], [0], [0], [1], [0, 0, 1, 1], [], []>} : vector<64x128xf32>, vector<128x5xf32>, vector<64x5xf32> -> vector<64x5xf32>
    %c0_314 = arith.constant 0 : index
    %c0_315 = arith.constant 0 : index
    %819 = vector.load %arg14[%c0_314, %c0_315] : memref<1x5xf32, #tpu.memory_space<vmem>>, vector<1x5xf32>
    %820 = vector.broadcast %819 : vector<1x5xf32> to vector<64x5xf32>
    %821 = arith.addf %818, %820 : vector<64x5xf32>
    %c0_316 = arith.constant 0 : index
    %c0_317 = arith.constant 0 : index
    %822 = vector.load %arg15[%c0_316, %c0_317] : memref<64x5xf32, #tpu.memory_space<vmem>>, vector<64x5xf32>
    tpu.vector_store %arg15[%c0_316, %c0_317], %821 {strides = array<i32>} : memref<64x5xf32, #tpu.memory_space<vmem>>, vector<64x5xf32>,
    return
  }
}

</mosaic_0001>

<llo_original>
// kernel: model_forward.1
$region0: #{model_forward.1}
  #allocation0 [shape = 'u32[]', space=smem, size = 0x4, offset = 0x4, fixed_abs, tag = 'smem constant byte address 0x4 - core index']
  #allocation1 [shape = 'u32[144,128]{1,0:T(1,128)}', space=vmem, size = 0x12000, scoped, tag = 'internal scratch']
  #allocation2 [shape = 'f32[64,384]{1,0:T(8,128)}', space=vmem, size = 0x18000, scoped, tag = 'scratch operand']
  #allocation3 [shape = 'f32[64,128]{1,0:T(8,128)}', space=vmem, size = 0x8000, scoped, tag = 'scratch operand']
  #allocation4 [shape = 'f32[64,128]{1,0:T(8,128)}', space=vmem, size = 0x8000, scoped, tag = 'scratch operand']
  %s0 = inlined_call_operand.vmem [shape: f32[64,1], index: 0, kind: input, shape index: {}]
  %s1 = inlined_call_operand.vmem [shape: f32[1,384], index: 1, kind: input, shape index: {}]
  %s2 = inlined_call_operand.hbm [shape: f32[128,384], index: 2, kind: input, shape index: {}]
  %s3 = inlined_call_operand.vmem [shape: f32[1,384], index: 3, kind: input, shape index: {}]
  %s4 = inlined_call_operand.vmem [shape: f32[1,384], index: 4, kind: input, shape index: {}]
  %s5 = inlined_call_operand.hbm [shape: f32[128,384], index: 5, kind: input, shape index: {}]
  %s6 = inlined_call_operand.hbm [shape: f32[128,384], index: 6, kind: input, shape index: {}]
  %s7 = inlined_call_operand.vmem [shape: f32[1,384], index: 7, kind: input, shape index: {}]
  %s8 = inlined_call_operand.vmem [shape: f32[1,384], index: 8, kind: input, shape index: {}]
  %s9 = inlined_call_operand.hbm [shape: f32[128,384], index: 9, kind: input, shape index: {}]
  %s10 = inlined_call_operand.hbm [shape: f32[128,384], index: 10, kind: input, shape index: {}]
  %s11 = inlined_call_operand.vmem [shape: f32[1,384], index: 11, kind: input, shape index: {}]
  %s12 = inlined_call_operand.vmem [shape: f32[1,384], index: 12, kind: input, shape index: {}]
  %s13 = inlined_call_operand.vmem [shape: f32[128,5], index: 13, kind: input, shape index: {}]
  %s14 = inlined_call_operand.vmem [shape: f32[1,5], index: 14, kind: input, shape index: {}]
  %s15 = inlined_call_operand.vmem [shape: f32[64,5], index: 15, kind: output, shape index: {}]
  %s16 = sld [smem:[#allocation0]]
  $region90: #{model_forward.1} parent=0
    _
  %s18 = ssub.s32 1, %s16
  %s19 = scalar_select 0, %s18, %s16
  $region1: #{model_forward.1} parent=0
    #allocation5 [shape = 'u8[196608]{0}', space=vmem, size = 0x30000, scoped, tag = 'input window, operand 2, single buffered']
    #allocation6 [shape = 's32[1]{0}', space=sflag, size = 0x4, scoped, tag = 'scoped memory for model_forward.1']
    #allocation7 [shape = 'u8[196608]{0}', space=vmem, size = 0x30000, scoped, tag = 'input window, operand 5, single buffered']
    #allocation8 [shape = 's32[1]{0}', space=sflag, size = 0x4, scoped, tag = 'scoped memory for model_forward.1']
    #allocation9 [shape = 'u8[196608]{0}', space=vmem, size = 0x30000, scoped, tag = 'input window, operand 6, single buffered']
    #allocation10 [shape = 'u8[196608]{0}', space=vmem, size = 0x30000, scoped, tag = 'input window, operand 9, single buffered']
    #allocation11 [shape = 's32[1]{0}', space=sflag, size = 0x4, scoped, tag = 'scoped memory for model_forward.1']
    #allocation12 [shape = 'u8[196608]{0}', space=vmem, size = 0x30000, scoped, tag = 'input window, operand 10, single buffered']
    %20 = vsyncpa [#allocation6], 0
    %21 = vsyncpa [#allocation8], 0
    %22 = vsyncpa [#allocation11], 0
    // Predicated region
    $region2: #{model_forward.1} parent=1 // pred_check
      _
    $region3: #{model_forward.1} parent=1 // pred_check_branch
      %24 = sbr.rel (0) target = $region5
    $region4: #{model_forward.1} parent=1 // pred_region
      _
    $region5: #{model_forward.1} parent=1 // pred_fallthru
      _
    // Predicated region
    $region6: #{model_forward.1} parent=1 // pred_check
      _
    $region7: #{model_forward.1} parent=1 // pred_check_branch
      %26 = sbr.rel (0) target = $region9
    $region8: #{model_forward.1} parent=1 // pred_region
      _
    $region9: #{model_forward.1} parent=1 // pred_fallthru
      _
    // Predicated region
    $region10: #{model_forward.1} parent=1 // pred_check
      _
    $region11: #{model_forward.1} parent=1 // pred_check_branch
      %28 = sbr.rel (0) target = $region13
    $region12: #{model_forward.1} parent=1 // pred_region
      %s30 = ssub.s32 6144, 6144
      %31 = vsyncadd [#allocation6], %s30
      %s32 = sshll.u32 [#allocation5], 4
      %s33 = int_to_ptr.vmem [resolvable:$true] %s32
      %38 = dma.hbm_to_vmem [thread:$0]  %s2, 6144, %s33, [#allocation6], 384, 384, 24
    $region13: #{model_forward.1} parent=1 // pred_fallthru
      _
    // Predicated region
    $region14: #{model_forward.1} parent=1 // pred_check
      _
    $region15: #{model_forward.1} parent=1 // pred_check_branch
      %40 = sbr.rel (0) target = $region17
    $region16: #{model_forward.1} parent=1 // pred_region
      _
    $region17: #{model_forward.1} parent=1 // pred_fallthru
      _
    // Predicated region
    $region18: #{model_forward.1} parent=1 // pred_check
      _
    $region19: #{model_forward.1} parent=1 // pred_check_branch
      %42 = sbr.rel (0) target = $region21
    $region20: #{model_forward.1} parent=1 // pred_region
      _
    $region21: #{model_forward.1} parent=1 // pred_fallthru
      _
    // Predicated region
    $region22: #{model_forward.1} parent=1 // pred_check
      _
    $region23: #{model_forward.1} parent=1 // pred_check_branch
      %44 = sbr.rel (0) target = $region25
    $region24: #{model_forward.1} parent=1 // pred_region
      %s46 = ssub.s32 6144, 6144
      %47 = vsyncadd [#allocation8], %s46
      %s48 = sshll.u32 [#allocation7], 4
      %s49 = int_to_ptr.vmem [resolvable:$true] %s48
      %54 = dma.hbm_to_vmem [thread:$0]  %s5, 6144, %s49, [#allocation8], 384, 384, 24
    $region25: #{model_forward.1} parent=1 // pred_fallthru
      _
    // Predicated region
    $region26: #{model_forward.1} parent=1 // pred_check
      _
    $region27: #{model_forward.1} parent=1 // pred_check_branch
      %56 = sbr.rel (0) target = $region29
    $region28: #{model_forward.1} parent=1 // pred_region
      %s58 = ssub.s32 6144, 6144
      %59 = vsyncadd [#allocation8], %s58
      %s60 = sshll.u32 [#allocation9], 4
      %s61 = int_to_ptr.vmem [resolvable:$true] %s60
      %66 = dma.hbm_to_vmem [thread:$0]  %s6, 6144, %s61, [#allocation8], 384, 384, 24
    $region29: #{model_forward.1} parent=1 // pred_fallthru
      _
    // Predicated region
    $region30: #{model_forward.1} parent=1 // pred_check
      _
    $region31: #{model_forward.1} parent=1 // pred_check_branch
      %68 = sbr.rel (0) target = $region33
    $region32: #{model_forward.1} parent=1 // pred_region
      _
    $region33: #{model_forward.1} parent=1 // pred_fallthru
      _
    // Predicated region
    $region34: #{model_forward.1} parent=1 // pred_check
      _
    $region35: #{model_forward.1} parent=1 // pred_check_branch
      %70 = sbr.rel (0) target = $region37
    $region36: #{model_forward.1} parent=1 // pred_region
      _
    $region37: #{model_forward.1} parent=1 // pred_fallthru
      _
    // Predicated region
    $region38: #{model_forward.1} parent=1 // pred_check
      _
    $region39: #{model_forward.1} parent=1 // pred_check_branch
      %72 = sbr.rel (0) target = $region41
    $region40: #{model_forward.1} parent=1 // pred_region
      %s74 = ssub.s32 6144, 6144
      %75 = vsyncadd [#allocation11], %s74
      %s76 = sshll.u32 [#allocation10], 4
      %s77 = int_to_ptr.vmem [resolvable:$true] %s76
      %82 = dma.hbm_to_vmem [thread:$0]  %s9, 6144, %s77, [#allocation11], 384, 384, 24
    $region41: #{model_forward.1} parent=1 // pred_fallthru
      _
    // Predicated region
    $region42: #{model_forward.1} parent=1 // pred_check
      _
    $region43: #{model_forward.1} parent=1 // pred_check_branch
      %84 = sbr.rel (0) target = $region45
    $region44: #{model_forward.1} parent=1 // pred_region
      %s86 = ssub.s32 6144, 6144
      %87 = vsyncadd [#allocation11], %s86
      %s88 = sshll.u32 [#allocation12], 4
      %s89 = int_to_ptr.vmem [resolvable:$true] %s88
      %94 = dma.hbm_to_vmem [thread:$0]  %s10, 6144, %s89, [#allocation11], 384, 384, 24
    $region45: #{model_forward.1} parent=1 // pred_fallthru
      _
    // Predicated region
    $region46: #{model_forward.1} parent=1 // pred_check
      _
    $region47: #{model_forward.1} parent=1 // pred_check_branch
      %96 = sbr.rel (0) target = $region49
    $region48: #{model_forward.1} parent=1 // pred_region
      _
    $region49: #{model_forward.1} parent=1 // pred_fallthru
      _
    // Predicated region
    $region50: #{model_forward.1} parent=1 // pred_check
      _
    $region51: #{model_forward.1} parent=1 // pred_check_branch
      %98 = sbr.rel (0) target = $region53
    $region52: #{model_forward.1} parent=1 // pred_region
      _
    $region53: #{model_forward.1} parent=1 // pred_fallthru
      _
    // Predicated region
    $region54: #{model_forward.1} parent=1 // pred_check
      _
    $region55: #{model_forward.1} parent=1 // pred_check_branch
      %100 = sbr.rel (0) target = $region57
    $region56: #{model_forward.1} parent=1 // pred_region
      _
    $region57: #{model_forward.1} parent=1 // pred_fallthru
      _
    // Predicated region
    $region58: #{model_forward.1} parent=1 // pred_check
      _
    $region59: #{model_forward.1} parent=1 // pred_check_branch
      %102 = sbr.rel (0) target = $region61
    $region60: #{model_forward.1} parent=1 // pred_region
      _
    $region61: #{model_forward.1} parent=1 // pred_fallthru
      _
    // Predicated region
    $region62: #{model_forward.1} parent=1 // pred_check
      _
    $region63: #{model_forward.1} parent=1 // pred_check_branch
      %104 = sbr.rel (0) target = $region65
    $region64: #{model_forward.1} parent=1 // pred_region
      %105 = dma.done [#allocation6], 6144
    $region65: #{model_forward.1} parent=1 // pred_fallthru
      _
    // Predicated region
    $region66: #{model_forward.1} parent=1 // pred_check
      _
    $region67: #{model_forward.1} parent=1 // pred_check_branch
      %107 = sbr.rel (0) target = $region69
    $region68: #{model_forward.1} parent=1 // pred_region
      %108 = dma.done [#allocation8], 6144
    $region69: #{model_forward.1} parent=1 // pred_fallthru
      _
    // Predicated region
    $region70: #{model_forward.1} parent=1 // pred_check
      _
    $region71: #{model_forward.1} parent=1 // pred_check_branch
      %110 = sbr.rel (0) target = $region73
    $region72: #{model_forward.1} parent=1 // pred_region
      %111 = dma.done [#allocation8], 6144
    $region73: #{model_forward.1} parent=1 // pred_fallthru
      _
    // Predicated region
    $region74: #{model_forward.1} parent=1 // pred_check
      _
    $region75: #{model_forward.1} parent=1 // pred_check_branch
      %113 = sbr.rel (0) target = $region77
    $region76: #{model_forward.1} parent=1 // pred_region
      %114 = dma.done [#allocation11], 6144
    $region77: #{model_forward.1} parent=1 // pred_fallthru
      _
    // Predicated region
    $region78: #{model_forward.1} parent=1 // pred_check
      _
    $region79: #{model_forward.1} parent=1 // pred_check_branch
      %116 = sbr.rel (0) target = $region81
    $region80: #{model_forward.1} parent=1 // pred_region
      %117 = dma.done [#allocation11], 6144
    $region81: #{model_forward.1} parent=1 // pred_fallthru
      _
    %v118 = vld [vmem:[%s0] sm:$0xff]
    %v119 = vld [vmem:[%s0 + $0x8] sm:$0xff]
    %v120 = vld [vmem:[%s0 + $0x10] sm:$0xff]
    %v121 = vld [vmem:[%s0 + $0x18] sm:$0xff]
    %v122 = vld [vmem:[%s0 + $0x20] sm:$0xff]
    %v123 = vld [vmem:[%s0 + $0x28] sm:$0xff]
    %v124 = vld [vmem:[%s0 + $0x30] sm:$0xff]
    %v125 = vld [vmem:[%s0 + $0x38] sm:$0xff]
    %v126 = vld [vmem:[%s1] sm:$0x7]
    %v127 = vld [vmem:[%s3] sm:$0x7]
    %v129 = vlaneseq
    %v130 = vshrl.u32 %v129, 7
    %v131 = vsub.s32 0, %v130
    %v132 = vrot.slane %v127, %v131
    %v133 = vlaneseq
    %v134 = vshrl.u32 %v133, 7
    %v135 = vsub.s32 1, %v134
    %v136 = vrot.slane %v127, %v135
    %v137 = vlaneseq
    %v138 = vshrl.u32 %v137, 7
    %v139 = vsub.s32 2, %v138
    %v140 = vrot.slane %v127, %v139
    %v145 = vlaneseq
    %v146 = vshrl.u32 %v145, 7
    %v147 = vsub.s32 0, %v146
    %v148 = vrot.slane %v126, %v147
    %v149 = vlaneseq
    %v150 = vshrl.u32 %v149, 7
    %v151 = vsub.s32 1, %v150
    %v152 = vrot.slane %v126, %v151
    %v153 = vlaneseq
    %v154 = vshrl.u32 %v153, 7
    %v155 = vsub.s32 2, %v154
    %v156 = vrot.slane %v126, %v155
    %vm157 = vcmask 7168
    %v159 = vsel %vm157, %v118, 0
    %v162 = vsel %vm157, %v119, 0
    %v165 = vsel %vm157, %v120, 0
    %v168 = vsel %vm157, %v121, 0
    %v171 = vsel %vm157, %v122, 0
    %v174 = vsel %vm157, %v123, 0
    %v177 = vsel %vm157, %v124, 0
    %v180 = vsel %vm157, %v125, 0
    %vm182 = vcmask 1040384
    %v183 = vsel %vm182, %v148, 0
    %v185 = vsel %vm182, %v152, 0
    %v187 = vsel %vm182, %v156, 0
    %189 = vmatprep.subr.mxu0 0.0
    %190 = vmatpush1.msra.mxu0 0.0
    %191 = vmatprep.subr.mxu0 0.0
    %192 = vmatpush1.msra.mxu0 0.0
    %193 = vmatprep.subr.mxu0 0.0
    %194 = vmatpush1.msra.mxu0 0.0
    %195 = vmatprep.subr.mxu0 0.0
    %196 = vmatpush1.msra.mxu0 0.0
    %197 = vmatprep.subr.mxu0 0.0
    %198 = vmatpush1.msra.mxu0 0.0
    %199 = vmatprep.subr.mxu0 0.0
    %200 = vmatpush1.msra.mxu0 0.0
    %201 = vmatprep.subr.mxu0 0.0
    %202 = vmatpush1.msra.mxu0 0.0
    %203 = vmatprep.subr.mxu0 0.0
    %204 = vmatpush1.msra.mxu0 0.0
    %205 = vmatprep.subr.mxu0 0.0
    %206 = vmatpush1.msra.mxu0 0.0
    %207 = vmatprep.subr.mxu0 0.0
    %208 = vmatpush1.msra.mxu0 0.0
    %209 = vmatprep.subr.mxu0 0.0
    %210 = vmatpush1.msra.mxu0 0.0
    %211 = vmatprep.subr.mxu0 0.0
    %212 = vmatpush1.msra.mxu0 0.0
    %213 = vmatprep.subr.mxu0 0.0
    %214 = vmatpush1.msra.mxu0 0.0
    %215 = vmatprep.subr.mxu0 0.0
    %216 = vmatpush1.msra.mxu0 0.0
    %217 = vmatprep.subr.mxu0 0.0
    %218 = vmatpush1.msra.mxu0 0.0
    %219 = vmatprep.subr.mxu0 %v185
    %220 = vmatpush1.msra.mxu0 %v183
    %221 = vmatprep.subr.mxu0 0.0
    %222 = vmatpush2.msra.mxu0 0.0
    %223 = vmatprep.subr.mxu0 0.0
    %224 = vmatpush2.msra.mxu0 0.0
    %225 = vmatprep.subr.mxu0 0.0
    %226 = vmatpush2.msra.mxu0 0.0
    %227 = vmatprep.subr.mxu0 0.0
    %228 = vmatpush2.msra.mxu0 0.0
    %229 = vmatprep.subr.mxu0 0.0
    %230 = vmatpush2.msra.mxu0 0.0
    %231 = vmatprep.subr.mxu0 0.0
    %232 = vmatpush2.msra.mxu0 0.0
    %233 = vmatprep.subr.mxu0 0.0
    %234 = vmatpush2.msra.mxu0 0.0
    %235 = vmatprep.subr.mxu0 0.0
    %236 = vmatpush2.msra.mxu0 0.0
    %237 = vmatprep.subr.mxu0 0.0
    %238 = vmatpush2.msra.mxu0 0.0
    %239 = vmatprep.subr.mxu0 0.0
    %240 = vmatpush2.msra.mxu0 0.0
    %241 = vmatprep.subr.mxu0 0.0
    %242 = vmatpush2.msra.mxu0 0.0
    %243 = vmatprep.subr.mxu0 0.0
    %244 = vmatpush2.msra.mxu0 0.0
    %245 = vmatprep.subr.mxu0 0.0
    %246 = vmatpush2.msra.mxu0 0.0
    %247 = vmatprep.subr.mxu0 0.0
    %248 = vmatpush2.msra.mxu0 0.0
    %249 = vmatprep.subr.mxu0 0.0
    %250 = vmatpush2.msra.mxu0 0.0
    %251 = vmatprep.subr.mxu0 0.0
    %252 = vmatpush2.msra.mxu0 0.0
    %253 = vmatprep.mubr.f32.mxu0 0.0
    %254 = vmatmul.mubr.f32.gmra.mxu0 %v159
    %v255 = vpop.f32.mrf.mxu0
    %v256 = vadd.f32 %v132, %v255
    %v257 = vpop.f32.mrf.mxu0
    %v258 = vadd.f32 %v136, %v257
    %259 = vmatprep.mubr.f32.mxu0 0.0
    %260 = vmatmul.mubr.f32.gmra.mxu0 %v162
    %v261 = vpop.f32.mrf.mxu0
    %v262 = vadd.f32 %v132, %v261
    %v263 = vpop.f32.mrf.mxu0
    %v264 = vadd.f32 %v136, %v263
    %265 = vmatprep.mubr.f32.mxu0 0.0
    %266 = vmatmul.mubr.f32.gmra.mxu0 %v165
    %v267 = vpop.f32.mrf.mxu0
    %v268 = vadd.f32 %v132, %v267
    %v269 = vpop.f32.mrf.mxu0
    %v270 = vadd.f32 %v136, %v269
    %271 = vmatprep.mubr.f32.mxu0 0.0
    %272 = vmatmul.mubr.f32.gmra.mxu0 %v168
    %v273 = vpop.f32.mrf.mxu0
    %v274 = vadd.f32 %v132, %v273
    %v275 = vpop.f32.mrf.mxu0
    %v276 = vadd.f32 %v136, %v275
    %277 = vmatprep.mubr.f32.mxu0 0.0
    %278 = vmatmul.mubr.f32.gmra.mxu0 %v171
    %v279 = vpop.f32.mrf.mxu0
    %v280 = vadd.f32 %v132, %v279
    %v281 = vpop.f32.mrf.mxu0
    %v282 = vadd.f32 %v136, %v281
    %283 = vmatprep.mubr.f32.mxu0 0.0
    %284 = vmatmul.mubr.f32.gmra.mxu0 %v174
    %v285 = vpop.f32.mrf.mxu0
    %v286 = vadd.f32 %v132, %v285
    %v287 = vpop.f32.mrf.mxu0
    %v288 = vadd.f32 %v136, %v287
    %289 = vmatprep.mubr.f32.mxu0 0.0
    %290 = vmatmul.mubr.f32.gmra.mxu0 %v177
    %v291 = vpop.f32.mrf.mxu0
    %v292 = vadd.f32 %v132, %v291
    %v293 = vpop.f32.mrf.mxu0
    %v294 = vadd.f32 %v136, %v293
    %295 = vmatprep.mubr.f32.mxu0 0.0
    %296 = vmatmul.mubr.f32.gmra.mxu0 %v180
    %v297 = vpop.f32.mrf.mxu0
    %v298 = vadd.f32 %v132, %v297
    %v299 = vpop.f32.mrf.mxu0
    %v300 = vadd.f32 %v136, %v299
    %301 = vdwg.mxu0
    %302 = vmatprep.subr.mxu0 0.0
    %303 = vmatpush1.msra.mxu0 0.0
    %304 = vmatprep.subr.mxu0 0.0
    %305 = vmatpush1.msra.mxu0 0.0
    %306 = vmatprep.subr.mxu0 0.0
    %307 = vmatpush1.msra.mxu0 0.0
    %308 = vmatprep.subr.mxu0 0.0
    %309 = vmatpush1.msra.mxu0 0.0
    %310 = vmatprep.subr.mxu0 0.0
    %311 = vmatpush1.msra.mxu0 0.0
    %312 = vmatprep.subr.mxu0 0.0
    %313 = vmatpush1.msra.mxu0 0.0
    %314 = vmatprep.subr.mxu0 0.0
    %315 = vmatpush1.msra.mxu0 0.0
    %316 = vmatprep.subr.mxu0 0.0
    %317 = vmatpush1.msra.mxu0 0.0
    %318 = vmatprep.subr.mxu0 0.0
    %319 = vmatpush1.msra.mxu0 0.0
    %320 = vmatprep.subr.mxu0 0.0
    %321 = vmatpush1.msra.mxu0 0.0
    %322 = vmatprep.subr.mxu0 0.0
    %323 = vmatpush1.msra.mxu0 0.0
    %324 = vmatprep.subr.mxu0 0.0
    %325 = vmatpush1.msra.mxu0 0.0
    %326 = vmatprep.subr.mxu0 0.0
    %327 = vmatpush1.msra.mxu0 0.0
    %328 = vmatprep.subr.mxu0 0.0
    %329 = vmatpush1.msra.mxu0 0.0
    %330 = vmatprep.subr.mxu0 0.0
    %331 = vmatpush1.msra.mxu0 0.0
    %332 = vmatprep.subr.mxu0 0.0
    %333 = vmatpush1.msra.mxu0 %v187
    %334 = vmatprep.subr.mxu0 0.0
    %335 = vmatpush2.msra.mxu0 0.0
    %336 = vmatprep.subr.mxu0 0.0
    %337 = vmatpush2.msra.mxu0 0.0
    %338 = vmatprep.subr.mxu0 0.0
    %339 = vmatpush2.msra.mxu0 0.0
    %340 = vmatprep.subr.mxu0 0.0
    %341 = vmatpush2.msra.mxu0 0.0
    %342 = vmatprep.subr.mxu0 0.0
    %343 = vmatpush2.msra.mxu0 0.0
    %344 = vmatprep.subr.mxu0 0.0
    %345 = vmatpush2.msra.mxu0 0.0
    %346 = vmatprep.subr.mxu0 0.0
    %347 = vmatpush2.msra.mxu0 0.0
    %348 = vmatprep.subr.mxu0 0.0
    %349 = vmatpush2.msra.mxu0 0.0
    %350 = vmatprep.subr.mxu0 0.0
    %351 = vmatpush2.msra.mxu0 0.0
    %352 = vmatprep.subr.mxu0 0.0
    %353 = vmatpush2.msra.mxu0 0.0
    %354 = vmatprep.subr.mxu0 0.0
    %355 = vmatpush2.msra.mxu0 0.0
    %356 = vmatprep.subr.mxu0 0.0
    %357 = vmatpush2.msra.mxu0 0.0
    %358 = vmatprep.subr.mxu0 0.0
    %359 = vmatpush2.msra.mxu0 0.0
    %360 = vmatprep.subr.mxu0 0.0
    %361 = vmatpush2.msra.mxu0 0.0
    %362 = vmatprep.subr.mxu0 0.0
    %363 = vmatpush2.msra.mxu0 0.0
    %364 = vmatprep.subr.mxu0 0.0
    %365 = vmatpush2.msra.mxu0 0.0
    %366 = vmatprep.mubr.f32.mxu0 0.0
    %367 = vmatmul.mubr.f32.gmra.mxu0 %v159
    %v368 = vpop.f32.mrf.mxu0
    %v369 = vadd.f32 %v140, %v368
    %v370 = vpop.f32.mrf.mxu0
    %371 = vmatprep.mubr.f32.mxu0 0.0
    %372 = vmatmul.mubr.f32.gmra.mxu0 %v162
    %v373 = vpop.f32.mrf.mxu0
    %v374 = vadd.f32 %v140, %v373
    %v375 = vpop.f32.mrf.mxu0
    %376 = vmatprep.mubr.f32.mxu0 0.0
    %377 = vmatmul.mubr.f32.gmra.mxu0 %v165
    %v378 = vpop.f32.mrf.mxu0
    %v379 = vadd.f32 %v140, %v378
    %v380 = vpop.f32.mrf.mxu0
    %381 = vmatprep.mubr.f32.mxu0 0.0
    %382 = vmatmul.mubr.f32.gmra.mxu0 %v168
    %v383 = vpop.f32.mrf.mxu0
    %v384 = vadd.f32 %v140, %v383
    %v385 = vpop.f32.mrf.mxu0
    %386 = vmatprep.mubr.f32.mxu0 0.0
    %387 = vmatmul.mubr.f32.gmra.mxu0 %v171
    %v388 = vpop.f32.mrf.mxu0
    %v389 = vadd.f32 %v140, %v388
    %v390 = vpop.f32.mrf.mxu0
    %391 = vmatprep.mubr.f32.mxu0 0.0
    %392 = vmatmul.mubr.f32.gmra.mxu0 %v174
    %v393 = vpop.f32.mrf.mxu0
    %v394 = vadd.f32 %v140, %v393
    %v395 = vpop.f32.mrf.mxu0
    %396 = vmatprep.mubr.f32.mxu0 0.0
    %397 = vmatmul.mubr.f32.gmra.mxu0 %v177
    %v398 = vpop.f32.mrf.mxu0
    %v399 = vadd.f32 %v140, %v398
    %v400 = vpop.f32.mrf.mxu0
    %401 = vmatprep.mubr.f32.mxu0 0.0
    %402 = vmatmul.mubr.f32.gmra.mxu0 %v180
    %v403 = vpop.f32.mrf.mxu0
    %v404 = vadd.f32 %v140, %v403
    %v405 = vpop.f32.mrf.mxu0
    %406 = vdwg.mxu0
    %407 = vst [vmem:[#allocation2] sm:$0xff] %v256
    %408 = vst [vmem:[#allocation2 + $0x8] sm:$0xff] %v258
    %409 = vst [vmem:[#allocation2 + $0x10] sm:$0xff] %v369
    %410 = vst [vmem:[#allocation2 + $0x18] sm:$0xff] %v262
    %411 = vst [vmem:[#allocation2 + $0x20] sm:$0xff] %v264
    %412 = vst [vmem:[#allocation2 + $0x28] sm:$0xff] %v374
    %413 = vst [vmem:[#allocation2 + $0x30] sm:$0xff] %v268
    %414 = vst [vmem:[#allocation2 + $0x38] sm:$0xff] %v270
    %415 = vst [vmem:[#allocation2 + $0x40] sm:$0xff] %v379
    %416 = vst [vmem:[#allocation2 + $0x48] sm:$0xff] %v274
    %417 = vst [vmem:[#allocation2 + $0x50] sm:$0xff] %v276
    %418 = vst [vmem:[#allocation2 + $0x58] sm:$0xff] %v384
    %419 = vst [vmem:[#allocation2 + $0x60] sm:$0xff] %v280
    %420 = vst [vmem:[#allocation2 + $0x68] sm:$0xff] %v282
    %421 = vst [vmem:[#allocation2 + $0x70] sm:$0xff] %v389
    %422 = vst [vmem:[#allocation2 + $0x78] sm:$0xff] %v286
    %423 = vst [vmem:[#allocation2 + $0x80] sm:$0xff] %v288
    %424 = vst [vmem:[#allocation2 + $0x88] sm:$0xff] %v394
    %425 = vst [vmem:[#allocation2 + $0x90] sm:$0xff] %v292
    %426 = vst [vmem:[#allocation2 + $0x98] sm:$0xff] %v294
    %427 = vst [vmem:[#allocation2 + $0xa0] sm:$0xff] %v399
    %428 = vst [vmem:[#allocation2 + $0xa8] sm:$0xff] %v298
    %429 = vst [vmem:[#allocation2 + $0xb0] sm:$0xff] %v300
    %430 = vst [vmem:[#allocation2 + $0xb8] sm:$0xff] %v404
    %v431 = vld [vmem:[#allocation2] sm:$0xff]
    %v432 = vld [vmem:[#allocation2 + $0x8] sm:$0xff]
    %v433 = vld [vmem:[#allocation2 + $0x10] sm:$0xff]
    %v434 = vld [vmem:[#allocation5] sm:$0xff]
    %v435 = vld [vmem:[#allocation5 + $0x8] sm:$0xff]
    %v436 = vld [vmem:[#allocation5 + $0x10] sm:$0xff]
    %v437 = vld [vmem:[#allocation5 + $0x18] sm:$0xff]
    %v438 = vld [vmem:[#allocation5 + $0x20] sm:$0xff]
    %v439 = vld [vmem:[#allocation5 + $0x28] sm:$0xff]
    %v440 = vld [vmem:[#allocation5 + $0x30] sm:$0xff]
    %v441 = vld [vmem:[#allocation5 + $0x38] sm:$0xff]
    %v442 = vld [vmem:[#allocation5 + $0x40] sm:$0xff]
    %v443 = vld [vmem:[#allocation5 + $0x48] sm:$0xff]
    %v444 = vld [vmem:[#allocation5 + $0x50] sm:$0xff]
    %v445 = vld [vmem:[#allocation5 + $0x58] sm:$0xff]
    %v446 = vld [vmem:[#allocation5 + $0x60] sm:$0xff]
    %v447 = vld [vmem:[#allocation5 + $0x68] sm:$0xff]
    %v448 = vld [vmem:[#allocation5 + $0x70] sm:$0xff]
    %v449 = vld [vmem:[#allocation5 + $0x78] sm:$0xff]
    %v450 = vld [vmem:[#allocation5 + $0x80] sm:$0xff]
    %v451 = vld [vmem:[#allocation5 + $0x88] sm:$0xff]
    %v452 = vld [vmem:[#allocation5 + $0x90] sm:$0xff]
    %v453 = vld [vmem:[#allocation5 + $0x98] sm:$0xff]
    %v454 = vld [vmem:[#allocation5 + $0xa0] sm:$0xff]
    %v455 = vld [vmem:[#allocation5 + $0xa8] sm:$0xff]
    %v456 = vld [vmem:[#allocation5 + $0xb0] sm:$0xff]
    %v457 = vld [vmem:[#allocation5 + $0xb8] sm:$0xff]
    %v458 = vld [vmem:[#allocation5 + $0xc0] sm:$0xff]
    %v459 = vld [vmem:[#allocation5 + $0xc8] sm:$0xff]
    %v460 = vld [vmem:[#allocation5 + $0xd0] sm:$0xff]
    %v461 = vld [vmem:[#allocation5 + $0xd8] sm:$0xff]
    %v462 = vld [vmem:[#allocation5 + $0xe0] sm:$0xff]
    %v463 = vld [vmem:[#allocation5 + $0xe8] sm:$0xff]
    %v464 = vld [vmem:[#allocation5 + $0xf0] sm:$0xff]
    %v465 = vld [vmem:[#allocation5 + $0xf8] sm:$0xff]
    %v466 = vld [vmem:[#allocation5 + $0x100] sm:$0xff]
    %v467 = vld [vmem:[#allocation5 + $0x108] sm:$0xff]
    %v468 = vld [vmem:[#allocation5 + $0x110] sm:$0xff]
    %v469 = vld [vmem:[#allocation5 + $0x118] sm:$0xff]
    %v470 = vld [vmem:[#allocation5 + $0x120] sm:$0xff]
    %v471 = vld [vmem:[#allocation5 + $0x128] sm:$0xff]
    %v472 = vld [vmem:[#allocation5 + $0x130] sm:$0xff]
    %v473 = vld [vmem:[#allocation5 + $0x138] sm:$0xff]
    %v474 = vld [vmem:[#allocation5 + $0x140] sm:$0xff]
    %v475 = vld [vmem:[#allocation5 + $0x148] sm:$0xff]
    %v476 = vld [vmem:[#allocation5 + $0x150] sm:$0xff]
    %v477 = vld [vmem:[#allocation5 + $0x158] sm:$0xff]
    %v478 = vld [vmem:[#allocation5 + $0x160] sm:$0xff]
    %v479 = vld [vmem:[#allocation5 + $0x168] sm:$0xff]
    %v480 = vld [vmem:[#allocation5 + $0x170] sm:$0xff]
    %v481 = vld [vmem:[#allocation5 + $0x178] sm:$0xff]
    %v482 = vld [vmem:[%s4] sm:$0x7]
    %v484 = vlaneseq
    %v485 = vshrl.u32 %v484, 7
    %v486 = vsub.s32 0, %v485
    %v487 = vrot.slane %v482, %v486
    %v488 = vlaneseq
    %v489 = vshrl.u32 %v488, 7
    %v490 = vsub.s32 1, %v489
    %v491 = vrot.slane %v482, %v490
    %v492 = vlaneseq
    %v493 = vshrl.u32 %v492, 7
    %v494 = vsub.s32 2, %v493
    %v495 = vrot.slane %v482, %v494
    %499 = vmatprep.subr.mxu0 %v480
    %500 = vmatpush1.msra.mxu0 %v479
    %501 = vmatprep.subr.mxu0 %v477
    %502 = vmatpush1.msra.mxu0 %v476
    %503 = vmatprep.subr.mxu0 %v474
    %504 = vmatpush1.msra.mxu0 %v473
    %505 = vmatprep.subr.mxu0 %v471
    %506 = vmatpush1.msra.mxu0 %v470
    %507 = vmatprep.subr.mxu0 %v468
    %508 = vmatpush1.msra.mxu0 %v467
    %509 = vmatprep.subr.mxu0 %v465
    %510 = vmatpush1.msra.mxu0 %v464
    %511 = vmatprep.subr.mxu0 %v462
    %512 = vmatpush1.msra.mxu0 %v461
    %513 = vmatprep.subr.mxu0 %v459
    %514 = vmatpush1.msra.mxu0 %v458
    %515 = vmatprep.subr.mxu0 %v456
    %516 = vmatpush1.msra.mxu0 %v455
    %517 = vmatprep.subr.mxu0 %v453
    %518 = vmatpush1.msra.mxu0 %v452
    %519 = vmatprep.subr.mxu0 %v450
    %520 = vmatpush1.msra.mxu0 %v449
    %521 = vmatprep.subr.mxu0 %v447
    %522 = vmatpush1.msra.mxu0 %v446
    %523 = vmatprep.subr.mxu0 %v444
    %524 = vmatpush1.msra.mxu0 %v443
    %525 = vmatprep.subr.mxu0 %v441
    %526 = vmatpush1.msra.mxu0 %v440
    %527 = vmatprep.subr.mxu0 %v438
    %528 = vmatpush1.msra.mxu0 %v437
    %529 = vmatprep.subr.mxu0 %v435
    %530 = vmatpush1.msra.mxu0 %v434
    %531 = vmatprep.subr.mxu0 0.0
    %532 = vmatpush2.msra.mxu0 0.0
    %533 = vmatprep.subr.mxu0 0.0
    %534 = vmatpush2.msra.mxu0 0.0
    %535 = vmatprep.subr.mxu0 0.0
    %536 = vmatpush2.msra.mxu0 0.0
    %537 = vmatprep.subr.mxu0 0.0
    %538 = vmatpush2.msra.mxu0 0.0
    %539 = vmatprep.subr.mxu0 0.0
    %540 = vmatpush2.msra.mxu0 0.0
    %541 = vmatprep.subr.mxu0 0.0
    %542 = vmatpush2.msra.mxu0 0.0
    %543 = vmatprep.subr.mxu0 0.0
    %544 = vmatpush2.msra.mxu0 0.0
    %545 = vmatprep.subr.mxu0 0.0
    %546 = vmatpush2.msra.mxu0 0.0
    %547 = vmatprep.subr.mxu0 0.0
    %548 = vmatpush2.msra.mxu0 0.0
    %549 = vmatprep.subr.mxu0 0.0
    %550 = vmatpush2.msra.mxu0 0.0
    %551 = vmatprep.subr.mxu0 0.0
    %552 = vmatpush2.msra.mxu0 0.0
    %553 = vmatprep.subr.mxu0 0.0
    %554 = vmatpush2.msra.mxu0 0.0
    %555 = vmatprep.subr.mxu0 0.0
    %556 = vmatpush2.msra.mxu0 0.0
    %557 = vmatprep.subr.mxu0 0.0
    %558 = vmatpush2.msra.mxu0 0.0
    %559 = vmatprep.subr.mxu0 0.0
    %560 = vmatpush2.msra.mxu0 0.0
    %561 = vmatprep.subr.mxu0 0.0
    %562 = vmatpush2.msra.mxu0 0.0
    %563 = vmatprep.mubr.f32.mxu0 0.0
    %564 = vmatmul.mubr.f32.gmra.mxu0 0.0
    %v565 = vpop.f32.mrf.mxu0
    %v566 = vadd.f32 %v487, %v565
    %v567 = vpop.f32.mrf.mxu0
    %v568 = vadd.f32 %v491, %v567
    %569 = vdwg.mxu0
    %570 = vmatprep.subr.mxu0 0.0
    %571 = vmatpush1.msra.mxu0 %v481
    %572 = vmatprep.subr.mxu0 0.0
    %573 = vmatpush1.msra.mxu0 %v478
    %574 = vmatprep.subr.mxu0 0.0
    %575 = vmatpush1.msra.mxu0 %v475
    %576 = vmatprep.subr.mxu0 0.0
    %577 = vmatpush1.msra.mxu0 %v472
    %578 = vmatprep.subr.mxu0 0.0
    %579 = vmatpush1.msra.mxu0 %v469
    %580 = vmatprep.subr.mxu0 0.0
    %581 = vmatpush1.msra.mxu0 %v466
    %582 = vmatprep.subr.mxu0 0.0
    %583 = vmatpush1.msra.mxu0 %v463
    %584 = vmatprep.subr.mxu0 0.0
    %585 = vmatpush1.msra.mxu0 %v460
    %586 = vmatprep.subr.mxu0 0.0
    %587 = vmatpush1.msra.mxu0 %v457
    %588 = vmatprep.subr.mxu0 0.0
    %589 = vmatpush1.msra.mxu0 %v454
    %590 = vmatprep.subr.mxu0 0.0
    %591 = vmatpush1.msra.mxu0 %v451
    %592 = vmatprep.subr.mxu0 0.0
    %593 = vmatpush1.msra.mxu0 %v448
    %594 = vmatprep.subr.mxu0 0.0
    %595 = vmatpush1.msra.mxu0 %v445
    %596 = vmatprep.subr.mxu0 0.0
    %597 = vmatpush1.msra.mxu0 %v442
    %598 = vmatprep.subr.mxu0 0.0
    %599 = vmatpush1.msra.mxu0 %v439
    %600 = vmatprep.subr.mxu0 0.0
    %601 = vmatpush1.msra.mxu0 %v436
    %602 = vmatprep.subr.mxu0 0.0
    %603 = vmatpush2.msra.mxu0 0.0
    %604 = vmatprep.subr.mxu0 0.0
    %605 = vmatpush2.msra.mxu0 0.0
    %606 = vmatprep.subr.mxu0 0.0
    %607 = vmatpush2.msra.mxu0 0.0
    %608 = vmatprep.subr.mxu0 0.0
    %609 = vmatpush2.msra.mxu0 0.0
    %610 = vmatprep.subr.mxu0 0.0
    %611 = vmatpush2.msra.mxu0 0.0
    %612 = vmatprep.subr.mxu0 0.0
    %613 = vmatpush2.msra.mxu0 0.0
    %614 = vmatprep.subr.mxu0 0.0
    %615 = vmatpush2.msra.mxu0 0.0
    %616 = vmatprep.subr.mxu0 0.0
    %617 = vmatpush2.msra.mxu0 0.0
    %618 = vmatprep.subr.mxu0 0.0
    %619 = vmatpush2.msra.mxu0 0.0
    %620 = vmatprep.subr.mxu0 0.0
    %621 = vmatpush2.msra.mxu0 0.0
    %622 = vmatprep.subr.mxu0 0.0
    %623 = vmatpush2.msra.mxu0 0.0
    %624 = vmatprep.subr.mxu0 0.0
    %625 = vmatpush2.msra.mxu0 0.0
    %626 = vmatprep.subr.mxu0 0.0
    %627 = vmatpush2.msra.mxu0 0.0
    %628 = vmatprep.subr.mxu0 0.0
    %629 = vmatpush2.msra.mxu0 0.0
    %630 = vmatprep.subr.mxu0 0.0
    %631 = vmatpush2.msra.mxu0 0.0
    %632 = vmatprep.subr.mxu0 0.0
    %633 = vmatpush2.msra.mxu0 0.0
    %634 = vmatprep.mubr.f32.mxu0 0.0
    %635 = vmatmul.mubr.f32.gmra.mxu0 0.0
    %v636 = vpop.f32.mrf.mxu0
    %v637 = vadd.f32 %v495, %v636
    %v638 = vpop.f32.mrf.mxu0
    %639 = vdwg.mxu0
    %v640 = vadd.f32 %v431, %v566
    %v641 = vxor.u32 %v640, 2147483648
    %v642 = vmul.f32 %v641, 1.442695
    %v643 = vpow.pop %v642
    %v644 = vadd.f32 %v643, 1.0
    %v645 = vrcp.pop %v644
    %v646 = vmul.f32 1.0, %v645
    %v647 = vadd.f32 %v432, %v568
    %v648 = vxor.u32 %v647, 2147483648
    %v649 = vmul.f32 %v648, 1.442695
    %v650 = vpow.pop %v649
    %v651 = vadd.f32 %v650, 1.0
    %v652 = vrcp.pop %v651
    %v653 = vmul.f32 1.0, %v652
    %v654 = vmul.f32 %v646, %v637
    %v655 = vadd.f32 %v433, %v654
    %v656 = vtanh.pop %v655
    %v657 = vsub.f32 1.0, %v653
    %v658 = vmul.f32 %v657, %v656
    %v659 = vmul.f32 %v653, 0.0
    %v660 = vadd.f32 %v658, %v659
    %661 = vst [vmem:[#allocation3] sm:$0xff] %v660
    %v662 = vld [vmem:[#allocation2 + $0x18] sm:$0xff]
    %v663 = vld [vmem:[#allocation2 + $0x20] sm:$0xff]
    %v664 = vld [vmem:[#allocation2 + $0x28] sm:$0xff]
    %v665 = vld [vmem:[#allocation5] sm:$0xff]
    %v666 = vld [vmem:[#allocation5 + $0x8] sm:$0xff]
    %v667 = vld [vmem:[#allocation5 + $0x10] sm:$0xff]
    %v668 = vld [vmem:[#allocation5 + $0x18] sm:$0xff]
    %v669 = vld [vmem:[#allocation5 + $0x20] sm:$0xff]
    %v670 = vld [vmem:[#allocation5 + $0x28] sm:$0xff]
    %v671 = vld [vmem:[#allocation5 + $0x30] sm:$0xff]
    %v672 = vld [vmem:[#allocation5 + $0x38] sm:$0xff]
    %v673 = vld [vmem:[#allocation5 + $0x40] sm:$0xff]
    %v674 = vld [vmem:[#allocation5 + $0x48] sm:$0xff]
    %v675 = vld [vmem:[#allocation5 + $0x50] sm:$0xff]
    %v676 = vld [vmem:[#allocation5 + $0x58] sm:$0xff]
    %v677 = vld [vmem:[#allocation5 + $0x60] sm:$0xff]
    %v678 = vld [vmem:[#allocation5 + $0x68] sm:$0xff]
    %v679 = vld [vmem:[#allocation5 + $0x70] sm:$0xff]
    %v680 = vld [vmem:[#allocation5 + $0x78] sm:$0xff]
    %v681 = vld [vmem:[#allocation5 + $0x80] sm:$0xff]
    %v682 = vld [vmem:[#allocation5 + $0x88] sm:$0xff]
    %v683 = vld [vmem:[#allocation5 + $0x90] sm:$0xff]
    %v684 = vld [vmem:[#allocation5 + $0x98] sm:$0xff]
    %v685 = vld [vmem:[#allocation5 + $0xa0] sm:$0xff]
    %v686 = vld [vmem:[#allocation5 + $0xa8] sm:$0xff]
    %v687 = vld [vmem:[#allocation5 + $0xb0] sm:$0xff]
    %v688 = vld [vmem:[#allocation5 + $0xb8] sm:$0xff]
    %v689 = vld [vmem:[#allocation5 + $0xc0] sm:$0xff]
    %v690 = vld [vmem:[#allocation5 + $0xc8] sm:$0xff]
    %v691 = vld [vmem:[#allocation5 + $0xd0] sm:$0xff]
    %v692 = vld [vmem:[#allocation5 + $0xd8] sm:$0xff]
    %v693 = vld [vmem:[#allocation5 + $0xe0] sm:$0xff]
    %v694 = vld [vmem:[#allocation5 + $0xe8] sm:$0xff]
    %v695 = vld [vmem:[#allocation5 + $0xf0] sm:$0xff]
    %v696 = vld [vmem:[#allocation5 + $0xf8] sm:$0xff]
    %v697 = vld [vmem:[#allocation5 + $0x100] sm:$0xff]
    %v698 = vld [vmem:[#allocation5 + $0x108] sm:$0xff]
    %v699 = vld [vmem:[#allocation5 + $0x110] sm:$0xff]
    %v700 = vld [vmem:[#allocation5 + $0x118] sm:$0xff]
    %v701 = vld [vmem:[#allocation5 + $0x120] sm:$0xff]
    %v702 = vld [vmem:[#allocation5 + $0x128] sm:$0xff]
    %v703 = vld [vmem:[#allocation5 + $0x130] sm:$0xff]
    %v704 = vld [vmem:[#allocation5 + $0x138] sm:$0xff]
    %v705 = vld [vmem:[#allocation5 + $0x140] sm:$0xff]
    %v706 = vld [vmem:[#allocation5 + $0x148] sm:$0xff]
    %v707 = vld [vmem:[#allocation5 + $0x150] sm:$0xff]
    %v708 = vld [vmem:[#allocation5 + $0x158] sm:$0xff]
    %v709 = vld [vmem:[#allocation5 + $0x160] sm:$0xff]
    %v710 = vld [vmem:[#allocation5 + $0x168] sm:$0xff]
    %v711 = vld [vmem:[#allocation5 + $0x170] sm:$0xff]
    %v712 = vld [vmem:[#allocation5 + $0x178] sm:$0xff]
    %v713 = vld [vmem:[%s4] sm:$0x7]
    %v715 = vlaneseq
    %v716 = vshrl.u32 %v715, 7
    %v717 = vsub.s32 0, %v716
    %v718 = vrot.slane %v713, %v717
    %v719 = vlaneseq
    %v720 = vshrl.u32 %v719, 7
    %v721 = vsub.s32 1, %v720
    %v722 = vrot.slane %v713, %v721
    %v723 = vlaneseq
    %v724 = vshrl.u32 %v723, 7
    %v725 = vsub.s32 2, %v724
    %v726 = vrot.slane %v713, %v725
    %730 = vmatprep.subr.mxu0 %v711
    %731 = vmatpush1.msra.mxu0 %v710
    %732 = vmatprep.subr.mxu0 %v708
    %733 = vmatpush1.msra.mxu0 %v707
    %734 = vmatprep.subr.mxu0 %v705
    %735 = vmatpush1.msra.mxu0 %v704
    %736 = vmatprep.subr.mxu0 %v702
    %737 = vmatpush1.msra.mxu0 %v701
    %738 = vmatprep.subr.mxu0 %v699
    %739 = vmatpush1.msra.mxu0 %v698
    %740 = vmatprep.subr.mxu0 %v696
    %741 = vmatpush1.msra.mxu0 %v695
    %742 = vmatprep.subr.mxu0 %v693
    %743 = vmatpush1.msra.mxu0 %v692
    %744 = vmatprep.subr.mxu0 %v690
    %745 = vmatpush1.msra.mxu0 %v689
    %746 = vmatprep.subr.mxu0 %v687
    %747 = vmatpush1.msra.mxu0 %v686
    %748 = vmatprep.subr.mxu0 %v684
    %749 = vmatpush1.msra.mxu0 %v683
    %750 = vmatprep.subr.mxu0 %v681
    %751 = vmatpush1.msra.mxu0 %v680
    %752 = vmatprep.subr.mxu0 %v678
    %753 = vmatpush1.msra.mxu0 %v677
    %754 = vmatprep.subr.mxu0 %v675
    %755 = vmatpush1.msra.mxu0 %v674
    %756 = vmatprep.subr.mxu0 %v672
    %757 = vmatpush1.msra.mxu0 %v671
    %758 = vmatprep.subr.mxu0 %v669
    %759 = vmatpush1.msra.mxu0 %v668
    %760 = vmatprep.subr.mxu0 %v666
    %761 = vmatpush1.msra.mxu0 %v665
    %762 = vmatprep.subr.mxu0 0.0
    %763 = vmatpush2.msra.mxu0 0.0
    %764 = vmatprep.subr.mxu0 0.0
    %765 = vmatpush2.msra.mxu0 0.0
    %766 = vmatprep.subr.mxu0 0.0
    %767 = vmatpush2.msra.mxu0 0.0
    %768 = vmatprep.subr.mxu0 0.0
    %769 = vmatpush2.msra.mxu0 0.0
    %770 = vmatprep.subr.mxu0 0.0
    %771 = vmatpush2.msra.mxu0 0.0
    %772 = vmatprep.subr.mxu0 0.0
    %773 = vmatpush2.msra.mxu0 0.0
    %774 = vmatprep.subr.mxu0 0.0
    %775 = vmatpush2.msra.mxu0 0.0
    %776 = vmatprep.subr.mxu0 0.0
    %777 = vmatpush2.msra.mxu0 0.0
    %778 = vmatprep.subr.mxu0 0.0
    %779 = vmatpush2.msra.mxu0 0.0
    %780 = vmatprep.subr.mxu0 0.0
    %781 = vmatpush2.msra.mxu0 0.0
    %782 = vmatprep.subr.mxu0 0.0
    %783 = vmatpush2.msra.mxu0 0.0
    %784 = vmatprep.subr.mxu0 0.0
    %785 = vmatpush2.msra.mxu0 0.0
    %786 = vmatprep.subr.mxu0 0.0
    %787 = vmatpush2.msra.mxu0 0.0
    %788 = vmatprep.subr.mxu0 0.0
    %789 = vmatpush2.msra.mxu0 0.0
    %790 = vmatprep.subr.mxu0 0.0
    %791 = vmatpush2.msra.mxu0 0.0
    %792 = vmatprep.subr.mxu0 0.0
    %793 = vmatpush2.msra.mxu0 0.0
    %794 = vmatprep.mubr.f32.mxu0 0.0
    %795 = vmatmul.mubr.f32.gmra.mxu0 %v660
    %v796 = vpop.f32.mrf.mxu0
    %v797 = vadd.f32 %v718, %v796
    %v798 = vpop.f32.mrf.mxu0
    %v799 = vadd.f32 %v722, %v798
    %800 = vdwg.mxu0
    %801 = vmatprep.subr.mxu0 0.0
    %802 = vmatpush1.msra.mxu0 %v712
    %803 = vmatprep.subr.mxu0 0.0
    %804 = vmatpush1.msra.mxu0 %v709
    %805 = vmatprep.subr.mxu0 0.0
    %806 = vmatpush1.msra.mxu0 %v706
    %807 = vmatprep.subr.mxu0 0.0
    %808 = vmatpush1.msra.mxu0 %v703
    %809 = vmatprep.subr.mxu0 0.0
    %810 = vmatpush1.msra.mxu0 %v700
    %811 = vmatprep.subr.mxu0 0.0
    %812 = vmatpush1.msra.mxu0 %v697
    %813 = vmatprep.subr.mxu0 0.0
    %814 = vmatpush1.msra.mxu0 %v694
    %815 = vmatprep.subr.mxu0 0.0
    %816 = vmatpush1.msra.mxu0 %v691
    %817 = vmatprep.subr.mxu0 0.0
    %818 = vmatpush1.msra.mxu0 %v688
    %819 = vmatprep.subr.mxu0 0.0
    %820 = vmatpush1.msra.mxu0 %v685
    %821 = vmatprep.subr.mxu0 0.0
    %822 = vmatpush1.msra.mxu0 %v682
    %823 = vmatprep.subr.mxu0 0.0
    %824 = vmatpush1.msra.mxu0 %v679
    %825 = vmatprep.subr.mxu0 0.0
    %826 = vmatpush1.msra.mxu0 %v676
    %827 = vmatprep.subr.mxu0 0.0
    %828 = vmatpush1.msra.mxu0 %v673
    %829 = vmatprep.subr.mxu0 0.0
    %830 = vmatpush1.msra.mxu0 %v670
    %831 = vmatprep.subr.mxu0 0.0
    %832 = vmatpush1.msra.mxu0 %v667
    %833 = vmatprep.subr.mxu0 0.0
    %834 = vmatpush2.msra.mxu0 0.0
    %835 = vmatprep.subr.mxu0 0.0
    %836 = vmatpush2.msra.mxu0 0.0
    %837 = vmatprep.subr.mxu0 0.0
    %838 = vmatpush2.msra.mxu0 0.0
    %839 = vmatprep.subr.mxu0 0.0
    %840 = vmatpush2.msra.mxu0 0.0
    %841 = vmatprep.subr.mxu0 0.0
    %842 = vmatpush2.msra.mxu0 0.0
    %843 = vmatprep.subr.mxu0 0.0
    %844 = vmatpush2.msra.mxu0 0.0
    %845 = vmatprep.subr.mxu0 0.0
    %846 = vmatpush2.msra.mxu0 0.0
    %847 = vmatprep.subr.mxu0 0.0
    %848 = vmatpush2.msra.mxu0 0.0
    %849 = vmatprep.subr.mxu0 0.0
    %850 = vmatpush2.msra.mxu0 0.0
    %851 = vmatprep.subr.mxu0 0.0
    %852 = vmatpush2.msra.mxu0 0.0
    %853 = vmatprep.subr.mxu0 0.0
    %854 = vmatpush2.msra.mxu0 0.0
    %855 = vmatprep.subr.mxu0 0.0
    %856 = vmatpush2.msra.mxu0 0.0
    %857 = vmatprep.subr.mxu0 0.0
    %858 = vmatpush2.msra.mxu0 0.0
    %859 = vmatprep.subr.mxu0 0.0
    %860 = vmatpush2.msra.mxu0 0.0
    %861 = vmatprep.subr.mxu0 0.0
    %862 = vmatpush2.msra.mxu0 0.0
    %863 = vmatprep.subr.mxu0 0.0
    %864 = vmatpush2.msra.mxu0 0.0
    %865 = vmatprep.mubr.f32.mxu0 0.0
    %866 = vmatmul.mubr.f32.gmra.mxu0 %v660
    %v867 = vpop.f32.mrf.mxu0
    %v868 = vadd.f32 %v726, %v867
    %v869 = vpop.f32.mrf.mxu0
    %870 = vdwg.mxu0
    %v871 = vadd.f32 %v662, %v797
    %v872 = vxor.u32 %v871, 2147483648
    %v873 = vmul.f32 %v872, 1.442695
    %v874 = vpow.pop %v873
    %v875 = vadd.f32 %v874, 1.0
    %v876 = vrcp.pop %v875
    %v877 = vmul.f32 1.0, %v876
    %v878 = vadd.f32 %v663, %v799
    %v879 = vxor.u32 %v878, 2147483648
    %v880 = vmul.f32 %v879, 1.442695
    %v881 = vpow.pop %v880
    %v882 = vadd.f32 %v881, 1.0
    %v883 = vrcp.pop %v882
    %v884 = vmul.f32 1.0, %v883
    %v885 = vmul.f32 %v877, %v868
    %v886 = vadd.f32 %v664, %v885
    %v887 = vtanh.pop %v886
    %v888 = vsub.f32 1.0, %v884
    %v889 = vmul.f32 %v888, %v887
    %v890 = vmul.f32 %v884, %v660
    %v891 = vadd.f32 %v889, %v890
    %892 = vst [vmem:[#allocation3 + $0x8] sm:$0xff] %v891
    %v893 = vld [vmem:[#allocation2 + $0x30] sm:$0xff]
    %v894 = vld [vmem:[#allocation2 + $0x38] sm:$0xff]
    %v895 = vld [vmem:[#allocation2 + $0x40] sm:$0xff]
    %v896 = vld [vmem:[#allocation5] sm:$0xff]
    %v897 = vld [vmem:[#allocation5 + $0x8] sm:$0xff]
    %v898 = vld [vmem:[#allocation5 + $0x10] sm:$0xff]
    %v899 = vld [vmem:[#allocation5 + $0x18] sm:$0xff]
    %v900 = vld [vmem:[#allocation5 + $0x20] sm:$0xff]
    %v901 = vld [vmem:[#allocation5 + $0x28] sm:$0xff]
    %v902 = vld [vmem:[#allocation5 + $0x30] sm:$0xff]
    %v903 = vld [vmem:[#allocation5 + $0x38] sm:$0xff]
    %v904 = vld [vmem:[#allocation5 + $0x40] sm:$0xff]
    %v905 = vld [vmem:[#allocation5 + $0x48] sm:$0xff]
    %v906 = vld [vmem:[#allocation5 + $0x50] sm:$0xff]
    %v907 = vld [vmem:[#allocation5 + $0x58] sm:$0xff]
    %v908 = vld [vmem:[#allocation5 + $0x60] sm:$0xff]
    %v909 = vld [vmem:[#allocation5 + $0x68] sm:$0xff]
    %v910 = vld [vmem:[#allocation5 + $0x70] sm:$0xff]
    %v911 = vld [vmem:[#allocation5 + $0x78] sm:$0xff]
    %v912 = vld [vmem:[#allocation5 + $0x80] sm:$0xff]
    %v913 = vld [vmem:[#allocation5 + $0x88] sm:$0xff]
    %v914 = vld [vmem:[#allocation5 + $0x90] sm:$0xff]
    %v915 = vld [vmem:[#allocation5 + $0x98] sm:$0xff]
    %v916 = vld [vmem:[#allocation5 + $0xa0] sm:$0xff]
    %v917 = vld [vmem:[#allocation5 + $0xa8] sm:$0xff]
    %v918 = vld [vmem:[#allocation5 + $0xb0] sm:$0xff]
    %v919 = vld [vmem:[#allocation5 + $0xb8] sm:$0xff]
    %v920 = vld [vmem:[#allocation5 + $0xc0] sm:$0xff]
    %v921 = vld [vmem:[#allocation5 + $0xc8] sm:$0xff]
    %v922 = vld [vmem:[#allocation5 + $0xd0] sm:$0xff]
    %v923 = vld [vmem:[#allocation5 + $0xd8] sm:$0xff]
    %v924 = vld [vmem:[#allocation5 + $0xe0] sm:$0xff]
    %v925 = vld [vmem:[#allocation5 + $0xe8] sm:$0xff]
    %v926 = vld [vmem:[#allocation5 + $0xf0] sm:$0xff]
    %v927 = vld [vmem:[#allocation5 + $0xf8] sm:$0xff]
    %v928 = vld [vmem:[#allocation5 + $0x100] sm:$0xff]
    %v929 = vld [vmem:[#allocation5 + $0x108] sm:$0xff]
    %v930 = vld [vmem:[#allocation5 + $0x110] sm:$0xff]
    %v931 = vld [vmem:[#allocation5 + $0x118] sm:$0xff]
    %v932 = vld [vmem:[#allocation5 + $0x120] sm:$0xff]
    %v933 = vld [vmem:[#allocation5 + $0x128] sm:$0xff]
    %v934 = vld [vmem:[#allocation5 + $0x130] sm:$0xff]
    %v935 = vld [vmem:[#allocation5 + $0x138] sm:$0xff]
    %v936 = vld [vmem:[#allocation5 + $0x140] sm:$0xff]
    %v937 = vld [vmem:[#allocation5 + $0x148] sm:$0xff]
    %v938 = vld [vmem:[#allocation5 + $0x150] sm:$0xff]
    %v939 = vld [vmem:[#allocation5 + $0x158] sm:$0xff]
    %v940 = vld [vmem:[#allocation5 + $0x160] sm:$0xff]
    %v941 = vld [vmem:[#allocation5 + $0x168] sm:$0xff]
    %v942 = vld [vmem:[#allocation5 + $0x170] sm:$0xff]
    %v943 = vld [vmem:[#allocation5 + $0x178] sm:$0xff]
    %v944 = vld [vmem:[%s4] sm:$0x7]
    %v946 = vlaneseq
    %v947 = vshrl.u32 %v946, 7
    %v948 = vsub.s32 0, %v947
    %v949 = vrot.slane %v944, %v948
    %v950 = vlaneseq
    %v951 = vshrl.u32 %v950, 7
    %v952 = vsub.s32 1, %v951
    %v953 = vrot.slane %v944, %v952
    %v954 = vlaneseq
    %v955 = vshrl.u32 %v954, 7
    %v956 = vsub.s32 2, %v955
    %v957 = vrot.slane %v944, %v956
    %961 = vmatprep.subr.mxu0 %v942
    %962 = vmatpush1.msra.mxu0 %v941
    %963 = vmatprep.subr.mxu0 %v939
    %964 = vmatpush1.msra.mxu0 %v938
    %965 = vmatprep.subr.mxu0 %v936
    %966 = vmatpush1.msra.mxu0 %v935
    %967 = vmatprep.subr.mxu0 %v933
    %968 = vmatpush1.msra.mxu0 %v932
    %969 = vmatprep.subr.mxu0 %v930
    %970 = vmatpush1.msra.mxu0 %v929
    %971 = vmatprep.subr.mxu0 %v927
    %972 = vmatpush1.msra.mxu0 %v926
    %973 = vmatprep.subr.mxu0 %v924
    %974 = vmatpush1.msra.mxu0 %v923
    %975 = vmatprep.subr.mxu0 %v921
    %976 = vmatpush1.msra.mxu0 %v920
    %977 = vmatprep.subr.mxu0 %v918
    %978 = vmatpush1.msra.mxu0 %v917
    %979 = vmatprep.subr.mxu0 %v915
    %980 = vmatpush1.msra.mxu0 %v914
    %981 = vmatprep.subr.mxu0 %v912
    %982 = vmatpush1.msra.mxu0 %v911
    %983 = vmatprep.subr.mxu0 %v909
    %984 = vmatpush1.msra.mxu0 %v908
    %985 = vmatprep.subr.mxu0 %v906
    %986 = vmatpush1.msra.mxu0 %v905
    %987 = vmatprep.subr.mxu0 %v903
    %988 = vmatpush1.msra.mxu0 %v902
    %989 = vmatprep.subr.mxu0 %v900
    %990 = vmatpush1.msra.mxu0 %v899
    %991 = vmatprep.subr.mxu0 %v897
    %992 = vmatpush1.msra.mxu0 %v896
    %993 = vmatprep.subr.mxu0 0.0
    %994 = vmatpush2.msra.mxu0 0.0
    %995 = vmatprep.subr.mxu0 0.0
    %996 = vmatpush2.msra.mxu0 0.0
    %997 = vmatprep.subr.mxu0 0.0
    %998 = vmatpush2.msra.mxu0 0.0
    %999 = vmatprep.subr.mxu0 0.0
    %1000 = vmatpush2.msra.mxu0 0.0
    %1001 = vmatprep.subr.mxu0 0.0
    %1002 = vmatpush2.msra.mxu0 0.0
    %1003 = vmatprep.subr.mxu0 0.0
    %1004 = vmatpush2.msra.mxu0 0.0
    %1005 = vmatprep.subr.mxu0 0.0
    %1006 = vmatpush2.msra.mxu0 0.0
    %1007 = vmatprep.subr.mxu0 0.0
    %1008 = vmatpush2.msra.mxu0 0.0
    %1009 = vmatprep.subr.mxu0 0.0
    %1010 = vmatpush2.msra.mxu0 0.0
    %1011 = vmatprep.subr.mxu0 0.0
    %1012 = vmatpush2.msra.mxu0 0.0
    %1013 = vmatprep.subr.mxu0 0.0
    %1014 = vmatpush2.msra.mxu0 0.0
    %1015 = vmatprep.subr.mxu0 0.0
    %1016 = vmatpush2.msra.mxu0 0.0
    %1017 = vmatprep.subr.mxu0 0.0
    %1018 = vmatpush2.msra.mxu0 0.0
    %1019 = vmatprep.subr.mxu0 0.0
    %1020 = vmatpush2.msra.mxu0 0.0
    %1021 = vmatprep.subr.mxu0 0.0
    %1022 = vmatpush2.msra.mxu0 0.0
    %1023 = vmatprep.subr.mxu0 0.0
    %1024 = vmatpush2.msra.mxu0 0.0
    %1025 = vmatprep.mubr.f32.mxu0 0.0
    %1026 = vmatmul.mubr.f32.gmra.mxu0 %v891
    %v1027 = vpop.f32.mrf.mxu0
    %v1028 = vadd.f32 %v949, %v1027
    %v1029 = vpop.f32.mrf.mxu0
    %v1030 = vadd.f32 %v953, %v1029
    %1031 = vdwg.mxu0
    %1032 = vmatprep.subr.mxu0 0.0
    %1033 = vmatpush1.msra.mxu0 %v943
    %1034 = vmatprep.subr.mxu0 0.0
    %1035 = vmatpush1.msra.mxu0 %v940
    %1036 = vmatprep.subr.mxu0 0.0
    %1037 = vmatpush1.msra.mxu0 %v937
    %1038 = vmatprep.subr.mxu0 0.0
    %1039 = vmatpush1.msra.mxu0 %v934
    %1040 = vmatprep.subr.mxu0 0.0
    %1041 = vmatpush1.msra.mxu0 %v931
    %1042 = vmatprep.subr.mxu0 0.0
    %1043 = vmatpush1.msra.mxu0 %v928
    %1044 = vmatprep.subr.mxu0 0.0
    %1045 = vmatpush1.msra.mxu0 %v925
    %1046 = vmatprep.subr.mxu0 0.0
    %1047 = vmatpush1.msra.mxu0 %v922
    %1048 = vmatprep.subr.mxu0 0.0
    %1049 = vmatpush1.msra.mxu0 %v919
    %1050 = vmatprep.subr.mxu0 0.0
    %1051 = vmatpush1.msra.mxu0 %v916
    %1052 = vmatprep.subr.mxu0 0.0
    %1053 = vmatpush1.msra.mxu0 %v913
    %1054 = vmatprep.subr.mxu0 0.0
    %1055 = vmatpush1.msra.mxu0 %v910
    %1056 = vmatprep.subr.mxu0 0.0
    %1057 = vmatpush1.msra.mxu0 %v907
    %1058 = vmatprep.subr.mxu0 0.0
    %1059 = vmatpush1.msra.mxu0 %v904
    %1060 = vmatprep.subr.mxu0 0.0
    %1061 = vmatpush1.msra.mxu0 %v901
    %1062 = vmatprep.subr.mxu0 0.0
    %1063 = vmatpush1.msra.mxu0 %v898
    %1064 = vmatprep.subr.mxu0 0.0
    %1065 = vmatpush2.msra.mxu0 0.0
    %1066 = vmatprep.subr.mxu0 0.0
    %1067 = vmatpush2.msra.mxu0 0.0
    %1068 = vmatprep.subr.mxu0 0.0
    %1069 = vmatpush2.msra.mxu0 0.0
    %1070 = vmatprep.subr.mxu0 0.0
    %1071 = vmatpush2.msra.mxu0 0.0
    %1072 = vmatprep.subr.mxu0 0.0
    %1073 = vmatpush2.msra.mxu0 0.0
    %1074 = vmatprep.subr.mxu0 0.0
    %1075 = vmatpush2.msra.mxu0 0.0
    %1076 = vmatprep.subr.mxu0 0.0
    %1077 = vmatpush2.msra.mxu0 0.0
    %1078 = vmatprep.subr.mxu0 0.0
    %1079 = vmatpush2.msra.mxu0 0.0
    %1080 = vmatprep.subr.mxu0 0.0
    %1081 = vmatpush2.msra.mxu0 0.0
    %1082 = vmatprep.subr.mxu0 0.0
    %1083 = vmatpush2.msra.mxu0 0.0
    %1084 = vmatprep.subr.mxu0 0.0
    %1085 = vmatpush2.msra.mxu0 0.0
    %1086 = vmatprep.subr.mxu0 0.0
    %1087 = vmatpush2.msra.mxu0 0.0
    %1088 = vmatprep.subr.mxu0 0.0
    %1089 = vmatpush2.msra.mxu0 0.0
    %1090 = vmatprep.subr.mxu0 0.0
    %1091 = vmatpush2.msra.mxu0 0.0
    %1092 = vmatprep.subr.mxu0 0.0
    %1093 = vmatpush2.msra.mxu0 0.0
    %1094 = vmatprep.subr.mxu0 0.0
    %1095 = vmatpush2.msra.mxu0 0.0
    %1096 = vmatprep.mubr.f32.mxu0 0.0
    %1097 = vmatmul.mubr.f32.gmra.mxu0 %v891
    %v1098 = vpop.f32.mrf.mxu0
    %v1099 = vadd.f32 %v957, %v1098
    %v1100 = vpop.f32.mrf.mxu0
    %1101 = vdwg.mxu0
    %v1102 = vadd.f32 %v893, %v1028
    %v1103 = vxor.u32 %v1102, 2147483648
    %v1104 = vmul.f32 %v1103, 1.442695
    %v1105 = vpow.pop %v1104
    %v1106 = vadd.f32 %v1105, 1.0
    %v1107 = vrcp.pop %v1106
    %v1108 = vmul.f32 1.0, %v1107
    %v1109 = vadd.f32 %v894, %v1030
    %v1110 = vxor.u32 %v1109, 2147483648
    %v1111 = vmul.f32 %v1110, 1.442695
    %v1112 = vpow.pop %v1111
    %v1113 = vadd.f32 %v1112, 1.0
    %v1114 = vrcp.pop %v1113
    %v1115 = vmul.f32 1.0, %v1114
    %v1116 = vmul.f32 %v1108, %v1099
    %v1117 = vadd.f32 %v895, %v1116
    %v1118 = vtanh.pop %v1117
    %v1119 = vsub.f32 1.0, %v1115
    %v1120 = vmul.f32 %v1119, %v1118
    %v1121 = vmul.f32 %v1115, %v891
    %v1122 = vadd.f32 %v1120, %v1121
    %1123 = vst [vmem:[#allocation3 + $0x10] sm:$0xff] %v1122
    %v1124 = vld [vmem:[#allocation2 + $0x48] sm:$0xff]
    %v1125 = vld [vmem:[#allocation2 + $0x50] sm:$0xff]
    %v1126 = vld [vmem:[#allocation2 + $0x58] sm:$0xff]
    %v1127 = vld [vmem:[#allocation5] sm:$0xff]
    %v1128 = vld [vmem:[#allocation5 + $0x8] sm:$0xff]
    %v1129 = vld [vmem:[#allocation5 + $0x10] sm:$0xff]
    %v1130 = vld [vmem:[#allocation5 + $0x18] sm:$0xff]
    %v1131 = vld [vmem:[#allocation5 + $0x20] sm:$0xff]
    %v1132 = vld [vmem:[#allocation5 + $0x28] sm:$0xff]
    %v1133 = vld [vmem:[#allocation5 + $0x30] sm:$0xff]
    %v1134 = vld [vmem:[#allocation5 + $0x38] sm:$0xff]
    %v1135 = vld [vmem:[#allocation5 + $0x40] sm:$0xff]
    %v1136 = vld [vmem:[#allocation5 + $0x48] sm:$0xff]
    %v1137 = vld [vmem:[#allocation5 + $0x50] sm:$0xff]
    %v1138 = vld [vmem:[#allocation5 + $0x58] sm:$0xff]
    %v1139 = vld [vmem:[#allocation5 + $0x60] sm:$0xff]
    %v1140 = vld [vmem:[#allocation5 + $0x68] sm:$0xff]
    %v1141 = vld [vmem:[#allocation5 + $0x70] sm:$0xff]
    %v1142 = vld [vmem:[#allocation5 + $0x78] sm:$0xff]
    %v1143 = vld [vmem:[#allocation5 + $0x80] sm:$0xff]
    %v1144 = vld [vmem:[#allocation5 + $0x88] sm:$0xff]
    %v1145 = vld [vmem:[#allocation5 + $0x90] sm:$0xff]
    %v1146 = vld [vmem:[#allocation5 + $0x98] sm:$0xff]
    %v1147 = vld [vmem:[#allocation5 + $0xa0] sm:$0xff]
    %v1148 = vld [vmem:[#allocation5 + $0xa8] sm:$0xff]
    %v1149 = vld [vmem:[#allocation5 + $0xb0] sm:$0xff]
    %v1150 = vld [vmem:[#allocation5 + $0xb8] sm:$0xff]
    %v1151 = vld [vmem:[#allocation5 + $0xc0] sm:$0xff]
    %v1152 = vld [vmem:[#allocation5 + $0xc8] sm:$0xff]
    %v1153 = vld [vmem:[#allocation5 + $0xd0] sm:$0xff]
    %v1154 = vld [vmem:[#allocation5 + $0xd8] sm:$0xff]
    %v1155 = vld [vmem:[#allocation5 + $0xe0] sm:$0xff]
    %v1156 = vld [vmem:[#allocation5 + $0xe8] sm:$0xff]
    %v1157 = vld [vmem:[#allocation5 + $0xf0] sm:$0xff]
    %v1158 = vld [vmem:[#allocation5 + $0xf8] sm:$0xff]
    %v1159 = vld [vmem:[#allocation5 + $0x100] sm:$0xff]
    %v1160 = vld [vmem:[#allocation5 + $0x108] sm:$0xff]
    %v1161 = vld [vmem:[#allocation5 + $0x110] sm:$0xff]
    %v1162 = vld [vmem:[#allocation5 + $0x118] sm:$0xff]
    %v1163 = vld [vmem:[#allocation5 + $0x120] sm:$0xff]
    %v1164 = vld [vmem:[#allocation5 + $0x128] sm:$0xff]
    %v1165 = vld [vmem:[#allocation5 + $0x130] sm:$0xff]
    %v1166 = vld [vmem:[#allocation5 + $0x138] sm:$0xff]
    %v1167 = vld [vmem:[#allocation5 + $0x140] sm:$0xff]
    %v1168 = vld [vmem:[#allocation5 + $0x148] sm:$0xff]
    %v1169 = vld [vmem:[#allocation5 + $0x150] sm:$0xff]
    %v1170 = vld [vmem:[#allocation5 + $0x158] sm:$0xff]
    %v1171 = vld [vmem:[#allocation5 + $0x160] sm:$0xff]
    %v1172 = vld [vmem:[#allocation5 + $0x168] sm:$0xff]
    %v1173 = vld [vmem:[#allocation5 + $0x170] sm:$0xff]
    %v1174 = vld [vmem:[#allocation5 + $0x178] sm:$0xff]
    %v1175 = vld [vmem:[%s4] sm:$0x7]
    %v1177 = vlaneseq
    %v1178 = vshrl.u32 %v1177, 7
    %v1179 = vsub.s32 0, %v1178
    %v1180 = vrot.slane %v1175, %v1179
    %v1181 = vlaneseq
    %v1182 = vshrl.u32 %v1181, 7
    %v1183 = vsub.s32 1, %v1182
    %v1184 = vrot.slane %v1175, %v1183
    %v1185 = vlaneseq
    %v1186 = vshrl.u32 %v1185, 7
    %v1187 = vsub.s32 2, %v1186
    %v1188 = vrot.slane %v1175, %v1187
    %1192 = vmatprep.subr.mxu0 %v1173
    %1193 = vmatpush1.msra.mxu0 %v1172
    %1194 = vmatprep.subr.mxu0 %v1170
    %1195 = vmatpush1.msra.mxu0 %v1169
    %1196 = vmatprep.subr.mxu0 %v1167
    %1197 = vmatpush1.msra.mxu0 %v1166
    %1198 = vmatprep.subr.mxu0 %v1164
    %1199 = vmatpush1.msra.mxu0 %v1163
    %1200 = vmatprep.subr.mxu0 %v1161
    %1201 = vmatpush1.msra.mxu0 %v1160
    %1202 = vmatprep.subr.mxu0 %v1158
    %1203 = vmatpush1.msra.mxu0 %v1157
    %1204 = vmatprep.subr.mxu0 %v1155
    %1205 = vmatpush1.msra.mxu0 %v1154
    %1206 = vmatprep.subr.mxu0 %v1152
    %1207 = vmatpush1.msra.mxu0 %v1151
    %1208 = vmatprep.subr.mxu0 %v1149
    %1209 = vmatpush1.msra.mxu0 %v1148
    %1210 = vmatprep.subr.mxu0 %v1146
    %1211 = vmatpush1.msra.mxu0 %v1145
    %1212 = vmatprep.subr.mxu0 %v1143
    %1213 = vmatpush1.msra.mxu0 %v1142
    %1214 = vmatprep.subr.mxu0 %v1140
    %1215 = vmatpush1.msra.mxu0 %v1139
    %1216 = vmatprep.subr.mxu0 %v1137
    %1217 = vmatpush1.msra.mxu0 %v1136
    %1218 = vmatprep.subr.mxu0 %v1134
    %1219 = vmatpush1.msra.mxu0 %v1133
    %1220 = vmatprep.subr.mxu0 %v1131
    %1221 = vmatpush1.msra.mxu0 %v1130
    %1222 = vmatprep.subr.mxu0 %v1128
    %1223 = vmatpush1.msra.mxu0 %v1127
    %1224 = vmatprep.subr.mxu0 0.0
    %1225 = vmatpush2.msra.mxu0 0.0
    %1226 = vmatprep.subr.mxu0 0.0
    %1227 = vmatpush2.msra.mxu0 0.0
    %1228 = vmatprep.subr.mxu0 0.0
    %1229 = vmatpush2.msra.mxu0 0.0
    %1230 = vmatprep.subr.mxu0 0.0
    %1231 = vmatpush2.msra.mxu0 0.0
    %1232 = vmatprep.subr.mxu0 0.0
    %1233 = vmatpush2.msra.mxu0 0.0
    %1234 = vmatprep.subr.mxu0 0.0
    %1235 = vmatpush2.msra.mxu0 0.0
    %1236 = vmatprep.subr.mxu0 0.0
    %1237 = vmatpush2.msra.mxu0 0.0
    %1238 = vmatprep.subr.mxu0 0.0
    %1239 = vmatpush2.msra.mxu0 0.0
    %1240 = vmatprep.subr.mxu0 0.0
    %1241 = vmatpush2.msra.mxu0 0.0
    %1242 = vmatprep.subr.mxu0 0.0
    %1243 = vmatpush2.msra.mxu0 0.0
    %1244 = vmatprep.subr.mxu0 0.0
    %1245 = vmatpush2.msra.mxu0 0.0
    %1246 = vmatprep.subr.mxu0 0.0
    %1247 = vmatpush2.msra.mxu0 0.0
    %1248 = vmatprep.subr.mxu0 0.0
    %1249 = vmatpush2.msra.mxu0 0.0
    %1250 = vmatprep.subr.mxu0 0.0
    %1251 = vmatpush2.msra.mxu0 0.0
    %1252 = vmatprep.subr.mxu0 0.0
    %1253 = vmatpush2.msra.mxu0 0.0
    %1254 = vmatprep.subr.mxu0 0.0
    %1255 = vmatpush2.msra.mxu0 0.0
    %1256 = vmatprep.mubr.f32.mxu0 0.0
    %1257 = vmatmul.mubr.f32.gmra.mxu0 %v1122
    %v1258 = vpop.f32.mrf.mxu0
    %v1259 = vadd.f32 %v1180, %v1258
    %v1260 = vpop.f32.mrf.mxu0
    %v1261 = vadd.f32 %v1184, %v1260
    %1262 = vdwg.mxu0
    %1263 = vmatprep.subr.mxu0 0.0
    %1264 = vmatpush1.msra.mxu0 %v1174
    %1265 = vmatprep.subr.mxu0 0.0
    %1266 = vmatpush1.msra.mxu0 %v1171
    %1267 = vmatprep.subr.mxu0 0.0
    %1268 = vmatpush1.msra.mxu0 %v1168
    %1269 = vmatprep.subr.mxu0 0.0
    %1270 = vmatpush1.msra.mxu0 %v1165
    %1271 = vmatprep.subr.mxu0 0.0
    %1272 = vmatpush1.msra.mxu0 %v1162
    %1273 = vmatprep.subr.mxu0 0.0
    %1274 = vmatpush1.msra.mxu0 %v1159
    %1275 = vmatprep.subr.mxu0 0.0
    %1276 = vmatpush1.msra.mxu0 %v1156
    %1277 = vmatprep.subr.mxu0 0.0
    %1278 = vmatpush1.msra.mxu0 %v1153
    %1279 = vmatprep.subr.mxu0 0.0
    %1280 = vmatpush1.msra.mxu0 %v1150
    %1281 = vmatprep.subr.mxu0 0.0
    %1282 = vmatpush1.msra.mxu0 %v1147
    %1283 = vmatprep.subr.mxu0 0.0
    %1284 = vmatpush1.msra.mxu0 %v1144
    %1285 = vmatprep.subr.mxu0 0.0
    %1286 = vmatpush1.msra.mxu0 %v1141
    %1287 = vmatprep.subr.mxu0 0.0
    %1288 = vmatpush1.msra.mxu0 %v1138
    %1289 = vmatprep.subr.mxu0 0.0
    %1290 = vmatpush1.msra.mxu0 %v1135
    %1291 = vmatprep.subr.mxu0 0.0
    %1292 = vmatpush1.msra.mxu0 %v1132
    %1293 = vmatprep.subr.mxu0 0.0
    %1294 = vmatpush1.msra.mxu0 %v1129
    %1295 = vmatprep.subr.mxu0 0.0
    %1296 = vmatpush2.msra.mxu0 0.0
    %1297 = vmatprep.subr.mxu0 0.0
    %1298 = vmatpush2.msra.mxu0 0.0
    %1299 = vmatprep.subr.mxu0 0.0
    %1300 = vmatpush2.msra.mxu0 0.0
    %1301 = vmatprep.subr.mxu0 0.0
    %1302 = vmatpush2.msra.mxu0 0.0
    %1303 = vmatprep.subr.mxu0 0.0
    %1304 = vmatpush2.msra.mxu0 0.0
    %1305 = vmatprep.subr.mxu0 0.0
    %1306 = vmatpush2.msra.mxu0 0.0
    %1307 = vmatprep.subr.mxu0 0.0
    %1308 = vmatpush2.msra.mxu0 0.0
    %1309 = vmatprep.subr.mxu0 0.0
    %1310 = vmatpush2.msra.mxu0 0.0
    %1311 = vmatprep.subr.mxu0 0.0
    %1312 = vmatpush2.msra.mxu0 0.0
    %1313 = vmatprep.subr.mxu0 0.0
    %1314 = vmatpush2.msra.mxu0 0.0
    %1315 = vmatprep.subr.mxu0 0.0
    %1316 = vmatpush2.msra.mxu0 0.0
    %1317 = vmatprep.subr.mxu0 0.0
    %1318 = vmatpush2.msra.mxu0 0.0
    %1319 = vmatprep.subr.mxu0 0.0
    %1320 = vmatpush2.msra.mxu0 0.0
    %1321 = vmatprep.subr.mxu0 0.0
    %1322 = vmatpush2.msra.mxu0 0.0
    %1323 = vmatprep.subr.mxu0 0.0
    %1324 = vmatpush2.msra.mxu0 0.0
    %1325 = vmatprep.subr.mxu0 0.0
    %1326 = vmatpush2.msra.mxu0 0.0
    %1327 = vmatprep.mubr.f32.mxu0 0.0
    %1328 = vmatmul.mubr.f32.gmra.mxu0 %v1122
    %v1329 = vpop.f32.mrf.mxu0
    %v1330 = vadd.f32 %v1188, %v1329
    %v1331 = vpop.f32.mrf.mxu0
    %1332 = vdwg.mxu0
    %v1333 = vadd.f32 %v1124, %v1259
    %v1334 = vxor.u32 %v1333, 2147483648
    %v1335 = vmul.f32 %v1334, 1.442695
    %v1336 = vpow.pop %v1335
    %v1337 = vadd.f32 %v1336, 1.0
    %v1338 = vrcp.pop %v1337
    %v1339 = vmul.f32 1.0, %v1338
    %v1340 = vadd.f32 %v1125, %v1261
    %v1341 = vxor.u32 %v1340, 2147483648
    %v1342 = vmul.f32 %v1341, 1.442695
    %v1343 = vpow.pop %v1342
    %v1344 = vadd.f32 %v1343, 1.0
    %v1345 = vrcp.pop %v1344
    %v1346 = vmul.f32 1.0, %v1345
    %v1347 = vmul.f32 %v1339, %v1330
    %v1348 = vadd.f32 %v1126, %v1347
    %v1349 = vtanh.pop %v1348
    %v1350 = vsub.f32 1.0, %v1346
    %v1351 = vmul.f32 %v1350, %v1349
    %v1352 = vmul.f32 %v1346, %v1122
    %v1353 = vadd.f32 %v1351, %v1352
    %1354 = vst [vmem:[#allocation3 + $0x18] sm:$0xff] %v1353
    %v1355 = vld [vmem:[#allocation2 + $0x60] sm:$0xff]
    %v1356 = vld [vmem:[#allocation2 + $0x68] sm:$0xff]
    %v1357 = vld [vmem:[#allocation2 + $0x70] sm:$0xff]
    %v1358 = vld [vmem:[#allocation5] sm:$0xff]
    %v1359 = vld [vmem:[#allocation5 + $0x8] sm:$0xff]
    %v1360 = vld [vmem:[#allocation5 + $0x10] sm:$0xff]
    %v1361 = vld [vmem:[#allocation5 + $0x18] sm:$0xff]
    %v1362 = vld [vmem:[#allocation5 + $0x20] sm:$0xff]
    %v1363 = vld [vmem:[#allocation5 + $0x28] sm:$0xff]
    %v1364 = vld [vmem:[#allocation5 + $0x30] sm:$0xff]
    %v1365 = vld [vmem:[#allocation5 + $0x38] sm:$0xff]
    %v1366 = vld [vmem:[#allocation5 + $0x40] sm:$0xff]
    %v1367 = vld [vmem:[#allocation5 + $0x48] sm:$0xff]
    %v1368 = vld [vmem:[#allocation5 + $0x50] sm:$0xff]
    %v1369 = vld [vmem:[#allocation5 + $0x58] sm:$0xff]
    %v1370 = vld [vmem:[#allocation5 + $0x60] sm:$0xff]
    %v1371 = vld [vmem:[#allocation5 + $0x68] sm:$0xff]
    %v1372 = vld [vmem:[#allocation5 + $0x70] sm:$0xff]
    %v1373 = vld [vmem:[#allocation5 + $0x78] sm:$0xff]
    %v1374 = vld [vmem:[#allocation5 + $0x80] sm:$0xff]
    %v1375 = vld [vmem:[#allocation5 + $0x88] sm:$0xff]
    %v1376 = vld [vmem:[#allocation5 + $0x90] sm:$0xff]
    %v1377 = vld [vmem:[#allocation5 + $0x98] sm:$0xff]
    %v1378 = vld [vmem:[#allocation5 + $0xa0] sm:$0xff]
    %v1379 = vld [vmem:[#allocation5 + $0xa8] sm:$0xff]
    %v1380 = vld [vmem:[#allocation5 + $0xb0] sm:$0xff]
    %v1381 = vld [vmem:[#allocation5 + $0xb8] sm:$0xff]
    %v1382 = vld [vmem:[#allocation5 + $0xc0] sm:$0xff]
    %v1383 = vld [vmem:[#allocation5 + $0xc8] sm:$0xff]
    %v1384 = vld [vmem:[#allocation5 + $0xd0] sm:$0xff]
    %v1385 = vld [vmem:[#allocation5 + $0xd8] sm:$0xff]
    %v1386 = vld [vmem:[#allocation5 + $0xe0] sm:$0xff]
    %v1387 = vld [vmem:[#allocation5 + $0xe8] sm:$0xff]
    %v1388 = vld [vmem:[#allocation5 + $0xf0] sm:$0xff]
    %v1389 = vld [vmem:[#allocation5 + $0xf8] sm:$0xff]
    %v1390 = vld [vmem:[#allocation5 + $0x100] sm:$0xff]
    %v1391 = vld [vmem:[#allocation5 + $0x108] sm:$0xff]
    %v1392 = vld [vmem:[#allocation5 + $0x110] sm:$0xff]
    %v1393 = vld [vmem:[#allocation5 + $0x118] sm:$0xff]
    %v1394 = vld [vmem:[#allocation5 + $0x120] sm:$0xff]
    %v1395 = vld [vmem:[#allocation5 + $0x128] sm:$0xff]
    %v1396 = vld [vmem:[#allocation5 + $0x130] sm:$0xff]
    %v1397 = vld [vmem:[#allocation5 + $0x138] sm:$0xff]
    %v1398 = vld [vmem:[#allocation5 + $0x140] sm:$0xff]
    %v1399 = vld [vmem:[#allocation5 + $0x148] sm:$0xff]
    %v1400 = vld [vmem:[#allocation5 + $0x150] sm:$0xff]
    %v1401 = vld [vmem:[#allocation5 + $0x158] sm:$0xff]
    %v1402 = vld [vmem:[#allocation5 + $0x160] sm:$0xff]
    %v1403 = vld [vmem:[#allocation5 + $0x168] sm:$0xff]
    %v1404 = vld [vmem:[#allocation5 + $0x170] sm:$0xff]
    %v1405 = vld [vmem:[#allocation5 + $0x178] sm:$0xff]
    %v1406 = vld [vmem:[%s4] sm:$0x7]
    %v1408 = vlaneseq
    %v1409 = vshrl.u32 %v1408, 7
    %v1410 = vsub.s32 0, %v1409
    %v1411 = vrot.slane %v1406, %v1410
    %v1412 = vlaneseq
    %v1413 = vshrl.u32 %v1412, 7
    %v1414 = vsub.s32 1, %v1413
    %v1415 = vrot.slane %v1406, %v1414
    %v1416 = vlaneseq
    %v1417 = vshrl.u32 %v1416, 7
    %v1418 = vsub.s32 2, %v1417
    %v1419 = vrot.slane %v1406, %v1418
    %1423 = vmatprep.subr.mxu0 %v1404
    %1424 = vmatpush1.msra.mxu0 %v1403
    %1425 = vmatprep.subr.mxu0 %v1401
    %1426 = vmatpush1.msra.mxu0 %v1400
    %1427 = vmatprep.subr.mxu0 %v1398
    %1428 = vmatpush1.msra.mxu0 %v1397
    %1429 = vmatprep.subr.mxu0 %v1395
    %1430 = vmatpush1.msra.mxu0 %v1394
    %1431 = vmatprep.subr.mxu0 %v1392
    %1432 = vmatpush1.msra.mxu0 %v1391
    %1433 = vmatprep.subr.mxu0 %v1389
    %1434 = vmatpush1.msra.mxu0 %v1388
    %1435 = vmatprep.subr.mxu0 %v1386
    %1436 = vmatpush1.msra.mxu0 %v1385
    %1437 = vmatprep.subr.mxu0 %v1383
    %1438 = vmatpush1.msra.mxu0 %v1382
    %1439 = vmatprep.subr.mxu0 %v1380
    %1440 = vmatpush1.msra.mxu0 %v1379
    %1441 = vmatprep.subr.mxu0 %v1377
    %1442 = vmatpush1.msra.mxu0 %v1376
    %1443 = vmatprep.subr.mxu0 %v1374
    %1444 = vmatpush1.msra.mxu0 %v1373
    %1445 = vmatprep.subr.mxu0 %v1371
    %1446 = vmatpush1.msra.mxu0 %v1370
    %1447 = vmatprep.subr.mxu0 %v1368
    %1448 = vmatpush1.msra.mxu0 %v1367
    %1449 = vmatprep.subr.mxu0 %v1365
    %1450 = vmatpush1.msra.mxu0 %v1364
    %1451 = vmatprep.subr.mxu0 %v1362
    %1452 = vmatpush1.msra.mxu0 %v1361
    %1453 = vmatprep.subr.mxu0 %v1359
    %1454 = vmatpush1.msra.mxu0 %v1358
    %1455 = vmatprep.subr.mxu0 0.0
    %1456 = vmatpush2.msra.mxu0 0.0
    %1457 = vmatprep.subr.mxu0 0.0
    %1458 = vmatpush2.msra.mxu0 0.0
    %1459 = vmatprep.subr.mxu0 0.0
    %1460 = vmatpush2.msra.mxu0 0.0
    %1461 = vmatprep.subr.mxu0 0.0
    %1462 = vmatpush2.msra.mxu0 0.0
    %1463 = vmatprep.subr.mxu0 0.0
    %1464 = vmatpush2.msra.mxu0 0.0
    %1465 = vmatprep.subr.mxu0 0.0
    %1466 = vmatpush2.msra.mxu0 0.0
    %1467 = vmatprep.subr.mxu0 0.0
    %1468 = vmatpush2.msra.mxu0 0.0
    %1469 = vmatprep.subr.mxu0 0.0
    %1470 = vmatpush2.msra.mxu0 0.0
    %1471 = vmatprep.subr.mxu0 0.0
    %1472 = vmatpush2.msra.mxu0 0.0
    %1473 = vmatprep.subr.mxu0 0.0
    %1474 = vmatpush2.msra.mxu0 0.0
    %1475 = vmatprep.subr.mxu0 0.0
    %1476 = vmatpush2.msra.mxu0 0.0
    %1477 = vmatprep.subr.mxu0 0.0
    %1478 = vmatpush2.msra.mxu0 0.0
    %1479 = vmatprep.subr.mxu0 0.0
    %1480 = vmatpush2.msra.mxu0 0.0
    %1481 = vmatprep.subr.mxu0 0.0
    %1482 = vmatpush2.msra.mxu0 0.0
    %1483 = vmatprep.subr.mxu0 0.0
    %1484 = vmatpush2.msra.mxu0 0.0
    %1485 = vmatprep.subr.mxu0 0.0
    %1486 = vmatpush2.msra.mxu0 0.0
    %1487 = vmatprep.mubr.f32.mxu0 0.0
    %1488 = vmatmul.mubr.f32.gmra.mxu0 %v1353
    %v1489 = vpop.f32.mrf.mxu0
    %v1490 = vadd.f32 %v1411, %v1489
    %v1491 = vpop.f32.mrf.mxu0
    %v1492 = vadd.f32 %v1415, %v1491
    %1493 = vdwg.mxu0
    %1494 = vmatprep.subr.mxu0 0.0
    %1495 = vmatpush1.msra.mxu0 %v1405
    %1496 = vmatprep.subr.mxu0 0.0
    %1497 = vmatpush1.msra.mxu0 %v1402
    %1498 = vmatprep.subr.mxu0 0.0
    %1499 = vmatpush1.msra.mxu0 %v1399
    %1500 = vmatprep.subr.mxu0 0.0
    %1501 = vmatpush1.msra.mxu0 %v1396
    %1502 = vmatprep.subr.mxu0 0.0
    %1503 = vmatpush1.msra.mxu0 %v1393
    %1504 = vmatprep.subr.mxu0 0.0
    %1505 = vmatpush1.msra.mxu0 %v1390
    %1506 = vmatprep.subr.mxu0 0.0
    %1507 = vmatpush1.msra.mxu0 %v1387
    %1508 = vmatprep.subr.mxu0 0.0
    %1509 = vmatpush1.msra.mxu0 %v1384
    %1510 = vmatprep.subr.mxu0 0.0
    %1511 = vmatpush1.msra.mxu0 %v1381
    %1512 = vmatprep.subr.mxu0 0.0
    %1513 = vmatpush1.msra.mxu0 %v1378
    %1514 = vmatprep.subr.mxu0 0.0
    %1515 = vmatpush1.msra.mxu0 %v1375
    %1516 = vmatprep.subr.mxu0 0.0
    %1517 = vmatpush1.msra.mxu0 %v1372
    %1518 = vmatprep.subr.mxu0 0.0
    %1519 = vmatpush1.msra.mxu0 %v1369
    %1520 = vmatprep.subr.mxu0 0.0
    %1521 = vmatpush1.msra.mxu0 %v1366
    %1522 = vmatprep.subr.mxu0 0.0
    %1523 = vmatpush1.msra.mxu0 %v1363
    %1524 = vmatprep.subr.mxu0 0.0
    %1525 = vmatpush1.msra.mxu0 %v1360
    %1526 = vmatprep.subr.mxu0 0.0
    %1527 = vmatpush2.msra.mxu0 0.0
    %1528 = vmatprep.subr.mxu0 0.0
    %1529 = vmatpush2.msra.mxu0 0.0
    %1530 = vmatprep.subr.mxu0 0.0
    %1531 = vmatpush2.msra.mxu0 0.0
    %1532 = vmatprep.subr.mxu0 0.0
    %1533 = vmatpush2.msra.mxu0 0.0
    %1534 = vmatprep.subr.mxu0 0.0
    %1535 = vmatpush2.msra.mxu0 0.0
    %1536 = vmatprep.subr.mxu0 0.0
    %1537 = vmatpush2.msra.mxu0 0.0
    %1538 = vmatprep.subr.mxu0 0.0
    %1539 = vmatpush2.msra.mxu0 0.0
    %1540 = vmatprep.subr.mxu0 0.0
    %1541 = vmatpush2.msra.mxu0 0.0
    %1542 = vmatprep.subr.mxu0 0.0
    %1543 = vmatpush2.msra.mxu0 0.0
    %1544 = vmatprep.subr.mxu0 0.0
    %1545 = vmatpush2.msra.mxu0 0.0
    %1546 = vmatprep.subr.mxu0 0.0
    %1547 = vmatpush2.msra.mxu0 0.0
    %1548 = vmatprep.subr.mxu0 0.0
    %1549 = vmatpush2.msra.mxu0 0.0
    %1550 = vmatprep.subr.mxu0 0.0
    %1551 = vmatpush2.msra.mxu0 0.0
    %1552 = vmatprep.subr.mxu0 0.0
    %1553 = vmatpush2.msra.mxu0 0.0
    %1554 = vmatprep.subr.mxu0 0.0
    %1555 = vmatpush2.msra.mxu0 0.0
    %1556 = vmatprep.subr.mxu0 0.0
    %1557 = vmatpush2.msra.mxu0 0.0
    %1558 = vmatprep.mubr.f32.mxu0 0.0
    %1559 = vmatmul.mubr.f32.gmra.mxu0 %v1353
    %v1560 = vpop.f32.mrf.mxu0
    %v1561 = vadd.f32 %v1419, %v1560
    %v1562 = vpop.f32.mrf.mxu0
    %1563 = vdwg.mxu0
    %v1564 = vadd.f32 %v1355, %v1490
    %v1565 = vxor.u32 %v1564, 2147483648
    %v1566 = vmul.f32 %v1565, 1.442695
    %v1567 = vpow.pop %v1566
    %v1568 = vadd.f32 %v1567, 1.0
    %v1569 = vrcp.pop %v1568
    %v1570 = vmul.f32 1.0, %v1569
    %v1571 = vadd.f32 %v1356, %v1492
    %v1572 = vxor.u32 %v1571, 2147483648
    %v1573 = vmul.f32 %v1572, 1.442695
    %v1574 = vpow.pop %v1573
    %v1575 = vadd.f32 %v1574, 1.0
    %v1576 = vrcp.pop %v1575
    %v1577 = vmul.f32 1.0, %v1576
    %v1578 = vmul.f32 %v1570, %v1561
    %v1579 = vadd.f32 %v1357, %v1578
    %v1580 = vtanh.pop %v1579
    %v1581 = vsub.f32 1.0, %v1577
    %v1582 = vmul.f32 %v1581, %v1580
    %v1583 = vmul.f32 %v1577, %v1353
    %v1584 = vadd.f32 %v1582, %v1583
    %1585 = vst [vmem:[#allocation3 + $0x20] sm:$0xff] %v1584
    %v1586 = vld [vmem:[#allocation2 + $0x78] sm:$0xff]
    %v1587 = vld [vmem:[#allocation2 + $0x80] sm:$0xff]
    %v1588 = vld [vmem:[#allocation2 + $0x88] sm:$0xff]
    %v1589 = vld [vmem:[#allocation5] sm:$0xff]
    %v1590 = vld [vmem:[#allocation5 + $0x8] sm:$0xff]
    %v1591 = vld [vmem:[#allocation5 + $0x10] sm:$0xff]
    %v1592 = vld [vmem:[#allocation5 + $0x18] sm:$0xff]
    %v1593 = vld [vmem:[#allocation5 + $0x20] sm:$0xff]
    %v1594 = vld [vmem:[#allocation5 + $0x28] sm:$0xff]
    %v1595 = vld [vmem:[#allocation5 + $0x30] sm:$0xff]
    %v1596 = vld [vmem:[#allocation5 + $0x38] sm:$0xff]
    %v1597 = vld [vmem:[#allocation5 + $0x40] sm:$0xff]
    %v1598 = vld [vmem:[#allocation5 + $0x48] sm:$0xff]
    %v1599 = vld [vmem:[#allocation5 + $0x50] sm:$0xff]
    %v1600 = vld [vmem:[#allocation5 + $0x58] sm:$0xff]
    %v1601 = vld [vmem:[#allocation5 + $0x60] sm:$0xff]
    %v1602 = vld [vmem:[#allocation5 + $0x68] sm:$0xff]
    %v1603 = vld [vmem:[#allocation5 + $0x70] sm:$0xff]
    %v1604 = vld [vmem:[#allocation5 + $0x78] sm:$0xff]
    %v1605 = vld [vmem:[#allocation5 + $0x80] sm:$0xff]
    %v1606 = vld [vmem:[#allocation5 + $0x88] sm:$0xff]
    %v1607 = vld [vmem:[#allocation5 + $0x90] sm:$0xff]
    %v1608 = vld [vmem:[#allocation5 + $0x98] sm:$0xff]
    %v1609 = vld [vmem:[#allocation5 + $0xa0] sm:$0xff]
    %v1610 = vld [vmem:[#allocation5 + $0xa8] sm:$0xff]
    %v1611 = vld [vmem:[#allocation5 + $0xb0] sm:$0xff]
    %v1612 = vld [vmem:[#allocation5 + $0xb8] sm:$0xff]
    %v1613 = vld [vmem:[#allocation5 + $0xc0] sm:$0xff]
    %v1614 = vld [vmem:[#allocation5 + $0xc8] sm:$0xff]
    %v1615 = vld [vmem:[#allocation5 + $0xd0] sm:$0xff]
    %v1616 = vld [vmem:[#allocation5 + $0xd8] sm:$0xff]
    %v1617 = vld [vmem:[#allocation5 + $0xe0] sm:$0xff]
    %v1618 = vld [vmem:[#allocation5 + $0xe8] sm:$0xff]
    %v1619 = vld [vmem:[#allocation5 + $0xf0] sm:$0xff]
    %v1620 = vld [vmem:[#allocation5 + $0xf8] sm:$0xff]
    %v1621 = vld [vmem:[#allocation5 + $0x100] sm:$0xff]
    %v1622 = vld [vmem:[#allocation5 + $0x108] sm:$0xff]
    %v1623 = vld [vmem:[#allocation5 + $0x110] sm:$0xff]
    %v1624 = vld [vmem:[#allocation5 + $0x118] sm:$0xff]
    %v1625 = vld [vmem:[#allocation5 + $0x120] sm:$0xff]
    %v1626 = vld [vmem:[#allocation5 + $0x128] sm:$0xff]
    %v1627 = vld [vmem:[#allocation5 + $0x130] sm:$0xff]
    %v1628 = vld [vmem:[#allocation5 + $0x138] sm:$0xff]
    %v1629 = vld [vmem:[#allocation5 + $0x140] sm:$0xff]
    %v1630 = vld [vmem:[#allocation5 + $0x148] sm:$0xff]
    %v1631 = vld [vmem:[#allocation5 + $0x150] sm:$0xff]
    %v1632 = vld [vmem:[#allocation5 + $0x158] sm:$0xff]
    %v1633 = vld [vmem:[#allocation5 + $0x160] sm:$0xff]
    %v1634 = vld [vmem:[#allocation5 + $0x168] sm:$0xff]
    %v1635 = vld [vmem:[#allocation5 + $0x170] sm:$0xff]
    %v1636 = vld [vmem:[#allocation5 + $0x178] sm:$0xff]
    %v1637 = vld [vmem:[%s4] sm:$0x7]
    %v1639 = vlaneseq
    %v1640 = vshrl.u32 %v1639, 7
    %v1641 = vsub.s32 0, %v1640
    %v1642 = vrot.slane %v1637, %v1641
    %v1643 = vlaneseq
    %v1644 = vshrl.u32 %v1643, 7
    %v1645 = vsub.s32 1, %v1644
    %v1646 = vrot.slane %v1637, %v1645
    %v1647 = vlaneseq
    %v1648 = vshrl.u32 %v1647, 7
    %v1649 = vsub.s32 2, %v1648
    %v1650 = vrot.slane %v1637, %v1649
    %1654 = vmatprep.subr.mxu0 %v1635
    %1655 = vmatpush1.msra.mxu0 %v1634
    %1656 = vmatprep.subr.mxu0 %v1632
    %1657 = vmatpush1.msra.mxu0 %v1631
    %1658 = vmatprep.subr.mxu0 %v1629
    %1659 = vmatpush1.msra.mxu0 %v1628
    %1660 = vmatprep.subr.mxu0 %v1626
    %1661 = vmatpush1.msra.mxu0 %v1625
    %1662 = vmatprep.subr.mxu0 %v1623
    %1663 = vmatpush1.msra.mxu0 %v1622
    %1664 = vmatprep.subr.mxu0 %v1620
    %1665 = vmatpush1.msra.mxu0 %v1619
    %1666 = vmatprep.subr.mxu0 %v1617
    %1667 = vmatpush1.msra.mxu0 %v1616
    %1668 = vmatprep.subr.mxu0 %v1614
    %1669 = vmatpush1.msra.mxu0 %v1613
    %1670 = vmatprep.subr.mxu0 %v1611
    %1671 = vmatpush1.msra.mxu0 %v1610
    %1672 = vmatprep.subr.mxu0 %v1608
    %1673 = vmatpush1.msra.mxu0 %v1607
    %1674 = vmatprep.subr.mxu0 %v1605
    %1675 = vmatpush1.msra.mxu0 %v1604
    %1676 = vmatprep.subr.mxu0 %v1602
    %1677 = vmatpush1.msra.mxu0 %v1601
    %1678 = vmatprep.subr.mxu0 %v1599
    %1679 = vmatpush1.msra.mxu0 %v1598
    %1680 = vmatprep.subr.mxu0 %v1596
    %1681 = vmatpush1.msra.mxu0 %v1595
    %1682 = vmatprep.subr.mxu0 %v1593
    %1683 = vmatpush1.msra.mxu0 %v1592
    %1684 = vmatprep.subr.mxu0 %v1590
    %1685 = vmatpush1.msra.mxu0 %v1589
    %1686 = vmatprep.subr.mxu0 0.0
    %1687 = vmatpush2.msra.mxu0 0.0
    %1688 = vmatprep.subr.mxu0 0.0
    %1689 = vmatpush2.msra.mxu0 0.0
    %1690 = vmatprep.subr.mxu0 0.0
    %1691 = vmatpush2.msra.mxu0 0.0
    %1692 = vmatprep.subr.mxu0 0.0
    %1693 = vmatpush2.msra.mxu0 0.0
    %1694 = vmatprep.subr.mxu0 0.0
    %1695 = vmatpush2.msra.mxu0 0.0
    %1696 = vmatprep.subr.mxu0 0.0
    %1697 = vmatpush2.msra.mxu0 0.0
    %1698 = vmatprep.subr.mxu0 0.0
    %1699 = vmatpush2.msra.mxu0 0.0
    %1700 = vmatprep.subr.mxu0 0.0
    %1701 = vmatpush2.msra.mxu0 0.0
    %1702 = vmatprep.subr.mxu0 0.0
    %1703 = vmatpush2.msra.mxu0 0.0
    %1704 = vmatprep.subr.mxu0 0.0
    %1705 = vmatpush2.msra.mxu0 0.0
    %1706 = vmatprep.subr.mxu0 0.0
    %1707 = vmatpush2.msra.mxu0 0.0
    %1708 = vmatprep.subr.mxu0 0.0
    %1709 = vmatpush2.msra.mxu0 0.0
    %1710 = vmatprep.subr.mxu0 0.0
    %1711 = vmatpush2.msra.mxu0 0.0
    %1712 = vmatprep.subr.mxu0 0.0
    %1713 = vmatpush2.msra.mxu0 0.0
    %1714 = vmatprep.subr.mxu0 0.0
    %1715 = vmatpush2.msra.mxu0 0.0
    %1716 = vmatprep.subr.mxu0 0.0
    %1717 = vmatpush2.msra.mxu0 0.0
    %1718 = vmatprep.mubr.f32.mxu0 0.0
    %1719 = vmatmul.mubr.f32.gmra.mxu0 %v1584
    %v1720 = vpop.f32.mrf.mxu0
    %v1721 = vadd.f32 %v1642, %v1720
    %v1722 = vpop.f32.mrf.mxu0
    %v1723 = vadd.f32 %v1646, %v1722
    %1724 = vdwg.mxu0
    %1725 = vmatprep.subr.mxu0 0.0
    %1726 = vmatpush1.msra.mxu0 %v1636
    %1727 = vmatprep.subr.mxu0 0.0
    %1728 = vmatpush1.msra.mxu0 %v1633
    %1729 = vmatprep.subr.mxu0 0.0
    %1730 = vmatpush1.msra.mxu0 %v1630
    %1731 = vmatprep.subr.mxu0 0.0
    %1732 = vmatpush1.msra.mxu0 %v1627
    %1733 = vmatprep.subr.mxu0 0.0
    %1734 = vmatpush1.msra.mxu0 %v1624
    %1735 = vmatprep.subr.mxu0 0.0
    %1736 = vmatpush1.msra.mxu0 %v1621
    %1737 = vmatprep.subr.mxu0 0.0
    %1738 = vmatpush1.msra.mxu0 %v1618
    %1739 = vmatprep.subr.mxu0 0.0
    %1740 = vmatpush1.msra.mxu0 %v1615
    %1741 = vmatprep.subr.mxu0 0.0
    %1742 = vmatpush1.msra.mxu0 %v1612
    %1743 = vmatprep.subr.mxu0 0.0
    %1744 = vmatpush1.msra.mxu0 %v1609
    %1745 = vmatprep.subr.mxu0 0.0
    %1746 = vmatpush1.msra.mxu0 %v1606
    %1747 = vmatprep.subr.mxu0 0.0
    %1748 = vmatpush1.msra.mxu0 %v1603
    %1749 = vmatprep.subr.mxu0 0.0
    %1750 = vmatpush1.msra.mxu0 %v1600
    %1751 = vmatprep.subr.mxu0 0.0
    %1752 = vmatpush1.msra.mxu0 %v1597
    %1753 = vmatprep.subr.mxu0 0.0
    %1754 = vmatpush1.msra.mxu0 %v1594
    %1755 = vmatprep.subr.mxu0 0.0
    %1756 = vmatpush1.msra.mxu0 %v1591
    %1757 = vmatprep.subr.mxu0 0.0
    %1758 = vmatpush2.msra.mxu0 0.0
    %1759 = vmatprep.subr.mxu0 0.0
    %1760 = vmatpush2.msra.mxu0 0.0
    %1761 = vmatprep.subr.mxu0 0.0
    %1762 = vmatpush2.msra.mxu0 0.0
    %1763 = vmatprep.subr.mxu0 0.0
    %1764 = vmatpush2.msra.mxu0 0.0
    %1765 = vmatprep.subr.mxu0 0.0
    %1766 = vmatpush2.msra.mxu0 0.0
    %1767 = vmatprep.subr.mxu0 0.0
    %1768 = vmatpush2.msra.mxu0 0.0
    %1769 = vmatprep.subr.mxu0 0.0
    %1770 = vmatpush2.msra.mxu0 0.0
    %1771 = vmatprep.subr.mxu0 0.0
    %1772 = vmatpush2.msra.mxu0 0.0
    %1773 = vmatprep.subr.mxu0 0.0
    %1774 = vmatpush2.msra.mxu0 0.0
    %1775 = vmatprep.subr.mxu0 0.0
    %1776 = vmatpush2.msra.mxu0 0.0
    %1777 = vmatprep.subr.mxu0 0.0
    %1778 = vmatpush2.msra.mxu0 0.0
    %1779 = vmatprep.subr.mxu0 0.0
    %1780 = vmatpush2.msra.mxu0 0.0
    %1781 = vmatprep.subr.mxu0 0.0
    %1782 = vmatpush2.msra.mxu0 0.0
    %1783 = vmatprep.subr.mxu0 0.0
    %1784 = vmatpush2.msra.mxu0 0.0
    %1785 = vmatprep.subr.mxu0 0.0
    %1786 = vmatpush2.msra.mxu0 0.0
    %1787 = vmatprep.subr.mxu0 0.0
    %1788 = vmatpush2.msra.mxu0 0.0
    %1789 = vmatprep.mubr.f32.mxu0 0.0
    %1790 = vmatmul.mubr.f32.gmra.mxu0 %v1584
    %v1791 = vpop.f32.mrf.mxu0
    %v1792 = vadd.f32 %v1650, %v1791
    %v1793 = vpop.f32.mrf.mxu0
    %1794 = vdwg.mxu0
    %v1795 = vadd.f32 %v1586, %v1721
    %v1796 = vxor.u32 %v1795, 2147483648
    %v1797 = vmul.f32 %v1796, 1.442695
    %v1798 = vpow.pop %v1797
    %v1799 = vadd.f32 %v1798, 1.0
    %v1800 = vrcp.pop %v1799
    %v1801 = vmul.f32 1.0, %v1800
    %v1802 = vadd.f32 %v1587, %v1723
    %v1803 = vxor.u32 %v1802, 2147483648
    %v1804 = vmul.f32 %v1803, 1.442695
    %v1805 = vpow.pop %v1804
    %v1806 = vadd.f32 %v1805, 1.0
    %v1807 = vrcp.pop %v1806
    %v1808 = vmul.f32 1.0, %v1807
    %v1809 = vmul.f32 %v1801, %v1792
    %v1810 = vadd.f32 %v1588, %v1809
    %v1811 = vtanh.pop %v1810
    %v1812 = vsub.f32 1.0, %v1808
    %v1813 = vmul.f32 %v1812, %v1811
    %v1814 = vmul.f32 %v1808, %v1584
    %v1815 = vadd.f32 %v1813, %v1814
    %1816 = vst [vmem:[#allocation3 + $0x28] sm:$0xff] %v1815
    %v1817 = vld [vmem:[#allocation2 + $0x90] sm:$0xff]
    %v1818 = vld [vmem:[#allocation2 + $0x98] sm:$0xff]
    %v1819 = vld [vmem:[#allocation2 + $0xa0] sm:$0xff]
    %v1820 = vld [vmem:[#allocation5] sm:$0xff]
    %v1821 = vld [vmem:[#allocation5 + $0x8] sm:$0xff]
    %v1822 = vld [vmem:[#allocation5 + $0x10] sm:$0xff]
    %v1823 = vld [vmem:[#allocation5 + $0x18] sm:$0xff]
    %v1824 = vld [vmem:[#allocation5 + $0x20] sm:$0xff]
    %v1825 = vld [vmem:[#allocation5 + $0x28] sm:$0xff]
    %v1826 = vld [vmem:[#allocation5 + $0x30] sm:$0xff]
    %v1827 = vld [vmem:[#allocation5 + $0x38] sm:$0xff]
    %v1828 = vld [vmem:[#allocation5 + $0x40] sm:$0xff]
    %v1829 = vld [vmem:[#allocation5 + $0x48] sm:$0xff]
    %v1830 = vld [vmem:[#allocation5 + $0x50] sm:$0xff]
    %v1831 = vld [vmem:[#allocation5 + $0x58] sm:$0xff]
    %v1832 = vld [vmem:[#allocation5 + $0x60] sm:$0xff]
    %v1833 = vld [vmem:[#allocation5 + $0x68] sm:$0xff]
    %v1834 = vld [vmem:[#allocation5 + $0x70] sm:$0xff]
    %v1835 = vld [vmem:[#allocation5 + $0x78] sm:$0xff]
    %v1836 = vld [vmem:[#allocation5 + $0x80] sm:$0xff]
    %v1837 = vld [vmem:[#allocation5 + $0x88] sm:$0xff]
    %v1838 = vld [vmem:[#allocation5 + $0x90] sm:$0xff]
    %v1839 = vld [vmem:[#allocation5 + $0x98] sm:$0xff]
    %v1840 = vld [vmem:[#allocation5 + $0xa0] sm:$0xff]
    %v1841 = vld [vmem:[#allocation5 + $0xa8] sm:$0xff]
    %v1842 = vld [vmem:[#allocation5 + $0xb0] sm:$0xff]
    %v1843 = vld [vmem:[#allocation5 + $0xb8] sm:$0xff]
    %v1844 = vld [vmem:[#allocation5 + $0xc0] sm:$0xff]
    %v1845 = vld [vmem:[#allocation5 + $0xc8] sm:$0xff]
    %v1846 = vld [vmem:[#allocation5 + $0xd0] sm:$0xff]
    %v1847 = vld [vmem:[#allocation5 + $0xd8] sm:$0xff]
    %v1848 = vld [vmem:[#allocation5 + $0xe0] sm:$0xff]
    %v1849 = vld [vmem:[#allocation5 + $0xe8] sm:$0xff]
    %v1850 = vld [vmem:[#allocation5 + $0xf0] sm:$0xff]
    %v1851 = vld [vmem:[#allocation5 + $0xf8] sm:$0xff]
    %v1852 = vld [vmem:[#allocation5 + $0x100] sm:$0xff]
    %v1853 = vld [vmem:[#allocation5 + $0x108] sm:$0xff]
    %v1854 = vld [vmem:[#allocation5 + $0x110] sm:$0xff]
    %v1855 = vld [vmem:[#allocation5 + $0x118] sm:$0xff]
    %v1856 = vld [vmem:[#allocation5 + $0x120] sm:$0xff]
    %v1857 = vld [vmem:[#allocation5 + $0x128] sm:$0xff]
    %v1858 = vld [vmem:[#allocation5 + $0x130] sm:$0xff]
    %v1859 = vld [vmem:[#allocation5 + $0x138] sm:$0xff]
    %v1860 = vld [vmem:[#allocation5 + $0x140] sm:$0xff]
    %v1861 = vld [vmem:[#allocation5 + $0x148] sm:$0xff]
    %v1862 = vld [vmem:[#allocation5 + $0x150] sm:$0xff]
    %v1863 = vld [vmem:[#allocation5 + $0x158] sm:$0xff]
    %v1864 = vld [vmem:[#allocation5 + $0x160] sm:$0xff]
    %v1865 = vld [vmem:[#allocation5 + $0x168] sm:$0xff]
    %v1866 = vld [vmem:[#allocation5 + $0x170] sm:$0xff]
    %v1867 = vld [vmem:[#allocation5 + $0x178] sm:$0xff]
    %v1868 = vld [vmem:[%s4] sm:$0x7]
    %v1870 = vlaneseq
    %v1871 = vshrl.u32 %v1870, 7
    %v1872 = vsub.s32 0, %v1871
    %v1873 = vrot.slane %v1868, %v1872
    %v1874 = vlaneseq
    %v1875 = vshrl.u32 %v1874, 7
    %v1876 = vsub.s32 1, %v1875
    %v1877 = vrot.slane %v1868, %v1876
    %v1878 = vlaneseq
    %v1879 = vshrl.u32 %v1878, 7
    %v1880 = vsub.s32 2, %v1879
    %v1881 = vrot.slane %v1868, %v1880
    %1885 = vmatprep.subr.mxu0 %v1866
    %1886 = vmatpush1.msra.mxu0 %v1865
    %1887 = vmatprep.subr.mxu0 %v1863
    %1888 = vmatpush1.msra.mxu0 %v1862
    %1889 = vmatprep.subr.mxu0 %v1860
    %1890 = vmatpush1.msra.mxu0 %v1859
    %1891 = vmatprep.subr.mxu0 %v1857
    %1892 = vmatpush1.msra.mxu0 %v1856
    %1893 = vmatprep.subr.mxu0 %v1854
    %1894 = vmatpush1.msra.mxu0 %v1853
    %1895 = vmatprep.subr.mxu0 %v1851
    %1896 = vmatpush1.msra.mxu0 %v1850
    %1897 = vmatprep.subr.mxu0 %v1848
    %1898 = vmatpush1.msra.mxu0 %v1847
    %1899 = vmatprep.subr.mxu0 %v1845
    %1900 = vmatpush1.msra.mxu0 %v1844
    %1901 = vmatprep.subr.mxu0 %v1842
    %1902 = vmatpush1.msra.mxu0 %v1841
    %1903 = vmatprep.subr.mxu0 %v1839
    %1904 = vmatpush1.msra.mxu0 %v1838
    %1905 = vmatprep.subr.mxu0 %v1836
    %1906 = vmatpush1.msra.mxu0 %v1835
    %1907 = vmatprep.subr.mxu0 %v1833
    %1908 = vmatpush1.msra.mxu0 %v1832
    %1909 = vmatprep.subr.mxu0 %v1830
    %1910 = vmatpush1.msra.mxu0 %v1829
    %1911 = vmatprep.subr.mxu0 %v1827
    %1912 = vmatpush1.msra.mxu0 %v1826
    %1913 = vmatprep.subr.mxu0 %v1824
    %1914 = vmatpush1.msra.mxu0 %v1823
    %1915 = vmatprep.subr.mxu0 %v1821
    %1916 = vmatpush1.msra.mxu0 %v1820
    %1917 = vmatprep.subr.mxu0 0.0
    %1918 = vmatpush2.msra.mxu0 0.0
    %1919 = vmatprep.subr.mxu0 0.0
    %1920 = vmatpush2.msra.mxu0 0.0
    %1921 = vmatprep.subr.mxu0 0.0
    %1922 = vmatpush2.msra.mxu0 0.0
    %1923 = vmatprep.subr.mxu0 0.0
    %1924 = vmatpush2.msra.mxu0 0.0
    %1925 = vmatprep.subr.mxu0 0.0
    %1926 = vmatpush2.msra.mxu0 0.0
    %1927 = vmatprep.subr.mxu0 0.0
    %1928 = vmatpush2.msra.mxu0 0.0
    %1929 = vmatprep.subr.mxu0 0.0
    %1930 = vmatpush2.msra.mxu0 0.0
    %1931 = vmatprep.subr.mxu0 0.0
    %1932 = vmatpush2.msra.mxu0 0.0
    %1933 = vmatprep.subr.mxu0 0.0
    %1934 = vmatpush2.msra.mxu0 0.0
    %1935 = vmatprep.subr.mxu0 0.0
    %1936 = vmatpush2.msra.mxu0 0.0
    %1937 = vmatprep.subr.mxu0 0.0
    %1938 = vmatpush2.msra.mxu0 0.0
    %1939 = vmatprep.subr.mxu0 0.0
    %1940 = vmatpush2.msra.mxu0 0.0
    %1941 = vmatprep.subr.mxu0 0.0
    %1942 = vmatpush2.msra.mxu0 0.0
    %1943 = vmatprep.subr.mxu0 0.0
    %1944 = vmatpush2.msra.mxu0 0.0
    %1945 = vmatprep.subr.mxu0 0.0
    %1946 = vmatpush2.msra.mxu0 0.0
    %1947 = vmatprep.subr.mxu0 0.0
    %1948 = vmatpush2.msra.mxu0 0.0
    %1949 = vmatprep.mubr.f32.mxu0 0.0
    %1950 = vmatmul.mubr.f32.gmra.mxu0 %v1815
    %v1951 = vpop.f32.mrf.mxu0
    %v1952 = vadd.f32 %v1873, %v1951
    %v1953 = vpop.f32.mrf.mxu0
    %v1954 = vadd.f32 %v1877, %v1953
    %1955 = vdwg.mxu0
    %1956 = vmatprep.subr.mxu0 0.0
    %1957 = vmatpush1.msra.mxu0 %v1867
    %1958 = vmatprep.subr.mxu0 0.0
    %1959 = vmatpush1.msra.mxu0 %v1864
    %1960 = vmatprep.subr.mxu0 0.0
    %1961 = vmatpush1.msra.mxu0 %v1861
    %1962 = vmatprep.subr.mxu0 0.0
    %1963 = vmatpush1.msra.mxu0 %v1858
    %1964 = vmatprep.subr.mxu0 0.0
    %1965 = vmatpush1.msra.mxu0 %v1855
    %1966 = vmatprep.subr.mxu0 0.0
    %1967 = vmatpush1.msra.mxu0 %v1852
    %1968 = vmatprep.subr.mxu0 0.0
    %1969 = vmatpush1.msra.mxu0 %v1849
    %1970 = vmatprep.subr.mxu0 0.0
    %1971 = vmatpush1.msra.mxu0 %v1846
    %1972 = vmatprep.subr.mxu0 0.0
    %1973 = vmatpush1.msra.mxu0 %v1843
    %1974 = vmatprep.subr.mxu0 0.0
    %1975 = vmatpush1.msra.mxu0 %v1840
    %1976 = vmatprep.subr.mxu0 0.0
    %1977 = vmatpush1.msra.mxu0 %v1837
    %1978 = vmatprep.subr.mxu0 0.0
    %1979 = vmatpush1.msra.mxu0 %v1834
    %1980 = vmatprep.subr.mxu0 0.0
    %1981 = vmatpush1.msra.mxu0 %v1831
    %1982 = vmatprep.subr.mxu0 0.0
    %1983 = vmatpush1.msra.mxu0 %v1828
    %1984 = vmatprep.subr.mxu0 0.0
    %1985 = vmatpush1.msra.mxu0 %v1825
    %1986 = vmatprep.subr.mxu0 0.0
    %1987 = vmatpush1.msra.mxu0 %v1822
    %1988 = vmatprep.subr.mxu0 0.0
    %1989 = vmatpush2.msra.mxu0 0.0
    %1990 = vmatprep.subr.mxu0 0.0
    %1991 = vmatpush2.msra.mxu0 0.0
    %1992 = vmatprep.subr.mxu0 0.0
    %1993 = vmatpush2.msra.mxu0 0.0
    %1994 = vmatprep.subr.mxu0 0.0
    %1995 = vmatpush2.msra.mxu0 0.0
    %1996 = vmatprep.subr.mxu0 0.0
    %1997 = vmatpush2.msra.mxu0 0.0
    %1998 = vmatprep.subr.mxu0 0.0
    %1999 = vmatpush2.msra.mxu0 0.0
    %2000 = vmatprep.subr.mxu0 0.0
    %2001 = vmatpush2.msra.mxu0 0.0
    %2002 = vmatprep.subr.mxu0 0.0
    %2003 = vmatpush2.msra.mxu0 0.0
    %2004 = vmatprep.subr.mxu0 0.0
    %2005 = vmatpush2.msra.mxu0 0.0
    %2006 = vmatprep.subr.mxu0 0.0
    %2007 = vmatpush2.msra.mxu0 0.0
    %2008 = vmatprep.subr.mxu0 0.0
    %2009 = vmatpush2.msra.mxu0 0.0
    %2010 = vmatprep.subr.mxu0 0.0
    %2011 = vmatpush2.msra.mxu0 0.0
    %2012 = vmatprep.subr.mxu0 0.0
    %2013 = vmatpush2.msra.mxu0 0.0
    %2014 = vmatprep.subr.mxu0 0.0
    %2015 = vmatpush2.msra.mxu0 0.0
    %2016 = vmatprep.subr.mxu0 0.0
    %2017 = vmatpush2.msra.mxu0 0.0
    %2018 = vmatprep.subr.mxu0 0.0
    %2019 = vmatpush2.msra.mxu0 0.0
    %2020 = vmatprep.mubr.f32.mxu0 0.0
    %2021 = vmatmul.mubr.f32.gmra.mxu0 %v1815
    %v2022 = vpop.f32.mrf.mxu0
    %v2023 = vadd.f32 %v1881, %v2022
    %v2024 = vpop.f32.mrf.mxu0
    %2025 = vdwg.mxu0
    %v2026 = vadd.f32 %v1817, %v1952
    %v2027 = vxor.u32 %v2026, 2147483648
    %v2028 = vmul.f32 %v2027, 1.442695
    %v2029 = vpow.pop %v2028
    %v2030 = vadd.f32 %v2029, 1.0
    %v2031 = vrcp.pop %v2030
    %v2032 = vmul.f32 1.0, %v2031
    %v2033 = vadd.f32 %v1818, %v1954
    %v2034 = vxor.u32 %v2033, 2147483648
    %v2035 = vmul.f32 %v2034, 1.442695
    %v2036 = vpow.pop %v2035
    %v2037 = vadd.f32 %v2036, 1.0
    %v2038 = vrcp.pop %v2037
    %v2039 = vmul.f32 1.0, %v2038
    %v2040 = vmul.f32 %v2032, %v2023
    %v2041 = vadd.f32 %v1819, %v2040
    %v2042 = vtanh.pop %v2041
    %v2043 = vsub.f32 1.0, %v2039
    %v2044 = vmul.f32 %v2043, %v2042
    %v2045 = vmul.f32 %v2039, %v1815
    %v2046 = vadd.f32 %v2044, %v2045
    %2047 = vst [vmem:[#allocation3 + $0x30] sm:$0xff] %v2046
    %v2048 = vld [vmem:[#allocation2 + $0xa8] sm:$0xff]
    %v2049 = vld [vmem:[#allocation2 + $0xb0] sm:$0xff]
    %v2050 = vld [vmem:[#allocation2 + $0xb8] sm:$0xff]
    %v2051 = vld [vmem:[#allocation5] sm:$0xff]
    %v2052 = vld [vmem:[#allocation5 + $0x8] sm:$0xff]
    %v2053 = vld [vmem:[#allocation5 + $0x10] sm:$0xff]
    %v2054 = vld [vmem:[#allocation5 + $0x18] sm:$0xff]
    %v2055 = vld [vmem:[#allocation5 + $0x20] sm:$0xff]
    %v2056 = vld [vmem:[#allocation5 + $0x28] sm:$0xff]
    %v2057 = vld [vmem:[#allocation5 + $0x30] sm:$0xff]
    %v2058 = vld [vmem:[#allocation5 + $0x38] sm:$0xff]
    %v2059 = vld [vmem:[#allocation5 + $0x40] sm:$0xff]
    %v2060 = vld [vmem:[#allocation5 + $0x48] sm:$0xff]
    %v2061 = vld [vmem:[#allocation5 + $0x50] sm:$0xff]
    %v2062 = vld [vmem:[#allocation5 + $0x58] sm:$0xff]
    %v2063 = vld [vmem:[#allocation5 + $0x60] sm:$0xff]
    %v2064 = vld [vmem:[#allocation5 + $0x68] sm:$0xff]
    %v2065 = vld [vmem:[#allocation5 + $0x70] sm:$0xff]
    %v2066 = vld [vmem:[#allocation5 + $0x78] sm:$0xff]
    %v2067 = vld [vmem:[#allocation5 + $0x80] sm:$0xff]
    %v2068 = vld [vmem:[#allocation5 + $0x88] sm:$0xff]
    %v2069 = vld [vmem:[#allocation5 + $0x90] sm:$0xff]
    %v2070 = vld [vmem:[#allocation5 + $0x98] sm:$0xff]
    %v2071 = vld [vmem:[#allocation5 + $0xa0] sm:$0xff]
    %v2072 = vld [vmem:[#allocation5 + $0xa8] sm:$0xff]
    %v2073 = vld [vmem:[#allocation5 + $0xb0] sm:$0xff]
    %v2074 = vld [vmem:[#allocation5 + $0xb8] sm:$0xff]
    %v2075 = vld [vmem:[#allocation5 + $0xc0] sm:$0xff]
    %v2076 = vld [vmem:[#allocation5 + $0xc8] sm:$0xff]
    %v2077 = vld [vmem:[#allocation5 + $0xd0] sm:$0xff]
    %v2078 = vld [vmem:[#allocation5 + $0xd8] sm:$0xff]
    %v2079 = vld [vmem:[#allocation5 + $0xe0] sm:$0xff]
    %v2080 = vld [vmem:[#allocation5 + $0xe8] sm:$0xff]
    %v2081 = vld [vmem:[#allocation5 + $0xf0] sm:$0xff]
    %v2082 = vld [vmem:[#allocation5 + $0xf8] sm:$0xff]
    %v2083 = vld [vmem:[#allocation5 + $0x100] sm:$0xff]
    %v2084 = vld [vmem:[#allocation5 + $0x108] sm:$0xff]
    %v2085 = vld [vmem:[#allocation5 + $0x110] sm:$0xff]
    %v2086 = vld [vmem:[#allocation5 + $0x118] sm:$0xff]
    %v2087 = vld [vmem:[#allocation5 + $0x120] sm:$0xff]
    %v2088 = vld [vmem:[#allocation5 + $0x128] sm:$0xff]
    %v2089 = vld [vmem:[#allocation5 + $0x130] sm:$0xff]
    %v2090 = vld [vmem:[#allocation5 + $0x138] sm:$0xff]
    %v2091 = vld [vmem:[#allocation5 + $0x140] sm:$0xff]
    %v2092 = vld [vmem:[#allocation5 + $0x148] sm:$0xff]
    %v2093 = vld [vmem:[#allocation5 + $0x150] sm:$0xff]
    %v2094 = vld [vmem:[#allocation5 + $0x158] sm:$0xff]
    %v2095 = vld [vmem:[#allocation5 + $0x160] sm:$0xff]
    %v2096 = vld [vmem:[#allocation5 + $0x168] sm:$0xff]
    %v2097 = vld [vmem:[#allocation5 + $0x170] sm:$0xff]
    %v2098 = vld [vmem:[#allocation5 + $0x178] sm:$0xff]
    %v2099 = vld [vmem:[%s4] sm:$0x7]
    %v2101 = vlaneseq
    %v2102 = vshrl.u32 %v2101, 7
    %v2103 = vsub.s32 0, %v2102
    %v2104 = vrot.slane %v2099, %v2103
    %v2105 = vlaneseq
    %v2106 = vshrl.u32 %v2105, 7
    %v2107 = vsub.s32 1, %v2106
    %v2108 = vrot.slane %v2099, %v2107
    %v2109 = vlaneseq
    %v2110 = vshrl.u32 %v2109, 7
    %v2111 = vsub.s32 2, %v2110
    %v2112 = vrot.slane %v2099, %v2111
    %2116 = vmatprep.subr.mxu0 %v2097
    %2117 = vmatpush1.msra.mxu0 %v2096
    %2118 = vmatprep.subr.mxu0 %v2094
    %2119 = vmatpush1.msra.mxu0 %v2093
    %2120 = vmatprep.subr.mxu0 %v2091
    %2121 = vmatpush1.msra.mxu0 %v2090
    %2122 = vmatprep.subr.mxu0 %v2088
    %2123 = vmatpush1.msra.mxu0 %v2087
    %2124 = vmatprep.subr.mxu0 %v2085
    %2125 = vmatpush1.msra.mxu0 %v2084
    %2126 = vmatprep.subr.mxu0 %v2082
    %2127 = vmatpush1.msra.mxu0 %v2081
    %2128 = vmatprep.subr.mxu0 %v2079
    %2129 = vmatpush1.msra.mxu0 %v2078
    %2130 = vmatprep.subr.mxu0 %v2076
    %2131 = vmatpush1.msra.mxu0 %v2075
    %2132 = vmatprep.subr.mxu0 %v2073
    %2133 = vmatpush1.msra.mxu0 %v2072
    %2134 = vmatprep.subr.mxu0 %v2070
    %2135 = vmatpush1.msra.mxu0 %v2069
    %2136 = vmatprep.subr.mxu0 %v2067
    %2137 = vmatpush1.msra.mxu0 %v2066
    %2138 = vmatprep.subr.mxu0 %v2064
    %2139 = vmatpush1.msra.mxu0 %v2063
    %2140 = vmatprep.subr.mxu0 %v2061
    %2141 = vmatpush1.msra.mxu0 %v2060
    %2142 = vmatprep.subr.mxu0 %v2058
    %2143 = vmatpush1.msra.mxu0 %v2057
    %2144 = vmatprep.subr.mxu0 %v2055
    %2145 = vmatpush1.msra.mxu0 %v2054
    %2146 = vmatprep.subr.mxu0 %v2052
    %2147 = vmatpush1.msra.mxu0 %v2051
    %2148 = vmatprep.subr.mxu0 0.0
    %2149 = vmatpush2.msra.mxu0 0.0
    %2150 = vmatprep.subr.mxu0 0.0
    %2151 = vmatpush2.msra.mxu0 0.0
    %2152 = vmatprep.subr.mxu0 0.0
    %2153 = vmatpush2.msra.mxu0 0.0
    %2154 = vmatprep.subr.mxu0 0.0
    %2155 = vmatpush2.msra.mxu0 0.0
    %2156 = vmatprep.subr.mxu0 0.0
    %2157 = vmatpush2.msra.mxu0 0.0
    %2158 = vmatprep.subr.mxu0 0.0
    %2159 = vmatpush2.msra.mxu0 0.0
    %2160 = vmatprep.subr.mxu0 0.0
    %2161 = vmatpush2.msra.mxu0 0.0
    %2162 = vmatprep.subr.mxu0 0.0
    %2163 = vmatpush2.msra.mxu0 0.0
    %2164 = vmatprep.subr.mxu0 0.0
    %2165 = vmatpush2.msra.mxu0 0.0
    %2166 = vmatprep.subr.mxu0 0.0
    %2167 = vmatpush2.msra.mxu0 0.0
    %2168 = vmatprep.subr.mxu0 0.0
    %2169 = vmatpush2.msra.mxu0 0.0
    %2170 = vmatprep.subr.mxu0 0.0
    %2171 = vmatpush2.msra.mxu0 0.0
    %2172 = vmatprep.subr.mxu0 0.0
    %2173 = vmatpush2.msra.mxu0 0.0
    %2174 = vmatprep.subr.mxu0 0.0
    %2175 = vmatpush2.msra.mxu0 0.0
    %2176 = vmatprep.subr.mxu0 0.0
    %2177 = vmatpush2.msra.mxu0 0.0
    %2178 = vmatprep.subr.mxu0 0.0
    %2179 = vmatpush2.msra.mxu0 0.0
    %2180 = vmatprep.mubr.f32.mxu0 0.0
    %2181 = vmatmul.mubr.f32.gmra.mxu0 %v2046
    %v2182 = vpop.f32.mrf.mxu0
    %v2183 = vadd.f32 %v2104, %v2182
    %v2184 = vpop.f32.mrf.mxu0
    %v2185 = vadd.f32 %v2108, %v2184
    %2186 = vdwg.mxu0
    %2187 = vmatprep.subr.mxu0 0.0
    %2188 = vmatpush1.msra.mxu0 %v2098
    %2189 = vmatprep.subr.mxu0 0.0
    %2190 = vmatpush1.msra.mxu0 %v2095
    %2191 = vmatprep.subr.mxu0 0.0
    %2192 = vmatpush1.msra.mxu0 %v2092
    %2193 = vmatprep.subr.mxu0 0.0
    %2194 = vmatpush1.msra.mxu0 %v2089
    %2195 = vmatprep.subr.mxu0 0.0
    %2196 = vmatpush1.msra.mxu0 %v2086
    %2197 = vmatprep.subr.mxu0 0.0
    %2198 = vmatpush1.msra.mxu0 %v2083
    %2199 = vmatprep.subr.mxu0 0.0
    %2200 = vmatpush1.msra.mxu0 %v2080
    %2201 = vmatprep.subr.mxu0 0.0
    %2202 = vmatpush1.msra.mxu0 %v2077
    %2203 = vmatprep.subr.mxu0 0.0
    %2204 = vmatpush1.msra.mxu0 %v2074
    %2205 = vmatprep.subr.mxu0 0.0
    %2206 = vmatpush1.msra.mxu0 %v2071
    %2207 = vmatprep.subr.mxu0 0.0
    %2208 = vmatpush1.msra.mxu0 %v2068
    %2209 = vmatprep.subr.mxu0 0.0
    %2210 = vmatpush1.msra.mxu0 %v2065
    %2211 = vmatprep.subr.mxu0 0.0
    %2212 = vmatpush1.msra.mxu0 %v2062
    %2213 = vmatprep.subr.mxu0 0.0
    %2214 = vmatpush1.msra.mxu0 %v2059
    %2215 = vmatprep.subr.mxu0 0.0
    %2216 = vmatpush1.msra.mxu0 %v2056
    %2217 = vmatprep.subr.mxu0 0.0
    %2218 = vmatpush1.msra.mxu0 %v2053
    %2219 = vmatprep.subr.mxu0 0.0
    %2220 = vmatpush2.msra.mxu0 0.0
    %2221 = vmatprep.subr.mxu0 0.0
    %2222 = vmatpush2.msra.mxu0 0.0
    %2223 = vmatprep.subr.mxu0 0.0
    %2224 = vmatpush2.msra.mxu0 0.0
    %2225 = vmatprep.subr.mxu0 0.0
    %2226 = vmatpush2.msra.mxu0 0.0
    %2227 = vmatprep.subr.mxu0 0.0
    %2228 = vmatpush2.msra.mxu0 0.0
    %2229 = vmatprep.subr.mxu0 0.0
    %2230 = vmatpush2.msra.mxu0 0.0
    %2231 = vmatprep.subr.mxu0 0.0
    %2232 = vmatpush2.msra.mxu0 0.0
    %2233 = vmatprep.subr.mxu0 0.0
    %2234 = vmatpush2.msra.mxu0 0.0
    %2235 = vmatprep.subr.mxu0 0.0
    %2236 = vmatpush2.msra.mxu0 0.0
    %2237 = vmatprep.subr.mxu0 0.0
    %2238 = vmatpush2.msra.mxu0 0.0
    %2239 = vmatprep.subr.mxu0 0.0
    %2240 = vmatpush2.msra.mxu0 0.0
    %2241 = vmatprep.subr.mxu0 0.0
    %2242 = vmatpush2.msra.mxu0 0.0
    %2243 = vmatprep.subr.mxu0 0.0
    %2244 = vmatpush2.msra.mxu0 0.0
    %2245 = vmatprep.subr.mxu0 0.0
    %2246 = vmatpush2.msra.mxu0 0.0
    %2247 = vmatprep.subr.mxu0 0.0
    %2248 = vmatpush2.msra.mxu0 0.0
    %2249 = vmatprep.subr.mxu0 0.0
    %2250 = vmatpush2.msra.mxu0 0.0
    %2251 = vmatprep.mubr.f32.mxu0 0.0
    %2252 = vmatmul.mubr.f32.gmra.mxu0 %v2046
    %v2253 = vpop.f32.mrf.mxu0
    %v2254 = vadd.f32 %v2112, %v2253
    %v2255 = vpop.f32.mrf.mxu0
    %2256 = vdwg.mxu0
    %v2257 = vadd.f32 %v2048, %v2183
    %v2258 = vxor.u32 %v2257, 2147483648
    %v2259 = vmul.f32 %v2258, 1.442695
    %v2260 = vpow.pop %v2259
    %v2261 = vadd.f32 %v2260, 1.0
    %v2262 = vrcp.pop %v2261
    %v2263 = vmul.f32 1.0, %v2262
    %v2264 = vadd.f32 %v2049, %v2185
    %v2265 = vxor.u32 %v2264, 2147483648
    %v2266 = vmul.f32 %v2265, 1.442695
    %v2267 = vpow.pop %v2266
    %v2268 = vadd.f32 %v2267, 1.0
    %v2269 = vrcp.pop %v2268
    %v2270 = vmul.f32 1.0, %v2269
    %v2271 = vmul.f32 %v2263, %v2254
    %v2272 = vadd.f32 %v2050, %v2271
    %v2273 = vtanh.pop %v2272
    %v2274 = vsub.f32 1.0, %v2270
    %v2275 = vmul.f32 %v2274, %v2273
    %v2276 = vmul.f32 %v2270, %v2046
    %v2277 = vadd.f32 %v2275, %v2276
    %2278 = vst [vmem:[#allocation3 + $0x38] sm:$0xff] %v2277
    %v2279 = vld [vmem:[#allocation3] sm:$0xff]
    %v2280 = vld [vmem:[#allocation3 + $0x8] sm:$0xff]
    %v2281 = vld [vmem:[#allocation3 + $0x10] sm:$0xff]
    %v2282 = vld [vmem:[#allocation3 + $0x18] sm:$0xff]
    %v2283 = vld [vmem:[#allocation3 + $0x20] sm:$0xff]
    %v2284 = vld [vmem:[#allocation3 + $0x28] sm:$0xff]
    %v2285 = vld [vmem:[#allocation3 + $0x30] sm:$0xff]
    %v2286 = vld [vmem:[#allocation3 + $0x38] sm:$0xff]
    %v2287 = vld [vmem:[#allocation7] sm:$0xff]
    %v2288 = vld [vmem:[#allocation7 + $0x8] sm:$0xff]
    %v2289 = vld [vmem:[#allocation7 + $0x10] sm:$0xff]
    %v2290 = vld [vmem:[#allocation7 + $0x18] sm:$0xff]
    %v2291 = vld [vmem:[#allocation7 + $0x20] sm:$0xff]
    %v2292 = vld [vmem:[#allocation7 + $0x28] sm:$0xff]
    %v2293 = vld [vmem:[#allocation7 + $0x30] sm:$0xff]
    %v2294 = vld [vmem:[#allocation7 + $0x38] sm:$0xff]
    %v2295 = vld [vmem:[#allocation7 + $0x40] sm:$0xff]
    %v2296 = vld [vmem:[#allocation7 + $0x48] sm:$0xff]
    %v2297 = vld [vmem:[#allocation7 + $0x50] sm:$0xff]
    %v2298 = vld [vmem:[#allocation7 + $0x58] sm:$0xff]
    %v2299 = vld [vmem:[#allocation7 + $0x60] sm:$0xff]
    %v2300 = vld [vmem:[#allocation7 + $0x68] sm:$0xff]
    %v2301 = vld [vmem:[#allocation7 + $0x70] sm:$0xff]
    %v2302 = vld [vmem:[#allocation7 + $0x78] sm:$0xff]
    %v2303 = vld [vmem:[#allocation7 + $0x80] sm:$0xff]
    %v2304 = vld [vmem:[#allocation7 + $0x88] sm:$0xff]
    %v2305 = vld [vmem:[#allocation7 + $0x90] sm:$0xff]
    %v2306 = vld [vmem:[#allocation7 + $0x98] sm:$0xff]
    %v2307 = vld [vmem:[#allocation7 + $0xa0] sm:$0xff]
    %v2308 = vld [vmem:[#allocation7 + $0xa8] sm:$0xff]
    %v2309 = vld [vmem:[#allocation7 + $0xb0] sm:$0xff]
    %v2310 = vld [vmem:[#allocation7 + $0xb8] sm:$0xff]
    %v2311 = vld [vmem:[#allocation7 + $0xc0] sm:$0xff]
    %v2312 = vld [vmem:[#allocation7 + $0xc8] sm:$0xff]
    %v2313 = vld [vmem:[#allocation7 + $0xd0] sm:$0xff]
    %v2314 = vld [vmem:[#allocation7 + $0xd8] sm:$0xff]
    %v2315 = vld [vmem:[#allocation7 + $0xe0] sm:$0xff]
    %v2316 = vld [vmem:[#allocation7 + $0xe8] sm:$0xff]
    %v2317 = vld [vmem:[#allocation7 + $0xf0] sm:$0xff]
    %v2318 = vld [vmem:[#allocation7 + $0xf8] sm:$0xff]
    %v2319 = vld [vmem:[#allocation7 + $0x100] sm:$0xff]
    %v2320 = vld [vmem:[#allocation7 + $0x108] sm:$0xff]
    %v2321 = vld [vmem:[#allocation7 + $0x110] sm:$0xff]
    %v2322 = vld [vmem:[#allocation7 + $0x118] sm:$0xff]
    %v2323 = vld [vmem:[#allocation7 + $0x120] sm:$0xff]
    %v2324 = vld [vmem:[#allocation7 + $0x128] sm:$0xff]
    %v2325 = vld [vmem:[#allocation7 + $0x130] sm:$0xff]
    %v2326 = vld [vmem:[#allocation7 + $0x138] sm:$0xff]
    %v2327 = vld [vmem:[#allocation7 + $0x140] sm:$0xff]
    %v2328 = vld [vmem:[#allocation7 + $0x148] sm:$0xff]
    %v2329 = vld [vmem:[#allocation7 + $0x150] sm:$0xff]
    %v2330 = vld [vmem:[#allocation7 + $0x158] sm:$0xff]
    %v2331 = vld [vmem:[#allocation7 + $0x160] sm:$0xff]
    %v2332 = vld [vmem:[#allocation7 + $0x168] sm:$0xff]
    %v2333 = vld [vmem:[#allocation7 + $0x170] sm:$0xff]
    %v2334 = vld [vmem:[#allocation7 + $0x178] sm:$0xff]
    %v2335 = vld [vmem:[%s7] sm:$0x7]
    %v2337 = vlaneseq
    %v2338 = vshrl.u32 %v2337, 7
    %v2339 = vsub.s32 0, %v2338
    %v2340 = vrot.slane %v2335, %v2339
    %v2341 = vlaneseq
    %v2342 = vshrl.u32 %v2341, 7
    %v2343 = vsub.s32 1, %v2342
    %v2344 = vrot.slane %v2335, %v2343
    %v2345 = vlaneseq
    %v2346 = vshrl.u32 %v2345, 7
    %v2347 = vsub.s32 2, %v2346
    %v2348 = vrot.slane %v2335, %v2347
    %2352 = vmatprep.subr.mxu0 %v2333
    %2353 = vmatpush1.msra.mxu0 %v2332
    %2354 = vmatprep.subr.mxu0 %v2330
    %2355 = vmatpush1.msra.mxu0 %v2329
    %2356 = vmatprep.subr.mxu0 %v2327
    %2357 = vmatpush1.msra.mxu0 %v2326
    %2358 = vmatprep.subr.mxu0 %v2324
    %2359 = vmatpush1.msra.mxu0 %v2323
    %2360 = vmatprep.subr.mxu0 %v2321
    %2361 = vmatpush1.msra.mxu0 %v2320
    %2362 = vmatprep.subr.mxu0 %v2318
    %2363 = vmatpush1.msra.mxu0 %v2317
    %2364 = vmatprep.subr.mxu0 %v2315
    %2365 = vmatpush1.msra.mxu0 %v2314
    %2366 = vmatprep.subr.mxu0 %v2312
    %2367 = vmatpush1.msra.mxu0 %v2311
    %2368 = vmatprep.subr.mxu0 %v2309
    %2369 = vmatpush1.msra.mxu0 %v2308
    %2370 = vmatprep.subr.mxu0 %v2306
    %2371 = vmatpush1.msra.mxu0 %v2305
    %2372 = vmatprep.subr.mxu0 %v2303
    %2373 = vmatpush1.msra.mxu0 %v2302
    %2374 = vmatprep.subr.mxu0 %v2300
    %2375 = vmatpush1.msra.mxu0 %v2299
    %2376 = vmatprep.subr.mxu0 %v2297
    %2377 = vmatpush1.msra.mxu0 %v2296
    %2378 = vmatprep.subr.mxu0 %v2294
    %2379 = vmatpush1.msra.mxu0 %v2293
    %2380 = vmatprep.subr.mxu0 %v2291
    %2381 = vmatpush1.msra.mxu0 %v2290
    %2382 = vmatprep.subr.mxu0 %v2288
    %2383 = vmatpush1.msra.mxu0 %v2287
    %2384 = vmatprep.subr.mxu0 0.0
    %2385 = vmatpush2.msra.mxu0 0.0
    %2386 = vmatprep.subr.mxu0 0.0
    %2387 = vmatpush2.msra.mxu0 0.0
    %2388 = vmatprep.subr.mxu0 0.0
    %2389 = vmatpush2.msra.mxu0 0.0
    %2390 = vmatprep.subr.mxu0 0.0
    %2391 = vmatpush2.msra.mxu0 0.0
    %2392 = vmatprep.subr.mxu0 0.0
    %2393 = vmatpush2.msra.mxu0 0.0
    %2394 = vmatprep.subr.mxu0 0.0
    %2395 = vmatpush2.msra.mxu0 0.0
    %2396 = vmatprep.subr.mxu0 0.0
    %2397 = vmatpush2.msra.mxu0 0.0
    %2398 = vmatprep.subr.mxu0 0.0
    %2399 = vmatpush2.msra.mxu0 0.0
    %2400 = vmatprep.subr.mxu0 0.0
    %2401 = vmatpush2.msra.mxu0 0.0
    %2402 = vmatprep.subr.mxu0 0.0
    %2403 = vmatpush2.msra.mxu0 0.0
    %2404 = vmatprep.subr.mxu0 0.0
    %2405 = vmatpush2.msra.mxu0 0.0
    %2406 = vmatprep.subr.mxu0 0.0
    %2407 = vmatpush2.msra.mxu0 0.0
    %2408 = vmatprep.subr.mxu0 0.0
    %2409 = vmatpush2.msra.mxu0 0.0
    %2410 = vmatprep.subr.mxu0 0.0
    %2411 = vmatpush2.msra.mxu0 0.0
    %2412 = vmatprep.subr.mxu0 0.0
    %2413 = vmatpush2.msra.mxu0 0.0
    %2414 = vmatprep.subr.mxu0 0.0
    %2415 = vmatpush2.msra.mxu0 0.0
    %2416 = vmatprep.mubr.f32.mxu0 0.0
    %2417 = vmatmul.mubr.f32.gmra.mxu0 %v2279
    %v2418 = vpop.f32.mrf.mxu0
    %v2419 = vadd.f32 %v2340, %v2418
    %v2420 = vpop.f32.mrf.mxu0
    %v2421 = vadd.f32 %v2344, %v2420
    %2422 = vmatprep.mubr.f32.mxu0 0.0
    %2423 = vmatmul.mubr.f32.gmra.mxu0 %v2280
    %v2424 = vpop.f32.mrf.mxu0
    %v2425 = vadd.f32 %v2340, %v2424
    %v2426 = vpop.f32.mrf.mxu0
    %v2427 = vadd.f32 %v2344, %v2426
    %2428 = vmatprep.mubr.f32.mxu0 0.0
    %2429 = vmatmul.mubr.f32.gmra.mxu0 %v2281
    %v2430 = vpop.f32.mrf.mxu0
    %v2431 = vadd.f32 %v2340, %v2430
    %v2432 = vpop.f32.mrf.mxu0
    %v2433 = vadd.f32 %v2344, %v2432
    %2434 = vmatprep.mubr.f32.mxu0 0.0
    %2435 = vmatmul.mubr.f32.gmra.mxu0 %v2282
    %v2436 = vpop.f32.mrf.mxu0
    %v2437 = vadd.f32 %v2340, %v2436
    %v2438 = vpop.f32.mrf.mxu0
    %v2439 = vadd.f32 %v2344, %v2438
    %2440 = vmatprep.mubr.f32.mxu0 0.0
    %2441 = vmatmul.mubr.f32.gmra.mxu0 %v2283
    %v2442 = vpop.f32.mrf.mxu0
    %v2443 = vadd.f32 %v2340, %v2442
    %v2444 = vpop.f32.mrf.mxu0
    %v2445 = vadd.f32 %v2344, %v2444
    %2446 = vmatprep.mubr.f32.mxu0 0.0
    %2447 = vmatmul.mubr.f32.gmra.mxu0 %v2284
    %v2448 = vpop.f32.mrf.mxu0
    %v2449 = vadd.f32 %v2340, %v2448
    %v2450 = vpop.f32.mrf.mxu0
    %v2451 = vadd.f32 %v2344, %v2450
    %2452 = vmatprep.mubr.f32.mxu0 0.0
    %2453 = vmatmul.mubr.f32.gmra.mxu0 %v2285
    %v2454 = vpop.f32.mrf.mxu0
    %v2455 = vadd.f32 %v2340, %v2454
    %v2456 = vpop.f32.mrf.mxu0
    %v2457 = vadd.f32 %v2344, %v2456
    %2458 = vmatprep.mubr.f32.mxu0 0.0
    %2459 = vmatmul.mubr.f32.gmra.mxu0 %v2286
    %v2460 = vpop.f32.mrf.mxu0
    %v2461 = vadd.f32 %v2340, %v2460
    %v2462 = vpop.f32.mrf.mxu0
    %v2463 = vadd.f32 %v2344, %v2462
    %2464 = vdwg.mxu0
    %2465 = vmatprep.subr.mxu0 0.0
    %2466 = vmatpush1.msra.mxu0 %v2334
    %2467 = vmatprep.subr.mxu0 0.0
    %2468 = vmatpush1.msra.mxu0 %v2331
    %2469 = vmatprep.subr.mxu0 0.0
    %2470 = vmatpush1.msra.mxu0 %v2328
    %2471 = vmatprep.subr.mxu0 0.0
    %2472 = vmatpush1.msra.mxu0 %v2325
    %2473 = vmatprep.subr.mxu0 0.0
    %2474 = vmatpush1.msra.mxu0 %v2322
    %2475 = vmatprep.subr.mxu0 0.0
    %2476 = vmatpush1.msra.mxu0 %v2319
    %2477 = vmatprep.subr.mxu0 0.0
    %2478 = vmatpush1.msra.mxu0 %v2316
    %2479 = vmatprep.subr.mxu0 0.0
    %2480 = vmatpush1.msra.mxu0 %v2313
    %2481 = vmatprep.subr.mxu0 0.0
    %2482 = vmatpush1.msra.mxu0 %v2310
    %2483 = vmatprep.subr.mxu0 0.0
    %2484 = vmatpush1.msra.mxu0 %v2307
    %2485 = vmatprep.subr.mxu0 0.0
    %2486 = vmatpush1.msra.mxu0 %v2304
    %2487 = vmatprep.subr.mxu0 0.0
    %2488 = vmatpush1.msra.mxu0 %v2301
    %2489 = vmatprep.subr.mxu0 0.0
    %2490 = vmatpush1.msra.mxu0 %v2298
    %2491 = vmatprep.subr.mxu0 0.0
    %2492 = vmatpush1.msra.mxu0 %v2295
    %2493 = vmatprep.subr.mxu0 0.0
    %2494 = vmatpush1.msra.mxu0 %v2292
    %2495 = vmatprep.subr.mxu0 0.0
    %2496 = vmatpush1.msra.mxu0 %v2289
    %2497 = vmatprep.subr.mxu0 0.0
    %2498 = vmatpush2.msra.mxu0 0.0
    %2499 = vmatprep.subr.mxu0 0.0
    %2500 = vmatpush2.msra.mxu0 0.0
    %2501 = vmatprep.subr.mxu0 0.0
    %2502 = vmatpush2.msra.mxu0 0.0
    %2503 = vmatprep.subr.mxu0 0.0
    %2504 = vmatpush2.msra.mxu0 0.0
    %2505 = vmatprep.subr.mxu0 0.0
    %2506 = vmatpush2.msra.mxu0 0.0
    %2507 = vmatprep.subr.mxu0 0.0
    %2508 = vmatpush2.msra.mxu0 0.0
    %2509 = vmatprep.subr.mxu0 0.0
    %2510 = vmatpush2.msra.mxu0 0.0
    %2511 = vmatprep.subr.mxu0 0.0
    %2512 = vmatpush2.msra.mxu0 0.0
    %2513 = vmatprep.subr.mxu0 0.0
    %2514 = vmatpush2.msra.mxu0 0.0
    %2515 = vmatprep.subr.mxu0 0.0
    %2516 = vmatpush2.msra.mxu0 0.0
    %2517 = vmatprep.subr.mxu0 0.0
    %2518 = vmatpush2.msra.mxu0 0.0
    %2519 = vmatprep.subr.mxu0 0.0
    %2520 = vmatpush2.msra.mxu0 0.0
    %2521 = vmatprep.subr.mxu0 0.0
    %2522 = vmatpush2.msra.mxu0 0.0
    %2523 = vmatprep.subr.mxu0 0.0
    %2524 = vmatpush2.msra.mxu0 0.0
    %2525 = vmatprep.subr.mxu0 0.0
    %2526 = vmatpush2.msra.mxu0 0.0
    %2527 = vmatprep.subr.mxu0 0.0
    %2528 = vmatpush2.msra.mxu0 0.0
    %2529 = vmatprep.mubr.f32.mxu0 0.0
    %2530 = vmatmul.mubr.f32.gmra.mxu0 %v2279
    %v2531 = vpop.f32.mrf.mxu0
    %v2532 = vadd.f32 %v2348, %v2531
    %v2533 = vpop.f32.mrf.mxu0
    %2534 = vmatprep.mubr.f32.mxu0 0.0
    %2535 = vmatmul.mubr.f32.gmra.mxu0 %v2280
    %v2536 = vpop.f32.mrf.mxu0
    %v2537 = vadd.f32 %v2348, %v2536
    %v2538 = vpop.f32.mrf.mxu0
    %2539 = vmatprep.mubr.f32.mxu0 0.0
    %2540 = vmatmul.mubr.f32.gmra.mxu0 %v2281
    %v2541 = vpop.f32.mrf.mxu0
    %v2542 = vadd.f32 %v2348, %v2541
    %v2543 = vpop.f32.mrf.mxu0
    %2544 = vmatprep.mubr.f32.mxu0 0.0
    %2545 = vmatmul.mubr.f32.gmra.mxu0 %v2282
    %v2546 = vpop.f32.mrf.mxu0
    %v2547 = vadd.f32 %v2348, %v2546
    %v2548 = vpop.f32.mrf.mxu0
    %2549 = vmatprep.mubr.f32.mxu0 0.0
    %2550 = vmatmul.mubr.f32.gmra.mxu0 %v2283
    %v2551 = vpop.f32.mrf.mxu0
    %v2552 = vadd.f32 %v2348, %v2551
    %v2553 = vpop.f32.mrf.mxu0
    %2554 = vmatprep.mubr.f32.mxu0 0.0
    %2555 = vmatmul.mubr.f32.gmra.mxu0 %v2284
    %v2556 = vpop.f32.mrf.mxu0
    %v2557 = vadd.f32 %v2348, %v2556
    %v2558 = vpop.f32.mrf.mxu0
    %2559 = vmatprep.mubr.f32.mxu0 0.0
    %2560 = vmatmul.mubr.f32.gmra.mxu0 %v2285
    %v2561 = vpop.f32.mrf.mxu0
    %v2562 = vadd.f32 %v2348, %v2561
    %v2563 = vpop.f32.mrf.mxu0
    %2564 = vmatprep.mubr.f32.mxu0 0.0
    %2565 = vmatmul.mubr.f32.gmra.mxu0 %v2286
    %v2566 = vpop.f32.mrf.mxu0
    %v2567 = vadd.f32 %v2348, %v2566
    %v2568 = vpop.f32.mrf.mxu0
    %2569 = vdwg.mxu0
    %2570 = vst [vmem:[#allocation2] sm:$0xff] %v2419
    %2571 = vst [vmem:[#allocation2 + $0x8] sm:$0xff] %v2421
    %2572 = vst [vmem:[#allocation2 + $0x10] sm:$0xff] %v2532
    %2573 = vst [vmem:[#allocation2 + $0x18] sm:$0xff] %v2425
    %2574 = vst [vmem:[#allocation2 + $0x20] sm:$0xff] %v2427
    %2575 = vst [vmem:[#allocation2 + $0x28] sm:$0xff] %v2537
    %2576 = vst [vmem:[#allocation2 + $0x30] sm:$0xff] %v2431
    %2577 = vst [vmem:[#allocation2 + $0x38] sm:$0xff] %v2433
    %2578 = vst [vmem:[#allocation2 + $0x40] sm:$0xff] %v2542
    %2579 = vst [vmem:[#allocation2 + $0x48] sm:$0xff] %v2437
    %2580 = vst [vmem:[#allocation2 + $0x50] sm:$0xff] %v2439
    %2581 = vst [vmem:[#allocation2 + $0x58] sm:$0xff] %v2547
    %2582 = vst [vmem:[#allocation2 + $0x60] sm:$0xff] %v2443
    %2583 = vst [vmem:[#allocation2 + $0x68] sm:$0xff] %v2445
    %2584 = vst [vmem:[#allocation2 + $0x70] sm:$0xff] %v2552
    %2585 = vst [vmem:[#allocation2 + $0x78] sm:$0xff] %v2449
    %2586 = vst [vmem:[#allocation2 + $0x80] sm:$0xff] %v2451
    %2587 = vst [vmem:[#allocation2 + $0x88] sm:$0xff] %v2557
    %2588 = vst [vmem:[#allocation2 + $0x90] sm:$0xff] %v2455
    %2589 = vst [vmem:[#allocation2 + $0x98] sm:$0xff] %v2457
    %2590 = vst [vmem:[#allocation2 + $0xa0] sm:$0xff] %v2562
    %2591 = vst [vmem:[#allocation2 + $0xa8] sm:$0xff] %v2461
    %2592 = vst [vmem:[#allocation2 + $0xb0] sm:$0xff] %v2463
    %2593 = vst [vmem:[#allocation2 + $0xb8] sm:$0xff] %v2567
    %v2594 = vld [vmem:[#allocation2] sm:$0xff]
    %v2595 = vld [vmem:[#allocation2 + $0x8] sm:$0xff]
    %v2596 = vld [vmem:[#allocation2 + $0x10] sm:$0xff]
    %v2597 = vld [vmem:[#allocation9] sm:$0xff]
    %v2598 = vld [vmem:[#allocation9 + $0x8] sm:$0xff]
    %v2599 = vld [vmem:[#allocation9 + $0x10] sm:$0xff]
    %v2600 = vld [vmem:[#allocation9 + $0x18] sm:$0xff]
    %v2601 = vld [vmem:[#allocation9 + $0x20] sm:$0xff]
    %v2602 = vld [vmem:[#allocation9 + $0x28] sm:$0xff]
    %v2603 = vld [vmem:[#allocation9 + $0x30] sm:$0xff]
    %v2604 = vld [vmem:[#allocation9 + $0x38] sm:$0xff]
    %v2605 = vld [vmem:[#allocation9 + $0x40] sm:$0xff]
    %v2606 = vld [vmem:[#allocation9 + $0x48] sm:$0xff]
    %v2607 = vld [vmem:[#allocation9 + $0x50] sm:$0xff]
    %v2608 = vld [vmem:[#allocation9 + $0x58] sm:$0xff]
    %v2609 = vld [vmem:[#allocation9 + $0x60] sm:$0xff]
    %v2610 = vld [vmem:[#allocation9 + $0x68] sm:$0xff]
    %v2611 = vld [vmem:[#allocation9 + $0x70] sm:$0xff]
    %v2612 = vld [vmem:[#allocation9 + $0x78] sm:$0xff]
    %v2613 = vld [vmem:[#allocation9 + $0x80] sm:$0xff]
    %v2614 = vld [vmem:[#allocation9 + $0x88] sm:$0xff]
    %v2615 = vld [vmem:[#allocation9 + $0x90] sm:$0xff]
    %v2616 = vld [vmem:[#allocation9 + $0x98] sm:$0xff]
    %v2617 = vld [vmem:[#allocation9 + $0xa0] sm:$0xff]
    %v2618 = vld [vmem:[#allocation9 + $0xa8] sm:$0xff]
    %v2619 = vld [vmem:[#allocation9 + $0xb0] sm:$0xff]
    %v2620 = vld [vmem:[#allocation9 + $0xb8] sm:$0xff]
    %v2621 = vld [vmem:[#allocation9 + $0xc0] sm:$0xff]
    %v2622 = vld [vmem:[#allocation9 + $0xc8] sm:$0xff]
    %v2623 = vld [vmem:[#allocation9 + $0xd0] sm:$0xff]
    %v2624 = vld [vmem:[#allocation9 + $0xd8] sm:$0xff]
    %v2625 = vld [vmem:[#allocation9 + $0xe0] sm:$0xff]
    %v2626 = vld [vmem:[#allocation9 + $0xe8] sm:$0xff]
    %v2627 = vld [vmem:[#allocation9 + $0xf0] sm:$0xff]
    %v2628 = vld [vmem:[#allocation9 + $0xf8] sm:$0xff]
    %v2629 = vld [vmem:[#allocation9 + $0x100] sm:$0xff]
    %v2630 = vld [vmem:[#allocation9 + $0x108] sm:$0xff]
    %v2631 = vld [vmem:[#allocation9 + $0x110] sm:$0xff]
    %v2632 = vld [vmem:[#allocation9 + $0x118] sm:$0xff]
    %v2633 = vld [vmem:[#allocation9 + $0x120] sm:$0xff]
    %v2634 = vld [vmem:[#allocation9 + $0x128] sm:$0xff]
    %v2635 = vld [vmem:[#allocation9 + $0x130] sm:$0xff]
    %v2636 = vld [vmem:[#allocation9 + $0x138] sm:$0xff]
    %v2637 = vld [vmem:[#allocation9 + $0x140] sm:$0xff]
    %v2638 = vld [vmem:[#allocation9 + $0x148] sm:$0xff]
    %v2639 = vld [vmem:[#allocation9 + $0x150] sm:$0xff]
    %v2640 = vld [vmem:[#allocation9 + $0x158] sm:$0xff]
    %v2641 = vld [vmem:[#allocation9 + $0x160] sm:$0xff]
    %v2642 = vld [vmem:[#allocation9 + $0x168] sm:$0xff]
    %v2643 = vld [vmem:[#allocation9 + $0x170] sm:$0xff]
    %v2644 = vld [vmem:[#allocation9 + $0x178] sm:$0xff]
    %v2645 = vld [vmem:[%s8] sm:$0x7]
    %v2647 = vlaneseq
    %v2648 = vshrl.u32 %v2647, 7
    %v2649 = vsub.s32 0, %v2648
    %v2650 = vrot.slane %v2645, %v2649
    %v2651 = vlaneseq
    %v2652 = vshrl.u32 %v2651, 7
    %v2653 = vsub.s32 1, %v2652
    %v2654 = vrot.slane %v2645, %v2653
    %v2655 = vlaneseq
    %v2656 = vshrl.u32 %v2655, 7
    %v2657 = vsub.s32 2, %v2656
    %v2658 = vrot.slane %v2645, %v2657
    %2662 = vmatprep.subr.mxu0 %v2643
    %2663 = vmatpush1.msra.mxu0 %v2642
    %2664 = vmatprep.subr.mxu0 %v2640
    %2665 = vmatpush1.msra.mxu0 %v2639
    %2666 = vmatprep.subr.mxu0 %v2637
    %2667 = vmatpush1.msra.mxu0 %v2636
    %2668 = vmatprep.subr.mxu0 %v2634
    %2669 = vmatpush1.msra.mxu0 %v2633
    %2670 = vmatprep.subr.mxu0 %v2631
    %2671 = vmatpush1.msra.mxu0 %v2630
    %2672 = vmatprep.subr.mxu0 %v2628
    %2673 = vmatpush1.msra.mxu0 %v2627
    %2674 = vmatprep.subr.mxu0 %v2625
    %2675 = vmatpush1.msra.mxu0 %v2624
    %2676 = vmatprep.subr.mxu0 %v2622
    %2677 = vmatpush1.msra.mxu0 %v2621
    %2678 = vmatprep.subr.mxu0 %v2619
    %2679 = vmatpush1.msra.mxu0 %v2618
    %2680 = vmatprep.subr.mxu0 %v2616
    %2681 = vmatpush1.msra.mxu0 %v2615
    %2682 = vmatprep.subr.mxu0 %v2613
    %2683 = vmatpush1.msra.mxu0 %v2612
    %2684 = vmatprep.subr.mxu0 %v2610
    %2685 = vmatpush1.msra.mxu0 %v2609
    %2686 = vmatprep.subr.mxu0 %v2607
    %2687 = vmatpush1.msra.mxu0 %v2606
    %2688 = vmatprep.subr.mxu0 %v2604
    %2689 = vmatpush1.msra.mxu0 %v2603
    %2690 = vmatprep.subr.mxu0 %v2601
    %2691 = vmatpush1.msra.mxu0 %v2600
    %2692 = vmatprep.subr.mxu0 %v2598
    %2693 = vmatpush1.msra.mxu0 %v2597
    %2694 = vmatprep.subr.mxu0 0.0
    %2695 = vmatpush2.msra.mxu0 0.0
    %2696 = vmatprep.subr.mxu0 0.0
    %2697 = vmatpush2.msra.mxu0 0.0
    %2698 = vmatprep.subr.mxu0 0.0
    %2699 = vmatpush2.msra.mxu0 0.0
    %2700 = vmatprep.subr.mxu0 0.0
    %2701 = vmatpush2.msra.mxu0 0.0
    %2702 = vmatprep.subr.mxu0 0.0
    %2703 = vmatpush2.msra.mxu0 0.0
    %2704 = vmatprep.subr.mxu0 0.0
    %2705 = vmatpush2.msra.mxu0 0.0
    %2706 = vmatprep.subr.mxu0 0.0
    %2707 = vmatpush2.msra.mxu0 0.0
    %2708 = vmatprep.subr.mxu0 0.0
    %2709 = vmatpush2.msra.mxu0 0.0
    %2710 = vmatprep.subr.mxu0 0.0
    %2711 = vmatpush2.msra.mxu0 0.0
    %2712 = vmatprep.subr.mxu0 0.0
    %2713 = vmatpush2.msra.mxu0 0.0
    %2714 = vmatprep.subr.mxu0 0.0
    %2715 = vmatpush2.msra.mxu0 0.0
    %2716 = vmatprep.subr.mxu0 0.0
    %2717 = vmatpush2.msra.mxu0 0.0
    %2718 = vmatprep.subr.mxu0 0.0
    %2719 = vmatpush2.msra.mxu0 0.0
    %2720 = vmatprep.subr.mxu0 0.0
    %2721 = vmatpush2.msra.mxu0 0.0
    %2722 = vmatprep.subr.mxu0 0.0
    %2723 = vmatpush2.msra.mxu0 0.0
    %2724 = vmatprep.subr.mxu0 0.0
    %2725 = vmatpush2.msra.mxu0 0.0
    %2726 = vmatprep.mubr.f32.mxu0 0.0
    %2727 = vmatmul.mubr.f32.gmra.mxu0 0.0
    %v2728 = vpop.f32.mrf.mxu0
    %v2729 = vadd.f32 %v2650, %v2728
    %v2730 = vpop.f32.mrf.mxu0
    %v2731 = vadd.f32 %v2654, %v2730
    %2732 = vdwg.mxu0
    %2733 = vmatprep.subr.mxu0 0.0
    %2734 = vmatpush1.msra.mxu0 %v2644
    %2735 = vmatprep.subr.mxu0 0.0
    %2736 = vmatpush1.msra.mxu0 %v2641
    %2737 = vmatprep.subr.mxu0 0.0
    %2738 = vmatpush1.msra.mxu0 %v2638
    %2739 = vmatprep.subr.mxu0 0.0
    %2740 = vmatpush1.msra.mxu0 %v2635
    %2741 = vmatprep.subr.mxu0 0.0
    %2742 = vmatpush1.msra.mxu0 %v2632
    %2743 = vmatprep.subr.mxu0 0.0
    %2744 = vmatpush1.msra.mxu0 %v2629
    %2745 = vmatprep.subr.mxu0 0.0
    %2746 = vmatpush1.msra.mxu0 %v2626
    %2747 = vmatprep.subr.mxu0 0.0
    %2748 = vmatpush1.msra.mxu0 %v2623
    %2749 = vmatprep.subr.mxu0 0.0
    %2750 = vmatpush1.msra.mxu0 %v2620
    %2751 = vmatprep.subr.mxu0 0.0
    %2752 = vmatpush1.msra.mxu0 %v2617
    %2753 = vmatprep.subr.mxu0 0.0
    %2754 = vmatpush1.msra.mxu0 %v2614
    %2755 = vmatprep.subr.mxu0 0.0
    %2756 = vmatpush1.msra.mxu0 %v2611
    %2757 = vmatprep.subr.mxu0 0.0
    %2758 = vmatpush1.msra.mxu0 %v2608
    %2759 = vmatprep.subr.mxu0 0.0
    %2760 = vmatpush1.msra.mxu0 %v2605
    %2761 = vmatprep.subr.mxu0 0.0
    %2762 = vmatpush1.msra.mxu0 %v2602
    %2763 = vmatprep.subr.mxu0 0.0
    %2764 = vmatpush1.msra.mxu0 %v2599
    %2765 = vmatprep.subr.mxu0 0.0
    %2766 = vmatpush2.msra.mxu0 0.0
    %2767 = vmatprep.subr.mxu0 0.0
    %2768 = vmatpush2.msra.mxu0 0.0
    %2769 = vmatprep.subr.mxu0 0.0
    %2770 = vmatpush2.msra.mxu0 0.0
    %2771 = vmatprep.subr.mxu0 0.0
    %2772 = vmatpush2.msra.mxu0 0.0
    %2773 = vmatprep.subr.mxu0 0.0
    %2774 = vmatpush2.msra.mxu0 0.0
    %2775 = vmatprep.subr.mxu0 0.0
    %2776 = vmatpush2.msra.mxu0 0.0
    %2777 = vmatprep.subr.mxu0 0.0
    %2778 = vmatpush2.msra.mxu0 0.0
    %2779 = vmatprep.subr.mxu0 0.0
    %2780 = vmatpush2.msra.mxu0 0.0
    %2781 = vmatprep.subr.mxu0 0.0
    %2782 = vmatpush2.msra.mxu0 0.0
    %2783 = vmatprep.subr.mxu0 0.0
    %2784 = vmatpush2.msra.mxu0 0.0
    %2785 = vmatprep.subr.mxu0 0.0
    %2786 = vmatpush2.msra.mxu0 0.0
    %2787 = vmatprep.subr.mxu0 0.0
    %2788 = vmatpush2.msra.mxu0 0.0
    %2789 = vmatprep.subr.mxu0 0.0
    %2790 = vmatpush2.msra.mxu0 0.0
    %2791 = vmatprep.subr.mxu0 0.0
    %2792 = vmatpush2.msra.mxu0 0.0
    %2793 = vmatprep.subr.mxu0 0.0
    %2794 = vmatpush2.msra.mxu0 0.0
    %2795 = vmatprep.subr.mxu0 0.0
    %2796 = vmatpush2.msra.mxu0 0.0
    %2797 = vmatprep.mubr.f32.mxu0 0.0
    %2798 = vmatmul.mubr.f32.gmra.mxu0 0.0
    %v2799 = vpop.f32.mrf.mxu0
    %v2800 = vadd.f32 %v2658, %v2799
    %v2801 = vpop.f32.mrf.mxu0
    %2802 = vdwg.mxu0
    %v2803 = vadd.f32 %v2594, %v2729
    %v2804 = vxor.u32 %v2803, 2147483648
    %v2805 = vmul.f32 %v2804, 1.442695
    %v2806 = vpow.pop %v2805
    %v2807 = vadd.f32 %v2806, 1.0
    %v2808 = vrcp.pop %v2807
    %v2809 = vmul.f32 1.0, %v2808
    %v2810 = vadd.f32 %v2595, %v2731
    %v2811 = vxor.u32 %v2810, 2147483648
    %v2812 = vmul.f32 %v2811, 1.442695
    %v2813 = vpow.pop %v2812
    %v2814 = vadd.f32 %v2813, 1.0
    %v2815 = vrcp.pop %v2814
    %v2816 = vmul.f32 1.0, %v2815
    %v2817 = vmul.f32 %v2809, %v2800
    %v2818 = vadd.f32 %v2596, %v2817
    %v2819 = vtanh.pop %v2818
    %v2820 = vsub.f32 1.0, %v2816
    %v2821 = vmul.f32 %v2820, %v2819
    %v2822 = vmul.f32 %v2816, 0.0
    %v2823 = vadd.f32 %v2821, %v2822
    %2824 = vst [vmem:[#allocation4] sm:$0xff] %v2823
    %v2825 = vld [vmem:[#allocation2 + $0x18] sm:$0xff]
    %v2826 = vld [vmem:[#allocation2 + $0x20] sm:$0xff]
    %v2827 = vld [vmem:[#allocation2 + $0x28] sm:$0xff]
    %v2828 = vld [vmem:[#allocation9] sm:$0xff]
    %v2829 = vld [vmem:[#allocation9 + $0x8] sm:$0xff]
    %v2830 = vld [vmem:[#allocation9 + $0x10] sm:$0xff]
    %v2831 = vld [vmem:[#allocation9 + $0x18] sm:$0xff]
    %v2832 = vld [vmem:[#allocation9 + $0x20] sm:$0xff]
    %v2833 = vld [vmem:[#allocation9 + $0x28] sm:$0xff]
    %v2834 = vld [vmem:[#allocation9 + $0x30] sm:$0xff]
    %v2835 = vld [vmem:[#allocation9 + $0x38] sm:$0xff]
    %v2836 = vld [vmem:[#allocation9 + $0x40] sm:$0xff]
    %v2837 = vld [vmem:[#allocation9 + $0x48] sm:$0xff]
    %v2838 = vld [vmem:[#allocation9 + $0x50] sm:$0xff]
    %v2839 = vld [vmem:[#allocation9 + $0x58] sm:$0xff]
    %v2840 = vld [vmem:[#allocation9 + $0x60] sm:$0xff]
    %v2841 = vld [vmem:[#allocation9 + $0x68] sm:$0xff]
    %v2842 = vld [vmem:[#allocation9 + $0x70] sm:$0xff]
    %v2843 = vld [vmem:[#allocation9 + $0x78] sm:$0xff]
    %v2844 = vld [vmem:[#allocation9 + $0x80] sm:$0xff]
    %v2845 = vld [vmem:[#allocation9 + $0x88] sm:$0xff]
    %v2846 = vld [vmem:[#allocation9 + $0x90] sm:$0xff]
    %v2847 = vld [vmem:[#allocation9 + $0x98] sm:$0xff]
    %v2848 = vld [vmem:[#allocation9 + $0xa0] sm:$0xff]
    %v2849 = vld [vmem:[#allocation9 + $0xa8] sm:$0xff]
    %v2850 = vld [vmem:[#allocation9 + $0xb0] sm:$0xff]
    %v2851 = vld [vmem:[#allocation9 + $0xb8] sm:$0xff]
    %v2852 = vld [vmem:[#allocation9 + $0xc0] sm:$0xff]
    %v2853 = vld [vmem:[#allocation9 + $0xc8] sm:$0xff]
    %v2854 = vld [vmem:[#allocation9 + $0xd0] sm:$0xff]
    %v2855 = vld [vmem:[#allocation9 + $0xd8] sm:$0xff]
    %v2856 = vld [vmem:[#allocation9 + $0xe0] sm:$0xff]
    %v2857 = vld [vmem:[#allocation9 + $0xe8] sm:$0xff]
    %v2858 = vld [vmem:[#allocation9 + $0xf0] sm:$0xff]
    %v2859 = vld [vmem:[#allocation9 + $0xf8] sm:$0xff]
    %v2860 = vld [vmem:[#allocation9 + $0x100] sm:$0xff]
    %v2861 = vld [vmem:[#allocation9 + $0x108] sm:$0xff]
    %v2862 = vld [vmem:[#allocation9 + $0x110] sm:$0xff]
    %v2863 = vld [vmem:[#allocation9 + $0x118] sm:$0xff]
    %v2864 = vld [vmem:[#allocation9 + $0x120] sm:$0xff]
    %v2865 = vld [vmem:[#allocation9 + $0x128] sm:$0xff]
    %v2866 = vld [vmem:[#allocation9 + $0x130] sm:$0xff]
    %v2867 = vld [vmem:[#allocation9 + $0x138] sm:$0xff]
    %v2868 = vld [vmem:[#allocation9 + $0x140] sm:$0xff]
    %v2869 = vld [vmem:[#allocation9 + $0x148] sm:$0xff]
    %v2870 = vld [vmem:[#allocation9 + $0x150] sm:$0xff]
    %v2871 = vld [vmem:[#allocation9 + $0x158] sm:$0xff]
    %v2872 = vld [vmem:[#allocation9 + $0x160] sm:$0xff]
    %v2873 = vld [vmem:[#allocation9 + $0x168] sm:$0xff]
    %v2874 = vld [vmem:[#allocation9 + $0x170] sm:$0xff]
    %v2875 = vld [vmem:[#allocation9 + $0x178] sm:$0xff]
    %v2876 = vld [vmem:[%s8] sm:$0x7]
    %v2878 = vlaneseq
    %v2879 = vshrl.u32 %v2878, 7
    %v2880 = vsub.s32 0, %v2879
    %v2881 = vrot.slane %v2876, %v2880
    %v2882 = vlaneseq
    %v2883 = vshrl.u32 %v2882, 7
    %v2884 = vsub.s32 1, %v2883
    %v2885 = vrot.slane %v2876, %v2884
    %v2886 = vlaneseq
    %v2887 = vshrl.u32 %v2886, 7
    %v2888 = vsub.s32 2, %v2887
    %v2889 = vrot.slane %v2876, %v2888
    %2893 = vmatprep.subr.mxu0 %v2874
    %2894 = vmatpush1.msra.mxu0 %v2873
    %2895 = vmatprep.subr.mxu0 %v2871
    %2896 = vmatpush1.msra.mxu0 %v2870
    %2897 = vmatprep.subr.mxu0 %v2868
    %2898 = vmatpush1.msra.mxu0 %v2867
    %2899 = vmatprep.subr.mxu0 %v2865
    %2900 = vmatpush1.msra.mxu0 %v2864
    %2901 = vmatprep.subr.mxu0 %v2862
    %2902 = vmatpush1.msra.mxu0 %v2861
    %2903 = vmatprep.subr.mxu0 %v2859
    %2904 = vmatpush1.msra.mxu0 %v2858
    %2905 = vmatprep.subr.mxu0 %v2856
    %2906 = vmatpush1.msra.mxu0 %v2855
    %2907 = vmatprep.subr.mxu0 %v2853
    %2908 = vmatpush1.msra.mxu0 %v2852
    %2909 = vmatprep.subr.mxu0 %v2850
    %2910 = vmatpush1.msra.mxu0 %v2849
    %2911 = vmatprep.subr.mxu0 %v2847
    %2912 = vmatpush1.msra.mxu0 %v2846
    %2913 = vmatprep.subr.mxu0 %v2844
    %2914 = vmatpush1.msra.mxu0 %v2843
    %2915 = vmatprep.subr.mxu0 %v2841
    %2916 = vmatpush1.msra.mxu0 %v2840
    %2917 = vmatprep.subr.mxu0 %v2838
    %2918 = vmatpush1.msra.mxu0 %v2837
    %2919 = vmatprep.subr.mxu0 %v2835
    %2920 = vmatpush1.msra.mxu0 %v2834
    %2921 = vmatprep.subr.mxu0 %v2832
    %2922 = vmatpush1.msra.mxu0 %v2831
    %2923 = vmatprep.subr.mxu0 %v2829
    %2924 = vmatpush1.msra.mxu0 %v2828
    %2925 = vmatprep.subr.mxu0 0.0
    %2926 = vmatpush2.msra.mxu0 0.0
    %2927 = vmatprep.subr.mxu0 0.0
    %2928 = vmatpush2.msra.mxu0 0.0
    %2929 = vmatprep.subr.mxu0 0.0
    %2930 = vmatpush2.msra.mxu0 0.0
    %2931 = vmatprep.subr.mxu0 0.0
    %2932 = vmatpush2.msra.mxu0 0.0
    %2933 = vmatprep.subr.mxu0 0.0
    %2934 = vmatpush2.msra.mxu0 0.0
    %2935 = vmatprep.subr.mxu0 0.0
    %2936 = vmatpush2.msra.mxu0 0.0
    %2937 = vmatprep.subr.mxu0 0.0
    %2938 = vmatpush2.msra.mxu0 0.0
    %2939 = vmatprep.subr.mxu0 0.0
    %2940 = vmatpush2.msra.mxu0 0.0
    %2941 = vmatprep.subr.mxu0 0.0
    %2942 = vmatpush2.msra.mxu0 0.0
    %2943 = vmatprep.subr.mxu0 0.0
    %2944 = vmatpush2.msra.mxu0 0.0
    %2945 = vmatprep.subr.mxu0 0.0
    %2946 = vmatpush2.msra.mxu0 0.0
    %2947 = vmatprep.subr.mxu0 0.0
    %2948 = vmatpush2.msra.mxu0 0.0
    %2949 = vmatprep.subr.mxu0 0.0
    %2950 = vmatpush2.msra.mxu0 0.0
    %2951 = vmatprep.subr.mxu0 0.0
    %2952 = vmatpush2.msra.mxu0 0.0
    %2953 = vmatprep.subr.mxu0 0.0
    %2954 = vmatpush2.msra.mxu0 0.0
    %2955 = vmatprep.subr.mxu0 0.0
    %2956 = vmatpush2.msra.mxu0 0.0
    %2957 = vmatprep.mubr.f32.mxu0 0.0
    %2958 = vmatmul.mubr.f32.gmra.mxu0 %v2823
    %v2959 = vpop.f32.mrf.mxu0
    %v2960 = vadd.f32 %v2881, %v2959
    %v2961 = vpop.f32.mrf.mxu0
    %v2962 = vadd.f32 %v2885, %v2961
    %2963 = vdwg.mxu0
    %2964 = vmatprep.subr.mxu0 0.0
    %2965 = vmatpush1.msra.mxu0 %v2875
    %2966 = vmatprep.subr.mxu0 0.0
    %2967 = vmatpush1.msra.mxu0 %v2872
    %2968 = vmatprep.subr.mxu0 0.0
    %2969 = vmatpush1.msra.mxu0 %v2869
    %2970 = vmatprep.subr.mxu0 0.0
    %2971 = vmatpush1.msra.mxu0 %v2866
    %2972 = vmatprep.subr.mxu0 0.0
    %2973 = vmatpush1.msra.mxu0 %v2863
    %2974 = vmatprep.subr.mxu0 0.0
    %2975 = vmatpush1.msra.mxu0 %v2860
    %2976 = vmatprep.subr.mxu0 0.0
    %2977 = vmatpush1.msra.mxu0 %v2857
    %2978 = vmatprep.subr.mxu0 0.0
    %2979 = vmatpush1.msra.mxu0 %v2854
    %2980 = vmatprep.subr.mxu0 0.0
    %2981 = vmatpush1.msra.mxu0 %v2851
    %2982 = vmatprep.subr.mxu0 0.0
    %2983 = vmatpush1.msra.mxu0 %v2848
    %2984 = vmatprep.subr.mxu0 0.0
    %2985 = vmatpush1.msra.mxu0 %v2845
    %2986 = vmatprep.subr.mxu0 0.0
    %2987 = vmatpush1.msra.mxu0 %v2842
    %2988 = vmatprep.subr.mxu0 0.0
    %2989 = vmatpush1.msra.mxu0 %v2839
    %2990 = vmatprep.subr.mxu0 0.0
    %2991 = vmatpush1.msra.mxu0 %v2836
    %2992 = vmatprep.subr.mxu0 0.0
    %2993 = vmatpush1.msra.mxu0 %v2833
    %2994 = vmatprep.subr.mxu0 0.0
    %2995 = vmatpush1.msra.mxu0 %v2830
    %2996 = vmatprep.subr.mxu0 0.0
    %2997 = vmatpush2.msra.mxu0 0.0
    %2998 = vmatprep.subr.mxu0 0.0
    %2999 = vmatpush2.msra.mxu0 0.0
    %3000 = vmatprep.subr.mxu0 0.0
    %3001 = vmatpush2.msra.mxu0 0.0
    %3002 = vmatprep.subr.mxu0 0.0
    %3003 = vmatpush2.msra.mxu0 0.0
    %3004 = vmatprep.subr.mxu0 0.0
    %3005 = vmatpush2.msra.mxu0 0.0
    %3006 = vmatprep.subr.mxu0 0.0
    %3007 = vmatpush2.msra.mxu0 0.0
    %3008 = vmatprep.subr.mxu0 0.0
    %3009 = vmatpush2.msra.mxu0 0.0
    %3010 = vmatprep.subr.mxu0 0.0
    %3011 = vmatpush2.msra.mxu0 0.0
    %3012 = vmatprep.subr.mxu0 0.0
    %3013 = vmatpush2.msra.mxu0 0.0
    %3014 = vmatprep.subr.mxu0 0.0
    %3015 = vmatpush2.msra.mxu0 0.0
    %3016 = vmatprep.subr.mxu0 0.0
    %3017 = vmatpush2.msra.mxu0 0.0
    %3018 = vmatprep.subr.mxu0 0.0
    %3019 = vmatpush2.msra.mxu0 0.0
    %3020 = vmatprep.subr.mxu0 0.0
    %3021 = vmatpush2.msra.mxu0 0.0
    %3022 = vmatprep.subr.mxu0 0.0
    %3023 = vmatpush2.msra.mxu0 0.0
    %3024 = vmatprep.subr.mxu0 0.0
    %3025 = vmatpush2.msra.mxu0 0.0
    %3026 = vmatprep.subr.mxu0 0.0
    %3027 = vmatpush2.msra.mxu0 0.0
    %3028 = vmatprep.mubr.f32.mxu0 0.0
    %3029 = vmatmul.mubr.f32.gmra.mxu0 %v2823
    %v3030 = vpop.f32.mrf.mxu0
    %v3031 = vadd.f32 %v2889, %v3030
    %v3032 = vpop.f32.mrf.mxu0
    %3033 = vdwg.mxu0
    %v3034 = vadd.f32 %v2825, %v2960
    %v3035 = vxor.u32 %v3034, 2147483648
    %v3036 = vmul.f32 %v3035, 1.442695
    %v3037 = vpow.pop %v3036
    %v3038 = vadd.f32 %v3037, 1.0
    %v3039 = vrcp.pop %v3038
    %v3040 = vmul.f32 1.0, %v3039
    %v3041 = vadd.f32 %v2826, %v2962
    %v3042 = vxor.u32 %v3041, 2147483648
    %v3043 = vmul.f32 %v3042, 1.442695
    %v3044 = vpow.pop %v3043
    %v3045 = vadd.f32 %v3044, 1.0
    %v3046 = vrcp.pop %v3045
    %v3047 = vmul.f32 1.0, %v3046
    %v3048 = vmul.f32 %v3040, %v3031
    %v3049 = vadd.f32 %v2827, %v3048
    %v3050 = vtanh.pop %v3049
    %v3051 = vsub.f32 1.0, %v3047
    %v3052 = vmul.f32 %v3051, %v3050
    %v3053 = vmul.f32 %v3047, %v2823
    %v3054 = vadd.f32 %v3052, %v3053
    %3055 = vst [vmem:[#allocation4 + $0x8] sm:$0xff] %v3054
    %v3056 = vld [vmem:[#allocation2 + $0x30] sm:$0xff]
    %v3057 = vld [vmem:[#allocation2 + $0x38] sm:$0xff]
    %v3058 = vld [vmem:[#allocation2 + $0x40] sm:$0xff]
    %v3059 = vld [vmem:[#allocation9] sm:$0xff]
    %v3060 = vld [vmem:[#allocation9 + $0x8] sm:$0xff]
    %v3061 = vld [vmem:[#allocation9 + $0x10] sm:$0xff]
    %v3062 = vld [vmem:[#allocation9 + $0x18] sm:$0xff]
    %v3063 = vld [vmem:[#allocation9 + $0x20] sm:$0xff]
    %v3064 = vld [vmem:[#allocation9 + $0x28] sm:$0xff]
    %v3065 = vld [vmem:[#allocation9 + $0x30] sm:$0xff]
    %v3066 = vld [vmem:[#allocation9 + $0x38] sm:$0xff]
    %v3067 = vld [vmem:[#allocation9 + $0x40] sm:$0xff]
    %v3068 = vld [vmem:[#allocation9 + $0x48] sm:$0xff]
    %v3069 = vld [vmem:[#allocation9 + $0x50] sm:$0xff]
    %v3070 = vld [vmem:[#allocation9 + $0x58] sm:$0xff]
    %v3071 = vld [vmem:[#allocation9 + $0x60] sm:$0xff]
    %v3072 = vld [vmem:[#allocation9 + $0x68] sm:$0xff]
    %v3073 = vld [vmem:[#allocation9 + $0x70] sm:$0xff]
    %v3074 = vld [vmem:[#allocation9 + $0x78] sm:$0xff]
    %v3075 = vld [vmem:[#allocation9 + $0x80] sm:$0xff]
    %v3076 = vld [vmem:[#allocation9 + $0x88] sm:$0xff]
    %v3077 = vld [vmem:[#allocation9 + $0x90] sm:$0xff]
    %v3078 = vld [vmem:[#allocation9 + $0x98] sm:$0xff]
    %v3079 = vld [vmem:[#allocation9 + $0xa0] sm:$0xff]
    %v3080 = vld [vmem:[#allocation9 + $0xa8] sm:$0xff]
    %v3081 = vld [vmem:[#allocation9 + $0xb0] sm:$0xff]
    %v3082 = vld [vmem:[#allocation9 + $0xb8] sm:$0xff]
    %v3083 = vld [vmem:[#allocation9 + $0xc0] sm:$0xff]
    %v3084 = vld [vmem:[#allocation9 + $0xc8] sm:$0xff]
    %v3085 = vld [vmem:[#allocation9 + $0xd0] sm:$0xff]
    %v3086 = vld [vmem:[#allocation9 + $0xd8] sm:$0xff]
    %v3087 = vld [vmem:[#allocation9 + $0xe0] sm:$0xff]
    %v3088 = vld [vmem:[#allocation9 + $0xe8] sm:$0xff]
    %v3089 = vld [vmem:[#allocation9 + $0xf0] sm:$0xff]
    %v3090 = vld [vmem:[#allocation9 + $0xf8] sm:$0xff]
    %v3091 = vld [vmem:[#allocation9 + $0x100] sm:$0xff]
    %v3092 = vld [vmem:[#allocation9 + $0x108] sm:$0xff]
    %v3093 = vld [vmem:[#allocation9 + $0x110] sm:$0xff]
    %v3094 = vld [vmem:[#allocation9 + $0x118] sm:$0xff]
    %v3095 = vld [vmem:[#allocation9 + $0x120] sm:$0xff]
    %v3096 = vld [vmem:[#allocation9 + $0x128] sm:$0xff]
    %v3097 = vld [vmem:[#allocation9 + $0x130] sm:$0xff]
    %v3098 = vld [vmem:[#allocation9 + $0x138] sm:$0xff]
    %v3099 = vld [vmem:[#allocation9 + $0x140] sm:$0xff]
    %v3100 = vld [vmem:[#allocation9 + $0x148] sm:$0xff]
    %v3101 = vld [vmem:[#allocation9 + $0x150] sm:$0xff]
    %v3102 = vld [vmem:[#allocation9 + $0x158] sm:$0xff]
    %v3103 = vld [vmem:[#allocation9 + $0x160] sm:$0xff]
    %v3104 = vld [vmem:[#allocation9 + $0x168] sm:$0xff]
    %v3105 = vld [vmem:[#allocation9 + $0x170] sm:$0xff]
    %v3106 = vld [vmem:[#allocation9 + $0x178] sm:$0xff]
    %v3107 = vld [vmem:[%s8] sm:$0x7]
    %v3109 = vlaneseq
    %v3110 = vshrl.u32 %v3109, 7
    %v3111 = vsub.s32 0, %v3110
    %v3112 = vrot.slane %v3107, %v3111
    %v3113 = vlaneseq
    %v3114 = vshrl.u32 %v3113, 7
    %v3115 = vsub.s32 1, %v3114
    %v3116 = vrot.slane %v3107, %v3115
    %v3117 = vlaneseq
    %v3118 = vshrl.u32 %v3117, 7
    %v3119 = vsub.s32 2, %v3118
    %v3120 = vrot.slane %v3107, %v3119
    %3124 = vmatprep.subr.mxu0 %v3105
    %3125 = vmatpush1.msra.mxu0 %v3104
    %3126 = vmatprep.subr.mxu0 %v3102
    %3127 = vmatpush1.msra.mxu0 %v3101
    %3128 = vmatprep.subr.mxu0 %v3099
    %3129 = vmatpush1.msra.mxu0 %v3098
    %3130 = vmatprep.subr.mxu0 %v3096
    %3131 = vmatpush1.msra.mxu0 %v3095
    %3132 = vmatprep.subr.mxu0 %v3093
    %3133 = vmatpush1.msra.mxu0 %v3092
    %3134 = vmatprep.subr.mxu0 %v3090
    %3135 = vmatpush1.msra.mxu0 %v3089
    %3136 = vmatprep.subr.mxu0 %v3087
    %3137 = vmatpush1.msra.mxu0 %v3086
    %3138 = vmatprep.subr.mxu0 %v3084
    %3139 = vmatpush1.msra.mxu0 %v3083
    %3140 = vmatprep.subr.mxu0 %v3081
    %3141 = vmatpush1.msra.mxu0 %v3080
    %3142 = vmatprep.subr.mxu0 %v3078
    %3143 = vmatpush1.msra.mxu0 %v3077
    %3144 = vmatprep.subr.mxu0 %v3075
    %3145 = vmatpush1.msra.mxu0 %v3074
    %3146 = vmatprep.subr.mxu0 %v3072
    %3147 = vmatpush1.msra.mxu0 %v3071
    %3148 = vmatprep.subr.mxu0 %v3069
    %3149 = vmatpush1.msra.mxu0 %v3068
    %3150 = vmatprep.subr.mxu0 %v3066
    %3151 = vmatpush1.msra.mxu0 %v3065
    %3152 = vmatprep.subr.mxu0 %v3063
    %3153 = vmatpush1.msra.mxu0 %v3062
    %3154 = vmatprep.subr.mxu0 %v3060
    %3155 = vmatpush1.msra.mxu0 %v3059
    %3156 = vmatprep.subr.mxu0 0.0
    %3157 = vmatpush2.msra.mxu0 0.0
    %3158 = vmatprep.subr.mxu0 0.0
    %3159 = vmatpush2.msra.mxu0 0.0
    %3160 = vmatprep.subr.mxu0 0.0
    %3161 = vmatpush2.msra.mxu0 0.0
    %3162 = vmatprep.subr.mxu0 0.0
    %3163 = vmatpush2.msra.mxu0 0.0
    %3164 = vmatprep.subr.mxu0 0.0
    %3165 = vmatpush2.msra.mxu0 0.0
    %3166 = vmatprep.subr.mxu0 0.0
    %3167 = vmatpush2.msra.mxu0 0.0
    %3168 = vmatprep.subr.mxu0 0.0
    %3169 = vmatpush2.msra.mxu0 0.0
    %3170 = vmatprep.subr.mxu0 0.0
    %3171 = vmatpush2.msra.mxu0 0.0
    %3172 = vmatprep.subr.mxu0 0.0
    %3173 = vmatpush2.msra.mxu0 0.0
    %3174 = vmatprep.subr.mxu0 0.0
    %3175 = vmatpush2.msra.mxu0 0.0
    %3176 = vmatprep.subr.mxu0 0.0
    %3177 = vmatpush2.msra.mxu0 0.0
    %3178 = vmatprep.subr.mxu0 0.0
    %3179 = vmatpush2.msra.mxu0 0.0
    %3180 = vmatprep.subr.mxu0 0.0
    %3181 = vmatpush2.msra.mxu0 0.0
    %3182 = vmatprep.subr.mxu0 0.0
    %3183 = vmatpush2.msra.mxu0 0.0
    %3184 = vmatprep.subr.mxu0 0.0
    %3185 = vmatpush2.msra.mxu0 0.0
    %3186 = vmatprep.subr.mxu0 0.0
    %3187 = vmatpush2.msra.mxu0 0.0
    %3188 = vmatprep.mubr.f32.mxu0 0.0
    %3189 = vmatmul.mubr.f32.gmra.mxu0 %v3054
    %v3190 = vpop.f32.mrf.mxu0
    %v3191 = vadd.f32 %v3112, %v3190
    %v3192 = vpop.f32.mrf.mxu0
    %v3193 = vadd.f32 %v3116, %v3192
    %3194 = vdwg.mxu0
    %3195 = vmatprep.subr.mxu0 0.0
    %3196 = vmatpush1.msra.mxu0 %v3106
    %3197 = vmatprep.subr.mxu0 0.0
    %3198 = vmatpush1.msra.mxu0 %v3103
    %3199 = vmatprep.subr.mxu0 0.0
    %3200 = vmatpush1.msra.mxu0 %v3100
    %3201 = vmatprep.subr.mxu0 0.0
    %3202 = vmatpush1.msra.mxu0 %v3097
    %3203 = vmatprep.subr.mxu0 0.0
    %3204 = vmatpush1.msra.mxu0 %v3094
    %3205 = vmatprep.subr.mxu0 0.0
    %3206 = vmatpush1.msra.mxu0 %v3091
    %3207 = vmatprep.subr.mxu0 0.0
    %3208 = vmatpush1.msra.mxu0 %v3088
    %3209 = vmatprep.subr.mxu0 0.0
    %3210 = vmatpush1.msra.mxu0 %v3085
    %3211 = vmatprep.subr.mxu0 0.0
    %3212 = vmatpush1.msra.mxu0 %v3082
    %3213 = vmatprep.subr.mxu0 0.0
    %3214 = vmatpush1.msra.mxu0 %v3079
    %3215 = vmatprep.subr.mxu0 0.0
    %3216 = vmatpush1.msra.mxu0 %v3076
    %3217 = vmatprep.subr.mxu0 0.0
    %3218 = vmatpush1.msra.mxu0 %v3073
    %3219 = vmatprep.subr.mxu0 0.0
    %3220 = vmatpush1.msra.mxu0 %v3070
    %3221 = vmatprep.subr.mxu0 0.0
    %3222 = vmatpush1.msra.mxu0 %v3067
    %3223 = vmatprep.subr.mxu0 0.0
    %3224 = vmatpush1.msra.mxu0 %v3064
    %3225 = vmatprep.subr.mxu0 0.0
    %3226 = vmatpush1.msra.mxu0 %v3061
    %3227 = vmatprep.subr.mxu0 0.0
    %3228 = vmatpush2.msra.mxu0 0.0
    %3229 = vmatprep.subr.mxu0 0.0
    %3230 = vmatpush2.msra.mxu0 0.0
    %3231 = vmatprep.subr.mxu0 0.0
    %3232 = vmatpush2.msra.mxu0 0.0
    %3233 = vmatprep.subr.mxu0 0.0
    %3234 = vmatpush2.msra.mxu0 0.0
    %3235 = vmatprep.subr.mxu0 0.0
    %3236 = vmatpush2.msra.mxu0 0.0
    %3237 = vmatprep.subr.mxu0 0.0
    %3238 = vmatpush2.msra.mxu0 0.0
    %3239 = vmatprep.subr.mxu0 0.0
    %3240 = vmatpush2.msra.mxu0 0.0
    %3241 = vmatprep.subr.mxu0 0.0
    %3242 = vmatpush2.msra.mxu0 0.0
    %3243 = vmatprep.subr.mxu0 0.0
    %3244 = vmatpush2.msra.mxu0 0.0
    %3245 = vmatprep.subr.mxu0 0.0
    %3246 = vmatpush2.msra.mxu0 0.0
    %3247 = vmatprep.subr.mxu0 0.0
    %3248 = vmatpush2.msra.mxu0 0.0
    %3249 = vmatprep.subr.mxu0 0.0
    %3250 = vmatpush2.msra.mxu0 0.0
    %3251 = vmatprep.subr.mxu0 0.0
    %3252 = vmatpush2.msra.mxu0 0.0
    %3253 = vmatprep.subr.mxu0 0.0
    %3254 = vmatpush2.msra.mxu0 0.0
    %3255 = vmatprep.subr.mxu0 0.0
    %3256 = vmatpush2.msra.mxu0 0.0
    %3257 = vmatprep.subr.mxu0 0.0
    %3258 = vmatpush2.msra.mxu0 0.0
    %3259 = vmatprep.mubr.f32.mxu0 0.0
    %3260 = vmatmul.mubr.f32.gmra.mxu0 %v3054
    %v3261 = vpop.f32.mrf.mxu0
    %v3262 = vadd.f32 %v3120, %v3261
    %v3263 = vpop.f32.mrf.mxu0
    %3264 = vdwg.mxu0
    %v3265 = vadd.f32 %v3056, %v3191
    %v3266 = vxor.u32 %v3265, 2147483648
    %v3267 = vmul.f32 %v3266, 1.442695
    %v3268 = vpow.pop %v3267
    %v3269 = vadd.f32 %v3268, 1.0
    %v3270 = vrcp.pop %v3269
    %v3271 = vmul.f32 1.0, %v3270
    %v3272 = vadd.f32 %v3057, %v3193
    %v3273 = vxor.u32 %v3272, 2147483648
    %v3274 = vmul.f32 %v3273, 1.442695
    %v3275 = vpow.pop %v3274
    %v3276 = vadd.f32 %v3275, 1.0
    %v3277 = vrcp.pop %v3276
    %v3278 = vmul.f32 1.0, %v3277
    %v3279 = vmul.f32 %v3271, %v3262
    %v3280 = vadd.f32 %v3058, %v3279
    %v3281 = vtanh.pop %v3280
    %v3282 = vsub.f32 1.0, %v3278
    %v3283 = vmul.f32 %v3282, %v3281
    %v3284 = vmul.f32 %v3278, %v3054
    %v3285 = vadd.f32 %v3283, %v3284
    %3286 = vst [vmem:[#allocation4 + $0x10] sm:$0xff] %v3285
    %v3287 = vld [vmem:[#allocation2 + $0x48] sm:$0xff]
    %v3288 = vld [vmem:[#allocation2 + $0x50] sm:$0xff]
    %v3289 = vld [vmem:[#allocation2 + $0x58] sm:$0xff]
    %v3290 = vld [vmem:[#allocation9] sm:$0xff]
    %v3291 = vld [vmem:[#allocation9 + $0x8] sm:$0xff]
    %v3292 = vld [vmem:[#allocation9 + $0x10] sm:$0xff]
    %v3293 = vld [vmem:[#allocation9 + $0x18] sm:$0xff]
    %v3294 = vld [vmem:[#allocation9 + $0x20] sm:$0xff]
    %v3295 = vld [vmem:[#allocation9 + $0x28] sm:$0xff]
    %v3296 = vld [vmem:[#allocation9 + $0x30] sm:$0xff]
    %v3297 = vld [vmem:[#allocation9 + $0x38] sm:$0xff]
    %v3298 = vld [vmem:[#allocation9 + $0x40] sm:$0xff]
    %v3299 = vld [vmem:[#allocation9 + $0x48] sm:$0xff]
    %v3300 = vld [vmem:[#allocation9 + $0x50] sm:$0xff]
    %v3301 = vld [vmem:[#allocation9 + $0x58] sm:$0xff]
    %v3302 = vld [vmem:[#allocation9 + $0x60] sm:$0xff]
    %v3303 = vld [vmem:[#allocation9 + $0x68] sm:$0xff]
    %v3304 = vld [vmem:[#allocation9 + $0x70] sm:$0xff]
    %v3305 = vld [vmem:[#allocation9 + $0x78] sm:$0xff]
    %v3306 = vld [vmem:[#allocation9 + $0x80] sm:$0xff]
    %v3307 = vld [vmem:[#allocation9 + $0x88] sm:$0xff]
    %v3308 = vld [vmem:[#allocation9 + $0x90] sm:$0xff]
    %v3309 = vld [vmem:[#allocation9 + $0x98] sm:$0xff]
    %v3310 = vld [vmem:[#allocation9 + $0xa0] sm:$0xff]
    %v3311 = vld [vmem:[#allocation9 + $0xa8] sm:$0xff]
    %v3312 = vld [vmem:[#allocation9 + $0xb0] sm:$0xff]
    %v3313 = vld [vmem:[#allocation9 + $0xb8] sm:$0xff]
    %v3314 = vld [vmem:[#allocation9 + $0xc0] sm:$0xff]
    %v3315 = vld [vmem:[#allocation9 + $0xc8] sm:$0xff]
    %v3316 = vld [vmem:[#allocation9 + $0xd0] sm:$0xff]
    %v3317 = vld [vmem:[#allocation9 + $0xd8] sm:$0xff]
    %v3318 = vld [vmem:[#allocation9 + $0xe0] sm:$0xff]
    %v3319 = vld [vmem:[#allocation9 + $0xe8] sm:$0xff]
    %v3320 = vld [vmem:[#allocation9 + $0xf0] sm:$0xff]
    %v3321 = vld [vmem:[#allocation9 + $0xf8] sm:$0xff]
    %v3322 = vld [vmem:[#allocation9 + $0x100] sm:$0xff]
    %v3323 = vld [vmem:[#allocation9 + $0x108] sm:$0xff]
    %v3324 = vld [vmem:[#allocation9 + $0x110] sm:$0xff]
    %v3325 = vld [vmem:[#allocation9 + $0x118] sm:$0xff]
    %v3326 = vld [vmem:[#allocation9 + $0x120] sm:$0xff]
    %v3327 = vld [vmem:[#allocation9 + $0x128] sm:$0xff]
    %v3328 = vld [vmem:[#allocation9 + $0x130] sm:$0xff]
    %v3329 = vld [vmem:[#allocation9 + $0x138] sm:$0xff]
    %v3330 = vld [vmem:[#allocation9 + $0x140] sm:$0xff]
    %v3331 = vld [vmem:[#allocation9 + $0x148] sm:$0xff]
    %v3332 = vld [vmem:[#allocation9 + $0x150] sm:$0xff]
    %v3333 = vld [vmem:[#allocation9 + $0x158] sm:$0xff]
    %v3334 = vld [vmem:[#allocation9 + $0x160] sm:$0xff]
    %v3335 = vld [vmem:[#allocation9 + $0x168] sm:$0xff]
    %v3336 = vld [vmem:[#allocation9 + $0x170] sm:$0xff]
    %v3337 = vld [vmem:[#allocation9 + $0x178] sm:$0xff]
    %v3338 = vld [vmem:[%s8] sm:$0x7]
    %v3340 = vlaneseq
    %v3341 = vshrl.u32 %v3340, 7
    %v3342 = vsub.s32 0, %v3341
    %v3343 = vrot.slane %v3338, %v3342
    %v3344 = vlaneseq
    %v3345 = vshrl.u32 %v3344, 7
    %v3346 = vsub.s32 1, %v3345
    %v3347 = vrot.slane %v3338, %v3346
    %v3348 = vlaneseq
    %v3349 = vshrl.u32 %v3348, 7
    %v3350 = vsub.s32 2, %v3349
    %v3351 = vrot.slane %v3338, %v3350
    %3355 = vmatprep.subr.mxu0 %v3336
    %3356 = vmatpush1.msra.mxu0 %v3335
    %3357 = vmatprep.subr.mxu0 %v3333
    %3358 = vmatpush1.msra.mxu0 %v3332
    %3359 = vmatprep.subr.mxu0 %v3330
    %3360 = vmatpush1.msra.mxu0 %v3329
    %3361 = vmatprep.subr.mxu0 %v3327
    %3362 = vmatpush1.msra.mxu0 %v3326
    %3363 = vmatprep.subr.mxu0 %v3324
    %3364 = vmatpush1.msra.mxu0 %v3323
    %3365 = vmatprep.subr.mxu0 %v3321
    %3366 = vmatpush1.msra.mxu0 %v3320
    %3367 = vmatprep.subr.mxu0 %v3318
    %3368 = vmatpush1.msra.mxu0 %v3317
    %3369 = vmatprep.subr.mxu0 %v3315
    %3370 = vmatpush1.msra.mxu0 %v3314
    %3371 = vmatprep.subr.mxu0 %v3312
    %3372 = vmatpush1.msra.mxu0 %v3311
    %3373 = vmatprep.subr.mxu0 %v3309
    %3374 = vmatpush1.msra.mxu0 %v3308
    %3375 = vmatprep.subr.mxu0 %v3306
    %3376 = vmatpush1.msra.mxu0 %v3305
    %3377 = vmatprep.subr.mxu0 %v3303
    %3378 = vmatpush1.msra.mxu0 %v3302
    %3379 = vmatprep.subr.mxu0 %v3300
    %3380 = vmatpush1.msra.mxu0 %v3299
    %3381 = vmatprep.subr.mxu0 %v3297
    %3382 = vmatpush1.msra.mxu0 %v3296
    %3383 = vmatprep.subr.mxu0 %v3294
    %3384 = vmatpush1.msra.mxu0 %v3293
    %3385 = vmatprep.subr.mxu0 %v3291
    %3386 = vmatpush1.msra.mxu0 %v3290
    %3387 = vmatprep.subr.mxu0 0.0
    %3388 = vmatpush2.msra.mxu0 0.0
    %3389 = vmatprep.subr.mxu0 0.0
    %3390 = vmatpush2.msra.mxu0 0.0
    %3391 = vmatprep.subr.mxu0 0.0
    %3392 = vmatpush2.msra.mxu0 0.0
    %3393 = vmatprep.subr.mxu0 0.0
    %3394 = vmatpush2.msra.mxu0 0.0
    %3395 = vmatprep.subr.mxu0 0.0
    %3396 = vmatpush2.msra.mxu0 0.0
    %3397 = vmatprep.subr.mxu0 0.0
    %3398 = vmatpush2.msra.mxu0 0.0
    %3399 = vmatprep.subr.mxu0 0.0
    %3400 = vmatpush2.msra.mxu0 0.0
    %3401 = vmatprep.subr.mxu0 0.0
    %3402 = vmatpush2.msra.mxu0 0.0
    %3403 = vmatprep.subr.mxu0 0.0
    %3404 = vmatpush2.msra.mxu0 0.0
    %3405 = vmatprep.subr.mxu0 0.0
    %3406 = vmatpush2.msra.mxu0 0.0
    %3407 = vmatprep.subr.mxu0 0.0
    %3408 = vmatpush2.msra.mxu0 0.0
    %3409 = vmatprep.subr.mxu0 0.0
    %3410 = vmatpush2.msra.mxu0 0.0
    %3411 = vmatprep.subr.mxu0 0.0
    %3412 = vmatpush2.msra.mxu0 0.0
    %3413 = vmatprep.subr.mxu0 0.0
    %3414 = vmatpush2.msra.mxu0 0.0
    %3415 = vmatprep.subr.mxu0 0.0
    %3416 = vmatpush2.msra.mxu0 0.0
    %3417 = vmatprep.subr.mxu0 0.0
    %3418 = vmatpush2.msra.mxu0 0.0
    %3419 = vmatprep.mubr.f32.mxu0 0.0
    %3420 = vmatmul.mubr.f32.gmra.mxu0 %v3285
    %v3421 = vpop.f32.mrf.mxu0
    %v3422 = vadd.f32 %v3343, %v3421
    %v3423 = vpop.f32.mrf.mxu0
    %v3424 = vadd.f32 %v3347, %v3423
    %3425 = vdwg.mxu0
    %3426 = vmatprep.subr.mxu0 0.0
    %3427 = vmatpush1.msra.mxu0 %v3337
    %3428 = vmatprep.subr.mxu0 0.0
    %3429 = vmatpush1.msra.mxu0 %v3334
    %3430 = vmatprep.subr.mxu0 0.0
    %3431 = vmatpush1.msra.mxu0 %v3331
    %3432 = vmatprep.subr.mxu0 0.0
    %3433 = vmatpush1.msra.mxu0 %v3328
    %3434 = vmatprep.subr.mxu0 0.0
    %3435 = vmatpush1.msra.mxu0 %v3325
    %3436 = vmatprep.subr.mxu0 0.0
    %3437 = vmatpush1.msra.mxu0 %v3322
    %3438 = vmatprep.subr.mxu0 0.0
    %3439 = vmatpush1.msra.mxu0 %v3319
    %3440 = vmatprep.subr.mxu0 0.0
    %3441 = vmatpush1.msra.mxu0 %v3316
    %3442 = vmatprep.subr.mxu0 0.0
    %3443 = vmatpush1.msra.mxu0 %v3313
    %3444 = vmatprep.subr.mxu0 0.0
    %3445 = vmatpush1.msra.mxu0 %v3310
    %3446 = vmatprep.subr.mxu0 0.0
    %3447 = vmatpush1.msra.mxu0 %v3307
    %3448 = vmatprep.subr.mxu0 0.0
    %3449 = vmatpush1.msra.mxu0 %v3304
    %3450 = vmatprep.subr.mxu0 0.0
    %3451 = vmatpush1.msra.mxu0 %v3301
    %3452 = vmatprep.subr.mxu0 0.0
    %3453 = vmatpush1.msra.mxu0 %v3298
    %3454 = vmatprep.subr.mxu0 0.0
    %3455 = vmatpush1.msra.mxu0 %v3295
    %3456 = vmatprep.subr.mxu0 0.0
    %3457 = vmatpush1.msra.mxu0 %v3292
    %3458 = vmatprep.subr.mxu0 0.0
    %3459 = vmatpush2.msra.mxu0 0.0
    %3460 = vmatprep.subr.mxu0 0.0
    %3461 = vmatpush2.msra.mxu0 0.0
    %3462 = vmatprep.subr.mxu0 0.0
    %3463 = vmatpush2.msra.mxu0 0.0
    %3464 = vmatprep.subr.mxu0 0.0
    %3465 = vmatpush2.msra.mxu0 0.0
    %3466 = vmatprep.subr.mxu0 0.0
    %3467 = vmatpush2.msra.mxu0 0.0
    %3468 = vmatprep.subr.mxu0 0.0
    %3469 = vmatpush2.msra.mxu0 0.0
    %3470 = vmatprep.subr.mxu0 0.0
    %3471 = vmatpush2.msra.mxu0 0.0
    %3472 = vmatprep.subr.mxu0 0.0
    %3473 = vmatpush2.msra.mxu0 0.0
    %3474 = vmatprep.subr.mxu0 0.0
    %3475 = vmatpush2.msra.mxu0 0.0
    %3476 = vmatprep.subr.mxu0 0.0
    %3477 = vmatpush2.msra.mxu0 0.0
    %3478 = vmatprep.subr.mxu0 0.0
    %3479 = vmatpush2.msra.mxu0 0.0
    %3480 = vmatprep.subr.mxu0 0.0
    %3481 = vmatpush2.msra.mxu0 0.0
    %3482 = vmatprep.subr.mxu0 0.0
    %3483 = vmatpush2.msra.mxu0 0.0
    %3484 = vmatprep.subr.mxu0 0.0
    %3485 = vmatpush2.msra.mxu0 0.0
    %3486 = vmatprep.subr.mxu0 0.0
    %3487 = vmatpush2.msra.mxu0 0.0
    %3488 = vmatprep.subr.mxu0 0.0
    %3489 = vmatpush2.msra.mxu0 0.0
    %3490 = vmatprep.mubr.f32.mxu0 0.0
    %3491 = vmatmul.mubr.f32.gmra.mxu0 %v3285
    %v3492 = vpop.f32.mrf.mxu0
    %v3493 = vadd.f32 %v3351, %v3492
    %v3494 = vpop.f32.mrf.mxu0
    %3495 = vdwg.mxu0
    %v3496 = vadd.f32 %v3287, %v3422
    %v3497 = vxor.u32 %v3496, 2147483648
    %v3498 = vmul.f32 %v3497, 1.442695
    %v3499 = vpow.pop %v3498
    %v3500 = vadd.f32 %v3499, 1.0
    %v3501 = vrcp.pop %v3500
    %v3502 = vmul.f32 1.0, %v3501
    %v3503 = vadd.f32 %v3288, %v3424
    %v3504 = vxor.u32 %v3503, 2147483648
    %v3505 = vmul.f32 %v3504, 1.442695
    %v3506 = vpow.pop %v3505
    %v3507 = vadd.f32 %v3506, 1.0
    %v3508 = vrcp.pop %v3507
    %v3509 = vmul.f32 1.0, %v3508
    %v3510 = vmul.f32 %v3502, %v3493
    %v3511 = vadd.f32 %v3289, %v3510
    %v3512 = vtanh.pop %v3511
    %v3513 = vsub.f32 1.0, %v3509
    %v3514 = vmul.f32 %v3513, %v3512
    %v3515 = vmul.f32 %v3509, %v3285
    %v3516 = vadd.f32 %v3514, %v3515
    %3517 = vst [vmem:[#allocation4 + $0x18] sm:$0xff] %v3516
    %v3518 = vld [vmem:[#allocation2 + $0x60] sm:$0xff]
    %v3519 = vld [vmem:[#allocation2 + $0x68] sm:$0xff]
    %v3520 = vld [vmem:[#allocation2 + $0x70] sm:$0xff]
    %v3521 = vld [vmem:[#allocation9] sm:$0xff]
    %v3522 = vld [vmem:[#allocation9 + $0x8] sm:$0xff]
    %v3523 = vld [vmem:[#allocation9 + $0x10] sm:$0xff]
    %v3524 = vld [vmem:[#allocation9 + $0x18] sm:$0xff]
    %v3525 = vld [vmem:[#allocation9 + $0x20] sm:$0xff]
    %v3526 = vld [vmem:[#allocation9 + $0x28] sm:$0xff]
    %v3527 = vld [vmem:[#allocation9 + $0x30] sm:$0xff]
    %v3528 = vld [vmem:[#allocation9 + $0x38] sm:$0xff]
    %v3529 = vld [vmem:[#allocation9 + $0x40] sm:$0xff]
    %v3530 = vld [vmem:[#allocation9 + $0x48] sm:$0xff]
    %v3531 = vld [vmem:[#allocation9 + $0x50] sm:$0xff]
    %v3532 = vld [vmem:[#allocation9 + $0x58] sm:$0xff]
    %v3533 = vld [vmem:[#allocation9 + $0x60] sm:$0xff]
    %v3534 = vld [vmem:[#allocation9 + $0x68] sm:$0xff]
    %v3535 = vld [vmem:[#allocation9 + $0x70] sm:$0xff]
    %v3536 = vld [vmem:[#allocation9 + $0x78] sm:$0xff]
    %v3537 = vld [vmem:[#allocation9 + $0x80] sm:$0xff]
    %v3538 = vld [vmem:[#allocation9 + $0x88] sm:$0xff]
    %v3539 = vld [vmem:[#allocation9 + $0x90] sm:$0xff]
    %v3540 = vld [vmem:[#allocation9 + $0x98] sm:$0xff]
    %v3541 = vld [vmem:[#allocation9 + $0xa0] sm:$0xff]
    %v3542 = vld [vmem:[#allocation9 + $0xa8] sm:$0xff]
    %v3543 = vld [vmem:[#allocation9 + $0xb0] sm:$0xff]
    %v3544 = vld [vmem:[#allocation9 + $0xb8] sm:$0xff]
    %v3545 = vld [vmem:[#allocation9 + $0xc0] sm:$0xff]
    %v3546 = vld [vmem:[#allocation9 + $0xc8] sm:$0xff]
    %v3547 = vld [vmem:[#allocation9 + $0xd0] sm:$0xff]
    %v3548 = vld [vmem:[#allocation9 + $0xd8] sm:$0xff]
    %v3549 = vld [vmem:[#allocation9 + $0xe0] sm:$0xff]
    %v3550 = vld [vmem:[#allocation9 + $0xe8] sm:$0xff]
    %v3551 = vld [vmem:[#allocation9 + $0xf0] sm:$0xff]
    %v3552 = vld [vmem:[#allocation9 + $0xf8] sm:$0xff]
    %v3553 = vld [vmem:[#allocation9 + $0x100] sm:$0xff]
    %v3554 = vld [vmem:[#allocation9 + $0x108] sm:$0xff]
    %v3555 = vld [vmem:[#allocation9 + $0x110] sm:$0xff]
    %v3556 = vld [vmem:[#allocation9 + $0x118] sm:$0xff]
    %v3557 = vld [vmem:[#allocation9 + $0x120] sm:$0xff]
    %v3558 = vld [vmem:[#allocation9 + $0x128] sm:$0xff]
    %v3559 = vld [vmem:[#allocation9 + $0x130] sm:$0xff]
    %v3560 = vld [vmem:[#allocation9 + $0x138] sm:$0xff]
    %v3561 = vld [vmem:[#allocation9 + $0x140] sm:$0xff]
    %v3562 = vld [vmem:[#allocation9 + $0x148] sm:$0xff]
    %v3563 = vld [vmem:[#allocation9 + $0x150] sm:$0xff]
    %v3564 = vld [vmem:[#allocation9 + $0x158] sm:$0xff]
    %v3565 = vld [vmem:[#allocation9 + $0x160] sm:$0xff]
    %v3566 = vld [vmem:[#allocation9 + $0x168] sm:$0xff]
    %v3567 = vld [vmem:[#allocation9 + $0x170] sm:$0xff]
    %v3568 = vld [vmem:[#allocation9 + $0x178] sm:$0xff]
    %v3569 = vld [vmem:[%s8] sm:$0x7]
    %v3571 = vlaneseq
    %v3572 = vshrl.u32 %v3571, 7
    %v3573 = vsub.s32 0, %v3572
    %v3574 = vrot.slane %v3569, %v3573
    %v3575 = vlaneseq
    %v3576 = vshrl.u32 %v3575, 7
    %v3577 = vsub.s32 1, %v3576
    %v3578 = vrot.slane %v3569, %v3577
    %v3579 = vlaneseq
    %v3580 = vshrl.u32 %v3579, 7
    %v3581 = vsub.s32 2, %v3580
    %v3582 = vrot.slane %v3569, %v3581
    %3586 = vmatprep.subr.mxu0 %v3567
    %3587 = vmatpush1.msra.mxu0 %v3566
    %3588 = vmatprep.subr.mxu0 %v3564
    %3589 = vmatpush1.msra.mxu0 %v3563
    %3590 = vmatprep.subr.mxu0 %v3561
    %3591 = vmatpush1.msra.mxu0 %v3560
    %3592 = vmatprep.subr.mxu0 %v3558
    %3593 = vmatpush1.msra.mxu0 %v3557
    %3594 = vmatprep.subr.mxu0 %v3555
    %3595 = vmatpush1.msra.mxu0 %v3554
    %3596 = vmatprep.subr.mxu0 %v3552
    %3597 = vmatpush1.msra.mxu0 %v3551
    %3598 = vmatprep.subr.mxu0 %v3549
    %3599 = vmatpush1.msra.mxu0 %v3548
    %3600 = vmatprep.subr.mxu0 %v3546
    %3601 = vmatpush1.msra.mxu0 %v3545
    %3602 = vmatprep.subr.mxu0 %v3543
    %3603 = vmatpush1.msra.mxu0 %v3542
    %3604 = vmatprep.subr.mxu0 %v3540
    %3605 = vmatpush1.msra.mxu0 %v3539
    %3606 = vmatprep.subr.mxu0 %v3537
    %3607 = vmatpush1.msra.mxu0 %v3536
    %3608 = vmatprep.subr.mxu0 %v3534
    %3609 = vmatpush1.msra.mxu0 %v3533
    %3610 = vmatprep.subr.mxu0 %v3531
    %3611 = vmatpush1.msra.mxu0 %v3530
    %3612 = vmatprep.subr.mxu0 %v3528
    %3613 = vmatpush1.msra.mxu0 %v3527
    %3614 = vmatprep.subr.mxu0 %v3525
    %3615 = vmatpush1.msra.mxu0 %v3524
    %3616 = vmatprep.subr.mxu0 %v3522
    %3617 = vmatpush1.msra.mxu0 %v3521
    %3618 = vmatprep.subr.mxu0 0.0
    %3619 = vmatpush2.msra.mxu0 0.0
    %3620 = vmatprep.subr.mxu0 0.0
    %3621 = vmatpush2.msra.mxu0 0.0
    %3622 = vmatprep.subr.mxu0 0.0
    %3623 = vmatpush2.msra.mxu0 0.0
    %3624 = vmatprep.subr.mxu0 0.0
    %3625 = vmatpush2.msra.mxu0 0.0
    %3626 = vmatprep.subr.mxu0 0.0
    %3627 = vmatpush2.msra.mxu0 0.0
    %3628 = vmatprep.subr.mxu0 0.0
    %3629 = vmatpush2.msra.mxu0 0.0
    %3630 = vmatprep.subr.mxu0 0.0
    %3631 = vmatpush2.msra.mxu0 0.0
    %3632 = vmatprep.subr.mxu0 0.0
    %3633 = vmatpush2.msra.mxu0 0.0
    %3634 = vmatprep.subr.mxu0 0.0
    %3635 = vmatpush2.msra.mxu0 0.0
    %3636 = vmatprep.subr.mxu0 0.0
    %3637 = vmatpush2.msra.mxu0 0.0
    %3638 = vmatprep.subr.mxu0 0.0
    %3639 = vmatpush2.msra.mxu0 0.0
    %3640 = vmatprep.subr.mxu0 0.0
    %3641 = vmatpush2.msra.mxu0 0.0
    %3642 = vmatprep.subr.mxu0 0.0
    %3643 = vmatpush2.msra.mxu0 0.0
    %3644 = vmatprep.subr.mxu0 0.0
    %3645 = vmatpush2.msra.mxu0 0.0
    %3646 = vmatprep.subr.mxu0 0.0
    %3647 = vmatpush2.msra.mxu0 0.0
    %3648 = vmatprep.subr.mxu0 0.0
    %3649 = vmatpush2.msra.mxu0 0.0
    %3650 = vmatprep.mubr.f32.mxu0 0.0
    %3651 = vmatmul.mubr.f32.gmra.mxu0 %v3516
    %v3652 = vpop.f32.mrf.mxu0
    %v3653 = vadd.f32 %v3574, %v3652
    %v3654 = vpop.f32.mrf.mxu0
    %v3655 = vadd.f32 %v3578, %v3654
    %3656 = vdwg.mxu0
    %3657 = vmatprep.subr.mxu0 0.0
    %3658 = vmatpush1.msra.mxu0 %v3568
    %3659 = vmatprep.subr.mxu0 0.0
    %3660 = vmatpush1.msra.mxu0 %v3565
    %3661 = vmatprep.subr.mxu0 0.0
    %3662 = vmatpush1.msra.mxu0 %v3562
    %3663 = vmatprep.subr.mxu0 0.0
    %3664 = vmatpush1.msra.mxu0 %v3559
    %3665 = vmatprep.subr.mxu0 0.0
    %3666 = vmatpush1.msra.mxu0 %v3556
    %3667 = vmatprep.subr.mxu0 0.0
    %3668 = vmatpush1.msra.mxu0 %v3553
    %3669 = vmatprep.subr.mxu0 0.0
    %3670 = vmatpush1.msra.mxu0 %v3550
    %3671 = vmatprep.subr.mxu0 0.0
    %3672 = vmatpush1.msra.mxu0 %v3547
    %3673 = vmatprep.subr.mxu0 0.0
    %3674 = vmatpush1.msra.mxu0 %v3544
    %3675 = vmatprep.subr.mxu0 0.0
    %3676 = vmatpush1.msra.mxu0 %v3541
    %3677 = vmatprep.subr.mxu0 0.0
    %3678 = vmatpush1.msra.mxu0 %v3538
    %3679 = vmatprep.subr.mxu0 0.0
    %3680 = vmatpush1.msra.mxu0 %v3535
    %3681 = vmatprep.subr.mxu0 0.0
    %3682 = vmatpush1.msra.mxu0 %v3532
    %3683 = vmatprep.subr.mxu0 0.0
    %3684 = vmatpush1.msra.mxu0 %v3529
    %3685 = vmatprep.subr.mxu0 0.0
    %3686 = vmatpush1.msra.mxu0 %v3526
    %3687 = vmatprep.subr.mxu0 0.0
    %3688 = vmatpush1.msra.mxu0 %v3523
    %3689 = vmatprep.subr.mxu0 0.0
    %3690 = vmatpush2.msra.mxu0 0.0
    %3691 = vmatprep.subr.mxu0 0.0
    %3692 = vmatpush2.msra.mxu0 0.0
    %3693 = vmatprep.subr.mxu0 0.0
    %3694 = vmatpush2.msra.mxu0 0.0
    %3695 = vmatprep.subr.mxu0 0.0
    %3696 = vmatpush2.msra.mxu0 0.0
    %3697 = vmatprep.subr.mxu0 0.0
    %3698 = vmatpush2.msra.mxu0 0.0
    %3699 = vmatprep.subr.mxu0 0.0
    %3700 = vmatpush2.msra.mxu0 0.0
    %3701 = vmatprep.subr.mxu0 0.0
    %3702 = vmatpush2.msra.mxu0 0.0
    %3703 = vmatprep.subr.mxu0 0.0
    %3704 = vmatpush2.msra.mxu0 0.0
    %3705 = vmatprep.subr.mxu0 0.0
    %3706 = vmatpush2.msra.mxu0 0.0
    %3707 = vmatprep.subr.mxu0 0.0
    %3708 = vmatpush2.msra.mxu0 0.0
    %3709 = vmatprep.subr.mxu0 0.0
    %3710 = vmatpush2.msra.mxu0 0.0
    %3711 = vmatprep.subr.mxu0 0.0
    %3712 = vmatpush2.msra.mxu0 0.0
    %3713 = vmatprep.subr.mxu0 0.0
    %3714 = vmatpush2.msra.mxu0 0.0
    %3715 = vmatprep.subr.mxu0 0.0
    %3716 = vmatpush2.msra.mxu0 0.0
    %3717 = vmatprep.subr.mxu0 0.0
    %3718 = vmatpush2.msra.mxu0 0.0
    %3719 = vmatprep.subr.mxu0 0.0
    %3720 = vmatpush2.msra.mxu0 0.0
    %3721 = vmatprep.mubr.f32.mxu0 0.0
    %3722 = vmatmul.mubr.f32.gmra.mxu0 %v3516
    %v3723 = vpop.f32.mrf.mxu0
    %v3724 = vadd.f32 %v3582, %v3723
    %v3725 = vpop.f32.mrf.mxu0
    %3726 = vdwg.mxu0
    %v3727 = vadd.f32 %v3518, %v3653
    %v3728 = vxor.u32 %v3727, 2147483648
    %v3729 = vmul.f32 %v3728, 1.442695
    %v3730 = vpow.pop %v3729
    %v3731 = vadd.f32 %v3730, 1.0
    %v3732 = vrcp.pop %v3731
    %v3733 = vmul.f32 1.0, %v3732
    %v3734 = vadd.f32 %v3519, %v3655
    %v3735 = vxor.u32 %v3734, 2147483648
    %v3736 = vmul.f32 %v3735, 1.442695
    %v3737 = vpow.pop %v3736
    %v3738 = vadd.f32 %v3737, 1.0
    %v3739 = vrcp.pop %v3738
    %v3740 = vmul.f32 1.0, %v3739
    %v3741 = vmul.f32 %v3733, %v3724
    %v3742 = vadd.f32 %v3520, %v3741
    %v3743 = vtanh.pop %v3742
    %v3744 = vsub.f32 1.0, %v3740
    %v3745 = vmul.f32 %v3744, %v3743
    %v3746 = vmul.f32 %v3740, %v3516
    %v3747 = vadd.f32 %v3745, %v3746
    %3748 = vst [vmem:[#allocation4 + $0x20] sm:$0xff] %v3747
    %v3749 = vld [vmem:[#allocation2 + $0x78] sm:$0xff]
    %v3750 = vld [vmem:[#allocation2 + $0x80] sm:$0xff]
    %v3751 = vld [vmem:[#allocation2 + $0x88] sm:$0xff]
    %v3752 = vld [vmem:[#allocation9] sm:$0xff]
    %v3753 = vld [vmem:[#allocation9 + $0x8] sm:$0xff]
    %v3754 = vld [vmem:[#allocation9 + $0x10] sm:$0xff]
    %v3755 = vld [vmem:[#allocation9 + $0x18] sm:$0xff]
    %v3756 = vld [vmem:[#allocation9 + $0x20] sm:$0xff]
    %v3757 = vld [vmem:[#allocation9 + $0x28] sm:$0xff]
    %v3758 = vld [vmem:[#allocation9 + $0x30] sm:$0xff]
    %v3759 = vld [vmem:[#allocation9 + $0x38] sm:$0xff]
    %v3760 = vld [vmem:[#allocation9 + $0x40] sm:$0xff]
    %v3761 = vld [vmem:[#allocation9 + $0x48] sm:$0xff]
    %v3762 = vld [vmem:[#allocation9 + $0x50] sm:$0xff]
    %v3763 = vld [vmem:[#allocation9 + $0x58] sm:$0xff]
    %v3764 = vld [vmem:[#allocation9 + $0x60] sm:$0xff]
    %v3765 = vld [vmem:[#allocation9 + $0x68] sm:$0xff]
    %v3766 = vld [vmem:[#allocation9 + $0x70] sm:$0xff]
    %v3767 = vld [vmem:[#allocation9 + $0x78] sm:$0xff]
    %v3768 = vld [vmem:[#allocation9 + $0x80] sm:$0xff]
    %v3769 = vld [vmem:[#allocation9 + $0x88] sm:$0xff]
    %v3770 = vld [vmem:[#allocation9 + $0x90] sm:$0xff]
    %v3771 = vld [vmem:[#allocation9 + $0x98] sm:$0xff]
    %v3772 = vld [vmem:[#allocation9 + $0xa0] sm:$0xff]
    %v3773 = vld [vmem:[#allocation9 + $0xa8] sm:$0xff]
    %v3774 = vld [vmem:[#allocation9 + $0xb0] sm:$0xff]
    %v3775 = vld [vmem:[#allocation9 + $0xb8] sm:$0xff]
    %v3776 = vld [vmem:[#allocation9 + $0xc0] sm:$0xff]
    %v3777 = vld [vmem:[#allocation9 + $0xc8] sm:$0xff]
    %v3778 = vld [vmem:[#allocation9 + $0xd0] sm:$0xff]
    %v3779 = vld [vmem:[#allocation9 + $0xd8] sm:$0xff]
    %v3780 = vld [vmem:[#allocation9 + $0xe0] sm:$0xff]
    %v3781 = vld [vmem:[#allocation9 + $0xe8] sm:$0xff]
    %v3782 = vld [vmem:[#allocation9 + $0xf0] sm:$0xff]
    %v3783 = vld [vmem:[#allocation9 + $0xf8] sm:$0xff]
    %v3784 = vld [vmem:[#allocation9 + $0x100] sm:$0xff]
    %v3785 = vld [vmem:[#allocation9 + $0x108] sm:$0xff]
    %v3786 = vld [vmem:[#allocation9 + $0x110] sm:$0xff]
    %v3787 = vld [vmem:[#allocation9 + $0x118] sm:$0xff]
    %v3788 = vld [vmem:[#allocation9 + $0x120] sm:$0xff]
    %v3789 = vld [vmem:[#allocation9 + $0x128] sm:$0xff]
    %v3790 = vld [vmem:[#allocation9 + $0x130] sm:$0xff]
    %v3791 = vld [vmem:[#allocation9 + $0x138] sm:$0xff]
    %v3792 = vld [vmem:[#allocation9 + $0x140] sm:$0xff]
    %v3793 = vld [vmem:[#allocation9 + $0x148] sm:$0xff]
    %v3794 = vld [vmem:[#allocation9 + $0x150] sm:$0xff]
    %v3795 = vld [vmem:[#allocation9 + $0x158] sm:$0xff]
    %v3796 = vld [vmem:[#allocation9 + $0x160] sm:$0xff]
    %v3797 = vld [vmem:[#allocation9 + $0x168] sm:$0xff]
    %v3798 = vld [vmem:[#allocation9 + $0x170] sm:$0xff]
    %v3799 = vld [vmem:[#allocation9 + $0x178] sm:$0xff]
    %v3800 = vld [vmem:[%s8] sm:$0x7]
    %v3802 = vlaneseq
    %v3803 = vshrl.u32 %v3802, 7
    %v3804 = vsub.s32 0, %v3803
    %v3805 = vrot.slane %v3800, %v3804
    %v3806 = vlaneseq
    %v3807 = vshrl.u32 %v3806, 7
    %v3808 = vsub.s32 1, %v3807
    %v3809 = vrot.slane %v3800, %v3808
    %v3810 = vlaneseq
    %v3811 = vshrl.u32 %v3810, 7
    %v3812 = vsub.s32 2, %v3811
    %v3813 = vrot.slane %v3800, %v3812
    %3817 = vmatprep.subr.mxu0 %v3798
    %3818 = vmatpush1.msra.mxu0 %v3797
    %3819 = vmatprep.subr.mxu0 %v3795
    %3820 = vmatpush1.msra.mxu0 %v3794
    %3821 = vmatprep.subr.mxu0 %v3792
    %3822 = vmatpush1.msra.mxu0 %v3791
    %3823 = vmatprep.subr.mxu0 %v3789
    %3824 = vmatpush1.msra.mxu0 %v3788
    %3825 = vmatprep.subr.mxu0 %v3786
    %3826 = vmatpush1.msra.mxu0 %v3785
    %3827 = vmatprep.subr.mxu0 %v3783
    %3828 = vmatpush1.msra.mxu0 %v3782
    %3829 = vmatprep.subr.mxu0 %v3780
    %3830 = vmatpush1.msra.mxu0 %v3779
    %3831 = vmatprep.subr.mxu0 %v3777
    %3832 = vmatpush1.msra.mxu0 %v3776
    %3833 = vmatprep.subr.mxu0 %v3774
    %3834 = vmatpush1.msra.mxu0 %v3773
    %3835 = vmatprep.subr.mxu0 %v3771
    %3836 = vmatpush1.msra.mxu0 %v3770
    %3837 = vmatprep.subr.mxu0 %v3768
    %3838 = vmatpush1.msra.mxu0 %v3767
    %3839 = vmatprep.subr.mxu0 %v3765
    %3840 = vmatpush1.msra.mxu0 %v3764
    %3841 = vmatprep.subr.mxu0 %v3762
    %3842 = vmatpush1.msra.mxu0 %v3761
    %3843 = vmatprep.subr.mxu0 %v3759
    %3844 = vmatpush1.msra.mxu0 %v3758
    %3845 = vmatprep.subr.mxu0 %v3756
    %3846 = vmatpush1.msra.mxu0 %v3755
    %3847 = vmatprep.subr.mxu0 %v3753
    %3848 = vmatpush1.msra.mxu0 %v3752
    %3849 = vmatprep.subr.mxu0 0.0
    %3850 = vmatpush2.msra.mxu0 0.0
    %3851 = vmatprep.subr.mxu0 0.0
    %3852 = vmatpush2.msra.mxu0 0.0
    %3853 = vmatprep.subr.mxu0 0.0
    %3854 = vmatpush2.msra.mxu0 0.0
    %3855 = vmatprep.subr.mxu0 0.0
    %3856 = vmatpush2.msra.mxu0 0.0
    %3857 = vmatprep.subr.mxu0 0.0
    %3858 = vmatpush2.msra.mxu0 0.0
    %3859 = vmatprep.subr.mxu0 0.0
    %3860 = vmatpush2.msra.mxu0 0.0
    %3861 = vmatprep.subr.mxu0 0.0
    %3862 = vmatpush2.msra.mxu0 0.0
    %3863 = vmatprep.subr.mxu0 0.0
    %3864 = vmatpush2.msra.mxu0 0.0
    %3865 = vmatprep.subr.mxu0 0.0
    %3866 = vmatpush2.msra.mxu0 0.0
    %3867 = vmatprep.subr.mxu0 0.0
    %3868 = vmatpush2.msra.mxu0 0.0
    %3869 = vmatprep.subr.mxu0 0.0
    %3870 = vmatpush2.msra.mxu0 0.0
    %3871 = vmatprep.subr.mxu0 0.0
    %3872 = vmatpush2.msra.mxu0 0.0
    %3873 = vmatprep.subr.mxu0 0.0
    %3874 = vmatpush2.msra.mxu0 0.0
    %3875 = vmatprep.subr.mxu0 0.0
    %3876 = vmatpush2.msra.mxu0 0.0
    %3877 = vmatprep.subr.mxu0 0.0
    %3878 = vmatpush2.msra.mxu0 0.0
    %3879 = vmatprep.subr.mxu0 0.0
    %3880 = vmatpush2.msra.mxu0 0.0
    %3881 = vmatprep.mubr.f32.mxu0 0.0
    %3882 = vmatmul.mubr.f32.gmra.mxu0 %v3747
    %v3883 = vpop.f32.mrf.mxu0
    %v3884 = vadd.f32 %v3805, %v3883
    %v3885 = vpop.f32.mrf.mxu0
    %v3886 = vadd.f32 %v3809, %v3885
    %3887 = vdwg.mxu0
    %3888 = vmatprep.subr.mxu0 0.0
    %3889 = vmatpush1.msra.mxu0 %v3799
    %3890 = vmatprep.subr.mxu0 0.0
    %3891 = vmatpush1.msra.mxu0 %v3796
    %3892 = vmatprep.subr.mxu0 0.0
    %3893 = vmatpush1.msra.mxu0 %v3793
    %3894 = vmatprep.subr.mxu0 0.0
    %3895 = vmatpush1.msra.mxu0 %v3790
    %3896 = vmatprep.subr.mxu0 0.0
    %3897 = vmatpush1.msra.mxu0 %v3787
    %3898 = vmatprep.subr.mxu0 0.0
    %3899 = vmatpush1.msra.mxu0 %v3784
    %3900 = vmatprep.subr.mxu0 0.0
    %3901 = vmatpush1.msra.mxu0 %v3781
    %3902 = vmatprep.subr.mxu0 0.0
    %3903 = vmatpush1.msra.mxu0 %v3778
    %3904 = vmatprep.subr.mxu0 0.0
    %3905 = vmatpush1.msra.mxu0 %v3775
    %3906 = vmatprep.subr.mxu0 0.0
    %3907 = vmatpush1.msra.mxu0 %v3772
    %3908 = vmatprep.subr.mxu0 0.0
    %3909 = vmatpush1.msra.mxu0 %v3769
    %3910 = vmatprep.subr.mxu0 0.0
    %3911 = vmatpush1.msra.mxu0 %v3766
    %3912 = vmatprep.subr.mxu0 0.0
    %3913 = vmatpush1.msra.mxu0 %v3763
    %3914 = vmatprep.subr.mxu0 0.0
    %3915 = vmatpush1.msra.mxu0 %v3760
    %3916 = vmatprep.subr.mxu0 0.0
    %3917 = vmatpush1.msra.mxu0 %v3757
    %3918 = vmatprep.subr.mxu0 0.0
    %3919 = vmatpush1.msra.mxu0 %v3754
    %3920 = vmatprep.subr.mxu0 0.0
    %3921 = vmatpush2.msra.mxu0 0.0
    %3922 = vmatprep.subr.mxu0 0.0
    %3923 = vmatpush2.msra.mxu0 0.0
    %3924 = vmatprep.subr.mxu0 0.0
    %3925 = vmatpush2.msra.mxu0 0.0
    %3926 = vmatprep.subr.mxu0 0.0
    %3927 = vmatpush2.msra.mxu0 0.0
    %3928 = vmatprep.subr.mxu0 0.0
    %3929 = vmatpush2.msra.mxu0 0.0
    %3930 = vmatprep.subr.mxu0 0.0
    %3931 = vmatpush2.msra.mxu0 0.0
    %3932 = vmatprep.subr.mxu0 0.0
    %3933 = vmatpush2.msra.mxu0 0.0
    %3934 = vmatprep.subr.mxu0 0.0
    %3935 = vmatpush2.msra.mxu0 0.0
    %3936 = vmatprep.subr.mxu0 0.0
    %3937 = vmatpush2.msra.mxu0 0.0
    %3938 = vmatprep.subr.mxu0 0.0
    %3939 = vmatpush2.msra.mxu0 0.0
    %3940 = vmatprep.subr.mxu0 0.0
    %3941 = vmatpush2.msra.mxu0 0.0
    %3942 = vmatprep.subr.mxu0 0.0
    %3943 = vmatpush2.msra.mxu0 0.0
    %3944 = vmatprep.subr.mxu0 0.0
    %3945 = vmatpush2.msra.mxu0 0.0
    %3946 = vmatprep.subr.mxu0 0.0
    %3947 = vmatpush2.msra.mxu0 0.0
    %3948 = vmatprep.subr.mxu0 0.0
    %3949 = vmatpush2.msra.mxu0 0.0
    %3950 = vmatprep.subr.mxu0 0.0
    %3951 = vmatpush2.msra.mxu0 0.0
    %3952 = vmatprep.mubr.f32.mxu0 0.0
    %3953 = vmatmul.mubr.f32.gmra.mxu0 %v3747
    %v3954 = vpop.f32.mrf.mxu0
    %v3955 = vadd.f32 %v3813, %v3954
    %v3956 = vpop.f32.mrf.mxu0
    %3957 = vdwg.mxu0
    %v3958 = vadd.f32 %v3749, %v3884
    %v3959 = vxor.u32 %v3958, 2147483648
    %v3960 = vmul.f32 %v3959, 1.442695
    %v3961 = vpow.pop %v3960
    %v3962 = vadd.f32 %v3961, 1.0
    %v3963 = vrcp.pop %v3962
    %v3964 = vmul.f32 1.0, %v3963
    %v3965 = vadd.f32 %v3750, %v3886
    %v3966 = vxor.u32 %v3965, 2147483648
    %v3967 = vmul.f32 %v3966, 1.442695
    %v3968 = vpow.pop %v3967
    %v3969 = vadd.f32 %v3968, 1.0
    %v3970 = vrcp.pop %v3969
    %v3971 = vmul.f32 1.0, %v3970
    %v3972 = vmul.f32 %v3964, %v3955
    %v3973 = vadd.f32 %v3751, %v3972
    %v3974 = vtanh.pop %v3973
    %v3975 = vsub.f32 1.0, %v3971
    %v3976 = vmul.f32 %v3975, %v3974
    %v3977 = vmul.f32 %v3971, %v3747
    %v3978 = vadd.f32 %v3976, %v3977
    %3979 = vst [vmem:[#allocation4 + $0x28] sm:$0xff] %v3978
    %v3980 = vld [vmem:[#allocation2 + $0x90] sm:$0xff]
    %v3981 = vld [vmem:[#allocation2 + $0x98] sm:$0xff]
    %v3982 = vld [vmem:[#allocation2 + $0xa0] sm:$0xff]
    %v3983 = vld [vmem:[#allocation9] sm:$0xff]
    %v3984 = vld [vmem:[#allocation9 + $0x8] sm:$0xff]
    %v3985 = vld [vmem:[#allocation9 + $0x10] sm:$0xff]
    %v3986 = vld [vmem:[#allocation9 + $0x18] sm:$0xff]
    %v3987 = vld [vmem:[#allocation9 + $0x20] sm:$0xff]
    %v3988 = vld [vmem:[#allocation9 + $0x28] sm:$0xff]
    %v3989 = vld [vmem:[#allocation9 + $0x30] sm:$0xff]
    %v3990 = vld [vmem:[#allocation9 + $0x38] sm:$0xff]
    %v3991 = vld [vmem:[#allocation9 + $0x40] sm:$0xff]
    %v3992 = vld [vmem:[#allocation9 + $0x48] sm:$0xff]
    %v3993 = vld [vmem:[#allocation9 + $0x50] sm:$0xff]
    %v3994 = vld [vmem:[#allocation9 + $0x58] sm:$0xff]
    %v3995 = vld [vmem:[#allocation9 + $0x60] sm:$0xff]
    %v3996 = vld [vmem:[#allocation9 + $0x68] sm:$0xff]
    %v3997 = vld [vmem:[#allocation9 + $0x70] sm:$0xff]
    %v3998 = vld [vmem:[#allocation9 + $0x78] sm:$0xff]
    %v3999 = vld [vmem:[#allocation9 + $0x80] sm:$0xff]
    %v4000 = vld [vmem:[#allocation9 + $0x88] sm:$0xff]
    %v4001 = vld [vmem:[#allocation9 + $0x90] sm:$0xff]
    %v4002 = vld [vmem:[#allocation9 + $0x98] sm:$0xff]
    %v4003 = vld [vmem:[#allocation9 + $0xa0] sm:$0xff]
    %v4004 = vld [vmem:[#allocation9 + $0xa8] sm:$0xff]
    %v4005 = vld [vmem:[#allocation9 + $0xb0] sm:$0xff]
    %v4006 = vld [vmem:[#allocation9 + $0xb8] sm:$0xff]
    %v4007 = vld [vmem:[#allocation9 + $0xc0] sm:$0xff]
    %v4008 = vld [vmem:[#allocation9 + $0xc8] sm:$0xff]
    %v4009 = vld [vmem:[#allocation9 + $0xd0] sm:$0xff]
    %v4010 = vld [vmem:[#allocation9 + $0xd8] sm:$0xff]
    %v4011 = vld [vmem:[#allocation9 + $0xe0] sm:$0xff]
    %v4012 = vld [vmem:[#allocation9 + $0xe8] sm:$0xff]
    %v4013 = vld [vmem:[#allocation9 + $0xf0] sm:$0xff]
    %v4014 = vld [vmem:[#allocation9 + $0xf8] sm:$0xff]
    %v4015 = vld [vmem:[#allocation9 + $0x100] sm:$0xff]
    %v4016 = vld [vmem:[#allocation9 + $0x108] sm:$0xff]
    %v4017 = vld [vmem:[#allocation9 + $0x110] sm:$0xff]
    %v4018 = vld [vmem:[#allocation9 + $0x118] sm:$0xff]
    %v4019 = vld [vmem:[#allocation9 + $0x120] sm:$0xff]
    %v4020 = vld [vmem:[#allocation9 + $0x128] sm:$0xff]
    %v4021 = vld [vmem:[#allocation9 + $0x130] sm:$0xff]
    %v4022 = vld [vmem:[#allocation9 + $0x138] sm:$0xff]
    %v4023 = vld [vmem:[#allocation9 + $0x140] sm:$0xff]
    %v4024 = vld [vmem:[#allocation9 + $0x148] sm:$0xff]
    %v4025 = vld [vmem:[#allocation9 + $0x150] sm:$0xff]
    %v4026 = vld [vmem:[#allocation9 + $0x158] sm:$0xff]
    %v4027 = vld [vmem:[#allocation9 + $0x160] sm:$0xff]
    %v4028 = vld [vmem:[#allocation9 + $0x168] sm:$0xff]
    %v4029 = vld [vmem:[#allocation9 + $0x170] sm:$0xff]
    %v4030 = vld [vmem:[#allocation9 + $0x178] sm:$0xff]
    %v4031 = vld [vmem:[%s8] sm:$0x7]
    %v4033 = vlaneseq
    %v4034 = vshrl.u32 %v4033, 7
    %v4035 = vsub.s32 0, %v4034
    %v4036 = vrot.slane %v4031, %v4035
    %v4037 = vlaneseq
    %v4038 = vshrl.u32 %v4037, 7
    %v4039 = vsub.s32 1, %v4038
    %v4040 = vrot.slane %v4031, %v4039
    %v4041 = vlaneseq
    %v4042 = vshrl.u32 %v4041, 7
    %v4043 = vsub.s32 2, %v4042
    %v4044 = vrot.slane %v4031, %v4043
    %4048 = vmatprep.subr.mxu0 %v4029
    %4049 = vmatpush1.msra.mxu0 %v4028
    %4050 = vmatprep.subr.mxu0 %v4026
    %4051 = vmatpush1.msra.mxu0 %v4025
    %4052 = vmatprep.subr.mxu0 %v4023
    %4053 = vmatpush1.msra.mxu0 %v4022
    %4054 = vmatprep.subr.mxu0 %v4020
    %4055 = vmatpush1.msra.mxu0 %v4019
    %4056 = vmatprep.subr.mxu0 %v4017
    %4057 = vmatpush1.msra.mxu0 %v4016
    %4058 = vmatprep.subr.mxu0 %v4014
    %4059 = vmatpush1.msra.mxu0 %v4013
    %4060 = vmatprep.subr.mxu0 %v4011
    %4061 = vmatpush1.msra.mxu0 %v4010
    %4062 = vmatprep.subr.mxu0 %v4008
    %4063 = vmatpush1.msra.mxu0 %v4007
    %4064 = vmatprep.subr.mxu0 %v4005
    %4065 = vmatpush1.msra.mxu0 %v4004
    %4066 = vmatprep.subr.mxu0 %v4002
    %4067 = vmatpush1.msra.mxu0 %v4001
    %4068 = vmatprep.subr.mxu0 %v3999
    %4069 = vmatpush1.msra.mxu0 %v3998
    %4070 = vmatprep.subr.mxu0 %v3996
    %4071 = vmatpush1.msra.mxu0 %v3995
    %4072 = vmatprep.subr.mxu0 %v3993
    %4073 = vmatpush1.msra.mxu0 %v3992
    %4074 = vmatprep.subr.mxu0 %v3990
    %4075 = vmatpush1.msra.mxu0 %v3989
    %4076 = vmatprep.subr.mxu0 %v3987
    %4077 = vmatpush1.msra.mxu0 %v3986
    %4078 = vmatprep.subr.mxu0 %v3984
    %4079 = vmatpush1.msra.mxu0 %v3983
    %4080 = vmatprep.subr.mxu0 0.0
    %4081 = vmatpush2.msra.mxu0 0.0
    %4082 = vmatprep.subr.mxu0 0.0
    %4083 = vmatpush2.msra.mxu0 0.0
    %4084 = vmatprep.subr.mxu0 0.0
    %4085 = vmatpush2.msra.mxu0 0.0
    %4086 = vmatprep.subr.mxu0 0.0
    %4087 = vmatpush2.msra.mxu0 0.0
    %4088 = vmatprep.subr.mxu0 0.0
    %4089 = vmatpush2.msra.mxu0 0.0
    %4090 = vmatprep.subr.mxu0 0.0
    %4091 = vmatpush2.msra.mxu0 0.0
    %4092 = vmatprep.subr.mxu0 0.0
    %4093 = vmatpush2.msra.mxu0 0.0
    %4094 = vmatprep.subr.mxu0 0.0
    %4095 = vmatpush2.msra.mxu0 0.0
    %4096 = vmatprep.subr.mxu0 0.0
    %4097 = vmatpush2.msra.mxu0 0.0
    %4098 = vmatprep.subr.mxu0 0.0
    %4099 = vmatpush2.msra.mxu0 0.0
    %4100 = vmatprep.subr.mxu0 0.0
    %4101 = vmatpush2.msra.mxu0 0.0
    %4102 = vmatprep.subr.mxu0 0.0
    %4103 = vmatpush2.msra.mxu0 0.0
    %4104 = vmatprep.subr.mxu0 0.0
    %4105 = vmatpush2.msra.mxu0 0.0
    %4106 = vmatprep.subr.mxu0 0.0
    %4107 = vmatpush2.msra.mxu0 0.0
    %4108 = vmatprep.subr.mxu0 0.0
    %4109 = vmatpush2.msra.mxu0 0.0
    %4110 = vmatprep.subr.mxu0 0.0
    %4111 = vmatpush2.msra.mxu0 0.0
    %4112 = vmatprep.mubr.f32.mxu0 0.0
    %4113 = vmatmul.mubr.f32.gmra.mxu0 %v3978
    %v4114 = vpop.f32.mrf.mxu0
    %v4115 = vadd.f32 %v4036, %v4114
    %v4116 = vpop.f32.mrf.mxu0
    %v4117 = vadd.f32 %v4040, %v4116
    %4118 = vdwg.mxu0
    %4119 = vmatprep.subr.mxu0 0.0
    %4120 = vmatpush1.msra.mxu0 %v4030
    %4121 = vmatprep.subr.mxu0 0.0
    %4122 = vmatpush1.msra.mxu0 %v4027
    %4123 = vmatprep.subr.mxu0 0.0
    %4124 = vmatpush1.msra.mxu0 %v4024
    %4125 = vmatprep.subr.mxu0 0.0
    %4126 = vmatpush1.msra.mxu0 %v4021
    %4127 = vmatprep.subr.mxu0 0.0
    %4128 = vmatpush1.msra.mxu0 %v4018
    %4129 = vmatprep.subr.mxu0 0.0
    %4130 = vmatpush1.msra.mxu0 %v4015
    %4131 = vmatprep.subr.mxu0 0.0
    %4132 = vmatpush1.msra.mxu0 %v4012
    %4133 = vmatprep.subr.mxu0 0.0
    %4134 = vmatpush1.msra.mxu0 %v4009
    %4135 = vmatprep.subr.mxu0 0.0
    %4136 = vmatpush1.msra.mxu0 %v4006
    %4137 = vmatprep.subr.mxu0 0.0
    %4138 = vmatpush1.msra.mxu0 %v4003
    %4139 = vmatprep.subr.mxu0 0.0
    %4140 = vmatpush1.msra.mxu0 %v4000
    %4141 = vmatprep.subr.mxu0 0.0
    %4142 = vmatpush1.msra.mxu0 %v3997
    %4143 = vmatprep.subr.mxu0 0.0
    %4144 = vmatpush1.msra.mxu0 %v3994
    %4145 = vmatprep.subr.mxu0 0.0
    %4146 = vmatpush1.msra.mxu0 %v3991
    %4147 = vmatprep.subr.mxu0 0.0
    %4148 = vmatpush1.msra.mxu0 %v3988
    %4149 = vmatprep.subr.mxu0 0.0
    %4150 = vmatpush1.msra.mxu0 %v3985
    %4151 = vmatprep.subr.mxu0 0.0
    %4152 = vmatpush2.msra.mxu0 0.0
    %4153 = vmatprep.subr.mxu0 0.0
    %4154 = vmatpush2.msra.mxu0 0.0
    %4155 = vmatprep.subr.mxu0 0.0
    %4156 = vmatpush2.msra.mxu0 0.0
    %4157 = vmatprep.subr.mxu0 0.0
    %4158 = vmatpush2.msra.mxu0 0.0
    %4159 = vmatprep.subr.mxu0 0.0
    %4160 = vmatpush2.msra.mxu0 0.0
    %4161 = vmatprep.subr.mxu0 0.0
    %4162 = vmatpush2.msra.mxu0 0.0
    %4163 = vmatprep.subr.mxu0 0.0
    %4164 = vmatpush2.msra.mxu0 0.0
    %4165 = vmatprep.subr.mxu0 0.0
    %4166 = vmatpush2.msra.mxu0 0.0
    %4167 = vmatprep.subr.mxu0 0.0
    %4168 = vmatpush2.msra.mxu0 0.0
    %4169 = vmatprep.subr.mxu0 0.0
    %4170 = vmatpush2.msra.mxu0 0.0
    %4171 = vmatprep.subr.mxu0 0.0
    %4172 = vmatpush2.msra.mxu0 0.0
    %4173 = vmatprep.subr.mxu0 0.0
    %4174 = vmatpush2.msra.mxu0 0.0
    %4175 = vmatprep.subr.mxu0 0.0
    %4176 = vmatpush2.msra.mxu0 0.0
    %4177 = vmatprep.subr.mxu0 0.0
    %4178 = vmatpush2.msra.mxu0 0.0
    %4179 = vmatprep.subr.mxu0 0.0
    %4180 = vmatpush2.msra.mxu0 0.0
    %4181 = vmatprep.subr.mxu0 0.0
    %4182 = vmatpush2.msra.mxu0 0.0
    %4183 = vmatprep.mubr.f32.mxu0 0.0
    %4184 = vmatmul.mubr.f32.gmra.mxu0 %v3978
    %v4185 = vpop.f32.mrf.mxu0
    %v4186 = vadd.f32 %v4044, %v4185
    %v4187 = vpop.f32.mrf.mxu0
    %4188 = vdwg.mxu0
    %v4189 = vadd.f32 %v3980, %v4115
    %v4190 = vxor.u32 %v4189, 2147483648
    %v4191 = vmul.f32 %v4190, 1.442695
    %v4192 = vpow.pop %v4191
    %v4193 = vadd.f32 %v4192, 1.0
    %v4194 = vrcp.pop %v4193
    %v4195 = vmul.f32 1.0, %v4194
    %v4196 = vadd.f32 %v3981, %v4117
    %v4197 = vxor.u32 %v4196, 2147483648
    %v4198 = vmul.f32 %v4197, 1.442695
    %v4199 = vpow.pop %v4198
    %v4200 = vadd.f32 %v4199, 1.0
    %v4201 = vrcp.pop %v4200
    %v4202 = vmul.f32 1.0, %v4201
    %v4203 = vmul.f32 %v4195, %v4186
    %v4204 = vadd.f32 %v3982, %v4203
    %v4205 = vtanh.pop %v4204
    %v4206 = vsub.f32 1.0, %v4202
    %v4207 = vmul.f32 %v4206, %v4205
    %v4208 = vmul.f32 %v4202, %v3978
    %v4209 = vadd.f32 %v4207, %v4208
    %4210 = vst [vmem:[#allocation4 + $0x30] sm:$0xff] %v4209
    %v4211 = vld [vmem:[#allocation2 + $0xa8] sm:$0xff]
    %v4212 = vld [vmem:[#allocation2 + $0xb0] sm:$0xff]
    %v4213 = vld [vmem:[#allocation2 + $0xb8] sm:$0xff]
    %v4214 = vld [vmem:[#allocation9] sm:$0xff]
    %v4215 = vld [vmem:[#allocation9 + $0x8] sm:$0xff]
    %v4216 = vld [vmem:[#allocation9 + $0x10] sm:$0xff]
    %v4217 = vld [vmem:[#allocation9 + $0x18] sm:$0xff]
    %v4218 = vld [vmem:[#allocation9 + $0x20] sm:$0xff]
    %v4219 = vld [vmem:[#allocation9 + $0x28] sm:$0xff]
    %v4220 = vld [vmem:[#allocation9 + $0x30] sm:$0xff]
    %v4221 = vld [vmem:[#allocation9 + $0x38] sm:$0xff]
    %v4222 = vld [vmem:[#allocation9 + $0x40] sm:$0xff]
    %v4223 = vld [vmem:[#allocation9 + $0x48] sm:$0xff]
    %v4224 = vld [vmem:[#allocation9 + $0x50] sm:$0xff]
    %v4225 = vld [vmem:[#allocation9 + $0x58] sm:$0xff]
    %v4226 = vld [vmem:[#allocation9 + $0x60] sm:$0xff]
    %v4227 = vld [vmem:[#allocation9 + $0x68] sm:$0xff]
    %v4228 = vld [vmem:[#allocation9 + $0x70] sm:$0xff]
    %v4229 = vld [vmem:[#allocation9 + $0x78] sm:$0xff]
    %v4230 = vld [vmem:[#allocation9 + $0x80] sm:$0xff]
    %v4231 = vld [vmem:[#allocation9 + $0x88] sm:$0xff]
    %v4232 = vld [vmem:[#allocation9 + $0x90] sm:$0xff]
    %v4233 = vld [vmem:[#allocation9 + $0x98] sm:$0xff]
    %v4234 = vld [vmem:[#allocation9 + $0xa0] sm:$0xff]
    %v4235 = vld [vmem:[#allocation9 + $0xa8] sm:$0xff]
    %v4236 = vld [vmem:[#allocation9 + $0xb0] sm:$0xff]
    %v4237 = vld [vmem:[#allocation9 + $0xb8] sm:$0xff]
    %v4238 = vld [vmem:[#allocation9 + $0xc0] sm:$0xff]
    %v4239 = vld [vmem:[#allocation9 + $0xc8] sm:$0xff]
    %v4240 = vld [vmem:[#allocation9 + $0xd0] sm:$0xff]
    %v4241 = vld [vmem:[#allocation9 + $0xd8] sm:$0xff]
    %v4242 = vld [vmem:[#allocation9 + $0xe0] sm:$0xff]
    %v4243 = vld [vmem:[#allocation9 + $0xe8] sm:$0xff]
    %v4244 = vld [vmem:[#allocation9 + $0xf0] sm:$0xff]
    %v4245 = vld [vmem:[#allocation9 + $0xf8] sm:$0xff]
    %v4246 = vld [vmem:[#allocation9 + $0x100] sm:$0xff]
    %v4247 = vld [vmem:[#allocation9 + $0x108] sm:$0xff]
    %v4248 = vld [vmem:[#allocation9 + $0x110] sm:$0xff]
    %v4249 = vld [vmem:[#allocation9 + $0x118] sm:$0xff]
    %v4250 = vld [vmem:[#allocation9 + $0x120] sm:$0xff]
    %v4251 = vld [vmem:[#allocation9 + $0x128] sm:$0xff]
    %v4252 = vld [vmem:[#allocation9 + $0x130] sm:$0xff]
    %v4253 = vld [vmem:[#allocation9 + $0x138] sm:$0xff]
    %v4254 = vld [vmem:[#allocation9 + $0x140] sm:$0xff]
    %v4255 = vld [vmem:[#allocation9 + $0x148] sm:$0xff]
    %v4256 = vld [vmem:[#allocation9 + $0x150] sm:$0xff]
    %v4257 = vld [vmem:[#allocation9 + $0x158] sm:$0xff]
    %v4258 = vld [vmem:[#allocation9 + $0x160] sm:$0xff]
    %v4259 = vld [vmem:[#allocation9 + $0x168] sm:$0xff]
    %v4260 = vld [vmem:[#allocation9 + $0x170] sm:$0xff]
    %v4261 = vld [vmem:[#allocation9 + $0x178] sm:$0xff]
    %v4262 = vld [vmem:[%s8] sm:$0x7]
    %v4264 = vlaneseq
    %v4265 = vshrl.u32 %v4264, 7
    %v4266 = vsub.s32 0, %v4265
    %v4267 = vrot.slane %v4262, %v4266
    %v4268 = vlaneseq
    %v4269 = vshrl.u32 %v4268, 7
    %v4270 = vsub.s32 1, %v4269
    %v4271 = vrot.slane %v4262, %v4270
    %v4272 = vlaneseq
    %v4273 = vshrl.u32 %v4272, 7
    %v4274 = vsub.s32 2, %v4273
    %v4275 = vrot.slane %v4262, %v4274
    %4279 = vmatprep.subr.mxu0 %v4260
    %4280 = vmatpush1.msra.mxu0 %v4259
    %4281 = vmatprep.subr.mxu0 %v4257
    %4282 = vmatpush1.msra.mxu0 %v4256
    %4283 = vmatprep.subr.mxu0 %v4254
    %4284 = vmatpush1.msra.mxu0 %v4253
    %4285 = vmatprep.subr.mxu0 %v4251
    %4286 = vmatpush1.msra.mxu0 %v4250
    %4287 = vmatprep.subr.mxu0 %v4248
    %4288 = vmatpush1.msra.mxu0 %v4247
    %4289 = vmatprep.subr.mxu0 %v4245
    %4290 = vmatpush1.msra.mxu0 %v4244
    %4291 = vmatprep.subr.mxu0 %v4242
    %4292 = vmatpush1.msra.mxu0 %v4241
    %4293 = vmatprep.subr.mxu0 %v4239
    %4294 = vmatpush1.msra.mxu0 %v4238
    %4295 = vmatprep.subr.mxu0 %v4236
    %4296 = vmatpush1.msra.mxu0 %v4235
    %4297 = vmatprep.subr.mxu0 %v4233
    %4298 = vmatpush1.msra.mxu0 %v4232
    %4299 = vmatprep.subr.mxu0 %v4230
    %4300 = vmatpush1.msra.mxu0 %v4229
    %4301 = vmatprep.subr.mxu0 %v4227
    %4302 = vmatpush1.msra.mxu0 %v4226
    %4303 = vmatprep.subr.mxu0 %v4224
    %4304 = vmatpush1.msra.mxu0 %v4223
    %4305 = vmatprep.subr.mxu0 %v4221
    %4306 = vmatpush1.msra.mxu0 %v4220
    %4307 = vmatprep.subr.mxu0 %v4218
    %4308 = vmatpush1.msra.mxu0 %v4217
    %4309 = vmatprep.subr.mxu0 %v4215
    %4310 = vmatpush1.msra.mxu0 %v4214
    %4311 = vmatprep.subr.mxu0 0.0
    %4312 = vmatpush2.msra.mxu0 0.0
    %4313 = vmatprep.subr.mxu0 0.0
    %4314 = vmatpush2.msra.mxu0 0.0
    %4315 = vmatprep.subr.mxu0 0.0
    %4316 = vmatpush2.msra.mxu0 0.0
    %4317 = vmatprep.subr.mxu0 0.0
    %4318 = vmatpush2.msra.mxu0 0.0
    %4319 = vmatprep.subr.mxu0 0.0
    %4320 = vmatpush2.msra.mxu0 0.0
    %4321 = vmatprep.subr.mxu0 0.0
    %4322 = vmatpush2.msra.mxu0 0.0
    %4323 = vmatprep.subr.mxu0 0.0
    %4324 = vmatpush2.msra.mxu0 0.0
    %4325 = vmatprep.subr.mxu0 0.0
    %4326 = vmatpush2.msra.mxu0 0.0
    %4327 = vmatprep.subr.mxu0 0.0
    %4328 = vmatpush2.msra.mxu0 0.0
    %4329 = vmatprep.subr.mxu0 0.0
    %4330 = vmatpush2.msra.mxu0 0.0
    %4331 = vmatprep.subr.mxu0 0.0
    %4332 = vmatpush2.msra.mxu0 0.0
    %4333 = vmatprep.subr.mxu0 0.0
    %4334 = vmatpush2.msra.mxu0 0.0
    %4335 = vmatprep.subr.mxu0 0.0
    %4336 = vmatpush2.msra.mxu0 0.0
    %4337 = vmatprep.subr.mxu0 0.0
    %4338 = vmatpush2.msra.mxu0 0.0
    %4339 = vmatprep.subr.mxu0 0.0
    %4340 = vmatpush2.msra.mxu0 0.0
    %4341 = vmatprep.subr.mxu0 0.0
    %4342 = vmatpush2.msra.mxu0 0.0
    %4343 = vmatprep.mubr.f32.mxu0 0.0
    %4344 = vmatmul.mubr.f32.gmra.mxu0 %v4209
    %v4345 = vpop.f32.mrf.mxu0
    %v4346 = vadd.f32 %v4267, %v4345
    %v4347 = vpop.f32.mrf.mxu0
    %v4348 = vadd.f32 %v4271, %v4347
    %4349 = vdwg.mxu0
    %4350 = vmatprep.subr.mxu0 0.0
    %4351 = vmatpush1.msra.mxu0 %v4261
    %4352 = vmatprep.subr.mxu0 0.0
    %4353 = vmatpush1.msra.mxu0 %v4258
    %4354 = vmatprep.subr.mxu0 0.0
    %4355 = vmatpush1.msra.mxu0 %v4255
    %4356 = vmatprep.subr.mxu0 0.0
    %4357 = vmatpush1.msra.mxu0 %v4252
    %4358 = vmatprep.subr.mxu0 0.0
    %4359 = vmatpush1.msra.mxu0 %v4249
    %4360 = vmatprep.subr.mxu0 0.0
    %4361 = vmatpush1.msra.mxu0 %v4246
    %4362 = vmatprep.subr.mxu0 0.0
    %4363 = vmatpush1.msra.mxu0 %v4243
    %4364 = vmatprep.subr.mxu0 0.0
    %4365 = vmatpush1.msra.mxu0 %v4240
    %4366 = vmatprep.subr.mxu0 0.0
    %4367 = vmatpush1.msra.mxu0 %v4237
    %4368 = vmatprep.subr.mxu0 0.0
    %4369 = vmatpush1.msra.mxu0 %v4234
    %4370 = vmatprep.subr.mxu0 0.0
    %4371 = vmatpush1.msra.mxu0 %v4231
    %4372 = vmatprep.subr.mxu0 0.0
    %4373 = vmatpush1.msra.mxu0 %v4228
    %4374 = vmatprep.subr.mxu0 0.0
    %4375 = vmatpush1.msra.mxu0 %v4225
    %4376 = vmatprep.subr.mxu0 0.0
    %4377 = vmatpush1.msra.mxu0 %v4222
    %4378 = vmatprep.subr.mxu0 0.0
    %4379 = vmatpush1.msra.mxu0 %v4219
    %4380 = vmatprep.subr.mxu0 0.0
    %4381 = vmatpush1.msra.mxu0 %v4216
    %4382 = vmatprep.subr.mxu0 0.0
    %4383 = vmatpush2.msra.mxu0 0.0
    %4384 = vmatprep.subr.mxu0 0.0
    %4385 = vmatpush2.msra.mxu0 0.0
    %4386 = vmatprep.subr.mxu0 0.0
    %4387 = vmatpush2.msra.mxu0 0.0
    %4388 = vmatprep.subr.mxu0 0.0
    %4389 = vmatpush2.msra.mxu0 0.0
    %4390 = vmatprep.subr.mxu0 0.0
    %4391 = vmatpush2.msra.mxu0 0.0
    %4392 = vmatprep.subr.mxu0 0.0
    %4393 = vmatpush2.msra.mxu0 0.0
    %4394 = vmatprep.subr.mxu0 0.0
    %4395 = vmatpush2.msra.mxu0 0.0
    %4396 = vmatprep.subr.mxu0 0.0
    %4397 = vmatpush2.msra.mxu0 0.0
    %4398 = vmatprep.subr.mxu0 0.0
    %4399 = vmatpush2.msra.mxu0 0.0
    %4400 = vmatprep.subr.mxu0 0.0
    %4401 = vmatpush2.msra.mxu0 0.0
    %4402 = vmatprep.subr.mxu0 0.0
    %4403 = vmatpush2.msra.mxu0 0.0
    %4404 = vmatprep.subr.mxu0 0.0
    %4405 = vmatpush2.msra.mxu0 0.0
    %4406 = vmatprep.subr.mxu0 0.0
    %4407 = vmatpush2.msra.mxu0 0.0
    %4408 = vmatprep.subr.mxu0 0.0
    %4409 = vmatpush2.msra.mxu0 0.0
    %4410 = vmatprep.subr.mxu0 0.0
    %4411 = vmatpush2.msra.mxu0 0.0
    %4412 = vmatprep.subr.mxu0 0.0
    %4413 = vmatpush2.msra.mxu0 0.0
    %4414 = vmatprep.mubr.f32.mxu0 0.0
    %4415 = vmatmul.mubr.f32.gmra.mxu0 %v4209
    %v4416 = vpop.f32.mrf.mxu0
    %v4417 = vadd.f32 %v4275, %v4416
    %v4418 = vpop.f32.mrf.mxu0
    %4419 = vdwg.mxu0
    %v4420 = vadd.f32 %v4211, %v4346
    %v4421 = vxor.u32 %v4420, 2147483648
    %v4422 = vmul.f32 %v4421, 1.442695
    %v4423 = vpow.pop %v4422
    %v4424 = vadd.f32 %v4423, 1.0
    %v4425 = vrcp.pop %v4424
    %v4426 = vmul.f32 1.0, %v4425
    %v4427 = vadd.f32 %v4212, %v4348
    %v4428 = vxor.u32 %v4427, 2147483648
    %v4429 = vmul.f32 %v4428, 1.442695
    %v4430 = vpow.pop %v4429
    %v4431 = vadd.f32 %v4430, 1.0
    %v4432 = vrcp.pop %v4431
    %v4433 = vmul.f32 1.0, %v4432
    %v4434 = vmul.f32 %v4426, %v4417
    %v4435 = vadd.f32 %v4213, %v4434
    %v4436 = vtanh.pop %v4435
    %v4437 = vsub.f32 1.0, %v4433
    %v4438 = vmul.f32 %v4437, %v4436
    %v4439 = vmul.f32 %v4433, %v4209
    %v4440 = vadd.f32 %v4438, %v4439
    %4441 = vst [vmem:[#allocation4 + $0x38] sm:$0xff] %v4440
    %v4442 = vld [vmem:[#allocation4] sm:$0xff]
    %v4443 = vld [vmem:[#allocation4 + $0x8] sm:$0xff]
    %v4444 = vld [vmem:[#allocation4 + $0x10] sm:$0xff]
    %v4445 = vld [vmem:[#allocation4 + $0x18] sm:$0xff]
    %v4446 = vld [vmem:[#allocation4 + $0x20] sm:$0xff]
    %v4447 = vld [vmem:[#allocation4 + $0x28] sm:$0xff]
    %v4448 = vld [vmem:[#allocation4 + $0x30] sm:$0xff]
    %v4449 = vld [vmem:[#allocation4 + $0x38] sm:$0xff]
    %v4450 = vld [vmem:[#allocation10] sm:$0xff]
    %v4451 = vld [vmem:[#allocation10 + $0x8] sm:$0xff]
    %v4452 = vld [vmem:[#allocation10 + $0x10] sm:$0xff]
    %v4453 = vld [vmem:[#allocation10 + $0x18] sm:$0xff]
    %v4454 = vld [vmem:[#allocation10 + $0x20] sm:$0xff]
    %v4455 = vld [vmem:[#allocation10 + $0x28] sm:$0xff]
    %v4456 = vld [vmem:[#allocation10 + $0x30] sm:$0xff]
    %v4457 = vld [vmem:[#allocation10 + $0x38] sm:$0xff]
    %v4458 = vld [vmem:[#allocation10 + $0x40] sm:$0xff]
    %v4459 = vld [vmem:[#allocation10 + $0x48] sm:$0xff]
    %v4460 = vld [vmem:[#allocation10 + $0x50] sm:$0xff]
    %v4461 = vld [vmem:[#allocation10 + $0x58] sm:$0xff]
    %v4462 = vld [vmem:[#allocation10 + $0x60] sm:$0xff]
    %v4463 = vld [vmem:[#allocation10 + $0x68] sm:$0xff]
    %v4464 = vld [vmem:[#allocation10 + $0x70] sm:$0xff]
    %v4465 = vld [vmem:[#allocation10 + $0x78] sm:$0xff]
    %v4466 = vld [vmem:[#allocation10 + $0x80] sm:$0xff]
    %v4467 = vld [vmem:[#allocation10 + $0x88] sm:$0xff]
    %v4468 = vld [vmem:[#allocation10 + $0x90] sm:$0xff]
    %v4469 = vld [vmem:[#allocation10 + $0x98] sm:$0xff]
    %v4470 = vld [vmem:[#allocation10 + $0xa0] sm:$0xff]
    %v4471 = vld [vmem:[#allocation10 + $0xa8] sm:$0xff]
    %v4472 = vld [vmem:[#allocation10 + $0xb0] sm:$0xff]
    %v4473 = vld [vmem:[#allocation10 + $0xb8] sm:$0xff]
    %v4474 = vld [vmem:[#allocation10 + $0xc0] sm:$0xff]
    %v4475 = vld [vmem:[#allocation10 + $0xc8] sm:$0xff]
    %v4476 = vld [vmem:[#allocation10 + $0xd0] sm:$0xff]
    %v4477 = vld [vmem:[#allocation10 + $0xd8] sm:$0xff]
    %v4478 = vld [vmem:[#allocation10 + $0xe0] sm:$0xff]
    %v4479 = vld [vmem:[#allocation10 + $0xe8] sm:$0xff]
    %v4480 = vld [vmem:[#allocation10 + $0xf0] sm:$0xff]
    %v4481 = vld [vmem:[#allocation10 + $0xf8] sm:$0xff]
    %v4482 = vld [vmem:[#allocation10 + $0x100] sm:$0xff]
    %v4483 = vld [vmem:[#allocation10 + $0x108] sm:$0xff]
    %v4484 = vld [vmem:[#allocation10 + $0x110] sm:$0xff]
    %v4485 = vld [vmem:[#allocation10 + $0x118] sm:$0xff]
    %v4486 = vld [vmem:[#allocation10 + $0x120] sm:$0xff]
    %v4487 = vld [vmem:[#allocation10 + $0x128] sm:$0xff]
    %v4488 = vld [vmem:[#allocation10 + $0x130] sm:$0xff]
    %v4489 = vld [vmem:[#allocation10 + $0x138] sm:$0xff]
    %v4490 = vld [vmem:[#allocation10 + $0x140] sm:$0xff]
    %v4491 = vld [vmem:[#allocation10 + $0x148] sm:$0xff]
    %v4492 = vld [vmem:[#allocation10 + $0x150] sm:$0xff]
    %v4493 = vld [vmem:[#allocation10 + $0x158] sm:$0xff]
    %v4494 = vld [vmem:[#allocation10 + $0x160] sm:$0xff]
    %v4495 = vld [vmem:[#allocation10 + $0x168] sm:$0xff]
    %v4496 = vld [vmem:[#allocation10 + $0x170] sm:$0xff]
    %v4497 = vld [vmem:[#allocation10 + $0x178] sm:$0xff]
    %v4498 = vld [vmem:[%s11] sm:$0x7]
    %v4500 = vlaneseq
    %v4501 = vshrl.u32 %v4500, 7
    %v4502 = vsub.s32 0, %v4501
    %v4503 = vrot.slane %v4498, %v4502
    %v4504 = vlaneseq
    %v4505 = vshrl.u32 %v4504, 7
    %v4506 = vsub.s32 1, %v4505
    %v4507 = vrot.slane %v4498, %v4506
    %v4508 = vlaneseq
    %v4509 = vshrl.u32 %v4508, 7
    %v4510 = vsub.s32 2, %v4509
    %v4511 = vrot.slane %v4498, %v4510
    %4515 = vmatprep.subr.mxu0 %v4496
    %4516 = vmatpush1.msra.mxu0 %v4495
    %4517 = vmatprep.subr.mxu0 %v4493
    %4518 = vmatpush1.msra.mxu0 %v4492
    %4519 = vmatprep.subr.mxu0 %v4490
    %4520 = vmatpush1.msra.mxu0 %v4489
    %4521 = vmatprep.subr.mxu0 %v4487
    %4522 = vmatpush1.msra.mxu0 %v4486
    %4523 = vmatprep.subr.mxu0 %v4484
    %4524 = vmatpush1.msra.mxu0 %v4483
    %4525 = vmatprep.subr.mxu0 %v4481
    %4526 = vmatpush1.msra.mxu0 %v4480
    %4527 = vmatprep.subr.mxu0 %v4478
    %4528 = vmatpush1.msra.mxu0 %v4477
    %4529 = vmatprep.subr.mxu0 %v4475
    %4530 = vmatpush1.msra.mxu0 %v4474
    %4531 = vmatprep.subr.mxu0 %v4472
    %4532 = vmatpush1.msra.mxu0 %v4471
    %4533 = vmatprep.subr.mxu0 %v4469
    %4534 = vmatpush1.msra.mxu0 %v4468
    %4535 = vmatprep.subr.mxu0 %v4466
    %4536 = vmatpush1.msra.mxu0 %v4465
    %4537 = vmatprep.subr.mxu0 %v4463
    %4538 = vmatpush1.msra.mxu0 %v4462
    %4539 = vmatprep.subr.mxu0 %v4460
    %4540 = vmatpush1.msra.mxu0 %v4459
    %4541 = vmatprep.subr.mxu0 %v4457
    %4542 = vmatpush1.msra.mxu0 %v4456
    %4543 = vmatprep.subr.mxu0 %v4454
    %4544 = vmatpush1.msra.mxu0 %v4453
    %4545 = vmatprep.subr.mxu0 %v4451
    %4546 = vmatpush1.msra.mxu0 %v4450
    %4547 = vmatprep.subr.mxu0 0.0
    %4548 = vmatpush2.msra.mxu0 0.0
    %4549 = vmatprep.subr.mxu0 0.0
    %4550 = vmatpush2.msra.mxu0 0.0
    %4551 = vmatprep.subr.mxu0 0.0
    %4552 = vmatpush2.msra.mxu0 0.0
    %4553 = vmatprep.subr.mxu0 0.0
    %4554 = vmatpush2.msra.mxu0 0.0
    %4555 = vmatprep.subr.mxu0 0.0
    %4556 = vmatpush2.msra.mxu0 0.0
    %4557 = vmatprep.subr.mxu0 0.0
    %4558 = vmatpush2.msra.mxu0 0.0
    %4559 = vmatprep.subr.mxu0 0.0
    %4560 = vmatpush2.msra.mxu0 0.0
    %4561 = vmatprep.subr.mxu0 0.0
    %4562 = vmatpush2.msra.mxu0 0.0
    %4563 = vmatprep.subr.mxu0 0.0
    %4564 = vmatpush2.msra.mxu0 0.0
    %4565 = vmatprep.subr.mxu0 0.0
    %4566 = vmatpush2.msra.mxu0 0.0
    %4567 = vmatprep.subr.mxu0 0.0
    %4568 = vmatpush2.msra.mxu0 0.0
    %4569 = vmatprep.subr.mxu0 0.0
    %4570 = vmatpush2.msra.mxu0 0.0
    %4571 = vmatprep.subr.mxu0 0.0
    %4572 = vmatpush2.msra.mxu0 0.0
    %4573 = vmatprep.subr.mxu0 0.0
    %4574 = vmatpush2.msra.mxu0 0.0
    %4575 = vmatprep.subr.mxu0 0.0
    %4576 = vmatpush2.msra.mxu0 0.0
    %4577 = vmatprep.subr.mxu0 0.0
    %4578 = vmatpush2.msra.mxu0 0.0
    %4579 = vmatprep.mubr.f32.mxu0 0.0
    %4580 = vmatmul.mubr.f32.gmra.mxu0 %v4442
    %v4581 = vpop.f32.mrf.mxu0
    %v4582 = vadd.f32 %v4503, %v4581
    %v4583 = vpop.f32.mrf.mxu0
    %v4584 = vadd.f32 %v4507, %v4583
    %4585 = vmatprep.mubr.f32.mxu0 0.0
    %4586 = vmatmul.mubr.f32.gmra.mxu0 %v4443
    %v4587 = vpop.f32.mrf.mxu0
    %v4588 = vadd.f32 %v4503, %v4587
    %v4589 = vpop.f32.mrf.mxu0
    %v4590 = vadd.f32 %v4507, %v4589
    %4591 = vmatprep.mubr.f32.mxu0 0.0
    %4592 = vmatmul.mubr.f32.gmra.mxu0 %v4444
    %v4593 = vpop.f32.mrf.mxu0
    %v4594 = vadd.f32 %v4503, %v4593
    %v4595 = vpop.f32.mrf.mxu0
    %v4596 = vadd.f32 %v4507, %v4595
    %4597 = vmatprep.mubr.f32.mxu0 0.0
    %4598 = vmatmul.mubr.f32.gmra.mxu0 %v4445
    %v4599 = vpop.f32.mrf.mxu0
    %v4600 = vadd.f32 %v4503, %v4599
    %v4601 = vpop.f32.mrf.mxu0
    %v4602 = vadd.f32 %v4507, %v4601
    %4603 = vmatprep.mubr.f32.mxu0 0.0
    %4604 = vmatmul.mubr.f32.gmra.mxu0 %v4446
    %v4605 = vpop.f32.mrf.mxu0
    %v4606 = vadd.f32 %v4503, %v4605
    %v4607 = vpop.f32.mrf.mxu0
    %v4608 = vadd.f32 %v4507, %v4607
    %4609 = vmatprep.mubr.f32.mxu0 0.0
    %4610 = vmatmul.mubr.f32.gmra.mxu0 %v4447
    %v4611 = vpop.f32.mrf.mxu0
    %v4612 = vadd.f32 %v4503, %v4611
    %v4613 = vpop.f32.mrf.mxu0
    %v4614 = vadd.f32 %v4507, %v4613
    %4615 = vmatprep.mubr.f32.mxu0 0.0
    %4616 = vmatmul.mubr.f32.gmra.mxu0 %v4448
    %v4617 = vpop.f32.mrf.mxu0
    %v4618 = vadd.f32 %v4503, %v4617
    %v4619 = vpop.f32.mrf.mxu0
    %v4620 = vadd.f32 %v4507, %v4619
    %4621 = vmatprep.mubr.f32.mxu0 0.0
    %4622 = vmatmul.mubr.f32.gmra.mxu0 %v4449
    %v4623 = vpop.f32.mrf.mxu0
    %v4624 = vadd.f32 %v4503, %v4623
    %v4625 = vpop.f32.mrf.mxu0
    %v4626 = vadd.f32 %v4507, %v4625
    %4627 = vdwg.mxu0
    %4628 = vmatprep.subr.mxu0 0.0
    %4629 = vmatpush1.msra.mxu0 %v4497
    %4630 = vmatprep.subr.mxu0 0.0
    %4631 = vmatpush1.msra.mxu0 %v4494
    %4632 = vmatprep.subr.mxu0 0.0
    %4633 = vmatpush1.msra.mxu0 %v4491
    %4634 = vmatprep.subr.mxu0 0.0
    %4635 = vmatpush1.msra.mxu0 %v4488
    %4636 = vmatprep.subr.mxu0 0.0
    %4637 = vmatpush1.msra.mxu0 %v4485
    %4638 = vmatprep.subr.mxu0 0.0
    %4639 = vmatpush1.msra.mxu0 %v4482
    %4640 = vmatprep.subr.mxu0 0.0
    %4641 = vmatpush1.msra.mxu0 %v4479
    %4642 = vmatprep.subr.mxu0 0.0
    %4643 = vmatpush1.msra.mxu0 %v4476
    %4644 = vmatprep.subr.mxu0 0.0
    %4645 = vmatpush1.msra.mxu0 %v4473
    %4646 = vmatprep.subr.mxu0 0.0
    %4647 = vmatpush1.msra.mxu0 %v4470
    %4648 = vmatprep.subr.mxu0 0.0
    %4649 = vmatpush1.msra.mxu0 %v4467
    %4650 = vmatprep.subr.mxu0 0.0
    %4651 = vmatpush1.msra.mxu0 %v4464
    %4652 = vmatprep.subr.mxu0 0.0
    %4653 = vmatpush1.msra.mxu0 %v4461
    %4654 = vmatprep.subr.mxu0 0.0
    %4655 = vmatpush1.msra.mxu0 %v4458
    %4656 = vmatprep.subr.mxu0 0.0
    %4657 = vmatpush1.msra.mxu0 %v4455
    %4658 = vmatprep.subr.mxu0 0.0
    %4659 = vmatpush1.msra.mxu0 %v4452
    %4660 = vmatprep.subr.mxu0 0.0
    %4661 = vmatpush2.msra.mxu0 0.0
    %4662 = vmatprep.subr.mxu0 0.0
    %4663 = vmatpush2.msra.mxu0 0.0
    %4664 = vmatprep.subr.mxu0 0.0
    %4665 = vmatpush2.msra.mxu0 0.0
    %4666 = vmatprep.subr.mxu0 0.0
    %4667 = vmatpush2.msra.mxu0 0.0
    %4668 = vmatprep.subr.mxu0 0.0
    %4669 = vmatpush2.msra.mxu0 0.0
    %4670 = vmatprep.subr.mxu0 0.0
    %4671 = vmatpush2.msra.mxu0 0.0
    %4672 = vmatprep.subr.mxu0 0.0
    %4673 = vmatpush2.msra.mxu0 0.0
    %4674 = vmatprep.subr.mxu0 0.0
    %4675 = vmatpush2.msra.mxu0 0.0
    %4676 = vmatprep.subr.mxu0 0.0
    %4677 = vmatpush2.msra.mxu0 0.0
    %4678 = vmatprep.subr.mxu0 0.0
    %4679 = vmatpush2.msra.mxu0 0.0
    %4680 = vmatprep.subr.mxu0 0.0
    %4681 = vmatpush2.msra.mxu0 0.0
    %4682 = vmatprep.subr.mxu0 0.0
    %4683 = vmatpush2.msra.mxu0 0.0
    %4684 = vmatprep.subr.mxu0 0.0
    %4685 = vmatpush2.msra.mxu0 0.0
    %4686 = vmatprep.subr.mxu0 0.0
    %4687 = vmatpush2.msra.mxu0 0.0
    %4688 = vmatprep.subr.mxu0 0.0
    %4689 = vmatpush2.msra.mxu0 0.0
    %4690 = vmatprep.subr.mxu0 0.0
    %4691 = vmatpush2.msra.mxu0 0.0
    %4692 = vmatprep.mubr.f32.mxu0 0.0
    %4693 = vmatmul.mubr.f32.gmra.mxu0 %v4442
    %v4694 = vpop.f32.mrf.mxu0
    %v4695 = vadd.f32 %v4511, %v4694
    %v4696 = vpop.f32.mrf.mxu0
    %4697 = vmatprep.mubr.f32.mxu0 0.0
    %4698 = vmatmul.mubr.f32.gmra.mxu0 %v4443
    %v4699 = vpop.f32.mrf.mxu0
    %v4700 = vadd.f32 %v4511, %v4699
    %v4701 = vpop.f32.mrf.mxu0
    %4702 = vmatprep.mubr.f32.mxu0 0.0
    %4703 = vmatmul.mubr.f32.gmra.mxu0 %v4444
    %v4704 = vpop.f32.mrf.mxu0
    %v4705 = vadd.f32 %v4511, %v4704
    %v4706 = vpop.f32.mrf.mxu0
    %4707 = vmatprep.mubr.f32.mxu0 0.0
    %4708 = vmatmul.mubr.f32.gmra.mxu0 %v4445
    %v4709 = vpop.f32.mrf.mxu0
    %v4710 = vadd.f32 %v4511, %v4709
    %v4711 = vpop.f32.mrf.mxu0
    %4712 = vmatprep.mubr.f32.mxu0 0.0
    %4713 = vmatmul.mubr.f32.gmra.mxu0 %v4446
    %v4714 = vpop.f32.mrf.mxu0
    %v4715 = vadd.f32 %v4511, %v4714
    %v4716 = vpop.f32.mrf.mxu0
    %4717 = vmatprep.mubr.f32.mxu0 0.0
    %4718 = vmatmul.mubr.f32.gmra.mxu0 %v4447
    %v4719 = vpop.f32.mrf.mxu0
    %v4720 = vadd.f32 %v4511, %v4719
    %v4721 = vpop.f32.mrf.mxu0
    %4722 = vmatprep.mubr.f32.mxu0 0.0
    %4723 = vmatmul.mubr.f32.gmra.mxu0 %v4448
    %v4724 = vpop.f32.mrf.mxu0
    %v4725 = vadd.f32 %v4511, %v4724
    %v4726 = vpop.f32.mrf.mxu0
    %4727 = vmatprep.mubr.f32.mxu0 0.0
    %4728 = vmatmul.mubr.f32.gmra.mxu0 %v4449
    %v4729 = vpop.f32.mrf.mxu0
    %v4730 = vadd.f32 %v4511, %v4729
    %v4731 = vpop.f32.mrf.mxu0
    %4732 = vdwg.mxu0
    %4733 = vst [vmem:[#allocation2] sm:$0xff] %v4582
    %4734 = vst [vmem:[#allocation2 + $0x8] sm:$0xff] %v4584
    %4735 = vst [vmem:[#allocation2 + $0x10] sm:$0xff] %v4695
    %4736 = vst [vmem:[#allocation2 + $0x18] sm:$0xff] %v4588
    %4737 = vst [vmem:[#allocation2 + $0x20] sm:$0xff] %v4590
    %4738 = vst [vmem:[#allocation2 + $0x28] sm:$0xff] %v4700
    %4739 = vst [vmem:[#allocation2 + $0x30] sm:$0xff] %v4594
    %4740 = vst [vmem:[#allocation2 + $0x38] sm:$0xff] %v4596
    %4741 = vst [vmem:[#allocation2 + $0x40] sm:$0xff] %v4705
    %4742 = vst [vmem:[#allocation2 + $0x48] sm:$0xff] %v4600
    %4743 = vst [vmem:[#allocation2 + $0x50] sm:$0xff] %v4602
    %4744 = vst [vmem:[#allocation2 + $0x58] sm:$0xff] %v4710
    %4745 = vst [vmem:[#allocation2 + $0x60] sm:$0xff] %v4606
    %4746 = vst [vmem:[#allocation2 + $0x68] sm:$0xff] %v4608
    %4747 = vst [vmem:[#allocation2 + $0x70] sm:$0xff] %v4715
    %4748 = vst [vmem:[#allocation2 + $0x78] sm:$0xff] %v4612
    %4749 = vst [vmem:[#allocation2 + $0x80] sm:$0xff] %v4614
    %4750 = vst [vmem:[#allocation2 + $0x88] sm:$0xff] %v4720
    %4751 = vst [vmem:[#allocation2 + $0x90] sm:$0xff] %v4618
    %4752 = vst [vmem:[#allocation2 + $0x98] sm:$0xff] %v4620
    %4753 = vst [vmem:[#allocation2 + $0xa0] sm:$0xff] %v4725
    %4754 = vst [vmem:[#allocation2 + $0xa8] sm:$0xff] %v4624
    %4755 = vst [vmem:[#allocation2 + $0xb0] sm:$0xff] %v4626
    %4756 = vst [vmem:[#allocation2 + $0xb8] sm:$0xff] %v4730
    %v4757 = vld [vmem:[#allocation2] sm:$0xff]
    %v4758 = vld [vmem:[#allocation2 + $0x8] sm:$0xff]
    %v4759 = vld [vmem:[#allocation2 + $0x10] sm:$0xff]
    %v4760 = vld [vmem:[#allocation12] sm:$0xff]
    %v4761 = vld [vmem:[#allocation12 + $0x8] sm:$0xff]
    %v4762 = vld [vmem:[#allocation12 + $0x10] sm:$0xff]
    %v4763 = vld [vmem:[#allocation12 + $0x18] sm:$0xff]
    %v4764 = vld [vmem:[#allocation12 + $0x20] sm:$0xff]
    %v4765 = vld [vmem:[#allocation12 + $0x28] sm:$0xff]
    %v4766 = vld [vmem:[#allocation12 + $0x30] sm:$0xff]
    %v4767 = vld [vmem:[#allocation12 + $0x38] sm:$0xff]
    %v4768 = vld [vmem:[#allocation12 + $0x40] sm:$0xff]
    %v4769 = vld [vmem:[#allocation12 + $0x48] sm:$0xff]
    %v4770 = vld [vmem:[#allocation12 + $0x50] sm:$0xff]
    %v4771 = vld [vmem:[#allocation12 + $0x58] sm:$0xff]
    %v4772 = vld [vmem:[#allocation12 + $0x60] sm:$0xff]
    %v4773 = vld [vmem:[#allocation12 + $0x68] sm:$0xff]
    %v4774 = vld [vmem:[#allocation12 + $0x70] sm:$0xff]
    %v4775 = vld [vmem:[#allocation12 + $0x78] sm:$0xff]
    %v4776 = vld [vmem:[#allocation12 + $0x80] sm:$0xff]
    %v4777 = vld [vmem:[#allocation12 + $0x88] sm:$0xff]
    %v4778 = vld [vmem:[#allocation12 + $0x90] sm:$0xff]
    %v4779 = vld [vmem:[#allocation12 + $0x98] sm:$0xff]
    %v4780 = vld [vmem:[#allocation12 + $0xa0] sm:$0xff]
    %v4781 = vld [vmem:[#allocation12 + $0xa8] sm:$0xff]
    %v4782 = vld [vmem:[#allocation12 + $0xb0] sm:$0xff]
    %v4783 = vld [vmem:[#allocation12 + $0xb8] sm:$0xff]
    %v4784 = vld [vmem:[#allocation12 + $0xc0] sm:$0xff]
    %v4785 = vld [vmem:[#allocation12 + $0xc8] sm:$0xff]
    %v4786 = vld [vmem:[#allocation12 + $0xd0] sm:$0xff]
    %v4787 = vld [vmem:[#allocation12 + $0xd8] sm:$0xff]
    %v4788 = vld [vmem:[#allocation12 + $0xe0] sm:$0xff]
    %v4789 = vld [vmem:[#allocation12 + $0xe8] sm:$0xff]
    %v4790 = vld [vmem:[#allocation12 + $0xf0] sm:$0xff]
    %v4791 = vld [vmem:[#allocation12 + $0xf8] sm:$0xff]
    %v4792 = vld [vmem:[#allocation12 + $0x100] sm:$0xff]
    %v4793 = vld [vmem:[#allocation12 + $0x108] sm:$0xff]
    %v4794 = vld [vmem:[#allocation12 + $0x110] sm:$0xff]
    %v4795 = vld [vmem:[#allocation12 + $0x118] sm:$0xff]
    %v4796 = vld [vmem:[#allocation12 + $0x120] sm:$0xff]
    %v4797 = vld [vmem:[#allocation12 + $0x128] sm:$0xff]
    %v4798 = vld [vmem:[#allocation12 + $0x130] sm:$0xff]
    %v4799 = vld [vmem:[#allocation12 + $0x138] sm:$0xff]
    %v4800 = vld [vmem:[#allocation12 + $0x140] sm:$0xff]
    %v4801 = vld [vmem:[#allocation12 + $0x148] sm:$0xff]
    %v4802 = vld [vmem:[#allocation12 + $0x150] sm:$0xff]
    %v4803 = vld [vmem:[#allocation12 + $0x158] sm:$0xff]
    %v4804 = vld [vmem:[#allocation12 + $0x160] sm:$0xff]
    %v4805 = vld [vmem:[#allocation12 + $0x168] sm:$0xff]
    %v4806 = vld [vmem:[#allocation12 + $0x170] sm:$0xff]
    %v4807 = vld [vmem:[#allocation12 + $0x178] sm:$0xff]
    %v4808 = vld [vmem:[%s12] sm:$0x7]
    %v4810 = vlaneseq
    %v4811 = vshrl.u32 %v4810, 7
    %v4812 = vsub.s32 0, %v4811
    %v4813 = vrot.slane %v4808, %v4812
    %v4814 = vlaneseq
    %v4815 = vshrl.u32 %v4814, 7
    %v4816 = vsub.s32 1, %v4815
    %v4817 = vrot.slane %v4808, %v4816
    %v4818 = vlaneseq
    %v4819 = vshrl.u32 %v4818, 7
    %v4820 = vsub.s32 2, %v4819
    %v4821 = vrot.slane %v4808, %v4820
    %4825 = vmatprep.subr.mxu0 %v4806
    %4826 = vmatpush1.msra.mxu0 %v4805
    %4827 = vmatprep.subr.mxu0 %v4803
    %4828 = vmatpush1.msra.mxu0 %v4802
    %4829 = vmatprep.subr.mxu0 %v4800
    %4830 = vmatpush1.msra.mxu0 %v4799
    %4831 = vmatprep.subr.mxu0 %v4797
    %4832 = vmatpush1.msra.mxu0 %v4796
    %4833 = vmatprep.subr.mxu0 %v4794
    %4834 = vmatpush1.msra.mxu0 %v4793
    %4835 = vmatprep.subr.mxu0 %v4791
    %4836 = vmatpush1.msra.mxu0 %v4790
    %4837 = vmatprep.subr.mxu0 %v4788
    %4838 = vmatpush1.msra.mxu0 %v4787
    %4839 = vmatprep.subr.mxu0 %v4785
    %4840 = vmatpush1.msra.mxu0 %v4784
    %4841 = vmatprep.subr.mxu0 %v4782
    %4842 = vmatpush1.msra.mxu0 %v4781
    %4843 = vmatprep.subr.mxu0 %v4779
    %4844 = vmatpush1.msra.mxu0 %v4778
    %4845 = vmatprep.subr.mxu0 %v4776
    %4846 = vmatpush1.msra.mxu0 %v4775
    %4847 = vmatprep.subr.mxu0 %v4773
    %4848 = vmatpush1.msra.mxu0 %v4772
    %4849 = vmatprep.subr.mxu0 %v4770
    %4850 = vmatpush1.msra.mxu0 %v4769
    %4851 = vmatprep.subr.mxu0 %v4767
    %4852 = vmatpush1.msra.mxu0 %v4766
    %4853 = vmatprep.subr.mxu0 %v4764
    %4854 = vmatpush1.msra.mxu0 %v4763
    %4855 = vmatprep.subr.mxu0 %v4761
    %4856 = vmatpush1.msra.mxu0 %v4760
    %4857 = vmatprep.subr.mxu0 0.0
    %4858 = vmatpush2.msra.mxu0 0.0
    %4859 = vmatprep.subr.mxu0 0.0
    %4860 = vmatpush2.msra.mxu0 0.0
    %4861 = vmatprep.subr.mxu0 0.0
    %4862 = vmatpush2.msra.mxu0 0.0
    %4863 = vmatprep.subr.mxu0 0.0
    %4864 = vmatpush2.msra.mxu0 0.0
    %4865 = vmatprep.subr.mxu0 0.0
    %4866 = vmatpush2.msra.mxu0 0.0
    %4867 = vmatprep.subr.mxu0 0.0
    %4868 = vmatpush2.msra.mxu0 0.0
    %4869 = vmatprep.subr.mxu0 0.0
    %4870 = vmatpush2.msra.mxu0 0.0
    %4871 = vmatprep.subr.mxu0 0.0
    %4872 = vmatpush2.msra.mxu0 0.0
    %4873 = vmatprep.subr.mxu0 0.0
    %4874 = vmatpush2.msra.mxu0 0.0
    %4875 = vmatprep.subr.mxu0 0.0
    %4876 = vmatpush2.msra.mxu0 0.0
    %4877 = vmatprep.subr.mxu0 0.0
    %4878 = vmatpush2.msra.mxu0 0.0
    %4879 = vmatprep.subr.mxu0 0.0
    %4880 = vmatpush2.msra.mxu0 0.0
    %4881 = vmatprep.subr.mxu0 0.0
    %4882 = vmatpush2.msra.mxu0 0.0
    %4883 = vmatprep.subr.mxu0 0.0
    %4884 = vmatpush2.msra.mxu0 0.0
    %4885 = vmatprep.subr.mxu0 0.0
    %4886 = vmatpush2.msra.mxu0 0.0
    %4887 = vmatprep.subr.mxu0 0.0
    %4888 = vmatpush2.msra.mxu0 0.0
    %4889 = vmatprep.mubr.f32.mxu0 0.0
    %4890 = vmatmul.mubr.f32.gmra.mxu0 0.0
    %v4891 = vpop.f32.mrf.mxu0
    %v4892 = vadd.f32 %v4813, %v4891
    %v4893 = vpop.f32.mrf.mxu0
    %v4894 = vadd.f32 %v4817, %v4893
    %4895 = vdwg.mxu0
    %4896 = vmatprep.subr.mxu0 0.0
    %4897 = vmatpush1.msra.mxu0 %v4807
    %4898 = vmatprep.subr.mxu0 0.0
    %4899 = vmatpush1.msra.mxu0 %v4804
    %4900 = vmatprep.subr.mxu0 0.0
    %4901 = vmatpush1.msra.mxu0 %v4801
    %4902 = vmatprep.subr.mxu0 0.0
    %4903 = vmatpush1.msra.mxu0 %v4798
    %4904 = vmatprep.subr.mxu0 0.0
    %4905 = vmatpush1.msra.mxu0 %v4795
    %4906 = vmatprep.subr.mxu0 0.0
    %4907 = vmatpush1.msra.mxu0 %v4792
    %4908 = vmatprep.subr.mxu0 0.0
    %4909 = vmatpush1.msra.mxu0 %v4789
    %4910 = vmatprep.subr.mxu0 0.0
    %4911 = vmatpush1.msra.mxu0 %v4786
    %4912 = vmatprep.subr.mxu0 0.0
    %4913 = vmatpush1.msra.mxu0 %v4783
    %4914 = vmatprep.subr.mxu0 0.0
    %4915 = vmatpush1.msra.mxu0 %v4780
    %4916 = vmatprep.subr.mxu0 0.0
    %4917 = vmatpush1.msra.mxu0 %v4777
    %4918 = vmatprep.subr.mxu0 0.0
    %4919 = vmatpush1.msra.mxu0 %v4774
    %4920 = vmatprep.subr.mxu0 0.0
    %4921 = vmatpush1.msra.mxu0 %v4771
    %4922 = vmatprep.subr.mxu0 0.0
    %4923 = vmatpush1.msra.mxu0 %v4768
    %4924 = vmatprep.subr.mxu0 0.0
    %4925 = vmatpush1.msra.mxu0 %v4765
    %4926 = vmatprep.subr.mxu0 0.0
    %4927 = vmatpush1.msra.mxu0 %v4762
    %4928 = vmatprep.subr.mxu0 0.0
    %4929 = vmatpush2.msra.mxu0 0.0
    %4930 = vmatprep.subr.mxu0 0.0
    %4931 = vmatpush2.msra.mxu0 0.0
    %4932 = vmatprep.subr.mxu0 0.0
    %4933 = vmatpush2.msra.mxu0 0.0
    %4934 = vmatprep.subr.mxu0 0.0
    %4935 = vmatpush2.msra.mxu0 0.0
    %4936 = vmatprep.subr.mxu0 0.0
    %4937 = vmatpush2.msra.mxu0 0.0
    %4938 = vmatprep.subr.mxu0 0.0
    %4939 = vmatpush2.msra.mxu0 0.0
    %4940 = vmatprep.subr.mxu0 0.0
    %4941 = vmatpush2.msra.mxu0 0.0
    %4942 = vmatprep.subr.mxu0 0.0
    %4943 = vmatpush2.msra.mxu0 0.0
    %4944 = vmatprep.subr.mxu0 0.0
    %4945 = vmatpush2.msra.mxu0 0.0
    %4946 = vmatprep.subr.mxu0 0.0
    %4947 = vmatpush2.msra.mxu0 0.0
    %4948 = vmatprep.subr.mxu0 0.0
    %4949 = vmatpush2.msra.mxu0 0.0
    %4950 = vmatprep.subr.mxu0 0.0
    %4951 = vmatpush2.msra.mxu0 0.0
    %4952 = vmatprep.subr.mxu0 0.0
    %4953 = vmatpush2.msra.mxu0 0.0
    %4954 = vmatprep.subr.mxu0 0.0
    %4955 = vmatpush2.msra.mxu0 0.0
    %4956 = vmatprep.subr.mxu0 0.0
    %4957 = vmatpush2.msra.mxu0 0.0
    %4958 = vmatprep.subr.mxu0 0.0
    %4959 = vmatpush2.msra.mxu0 0.0
    %4960 = vmatprep.mubr.f32.mxu0 0.0
    %4961 = vmatmul.mubr.f32.gmra.mxu0 0.0
    %v4962 = vpop.f32.mrf.mxu0
    %v4963 = vadd.f32 %v4821, %v4962
    %v4964 = vpop.f32.mrf.mxu0
    %4965 = vdwg.mxu0
    %v4966 = vadd.f32 %v4757, %v4892
    %v4967 = vxor.u32 %v4966, 2147483648
    %v4968 = vmul.f32 %v4967, 1.442695
    %v4969 = vpow.pop %v4968
    %v4970 = vadd.f32 %v4969, 1.0
    %v4971 = vrcp.pop %v4970
    %v4972 = vmul.f32 1.0, %v4971
    %v4973 = vadd.f32 %v4758, %v4894
    %v4974 = vxor.u32 %v4973, 2147483648
    %v4975 = vmul.f32 %v4974, 1.442695
    %v4976 = vpow.pop %v4975
    %v4977 = vadd.f32 %v4976, 1.0
    %v4978 = vrcp.pop %v4977
    %v4979 = vmul.f32 1.0, %v4978
    %v4980 = vmul.f32 %v4972, %v4963
    %v4981 = vadd.f32 %v4759, %v4980
    %v4982 = vtanh.pop %v4981
    %v4983 = vsub.f32 1.0, %v4979
    %v4984 = vmul.f32 %v4983, %v4982
    %v4985 = vmul.f32 %v4979, 0.0
    %v4986 = vadd.f32 %v4984, %v4985
    %4987 = vst [vmem:[#allocation3] sm:$0xff] %v4986
    %v4988 = vld [vmem:[#allocation2 + $0x18] sm:$0xff]
    %v4989 = vld [vmem:[#allocation2 + $0x20] sm:$0xff]
    %v4990 = vld [vmem:[#allocation2 + $0x28] sm:$0xff]
    %v4991 = vld [vmem:[#allocation12] sm:$0xff]
    %v4992 = vld [vmem:[#allocation12 + $0x8] sm:$0xff]
    %v4993 = vld [vmem:[#allocation12 + $0x10] sm:$0xff]
    %v4994 = vld [vmem:[#allocation12 + $0x18] sm:$0xff]
    %v4995 = vld [vmem:[#allocation12 + $0x20] sm:$0xff]
    %v4996 = vld [vmem:[#allocation12 + $0x28] sm:$0xff]
    %v4997 = vld [vmem:[#allocation12 + $0x30] sm:$0xff]
    %v4998 = vld [vmem:[#allocation12 + $0x38] sm:$0xff]
    %v4999 = vld [vmem:[#allocation12 + $0x40] sm:$0xff]
    %v5000 = vld [vmem:[#allocation12 + $0x48] sm:$0xff]
    %v5001 = vld [vmem:[#allocation12 + $0x50] sm:$0xff]
    %v5002 = vld [vmem:[#allocation12 + $0x58] sm:$0xff]
    %v5003 = vld [vmem:[#allocation12 + $0x60] sm:$0xff]
    %v5004 = vld [vmem:[#allocation12 + $0x68] sm:$0xff]
    %v5005 = vld [vmem:[#allocation12 + $0x70] sm:$0xff]
    %v5006 = vld [vmem:[#allocation12 + $0x78] sm:$0xff]
    %v5007 = vld [vmem:[#allocation12 + $0x80] sm:$0xff]
    %v5008 = vld [vmem:[#allocation12 + $0x88] sm:$0xff]
    %v5009 = vld [vmem:[#allocation12 + $0x90] sm:$0xff]
    %v5010 = vld [vmem:[#allocation12 + $0x98] sm:$0xff]
    %v5011 = vld [vmem:[#allocation12 + $0xa0] sm:$0xff]
    %v5012 = vld [vmem:[#allocation12 + $0xa8] sm:$0xff]
    %v5013 = vld [vmem:[#allocation12 + $0xb0] sm:$0xff]
    %v5014 = vld [vmem:[#allocation12 + $0xb8] sm:$0xff]
    %v5015 = vld [vmem:[#allocation12 + $0xc0] sm:$0xff]
    %v5016 = vld [vmem:[#allocation12 + $0xc8] sm:$0xff]
    %v5017 = vld [vmem:[#allocation12 + $0xd0] sm:$0xff]
    %v5018 = vld [vmem:[#allocation12 + $0xd8] sm:$0xff]
    %v5019 = vld [vmem:[#allocation12 + $0xe0] sm:$0xff]
    %v5020 = vld [vmem:[#allocation12 + $0xe8] sm:$0xff]
    %v5021 = vld [vmem:[#allocation12 + $0xf0] sm:$0xff]
    %v5022 = vld [vmem:[#allocation12 + $0xf8] sm:$0xff]
    %v5023 = vld [vmem:[#allocation12 + $0x100] sm:$0xff]
    %v5024 = vld [vmem:[#allocation12 + $0x108] sm:$0xff]
    %v5025 = vld [vmem:[#allocation12 + $0x110] sm:$0xff]
    %v5026 = vld [vmem:[#allocation12 + $0x118] sm:$0xff]
    %v5027 = vld [vmem:[#allocation12 + $0x120] sm:$0xff]
    %v5028 = vld [vmem:[#allocation12 + $0x128] sm:$0xff]
    %v5029 = vld [vmem:[#allocation12 + $0x130] sm:$0xff]
    %v5030 = vld [vmem:[#allocation12 + $0x138] sm:$0xff]
    %v5031 = vld [vmem:[#allocation12 + $0x140] sm:$0xff]
    %v5032 = vld [vmem:[#allocation12 + $0x148] sm:$0xff]
    %v5033 = vld [vmem:[#allocation12 + $0x150] sm:$0xff]
    %v5034 = vld [vmem:[#allocation12 + $0x158] sm:$0xff]
    %v5035 = vld [vmem:[#allocation12 + $0x160] sm:$0xff]
    %v5036 = vld [vmem:[#allocation12 + $0x168] sm:$0xff]
    %v5037 = vld [vmem:[#allocation12 + $0x170] sm:$0xff]
    %v5038 = vld [vmem:[#allocation12 + $0x178] sm:$0xff]
    %v5039 = vld [vmem:[%s12] sm:$0x7]
    %v5041 = vlaneseq
    %v5042 = vshrl.u32 %v5041, 7
    %v5043 = vsub.s32 0, %v5042
    %v5044 = vrot.slane %v5039, %v5043
    %v5045 = vlaneseq
    %v5046 = vshrl.u32 %v5045, 7
    %v5047 = vsub.s32 1, %v5046
    %v5048 = vrot.slane %v5039, %v5047
    %v5049 = vlaneseq
    %v5050 = vshrl.u32 %v5049, 7
    %v5051 = vsub.s32 2, %v5050
    %v5052 = vrot.slane %v5039, %v5051
    %5056 = vmatprep.subr.mxu0 %v5037
    %5057 = vmatpush1.msra.mxu0 %v5036
    %5058 = vmatprep.subr.mxu0 %v5034
    %5059 = vmatpush1.msra.mxu0 %v5033
    %5060 = vmatprep.subr.mxu0 %v5031
    %5061 = vmatpush1.msra.mxu0 %v5030
    %5062 = vmatprep.subr.mxu0 %v5028
    %5063 = vmatpush1.msra.mxu0 %v5027
    %5064 = vmatprep.subr.mxu0 %v5025
    %5065 = vmatpush1.msra.mxu0 %v5024
    %5066 = vmatprep.subr.mxu0 %v5022
    %5067 = vmatpush1.msra.mxu0 %v5021
    %5068 = vmatprep.subr.mxu0 %v5019
    %5069 = vmatpush1.msra.mxu0 %v5018
    %5070 = vmatprep.subr.mxu0 %v5016
    %5071 = vmatpush1.msra.mxu0 %v5015
    %5072 = vmatprep.subr.mxu0 %v5013
    %5073 = vmatpush1.msra.mxu0 %v5012
    %5074 = vmatprep.subr.mxu0 %v5010
    %5075 = vmatpush1.msra.mxu0 %v5009
    %5076 = vmatprep.subr.mxu0 %v5007
    %5077 = vmatpush1.msra.mxu0 %v5006
    %5078 = vmatprep.subr.mxu0 %v5004
    %5079 = vmatpush1.msra.mxu0 %v5003
    %5080 = vmatprep.subr.mxu0 %v5001
    %5081 = vmatpush1.msra.mxu0 %v5000
    %5082 = vmatprep.subr.mxu0 %v4998
    %5083 = vmatpush1.msra.mxu0 %v4997
    %5084 = vmatprep.subr.mxu0 %v4995
    %5085 = vmatpush1.msra.mxu0 %v4994
    %5086 = vmatprep.subr.mxu0 %v4992
    %5087 = vmatpush1.msra.mxu0 %v4991
    %5088 = vmatprep.subr.mxu0 0.0
    %5089 = vmatpush2.msra.mxu0 0.0
    %5090 = vmatprep.subr.mxu0 0.0
    %5091 = vmatpush2.msra.mxu0 0.0
    %5092 = vmatprep.subr.mxu0 0.0
    %5093 = vmatpush2.msra.mxu0 0.0
    %5094 = vmatprep.subr.mxu0 0.0
    %5095 = vmatpush2.msra.mxu0 0.0
    %5096 = vmatprep.subr.mxu0 0.0
    %5097 = vmatpush2.msra.mxu0 0.0
    %5098 = vmatprep.subr.mxu0 0.0
    %5099 = vmatpush2.msra.mxu0 0.0
    %5100 = vmatprep.subr.mxu0 0.0
    %5101 = vmatpush2.msra.mxu0 0.0
    %5102 = vmatprep.subr.mxu0 0.0
    %5103 = vmatpush2.msra.mxu0 0.0
    %5104 = vmatprep.subr.mxu0 0.0
    %5105 = vmatpush2.msra.mxu0 0.0
    %5106 = vmatprep.subr.mxu0 0.0
    %5107 = vmatpush2.msra.mxu0 0.0
    %5108 = vmatprep.subr.mxu0 0.0
    %5109 = vmatpush2.msra.mxu0 0.0
    %5110 = vmatprep.subr.mxu0 0.0
    %5111 = vmatpush2.msra.mxu0 0.0
    %5112 = vmatprep.subr.mxu0 0.0
    %5113 = vmatpush2.msra.mxu0 0.0
    %5114 = vmatprep.subr.mxu0 0.0
    %5115 = vmatpush2.msra.mxu0 0.0
    %5116 = vmatprep.subr.mxu0 0.0
    %5117 = vmatpush2.msra.mxu0 0.0
    %5118 = vmatprep.subr.mxu0 0.0
    %5119 = vmatpush2.msra.mxu0 0.0
    %5120 = vmatprep.mubr.f32.mxu0 0.0
    %5121 = vmatmul.mubr.f32.gmra.mxu0 %v4986
    %v5122 = vpop.f32.mrf.mxu0
    %v5123 = vadd.f32 %v5044, %v5122
    %v5124 = vpop.f32.mrf.mxu0
    %v5125 = vadd.f32 %v5048, %v5124
    %5126 = vdwg.mxu0
    %5127 = vmatprep.subr.mxu0 0.0
    %5128 = vmatpush1.msra.mxu0 %v5038
    %5129 = vmatprep.subr.mxu0 0.0
    %5130 = vmatpush1.msra.mxu0 %v5035
    %5131 = vmatprep.subr.mxu0 0.0
    %5132 = vmatpush1.msra.mxu0 %v5032
    %5133 = vmatprep.subr.mxu0 0.0
    %5134 = vmatpush1.msra.mxu0 %v5029
    %5135 = vmatprep.subr.mxu0 0.0
    %5136 = vmatpush1.msra.mxu0 %v5026
    %5137 = vmatprep.subr.mxu0 0.0
    %5138 = vmatpush1.msra.mxu0 %v5023
    %5139 = vmatprep.subr.mxu0 0.0
    %5140 = vmatpush1.msra.mxu0 %v5020
    %5141 = vmatprep.subr.mxu0 0.0
    %5142 = vmatpush1.msra.mxu0 %v5017
    %5143 = vmatprep.subr.mxu0 0.0
    %5144 = vmatpush1.msra.mxu0 %v5014
    %5145 = vmatprep.subr.mxu0 0.0
    %5146 = vmatpush1.msra.mxu0 %v5011
    %5147 = vmatprep.subr.mxu0 0.0
    %5148 = vmatpush1.msra.mxu0 %v5008
    %5149 = vmatprep.subr.mxu0 0.0
    %5150 = vmatpush1.msra.mxu0 %v5005
    %5151 = vmatprep.subr.mxu0 0.0
    %5152 = vmatpush1.msra.mxu0 %v5002
    %5153 = vmatprep.subr.mxu0 0.0
    %5154 = vmatpush1.msra.mxu0 %v4999
    %5155 = vmatprep.subr.mxu0 0.0
    %5156 = vmatpush1.msra.mxu0 %v4996
    %5157 = vmatprep.subr.mxu0 0.0
    %5158 = vmatpush1.msra.mxu0 %v4993
    %5159 = vmatprep.subr.mxu0 0.0
    %5160 = vmatpush2.msra.mxu0 0.0
    %5161 = vmatprep.subr.mxu0 0.0
    %5162 = vmatpush2.msra.mxu0 0.0
    %5163 = vmatprep.subr.mxu0 0.0
    %5164 = vmatpush2.msra.mxu0 0.0
    %5165 = vmatprep.subr.mxu0 0.0
    %5166 = vmatpush2.msra.mxu0 0.0
    %5167 = vmatprep.subr.mxu0 0.0
    %5168 = vmatpush2.msra.mxu0 0.0
    %5169 = vmatprep.subr.mxu0 0.0
    %5170 = vmatpush2.msra.mxu0 0.0
    %5171 = vmatprep.subr.mxu0 0.0
    %5172 = vmatpush2.msra.mxu0 0.0
    %5173 = vmatprep.subr.mxu0 0.0
    %5174 = vmatpush2.msra.mxu0 0.0
    %5175 = vmatprep.subr.mxu0 0.0
    %5176 = vmatpush2.msra.mxu0 0.0
    %5177 = vmatprep.subr.mxu0 0.0
    %5178 = vmatpush2.msra.mxu0 0.0
    %5179 = vmatprep.subr.mxu0 0.0
    %5180 = vmatpush2.msra.mxu0 0.0
    %5181 = vmatprep.subr.mxu0 0.0
    %5182 = vmatpush2.msra.mxu0 0.0
    %5183 = vmatprep.subr.mxu0 0.0
    %5184 = vmatpush2.msra.mxu0 0.0
    %5185 = vmatprep.subr.mxu0 0.0
    %5186 = vmatpush2.msra.mxu0 0.0
    %5187 = vmatprep.subr.mxu0 0.0
    %5188 = vmatpush2.msra.mxu0 0.0
    %5189 = vmatprep.subr.mxu0 0.0
    %5190 = vmatpush2.msra.mxu0 0.0
    %5191 = vmatprep.mubr.f32.mxu0 0.0
    %5192 = vmatmul.mubr.f32.gmra.mxu0 %v4986
    %v5193 = vpop.f32.mrf.mxu0
    %v5194 = vadd.f32 %v5052, %v5193
    %v5195 = vpop.f32.mrf.mxu0
    %5196 = vdwg.mxu0
    %v5197 = vadd.f32 %v4988, %v5123
    %v5198 = vxor.u32 %v5197, 2147483648
    %v5199 = vmul.f32 %v5198, 1.442695
    %v5200 = vpow.pop %v5199
    %v5201 = vadd.f32 %v5200, 1.0
    %v5202 = vrcp.pop %v5201
    %v5203 = vmul.f32 1.0, %v5202
    %v5204 = vadd.f32 %v4989, %v5125
    %v5205 = vxor.u32 %v5204, 2147483648
    %v5206 = vmul.f32 %v5205, 1.442695
    %v5207 = vpow.pop %v5206
    %v5208 = vadd.f32 %v5207, 1.0
    %v5209 = vrcp.pop %v5208
    %v5210 = vmul.f32 1.0, %v5209
    %v5211 = vmul.f32 %v5203, %v5194
    %v5212 = vadd.f32 %v4990, %v5211
    %v5213 = vtanh.pop %v5212
    %v5214 = vsub.f32 1.0, %v5210
    %v5215 = vmul.f32 %v5214, %v5213
    %v5216 = vmul.f32 %v5210, %v4986
    %v5217 = vadd.f32 %v5215, %v5216
    %5218 = vst [vmem:[#allocation3 + $0x8] sm:$0xff] %v5217
    %v5219 = vld [vmem:[#allocation2 + $0x30] sm:$0xff]
    %v5220 = vld [vmem:[#allocation2 + $0x38] sm:$0xff]
    %v5221 = vld [vmem:[#allocation2 + $0x40] sm:$0xff]
    %v5222 = vld [vmem:[#allocation12] sm:$0xff]
    %v5223 = vld [vmem:[#allocation12 + $0x8] sm:$0xff]
    %v5224 = vld [vmem:[#allocation12 + $0x10] sm:$0xff]
    %v5225 = vld [vmem:[#allocation12 + $0x18] sm:$0xff]
    %v5226 = vld [vmem:[#allocation12 + $0x20] sm:$0xff]
    %v5227 = vld [vmem:[#allocation12 + $0x28] sm:$0xff]
    %v5228 = vld [vmem:[#allocation12 + $0x30] sm:$0xff]
    %v5229 = vld [vmem:[#allocation12 + $0x38] sm:$0xff]
    %v5230 = vld [vmem:[#allocation12 + $0x40] sm:$0xff]
    %v5231 = vld [vmem:[#allocation12 + $0x48] sm:$0xff]
    %v5232 = vld [vmem:[#allocation12 + $0x50] sm:$0xff]
    %v5233 = vld [vmem:[#allocation12 + $0x58] sm:$0xff]
    %v5234 = vld [vmem:[#allocation12 + $0x60] sm:$0xff]
    %v5235 = vld [vmem:[#allocation12 + $0x68] sm:$0xff]
    %v5236 = vld [vmem:[#allocation12 + $0x70] sm:$0xff]
    %v5237 = vld [vmem:[#allocation12 + $0x78] sm:$0xff]
    %v5238 = vld [vmem:[#allocation12 + $0x80] sm:$0xff]
    %v5239 = vld [vmem:[#allocation12 + $0x88] sm:$0xff]
    %v5240 = vld [vmem:[#allocation12 + $0x90] sm:$0xff]
    %v5241 = vld [vmem:[#allocation12 + $0x98] sm:$0xff]
    %v5242 = vld [vmem:[#allocation12 + $0xa0] sm:$0xff]
    %v5243 = vld [vmem:[#allocation12 + $0xa8] sm:$0xff]
    %v5244 = vld [vmem:[#allocation12 + $0xb0] sm:$0xff]
    %v5245 = vld [vmem:[#allocation12 + $0xb8] sm:$0xff]
    %v5246 = vld [vmem:[#allocation12 + $0xc0] sm:$0xff]
    %v5247 = vld [vmem:[#allocation12 + $0xc8] sm:$0xff]
    %v5248 = vld [vmem:[#allocation12 + $0xd0] sm:$0xff]
    %v5249 = vld [vmem:[#allocation12 + $0xd8] sm:$0xff]
    %v5250 = vld [vmem:[#allocation12 + $0xe0] sm:$0xff]
    %v5251 = vld [vmem:[#allocation12 + $0xe8] sm:$0xff]
    %v5252 = vld [vmem:[#allocation12 + $0xf0] sm:$0xff]
    %v5253 = vld [vmem:[#allocation12 + $0xf8] sm:$0xff]
    %v5254 = vld [vmem:[#allocation12 + $0x100] sm:$0xff]
    %v5255 = vld [vmem:[#allocation12 + $0x108] sm:$0xff]
    %v5256 = vld [vmem:[#allocation12 + $0x110] sm:$0xff]
    %v5257 = vld [vmem:[#allocation12 + $0x118] sm:$0xff]
    %v5258 = vld [vmem:[#allocation12 + $0x120] sm:$0xff]
    %v5259 = vld [vmem:[#allocation12 + $0x128] sm:$0xff]
    %v5260 = vld [vmem:[#allocation12 + $0x130] sm:$0xff]
    %v5261 = vld [vmem:[#allocation12 + $0x138] sm:$0xff]
    %v5262 = vld [vmem:[#allocation12 + $0x140] sm:$0xff]
    %v5263 = vld [vmem:[#allocation12 + $0x148] sm:$0xff]
    %v5264 = vld [vmem:[#allocation12 + $0x150] sm:$0xff]
    %v5265 = vld [vmem:[#allocation12 + $0x158] sm:$0xff]
    %v5266 = vld [vmem:[#allocation12 + $0x160] sm:$0xff]
    %v5267 = vld [vmem:[#allocation12 + $0x168] sm:$0xff]
    %v5268 = vld [vmem:[#allocation12 + $0x170] sm:$0xff]
    %v5269 = vld [vmem:[#allocation12 + $0x178] sm:$0xff]
    %v5270 = vld [vmem:[%s12] sm:$0x7]
    %v5272 = vlaneseq
    %v5273 = vshrl.u32 %v5272, 7
    %v5274 = vsub.s32 0, %v5273
    %v5275 = vrot.slane %v5270, %v5274
    %v5276 = vlaneseq
    %v5277 = vshrl.u32 %v5276, 7
    %v5278 = vsub.s32 1, %v5277
    %v5279 = vrot.slane %v5270, %v5278
    %v5280 = vlaneseq
    %v5281 = vshrl.u32 %v5280, 7
    %v5282 = vsub.s32 2, %v5281
    %v5283 = vrot.slane %v5270, %v5282
    %5287 = vmatprep.subr.mxu0 %v5268
    %5288 = vmatpush1.msra.mxu0 %v5267
    %5289 = vmatprep.subr.mxu0 %v5265
    %5290 = vmatpush1.msra.mxu0 %v5264
    %5291 = vmatprep.subr.mxu0 %v5262
    %5292 = vmatpush1.msra.mxu0 %v5261
    %5293 = vmatprep.subr.mxu0 %v5259
    %5294 = vmatpush1.msra.mxu0 %v5258
    %5295 = vmatprep.subr.mxu0 %v5256
    %5296 = vmatpush1.msra.mxu0 %v5255
    %5297 = vmatprep.subr.mxu0 %v5253
    %5298 = vmatpush1.msra.mxu0 %v5252
    %5299 = vmatprep.subr.mxu0 %v5250
    %5300 = vmatpush1.msra.mxu0 %v5249
    %5301 = vmatprep.subr.mxu0 %v5247
    %5302 = vmatpush1.msra.mxu0 %v5246
    %5303 = vmatprep.subr.mxu0 %v5244
    %5304 = vmatpush1.msra.mxu0 %v5243
    %5305 = vmatprep.subr.mxu0 %v5241
    %5306 = vmatpush1.msra.mxu0 %v5240
    %5307 = vmatprep.subr.mxu0 %v5238
    %5308 = vmatpush1.msra.mxu0 %v5237
    %5309 = vmatprep.subr.mxu0 %v5235
    %5310 = vmatpush1.msra.mxu0 %v5234
    %5311 = vmatprep.subr.mxu0 %v5232
    %5312 = vmatpush1.msra.mxu0 %v5231
    %5313 = vmatprep.subr.mxu0 %v5229
    %5314 = vmatpush1.msra.mxu0 %v5228
    %5315 = vmatprep.subr.mxu0 %v5226
    %5316 = vmatpush1.msra.mxu0 %v5225
    %5317 = vmatprep.subr.mxu0 %v5223
    %5318 = vmatpush1.msra.mxu0 %v5222
    %5319 = vmatprep.subr.mxu0 0.0
    %5320 = vmatpush2.msra.mxu0 0.0
    %5321 = vmatprep.subr.mxu0 0.0
    %5322 = vmatpush2.msra.mxu0 0.0
    %5323 = vmatprep.subr.mxu0 0.0
    %5324 = vmatpush2.msra.mxu0 0.0
    %5325 = vmatprep.subr.mxu0 0.0
    %5326 = vmatpush2.msra.mxu0 0.0
    %5327 = vmatprep.subr.mxu0 0.0
    %5328 = vmatpush2.msra.mxu0 0.0
    %5329 = vmatprep.subr.mxu0 0.0
    %5330 = vmatpush2.msra.mxu0 0.0
    %5331 = vmatprep.subr.mxu0 0.0
    %5332 = vmatpush2.msra.mxu0 0.0
    %5333 = vmatprep.subr.mxu0 0.0
    %5334 = vmatpush2.msra.mxu0 0.0
    %5335 = vmatprep.subr.mxu0 0.0
    %5336 = vmatpush2.msra.mxu0 0.0
    %5337 = vmatprep.subr.mxu0 0.0
    %5338 = vmatpush2.msra.mxu0 0.0
    %5339 = vmatprep.subr.mxu0 0.0
    %5340 = vmatpush2.msra.mxu0 0.0
    %5341 = vmatprep.subr.mxu0 0.0
    %5342 = vmatpush2.msra.mxu0 0.0
    %5343 = vmatprep.subr.mxu0 0.0
    %5344 = vmatpush2.msra.mxu0 0.0
    %5345 = vmatprep.subr.mxu0 0.0
    %5346 = vmatpush2.msra.mxu0 0.0
    %5347 = vmatprep.subr.mxu0 0.0
    %5348 = vmatpush2.msra.mxu0 0.0
    %5349 = vmatprep.subr.mxu0 0.0
    %5350 = vmatpush2.msra.mxu0 0.0
    %5351 = vmatprep.mubr.f32.mxu0 0.0
    %5352 = vmatmul.mubr.f32.gmra.mxu0 %v5217
    %v5353 = vpop.f32.mrf.mxu0
    %v5354 = vadd.f32 %v5275, %v5353
    %v5355 = vpop.f32.mrf.mxu0
    %v5356 = vadd.f32 %v5279, %v5355
    %5357 = vdwg.mxu0
    %5358 = vmatprep.subr.mxu0 0.0
    %5359 = vmatpush1.msra.mxu0 %v5269
    %5360 = vmatprep.subr.mxu0 0.0
    %5361 = vmatpush1.msra.mxu0 %v5266
    %5362 = vmatprep.subr.mxu0 0.0
    %5363 = vmatpush1.msra.mxu0 %v5263
    %5364 = vmatprep.subr.mxu0 0.0
    %5365 = vmatpush1.msra.mxu0 %v5260
    %5366 = vmatprep.subr.mxu0 0.0
    %5367 = vmatpush1.msra.mxu0 %v5257
    %5368 = vmatprep.subr.mxu0 0.0
    %5369 = vmatpush1.msra.mxu0 %v5254
    %5370 = vmatprep.subr.mxu0 0.0
    %5371 = vmatpush1.msra.mxu0 %v5251
    %5372 = vmatprep.subr.mxu0 0.0
    %5373 = vmatpush1.msra.mxu0 %v5248
    %5374 = vmatprep.subr.mxu0 0.0
    %5375 = vmatpush1.msra.mxu0 %v5245
    %5376 = vmatprep.subr.mxu0 0.0
    %5377 = vmatpush1.msra.mxu0 %v5242
    %5378 = vmatprep.subr.mxu0 0.0
    %5379 = vmatpush1.msra.mxu0 %v5239
    %5380 = vmatprep.subr.mxu0 0.0
    %5381 = vmatpush1.msra.mxu0 %v5236
    %5382 = vmatprep.subr.mxu0 0.0
    %5383 = vmatpush1.msra.mxu0 %v5233
    %5384 = vmatprep.subr.mxu0 0.0
    %5385 = vmatpush1.msra.mxu0 %v5230
    %5386 = vmatprep.subr.mxu0 0.0
    %5387 = vmatpush1.msra.mxu0 %v5227
    %5388 = vmatprep.subr.mxu0 0.0
    %5389 = vmatpush1.msra.mxu0 %v5224
    %5390 = vmatprep.subr.mxu0 0.0
    %5391 = vmatpush2.msra.mxu0 0.0
    %5392 = vmatprep.subr.mxu0 0.0
    %5393 = vmatpush2.msra.mxu0 0.0
    %5394 = vmatprep.subr.mxu0 0.0
    %5395 = vmatpush2.msra.mxu0 0.0
    %5396 = vmatprep.subr.mxu0 0.0
    %5397 = vmatpush2.msra.mxu0 0.0
    %5398 = vmatprep.subr.mxu0 0.0
    %5399 = vmatpush2.msra.mxu0 0.0
    %5400 = vmatprep.subr.mxu0 0.0
    %5401 = vmatpush2.msra.mxu0 0.0
    %5402 = vmatprep.subr.mxu0 0.0
    %5403 = vmatpush2.msra.mxu0 0.0
    %5404 = vmatprep.subr.mxu0 0.0
    %5405 = vmatpush2.msra.mxu0 0.0
    %5406 = vmatprep.subr.mxu0 0.0
    %5407 = vmatpush2.msra.mxu0 0.0
    %5408 = vmatprep.subr.mxu0 0.0
    %5409 = vmatpush2.msra.mxu0 0.0
    %5410 = vmatprep.subr.mxu0 0.0
    %5411 = vmatpush2.msra.mxu0 0.0
    %5412 = vmatprep.subr.mxu0 0.0
    %5413 = vmatpush2.msra.mxu0 0.0
    %5414 = vmatprep.subr.mxu0 0.0
    %5415 = vmatpush2.msra.mxu0 0.0
    %5416 = vmatprep.subr.mxu0 0.0
    %5417 = vmatpush2.msra.mxu0 0.0
    %5418 = vmatprep.subr.mxu0 0.0
    %5419 = vmatpush2.msra.mxu0 0.0
    %5420 = vmatprep.subr.mxu0 0.0
    %5421 = vmatpush2.msra.mxu0 0.0
    %5422 = vmatprep.mubr.f32.mxu0 0.0
    %5423 = vmatmul.mubr.f32.gmra.mxu0 %v5217
    %v5424 = vpop.f32.mrf.mxu0
    %v5425 = vadd.f32 %v5283, %v5424
    %v5426 = vpop.f32.mrf.mxu0
    %5427 = vdwg.mxu0
    %v5428 = vadd.f32 %v5219, %v5354
    %v5429 = vxor.u32 %v5428, 2147483648
    %v5430 = vmul.f32 %v5429, 1.442695
    %v5431 = vpow.pop %v5430
    %v5432 = vadd.f32 %v5431, 1.0
    %v5433 = vrcp.pop %v5432
    %v5434 = vmul.f32 1.0, %v5433
    %v5435 = vadd.f32 %v5220, %v5356
    %v5436 = vxor.u32 %v5435, 2147483648
    %v5437 = vmul.f32 %v5436, 1.442695
    %v5438 = vpow.pop %v5437
    %v5439 = vadd.f32 %v5438, 1.0
    %v5440 = vrcp.pop %v5439
    %v5441 = vmul.f32 1.0, %v5440
    %v5442 = vmul.f32 %v5434, %v5425
    %v5443 = vadd.f32 %v5221, %v5442
    %v5444 = vtanh.pop %v5443
    %v5445 = vsub.f32 1.0, %v5441
    %v5446 = vmul.f32 %v5445, %v5444
    %v5447 = vmul.f32 %v5441, %v5217
    %v5448 = vadd.f32 %v5446, %v5447
    %5449 = vst [vmem:[#allocation3 + $0x10] sm:$0xff] %v5448
    %v5450 = vld [vmem:[#allocation2 + $0x48] sm:$0xff]
    %v5451 = vld [vmem:[#allocation2 + $0x50] sm:$0xff]
    %v5452 = vld [vmem:[#allocation2 + $0x58] sm:$0xff]
    %v5453 = vld [vmem:[#allocation12] sm:$0xff]
    %v5454 = vld [vmem:[#allocation12 + $0x8] sm:$0xff]
    %v5455 = vld [vmem:[#allocation12 + $0x10] sm:$0xff]
    %v5456 = vld [vmem:[#allocation12 + $0x18] sm:$0xff]
    %v5457 = vld [vmem:[#allocation12 + $0x20] sm:$0xff]
    %v5458 = vld [vmem:[#allocation12 + $0x28] sm:$0xff]
    %v5459 = vld [vmem:[#allocation12 + $0x30] sm:$0xff]
    %v5460 = vld [vmem:[#allocation12 + $0x38] sm:$0xff]
    %v5461 = vld [vmem:[#allocation12 + $0x40] sm:$0xff]
    %v5462 = vld [vmem:[#allocation12 + $0x48] sm:$0xff]
    %v5463 = vld [vmem:[#allocation12 + $0x50] sm:$0xff]
    %v5464 = vld [vmem:[#allocation12 + $0x58] sm:$0xff]
    %v5465 = vld [vmem:[#allocation12 + $0x60] sm:$0xff]
    %v5466 = vld [vmem:[#allocation12 + $0x68] sm:$0xff]
    %v5467 = vld [vmem:[#allocation12 + $0x70] sm:$0xff]
    %v5468 = vld [vmem:[#allocation12 + $0x78] sm:$0xff]
    %v5469 = vld [vmem:[#allocation12 + $0x80] sm:$0xff]
    %v5470 = vld [vmem:[#allocation12 + $0x88] sm:$0xff]
    %v5471 = vld [vmem:[#allocation12 + $0x90] sm:$0xff]
    %v5472 = vld [vmem:[#allocation12 + $0x98] sm:$0xff]
    %v5473 = vld [vmem:[#allocation12 + $0xa0] sm:$0xff]
    %v5474 = vld [vmem:[#allocation12 + $0xa8] sm:$0xff]
    %v5475 = vld [vmem:[#allocation12 + $0xb0] sm:$0xff]
    %v5476 = vld [vmem:[#allocation12 + $0xb8] sm:$0xff]
    %v5477 = vld [vmem:[#allocation12 + $0xc0] sm:$0xff]
    %v5478 = vld [vmem:[#allocation12 + $0xc8] sm:$0xff]
    %v5479 = vld [vmem:[#allocation12 + $0xd0] sm:$0xff]
    %v5480 = vld [vmem:[#allocation12 + $0xd8] sm:$0xff]
    %v5481 = vld [vmem:[#allocation12 + $0xe0] sm:$0xff]
    %v5482 = vld [vmem:[#allocation12 + $0xe8] sm:$0xff]
    %v5483 = vld [vmem:[#allocation12 + $0xf0] sm:$0xff]
    %v5484 = vld [vmem:[#allocation12 + $0xf8] sm:$0xff]
    %v5485 = vld [vmem:[#allocation12 + $0x100] sm:$0xff]
    %v5486 = vld [vmem:[#allocation12 + $0x108] sm:$0xff]
    %v5487 = vld [vmem:[#allocation12 + $0x110] sm:$0xff]
    %v5488 = vld [vmem:[#allocation12 + $0x118] sm:$0xff]
    %v5489 = vld [vmem:[#allocation12 + $0x120] sm:$0xff]
    %v5490 = vld [vmem:[#allocation12 + $0x128] sm:$0xff]
    %v5491 = vld [vmem:[#allocation12 + $0x130] sm:$0xff]
    %v5492 = vld [vmem:[#allocation12 + $0x138] sm:$0xff]
    %v5493 = vld [vmem:[#allocation12 + $0x140] sm:$0xff]
    %v5494 = vld [vmem:[#allocation12 + $0x148] sm:$0xff]
    %v5495 = vld [vmem:[#allocation12 + $0x150] sm:$0xff]
    %v5496 = vld [vmem:[#allocation12 + $0x158] sm:$0xff]
    %v5497 = vld [vmem:[#allocation12 + $0x160] sm:$0xff]
    %v5498 = vld [vmem:[#allocation12 + $0x168] sm:$0xff]
    %v5499 = vld [vmem:[#allocation12 + $0x170] sm:$0xff]
    %v5500 = vld [vmem:[#allocation12 + $0x178] sm:$0xff]
    %v5501 = vld [vmem:[%s12] sm:$0x7]
    %v5503 = vlaneseq
    %v5504 = vshrl.u32 %v5503, 7
    %v5505 = vsub.s32 0, %v5504
    %v5506 = vrot.slane %v5501, %v5505
    %v5507 = vlaneseq
    %v5508 = vshrl.u32 %v5507, 7
    %v5509 = vsub.s32 1, %v5508
    %v5510 = vrot.slane %v5501, %v5509
    %v5511 = vlaneseq
    %v5512 = vshrl.u32 %v5511, 7
    %v5513 = vsub.s32 2, %v5512
    %v5514 = vrot.slane %v5501, %v5513
    %5518 = vmatprep.subr.mxu0 %v5499
    %5519 = vmatpush1.msra.mxu0 %v5498
    %5520 = vmatprep.subr.mxu0 %v5496
    %5521 = vmatpush1.msra.mxu0 %v5495
    %5522 = vmatprep.subr.mxu0 %v5493
    %5523 = vmatpush1.msra.mxu0 %v5492
    %5524 = vmatprep.subr.mxu0 %v5490
    %5525 = vmatpush1.msra.mxu0 %v5489
    %5526 = vmatprep.subr.mxu0 %v5487
    %5527 = vmatpush1.msra.mxu0 %v5486
    %5528 = vmatprep.subr.mxu0 %v5484
    %5529 = vmatpush1.msra.mxu0 %v5483
    %5530 = vmatprep.subr.mxu0 %v5481
    %5531 = vmatpush1.msra.mxu0 %v5480
    %5532 = vmatprep.subr.mxu0 %v5478
    %5533 = vmatpush1.msra.mxu0 %v5477
    %5534 = vmatprep.subr.mxu0 %v5475
    %5535 = vmatpush1.msra.mxu0 %v5474
    %5536 = vmatprep.subr.mxu0 %v5472
    %5537 = vmatpush1.msra.mxu0 %v5471
    %5538 = vmatprep.subr.mxu0 %v5469
    %5539 = vmatpush1.msra.mxu0 %v5468
    %5540 = vmatprep.subr.mxu0 %v5466
    %5541 = vmatpush1.msra.mxu0 %v5465
    %5542 = vmatprep.subr.mxu0 %v5463
    %5543 = vmatpush1.msra.mxu0 %v5462
    %5544 = vmatprep.subr.mxu0 %v5460
    %5545 = vmatpush1.msra.mxu0 %v5459
    %5546 = vmatprep.subr.mxu0 %v5457
    %5547 = vmatpush1.msra.mxu0 %v5456
    %5548 = vmatprep.subr.mxu0 %v5454
    %5549 = vmatpush1.msra.mxu0 %v5453
    %5550 = vmatprep.subr.mxu0 0.0
    %5551 = vmatpush2.msra.mxu0 0.0
    %5552 = vmatprep.subr.mxu0 0.0
    %5553 = vmatpush2.msra.mxu0 0.0
    %5554 = vmatprep.subr.mxu0 0.0
    %5555 = vmatpush2.msra.mxu0 0.0
    %5556 = vmatprep.subr.mxu0 0.0
    %5557 = vmatpush2.msra.mxu0 0.0
    %5558 = vmatprep.subr.mxu0 0.0
    %5559 = vmatpush2.msra.mxu0 0.0
    %5560 = vmatprep.subr.mxu0 0.0
    %5561 = vmatpush2.msra.mxu0 0.0
    %5562 = vmatprep.subr.mxu0 0.0
    %5563 = vmatpush2.msra.mxu0 0.0
    %5564 = vmatprep.subr.mxu0 0.0
    %5565 = vmatpush2.msra.mxu0 0.0
    %5566 = vmatprep.subr.mxu0 0.0
    %5567 = vmatpush2.msra.mxu0 0.0
    %5568 = vmatprep.subr.mxu0 0.0
    %5569 = vmatpush2.msra.mxu0 0.0
    %5570 = vmatprep.subr.mxu0 0.0
    %5571 = vmatpush2.msra.mxu0 0.0
    %5572 = vmatprep.subr.mxu0 0.0
    %5573 = vmatpush2.msra.mxu0 0.0
    %5574 = vmatprep.subr.mxu0 0.0
    %5575 = vmatpush2.msra.mxu0 0.0
    %5576 = vmatprep.subr.mxu0 0.0
    %5577 = vmatpush2.msra.mxu0 0.0
    %5578 = vmatprep.subr.mxu0 0.0
    %5579 = vmatpush2.msra.mxu0 0.0
    %5580 = vmatprep.subr.mxu0 0.0
    %5581 = vmatpush2.msra.mxu0 0.0
    %5582 = vmatprep.mubr.f32.mxu0 0.0
    %5583 = vmatmul.mubr.f32.gmra.mxu0 %v5448
    %v5584 = vpop.f32.mrf.mxu0
    %v5585 = vadd.f32 %v5506, %v5584
    %v5586 = vpop.f32.mrf.mxu0
    %v5587 = vadd.f32 %v5510, %v5586
    %5588 = vdwg.mxu0
    %5589 = vmatprep.subr.mxu0 0.0
    %5590 = vmatpush1.msra.mxu0 %v5500
    %5591 = vmatprep.subr.mxu0 0.0
    %5592 = vmatpush1.msra.mxu0 %v5497
    %5593 = vmatprep.subr.mxu0 0.0
    %5594 = vmatpush1.msra.mxu0 %v5494
    %5595 = vmatprep.subr.mxu0 0.0
    %5596 = vmatpush1.msra.mxu0 %v5491
    %5597 = vmatprep.subr.mxu0 0.0
    %5598 = vmatpush1.msra.mxu0 %v5488
    %5599 = vmatprep.subr.mxu0 0.0
    %5600 = vmatpush1.msra.mxu0 %v5485
    %5601 = vmatprep.subr.mxu0 0.0
    %5602 = vmatpush1.msra.mxu0 %v5482
    %5603 = vmatprep.subr.mxu0 0.0
    %5604 = vmatpush1.msra.mxu0 %v5479
    %5605 = vmatprep.subr.mxu0 0.0
    %5606 = vmatpush1.msra.mxu0 %v5476
    %5607 = vmatprep.subr.mxu0 0.0
    %5608 = vmatpush1.msra.mxu0 %v5473
    %5609 = vmatprep.subr.mxu0 0.0
    %5610 = vmatpush1.msra.mxu0 %v5470
    %5611 = vmatprep.subr.mxu0 0.0
    %5612 = vmatpush1.msra.mxu0 %v5467
    %5613 = vmatprep.subr.mxu0 0.0
    %5614 = vmatpush1.msra.mxu0 %v5464
    %5615 = vmatprep.subr.mxu0 0.0
    %5616 = vmatpush1.msra.mxu0 %v5461
    %5617 = vmatprep.subr.mxu0 0.0
    %5618 = vmatpush1.msra.mxu0 %v5458
    %5619 = vmatprep.subr.mxu0 0.0
    %5620 = vmatpush1.msra.mxu0 %v5455
    %5621 = vmatprep.subr.mxu0 0.0
    %5622 = vmatpush2.msra.mxu0 0.0
    %5623 = vmatprep.subr.mxu0 0.0
    %5624 = vmatpush2.msra.mxu0 0.0
    %5625 = vmatprep.subr.mxu0 0.0
    %5626 = vmatpush2.msra.mxu0 0.0
    %5627 = vmatprep.subr.mxu0 0.0
    %5628 = vmatpush2.msra.mxu0 0.0
    %5629 = vmatprep.subr.mxu0 0.0
    %5630 = vmatpush2.msra.mxu0 0.0
    %5631 = vmatprep.subr.mxu0 0.0
    %5632 = vmatpush2.msra.mxu0 0.0
    %5633 = vmatprep.subr.mxu0 0.0
    %5634 = vmatpush2.msra.mxu0 0.0
    %5635 = vmatprep.subr.mxu0 0.0
    %5636 = vmatpush2.msra.mxu0 0.0
    %5637 = vmatprep.subr.mxu0 0.0
    %5638 = vmatpush2.msra.mxu0 0.0
    %5639 = vmatprep.subr.mxu0 0.0
    %5640 = vmatpush2.msra.mxu0 0.0
    %5641 = vmatprep.subr.mxu0 0.0
    %5642 = vmatpush2.msra.mxu0 0.0
    %5643 = vmatprep.subr.mxu0 0.0
    %5644 = vmatpush2.msra.mxu0 0.0
    %5645 = vmatprep.subr.mxu0 0.0
    %5646 = vmatpush2.msra.mxu0 0.0
    %5647 = vmatprep.subr.mxu0 0.0
    %5648 = vmatpush2.msra.mxu0 0.0
    %5649 = vmatprep.subr.mxu0 0.0
    %5650 = vmatpush2.msra.mxu0 0.0
    %5651 = vmatprep.subr.mxu0 0.0
    %5652 = vmatpush2.msra.mxu0 0.0
    %5653 = vmatprep.mubr.f32.mxu0 0.0
    %5654 = vmatmul.mubr.f32.gmra.mxu0 %v5448
    %v5655 = vpop.f32.mrf.mxu0
    %v5656 = vadd.f32 %v5514, %v5655
    %v5657 = vpop.f32.mrf.mxu0
    %5658 = vdwg.mxu0
    %v5659 = vadd.f32 %v5450, %v5585
    %v5660 = vxor.u32 %v5659, 2147483648
    %v5661 = vmul.f32 %v5660, 1.442695
    %v5662 = vpow.pop %v5661
    %v5663 = vadd.f32 %v5662, 1.0
    %v5664 = vrcp.pop %v5663
    %v5665 = vmul.f32 1.0, %v5664
    %v5666 = vadd.f32 %v5451, %v5587
    %v5667 = vxor.u32 %v5666, 2147483648
    %v5668 = vmul.f32 %v5667, 1.442695
    %v5669 = vpow.pop %v5668
    %v5670 = vadd.f32 %v5669, 1.0
    %v5671 = vrcp.pop %v5670
    %v5672 = vmul.f32 1.0, %v5671
    %v5673 = vmul.f32 %v5665, %v5656
    %v5674 = vadd.f32 %v5452, %v5673
    %v5675 = vtanh.pop %v5674
    %v5676 = vsub.f32 1.0, %v5672
    %v5677 = vmul.f32 %v5676, %v5675
    %v5678 = vmul.f32 %v5672, %v5448
    %v5679 = vadd.f32 %v5677, %v5678
    %5680 = vst [vmem:[#allocation3 + $0x18] sm:$0xff] %v5679
    %v5681 = vld [vmem:[#allocation2 + $0x60] sm:$0xff]
    %v5682 = vld [vmem:[#allocation2 + $0x68] sm:$0xff]
    %v5683 = vld [vmem:[#allocation2 + $0x70] sm:$0xff]
    %v5684 = vld [vmem:[#allocation12] sm:$0xff]
    %v5685 = vld [vmem:[#allocation12 + $0x8] sm:$0xff]
    %v5686 = vld [vmem:[#allocation12 + $0x10] sm:$0xff]
    %v5687 = vld [vmem:[#allocation12 + $0x18] sm:$0xff]
    %v5688 = vld [vmem:[#allocation12 + $0x20] sm:$0xff]
    %v5689 = vld [vmem:[#allocation12 + $0x28] sm:$0xff]
    %v5690 = vld [vmem:[#allocation12 + $0x30] sm:$0xff]
    %v5691 = vld [vmem:[#allocation12 + $0x38] sm:$0xff]
    %v5692 = vld [vmem:[#allocation12 + $0x40] sm:$0xff]
    %v5693 = vld [vmem:[#allocation12 + $0x48] sm:$0xff]
    %v5694 = vld [vmem:[#allocation12 + $0x50] sm:$0xff]
    %v5695 = vld [vmem:[#allocation12 + $0x58] sm:$0xff]
    %v5696 = vld [vmem:[#allocation12 + $0x60] sm:$0xff]
    %v5697 = vld [vmem:[#allocation12 + $0x68] sm:$0xff]
    %v5698 = vld [vmem:[#allocation12 + $0x70] sm:$0xff]
    %v5699 = vld [vmem:[#allocation12 + $0x78] sm:$0xff]
    %v5700 = vld [vmem:[#allocation12 + $0x80] sm:$0xff]
    %v5701 = vld [vmem:[#allocation12 + $0x88] sm:$0xff]
    %v5702 = vld [vmem:[#allocation12 + $0x90] sm:$0xff]
    %v5703 = vld [vmem:[#allocation12 + $0x98] sm:$0xff]
    %v5704 = vld [vmem:[#allocation12 + $0xa0] sm:$0xff]
    %v5705 = vld [vmem:[#allocation12 + $0xa8] sm:$0xff]
    %v5706 = vld [vmem:[#allocation12 + $0xb0] sm:$0xff]
    %v5707 = vld [vmem:[#allocation12 + $0xb8] sm:$0xff]
    %v5708 = vld [vmem:[#allocation12 + $0xc0] sm:$0xff]
    %v5709 = vld [vmem:[#allocation12 + $0xc8] sm:$0xff]
    %v5710 = vld [vmem:[#allocation12 + $0xd0] sm:$0xff]
    %v5711 = vld [vmem:[#allocation12 + $0xd8] sm:$0xff]
    %v5712 = vld [vmem:[#allocation12 + $0xe0] sm:$0xff]
    %v5713 = vld [vmem:[#allocation12 + $0xe8] sm:$0xff]
    %v5714 = vld [vmem:[#allocation12 + $0xf0] sm:$0xff]
    %v5715 = vld [vmem:[#allocation12 + $0xf8] sm:$0xff]
    %v5716 = vld [vmem:[#allocation12 + $0x100] sm:$0xff]
    %v5717 = vld [vmem:[#allocation12 + $0x108] sm:$0xff]
    %v5718 = vld [vmem:[#allocation12 + $0x110] sm:$0xff]
    %v5719 = vld [vmem:[#allocation12 + $0x118] sm:$0xff]
    %v5720 = vld [vmem:[#allocation12 + $0x120] sm:$0xff]
    %v5721 = vld [vmem:[#allocation12 + $0x128] sm:$0xff]
    %v5722 = vld [vmem:[#allocation12 + $0x130] sm:$0xff]
    %v5723 = vld [vmem:[#allocation12 + $0x138] sm:$0xff]
    %v5724 = vld [vmem:[#allocation12 + $0x140] sm:$0xff]
    %v5725 = vld [vmem:[#allocation12 + $0x148] sm:$0xff]
    %v5726 = vld [vmem:[#allocation12 + $0x150] sm:$0xff]
    %v5727 = vld [vmem:[#allocation12 + $0x158] sm:$0xff]
    %v5728 = vld [vmem:[#allocation12 + $0x160] sm:$0xff]
    %v5729 = vld [vmem:[#allocation12 + $0x168] sm:$0xff]
    %v5730 = vld [vmem:[#allocation12 + $0x170] sm:$0xff]
    %v5731 = vld [vmem:[#allocation12 + $0x178] sm:$0xff]
    %v5732 = vld [vmem:[%s12] sm:$0x7]
    %v5734 = vlaneseq
    %v5735 = vshrl.u32 %v5734, 7
    %v5736 = vsub.s32 0, %v5735
    %v5737 = vrot.slane %v5732, %v5736
    %v5738 = vlaneseq
    %v5739 = vshrl.u32 %v5738, 7
    %v5740 = vsub.s32 1, %v5739
    %v5741 = vrot.slane %v5732, %v5740
    %v5742 = vlaneseq
    %v5743 = vshrl.u32 %v5742, 7
    %v5744 = vsub.s32 2, %v5743
    %v5745 = vrot.slane %v5732, %v5744
    %5749 = vmatprep.subr.mxu0 %v5730
    %5750 = vmatpush1.msra.mxu0 %v5729
    %5751 = vmatprep.subr.mxu0 %v5727
    %5752 = vmatpush1.msra.mxu0 %v5726
    %5753 = vmatprep.subr.mxu0 %v5724
    %5754 = vmatpush1.msra.mxu0 %v5723
    %5755 = vmatprep.subr.mxu0 %v5721
    %5756 = vmatpush1.msra.mxu0 %v5720
    %5757 = vmatprep.subr.mxu0 %v5718
    %5758 = vmatpush1.msra.mxu0 %v5717
    %5759 = vmatprep.subr.mxu0 %v5715
    %5760 = vmatpush1.msra.mxu0 %v5714
    %5761 = vmatprep.subr.mxu0 %v5712
    %5762 = vmatpush1.msra.mxu0 %v5711
    %5763 = vmatprep.subr.mxu0 %v5709
    %5764 = vmatpush1.msra.mxu0 %v5708
    %5765 = vmatprep.subr.mxu0 %v5706
    %5766 = vmatpush1.msra.mxu0 %v5705
    %5767 = vmatprep.subr.mxu0 %v5703
    %5768 = vmatpush1.msra.mxu0 %v5702
    %5769 = vmatprep.subr.mxu0 %v5700
    %5770 = vmatpush1.msra.mxu0 %v5699
    %5771 = vmatprep.subr.mxu0 %v5697
    %5772 = vmatpush1.msra.mxu0 %v5696
    %5773 = vmatprep.subr.mxu0 %v5694
    %5774 = vmatpush1.msra.mxu0 %v5693
    %5775 = vmatprep.subr.mxu0 %v5691
    %5776 = vmatpush1.msra.mxu0 %v5690
    %5777 = vmatprep.subr.mxu0 %v5688
    %5778 = vmatpush1.msra.mxu0 %v5687
    %5779 = vmatprep.subr.mxu0 %v5685
    %5780 = vmatpush1.msra.mxu0 %v5684
    %5781 = vmatprep.subr.mxu0 0.0
    %5782 = vmatpush2.msra.mxu0 0.0
    %5783 = vmatprep.subr.mxu0 0.0
    %5784 = vmatpush2.msra.mxu0 0.0
    %5785 = vmatprep.subr.mxu0 0.0
    %5786 = vmatpush2.msra.mxu0 0.0
    %5787 = vmatprep.subr.mxu0 0.0
    %5788 = vmatpush2.msra.mxu0 0.0
    %5789 = vmatprep.subr.mxu0 0.0
    %5790 = vmatpush2.msra.mxu0 0.0
    %5791 = vmatprep.subr.mxu0 0.0
    %5792 = vmatpush2.msra.mxu0 0.0
    %5793 = vmatprep.subr.mxu0 0.0
    %5794 = vmatpush2.msra.mxu0 0.0
    %5795 = vmatprep.subr.mxu0 0.0
    %5796 = vmatpush2.msra.mxu0 0.0
    %5797 = vmatprep.subr.mxu0 0.0
    %5798 = vmatpush2.msra.mxu0 0.0
    %5799 = vmatprep.subr.mxu0 0.0
    %5800 = vmatpush2.msra.mxu0 0.0
    %5801 = vmatprep.subr.mxu0 0.0
    %5802 = vmatpush2.msra.mxu0 0.0
    %5803 = vmatprep.subr.mxu0 0.0
    %5804 = vmatpush2.msra.mxu0 0.0
    %5805 = vmatprep.subr.mxu0 0.0
    %5806 = vmatpush2.msra.mxu0 0.0
    %5807 = vmatprep.subr.mxu0 0.0
    %5808 = vmatpush2.msra.mxu0 0.0
    %5809 = vmatprep.subr.mxu0 0.0
    %5810 = vmatpush2.msra.mxu0 0.0
    %5811 = vmatprep.subr.mxu0 0.0
    %5812 = vmatpush2.msra.mxu0 0.0
    %5813 = vmatprep.mubr.f32.mxu0 0.0
    %5814 = vmatmul.mubr.f32.gmra.mxu0 %v5679
    %v5815 = vpop.f32.mrf.mxu0
    %v5816 = vadd.f32 %v5737, %v5815
    %v5817 = vpop.f32.mrf.mxu0
    %v5818 = vadd.f32 %v5741, %v5817
    %5819 = vdwg.mxu0
    %5820 = vmatprep.subr.mxu0 0.0
    %5821 = vmatpush1.msra.mxu0 %v5731
    %5822 = vmatprep.subr.mxu0 0.0
    %5823 = vmatpush1.msra.mxu0 %v5728
    %5824 = vmatprep.subr.mxu0 0.0
    %5825 = vmatpush1.msra.mxu0 %v5725
    %5826 = vmatprep.subr.mxu0 0.0
    %5827 = vmatpush1.msra.mxu0 %v5722
    %5828 = vmatprep.subr.mxu0 0.0
    %5829 = vmatpush1.msra.mxu0 %v5719
    %5830 = vmatprep.subr.mxu0 0.0
    %5831 = vmatpush1.msra.mxu0 %v5716
    %5832 = vmatprep.subr.mxu0 0.0
    %5833 = vmatpush1.msra.mxu0 %v5713
    %5834 = vmatprep.subr.mxu0 0.0
    %5835 = vmatpush1.msra.mxu0 %v5710
    %5836 = vmatprep.subr.mxu0 0.0
    %5837 = vmatpush1.msra.mxu0 %v5707
    %5838 = vmatprep.subr.mxu0 0.0
    %5839 = vmatpush1.msra.mxu0 %v5704
    %5840 = vmatprep.subr.mxu0 0.0
    %5841 = vmatpush1.msra.mxu0 %v5701
    %5842 = vmatprep.subr.mxu0 0.0
    %5843 = vmatpush1.msra.mxu0 %v5698
    %5844 = vmatprep.subr.mxu0 0.0
    %5845 = vmatpush1.msra.mxu0 %v5695
    %5846 = vmatprep.subr.mxu0 0.0
    %5847 = vmatpush1.msra.mxu0 %v5692
    %5848 = vmatprep.subr.mxu0 0.0
    %5849 = vmatpush1.msra.mxu0 %v5689
    %5850 = vmatprep.subr.mxu0 0.0
    %5851 = vmatpush1.msra.mxu0 %v5686
    %5852 = vmatprep.subr.mxu0 0.0
    %5853 = vmatpush2.msra.mxu0 0.0
    %5854 = vmatprep.subr.mxu0 0.0
    %5855 = vmatpush2.msra.mxu0 0.0
    %5856 = vmatprep.subr.mxu0 0.0
    %5857 = vmatpush2.msra.mxu0 0.0
    %5858 = vmatprep.subr.mxu0 0.0
    %5859 = vmatpush2.msra.mxu0 0.0
    %5860 = vmatprep.subr.mxu0 0.0
    %5861 = vmatpush2.msra.mxu0 0.0
    %5862 = vmatprep.subr.mxu0 0.0
    %5863 = vmatpush2.msra.mxu0 0.0
    %5864 = vmatprep.subr.mxu0 0.0
    %5865 = vmatpush2.msra.mxu0 0.0
    %5866 = vmatprep.subr.mxu0 0.0
    %5867 = vmatpush2.msra.mxu0 0.0
    %5868 = vmatprep.subr.mxu0 0.0
    %5869 = vmatpush2.msra.mxu0 0.0
    %5870 = vmatprep.subr.mxu0 0.0
    %5871 = vmatpush2.msra.mxu0 0.0
    %5872 = vmatprep.subr.mxu0 0.0
    %5873 = vmatpush2.msra.mxu0 0.0
    %5874 = vmatprep.subr.mxu0 0.0
    %5875 = vmatpush2.msra.mxu0 0.0
    %5876 = vmatprep.subr.mxu0 0.0
    %5877 = vmatpush2.msra.mxu0 0.0
    %5878 = vmatprep.subr.mxu0 0.0
    %5879 = vmatpush2.msra.mxu0 0.0
    %5880 = vmatprep.subr.mxu0 0.0
    %5881 = vmatpush2.msra.mxu0 0.0
    %5882 = vmatprep.subr.mxu0 0.0
    %5883 = vmatpush2.msra.mxu0 0.0
    %5884 = vmatprep.mubr.f32.mxu0 0.0
    %5885 = vmatmul.mubr.f32.gmra.mxu0 %v5679
    %v5886 = vpop.f32.mrf.mxu0
    %v5887 = vadd.f32 %v5745, %v5886
    %v5888 = vpop.f32.mrf.mxu0
    %5889 = vdwg.mxu0
    %v5890 = vadd.f32 %v5681, %v5816
    %v5891 = vxor.u32 %v5890, 2147483648
    %v5892 = vmul.f32 %v5891, 1.442695
    %v5893 = vpow.pop %v5892
    %v5894 = vadd.f32 %v5893, 1.0
    %v5895 = vrcp.pop %v5894
    %v5896 = vmul.f32 1.0, %v5895
    %v5897 = vadd.f32 %v5682, %v5818
    %v5898 = vxor.u32 %v5897, 2147483648
    %v5899 = vmul.f32 %v5898, 1.442695
    %v5900 = vpow.pop %v5899
    %v5901 = vadd.f32 %v5900, 1.0
    %v5902 = vrcp.pop %v5901
    %v5903 = vmul.f32 1.0, %v5902
    %v5904 = vmul.f32 %v5896, %v5887
    %v5905 = vadd.f32 %v5683, %v5904
    %v5906 = vtanh.pop %v5905
    %v5907 = vsub.f32 1.0, %v5903
    %v5908 = vmul.f32 %v5907, %v5906
    %v5909 = vmul.f32 %v5903, %v5679
    %v5910 = vadd.f32 %v5908, %v5909
    %5911 = vst [vmem:[#allocation3 + $0x20] sm:$0xff] %v5910
    %v5912 = vld [vmem:[#allocation2 + $0x78] sm:$0xff]
    %v5913 = vld [vmem:[#allocation2 + $0x80] sm:$0xff]
    %v5914 = vld [vmem:[#allocation2 + $0x88] sm:$0xff]
    %v5915 = vld [vmem:[#allocation12] sm:$0xff]
    %v5916 = vld [vmem:[#allocation12 + $0x8] sm:$0xff]
    %v5917 = vld [vmem:[#allocation12 + $0x10] sm:$0xff]
    %v5918 = vld [vmem:[#allocation12 + $0x18] sm:$0xff]
    %v5919 = vld [vmem:[#allocation12 + $0x20] sm:$0xff]
    %v5920 = vld [vmem:[#allocation12 + $0x28] sm:$0xff]
    %v5921 = vld [vmem:[#allocation12 + $0x30] sm:$0xff]
    %v5922 = vld [vmem:[#allocation12 + $0x38] sm:$0xff]
    %v5923 = vld [vmem:[#allocation12 + $0x40] sm:$0xff]
    %v5924 = vld [vmem:[#allocation12 + $0x48] sm:$0xff]
    %v5925 = vld [vmem:[#allocation12 + $0x50] sm:$0xff]
    %v5926 = vld [vmem:[#allocation12 + $0x58] sm:$0xff]
    %v5927 = vld [vmem:[#allocation12 + $0x60] sm:$0xff]
    %v5928 = vld [vmem:[#allocation12 + $0x68] sm:$0xff]
    %v5929 = vld [vmem:[#allocation12 + $0x70] sm:$0xff]
    %v5930 = vld [vmem:[#allocation12 + $0x78] sm:$0xff]
    %v5931 = vld [vmem:[#allocation12 + $0x80] sm:$0xff]
    %v5932 = vld [vmem:[#allocation12 + $0x88] sm:$0xff]
    %v5933 = vld [vmem:[#allocation12 + $0x90] sm:$0xff]
    %v5934 = vld [vmem:[#allocation12 + $0x98] sm:$0xff]
    %v5935 = vld [vmem:[#allocation12 + $0xa0] sm:$0xff]
    %v5936 = vld [vmem:[#allocation12 + $0xa8] sm:$0xff]
    %v5937 = vld [vmem:[#allocation12 + $0xb0] sm:$0xff]
    %v5938 = vld [vmem:[#allocation12 + $0xb8] sm:$0xff]
    %v5939 = vld [vmem:[#allocation12 + $0xc0] sm:$0xff]
    %v5940 = vld [vmem:[#allocation12 + $0xc8] sm:$0xff]
    %v5941 = vld [vmem:[#allocation12 + $0xd0] sm:$0xff]
    %v5942 = vld [vmem:[#allocation12 + $0xd8] sm:$0xff]
    %v5943 = vld [vmem:[#allocation12 + $0xe0] sm:$0xff]
    %v5944 = vld [vmem:[#allocation12 + $0xe8] sm:$0xff]
    %v5945 = vld [vmem:[#allocation12 + $0xf0] sm:$0xff]
    %v5946 = vld [vmem:[#allocation12 + $0xf8] sm:$0xff]
    %v5947 = vld [vmem:[#allocation12 + $0x100] sm:$0xff]
    %v5948 = vld [vmem:[#allocation12 + $0x108] sm:$0xff]
    %v5949 = vld [vmem:[#allocation12 + $0x110] sm:$0xff]
    %v5950 = vld [vmem:[#allocation12 + $0x118] sm:$0xff]
    %v5951 = vld [vmem:[#allocation12 + $0x120] sm:$0xff]
    %v5952 = vld [vmem:[#allocation12 + $0x128] sm:$0xff]
    %v5953 = vld [vmem:[#allocation12 + $0x130] sm:$0xff]
    %v5954 = vld [vmem:[#allocation12 + $0x138] sm:$0xff]
    %v5955 = vld [vmem:[#allocation12 + $0x140] sm:$0xff]
    %v5956 = vld [vmem:[#allocation12 + $0x148] sm:$0xff]
    %v5957 = vld [vmem:[#allocation12 + $0x150] sm:$0xff]
    %v5958 = vld [vmem:[#allocation12 + $0x158] sm:$0xff]
    %v5959 = vld [vmem:[#allocation12 + $0x160] sm:$0xff]
    %v5960 = vld [vmem:[#allocation12 + $0x168] sm:$0xff]
    %v5961 = vld [vmem:[#allocation12 + $0x170] sm:$0xff]
    %v5962 = vld [vmem:[#allocation12 + $0x178] sm:$0xff]
    %v5963 = vld [vmem:[%s12] sm:$0x7]
    %v5965 = vlaneseq
    %v5966 = vshrl.u32 %v5965, 7
    %v5967 = vsub.s32 0, %v5966
    %v5968 = vrot.slane %v5963, %v5967
    %v5969 = vlaneseq
    %v5970 = vshrl.u32 %v5969, 7
    %v5971 = vsub.s32 1, %v5970
    %v5972 = vrot.slane %v5963, %v5971
    %v5973 = vlaneseq
    %v5974 = vshrl.u32 %v5973, 7
    %v5975 = vsub.s32 2, %v5974
    %v5976 = vrot.slane %v5963, %v5975
    %5980 = vmatprep.subr.mxu0 %v5961
    %5981 = vmatpush1.msra.mxu0 %v5960
    %5982 = vmatprep.subr.mxu0 %v5958
    %5983 = vmatpush1.msra.mxu0 %v5957
    %5984 = vmatprep.subr.mxu0 %v5955
    %5985 = vmatpush1.msra.mxu0 %v5954
    %5986 = vmatprep.subr.mxu0 %v5952
    %5987 = vmatpush1.msra.mxu0 %v5951
    %5988 = vmatprep.subr.mxu0 %v5949
    %5989 = vmatpush1.msra.mxu0 %v5948
    %5990 = vmatprep.subr.mxu0 %v5946
    %5991 = vmatpush1.msra.mxu0 %v5945
    %5992 = vmatprep.subr.mxu0 %v5943
    %5993 = vmatpush1.msra.mxu0 %v5942
    %5994 = vmatprep.subr.mxu0 %v5940
    %5995 = vmatpush1.msra.mxu0 %v5939
    %5996 = vmatprep.subr.mxu0 %v5937
    %5997 = vmatpush1.msra.mxu0 %v5936
    %5998 = vmatprep.subr.mxu0 %v5934
    %5999 = vmatpush1.msra.mxu0 %v5933
    %6000 = vmatprep.subr.mxu0 %v5931
    %6001 = vmatpush1.msra.mxu0 %v5930
    %6002 = vmatprep.subr.mxu0 %v5928
    %6003 = vmatpush1.msra.mxu0 %v5927
    %6004 = vmatprep.subr.mxu0 %v5925
    %6005 = vmatpush1.msra.mxu0 %v5924
    %6006 = vmatprep.subr.mxu0 %v5922
    %6007 = vmatpush1.msra.mxu0 %v5921
    %6008 = vmatprep.subr.mxu0 %v5919
    %6009 = vmatpush1.msra.mxu0 %v5918
    %6010 = vmatprep.subr.mxu0 %v5916
    %6011 = vmatpush1.msra.mxu0 %v5915
    %6012 = vmatprep.subr.mxu0 0.0
    %6013 = vmatpush2.msra.mxu0 0.0
    %6014 = vmatprep.subr.mxu0 0.0
    %6015 = vmatpush2.msra.mxu0 0.0
    %6016 = vmatprep.subr.mxu0 0.0
    %6017 = vmatpush2.msra.mxu0 0.0
    %6018 = vmatprep.subr.mxu0 0.0
    %6019 = vmatpush2.msra.mxu0 0.0
    %6020 = vmatprep.subr.mxu0 0.0
    %6021 = vmatpush2.msra.mxu0 0.0
    %6022 = vmatprep.subr.mxu0 0.0
    %6023 = vmatpush2.msra.mxu0 0.0
    %6024 = vmatprep.subr.mxu0 0.0
    %6025 = vmatpush2.msra.mxu0 0.0
    %6026 = vmatprep.subr.mxu0 0.0
    %6027 = vmatpush2.msra.mxu0 0.0
    %6028 = vmatprep.subr.mxu0 0.0
    %6029 = vmatpush2.msra.mxu0 0.0
    %6030 = vmatprep.subr.mxu0 0.0
    %6031 = vmatpush2.msra.mxu0 0.0
    %6032 = vmatprep.subr.mxu0 0.0
    %6033 = vmatpush2.msra.mxu0 0.0
    %6034 = vmatprep.subr.mxu0 0.0
    %6035 = vmatpush2.msra.mxu0 0.0
    %6036 = vmatprep.subr.mxu0 0.0
    %6037 = vmatpush2.msra.mxu0 0.0
    %6038 = vmatprep.subr.mxu0 0.0
    %6039 = vmatpush2.msra.mxu0 0.0
    %6040 = vmatprep.subr.mxu0 0.0
    %6041 = vmatpush2.msra.mxu0 0.0
    %6042 = vmatprep.subr.mxu0 0.0
    %6043 = vmatpush2.msra.mxu0 0.0
    %6044 = vmatprep.mubr.f32.mxu0 0.0
    %6045 = vmatmul.mubr.f32.gmra.mxu0 %v5910
    %v6046 = vpop.f32.mrf.mxu0
    %v6047 = vadd.f32 %v5968, %v6046
    %v6048 = vpop.f32.mrf.mxu0
    %v6049 = vadd.f32 %v5972, %v6048
    %6050 = vdwg.mxu0
    %6051 = vmatprep.subr.mxu0 0.0
    %6052 = vmatpush1.msra.mxu0 %v5962
    %6053 = vmatprep.subr.mxu0 0.0
    %6054 = vmatpush1.msra.mxu0 %v5959
    %6055 = vmatprep.subr.mxu0 0.0
    %6056 = vmatpush1.msra.mxu0 %v5956
    %6057 = vmatprep.subr.mxu0 0.0
    %6058 = vmatpush1.msra.mxu0 %v5953
    %6059 = vmatprep.subr.mxu0 0.0
    %6060 = vmatpush1.msra.mxu0 %v5950
    %6061 = vmatprep.subr.mxu0 0.0
    %6062 = vmatpush1.msra.mxu0 %v5947
    %6063 = vmatprep.subr.mxu0 0.0
    %6064 = vmatpush1.msra.mxu0 %v5944
    %6065 = vmatprep.subr.mxu0 0.0
    %6066 = vmatpush1.msra.mxu0 %v5941
    %6067 = vmatprep.subr.mxu0 0.0
    %6068 = vmatpush1.msra.mxu0 %v5938
    %6069 = vmatprep.subr.mxu0 0.0
    %6070 = vmatpush1.msra.mxu0 %v5935
    %6071 = vmatprep.subr.mxu0 0.0
    %6072 = vmatpush1.msra.mxu0 %v5932
    %6073 = vmatprep.subr.mxu0 0.0
    %6074 = vmatpush1.msra.mxu0 %v5929
    %6075 = vmatprep.subr.mxu0 0.0
    %6076 = vmatpush1.msra.mxu0 %v5926
    %6077 = vmatprep.subr.mxu0 0.0
    %6078 = vmatpush1.msra.mxu0 %v5923
    %6079 = vmatprep.subr.mxu0 0.0
    %6080 = vmatpush1.msra.mxu0 %v5920
    %6081 = vmatprep.subr.mxu0 0.0
    %6082 = vmatpush1.msra.mxu0 %v5917
    %6083 = vmatprep.subr.mxu0 0.0
    %6084 = vmatpush2.msra.mxu0 0.0
    %6085 = vmatprep.subr.mxu0 0.0
    %6086 = vmatpush2.msra.mxu0 0.0
    %6087 = vmatprep.subr.mxu0 0.0
    %6088 = vmatpush2.msra.mxu0 0.0
    %6089 = vmatprep.subr.mxu0 0.0
    %6090 = vmatpush2.msra.mxu0 0.0
    %6091 = vmatprep.subr.mxu0 0.0
    %6092 = vmatpush2.msra.mxu0 0.0
    %6093 = vmatprep.subr.mxu0 0.0
    %6094 = vmatpush2.msra.mxu0 0.0
    %6095 = vmatprep.subr.mxu0 0.0
    %6096 = vmatpush2.msra.mxu0 0.0
    %6097 = vmatprep.subr.mxu0 0.0
    %6098 = vmatpush2.msra.mxu0 0.0
    %6099 = vmatprep.subr.mxu0 0.0
    %6100 = vmatpush2.msra.mxu0 0.0
    %6101 = vmatprep.subr.mxu0 0.0
    %6102 = vmatpush2.msra.mxu0 0.0
    %6103 = vmatprep.subr.mxu0 0.0
    %6104 = vmatpush2.msra.mxu0 0.0
    %6105 = vmatprep.subr.mxu0 0.0
    %6106 = vmatpush2.msra.mxu0 0.0
    %6107 = vmatprep.subr.mxu0 0.0
    %6108 = vmatpush2.msra.mxu0 0.0
    %6109 = vmatprep.subr.mxu0 0.0
    %6110 = vmatpush2.msra.mxu0 0.0
    %6111 = vmatprep.subr.mxu0 0.0
    %6112 = vmatpush2.msra.mxu0 0.0
    %6113 = vmatprep.subr.mxu0 0.0
    %6114 = vmatpush2.msra.mxu0 0.0
    %6115 = vmatprep.mubr.f32.mxu0 0.0
    %6116 = vmatmul.mubr.f32.gmra.mxu0 %v5910
    %v6117 = vpop.f32.mrf.mxu0
    %v6118 = vadd.f32 %v5976, %v6117
    %v6119 = vpop.f32.mrf.mxu0
    %6120 = vdwg.mxu0
    %v6121 = vadd.f32 %v5912, %v6047
    %v6122 = vxor.u32 %v6121, 2147483648
    %v6123 = vmul.f32 %v6122, 1.442695
    %v6124 = vpow.pop %v6123
    %v6125 = vadd.f32 %v6124, 1.0
    %v6126 = vrcp.pop %v6125
    %v6127 = vmul.f32 1.0, %v6126
    %v6128 = vadd.f32 %v5913, %v6049
    %v6129 = vxor.u32 %v6128, 2147483648
    %v6130 = vmul.f32 %v6129, 1.442695
    %v6131 = vpow.pop %v6130
    %v6132 = vadd.f32 %v6131, 1.0
    %v6133 = vrcp.pop %v6132
    %v6134 = vmul.f32 1.0, %v6133
    %v6135 = vmul.f32 %v6127, %v6118
    %v6136 = vadd.f32 %v5914, %v6135
    %v6137 = vtanh.pop %v6136
    %v6138 = vsub.f32 1.0, %v6134
    %v6139 = vmul.f32 %v6138, %v6137
    %v6140 = vmul.f32 %v6134, %v5910
    %v6141 = vadd.f32 %v6139, %v6140
    %6142 = vst [vmem:[#allocation3 + $0x28] sm:$0xff] %v6141
    %v6143 = vld [vmem:[#allocation2 + $0x90] sm:$0xff]
    %v6144 = vld [vmem:[#allocation2 + $0x98] sm:$0xff]
    %v6145 = vld [vmem:[#allocation2 + $0xa0] sm:$0xff]
    %v6146 = vld [vmem:[#allocation12] sm:$0xff]
    %v6147 = vld [vmem:[#allocation12 + $0x8] sm:$0xff]
    %v6148 = vld [vmem:[#allocation12 + $0x10] sm:$0xff]
    %v6149 = vld [vmem:[#allocation12 + $0x18] sm:$0xff]
    %v6150 = vld [vmem:[#allocation12 + $0x20] sm:$0xff]
    %v6151 = vld [vmem:[#allocation12 + $0x28] sm:$0xff]
    %v6152 = vld [vmem:[#allocation12 + $0x30] sm:$0xff]
    %v6153 = vld [vmem:[#allocation12 + $0x38] sm:$0xff]
    %v6154 = vld [vmem:[#allocation12 + $0x40] sm:$0xff]
    %v6155 = vld [vmem:[#allocation12 + $0x48] sm:$0xff]
    %v6156 = vld [vmem:[#allocation12 + $0x50] sm:$0xff]
    %v6157 = vld [vmem:[#allocation12 + $0x58] sm:$0xff]
    %v6158 = vld [vmem:[#allocation12 + $0x60] sm:$0xff]
    %v6159 = vld [vmem:[#allocation12 + $0x68] sm:$0xff]
    %v6160 = vld [vmem:[#allocation12 + $0x70] sm:$0xff]
    %v6161 = vld [vmem:[#allocation12 + $0x78] sm:$0xff]
    %v6162 = vld [vmem:[#allocation12 + $0x80] sm:$0xff]
    %v6163 = vld [vmem:[#allocation12 + $0x88] sm:$0xff]
    %v6164 = vld [vmem:[#allocation12 + $0x90] sm:$0xff]
    %v6165 = vld [vmem:[#allocation12 + $0x98] sm:$0xff]
    %v6166 = vld [vmem:[#allocation12 + $0xa0] sm:$0xff]
    %v6167 = vld [vmem:[#allocation12 + $0xa8] sm:$0xff]
    %v6168 = vld [vmem:[#allocation12 + $0xb0] sm:$0xff]
    %v6169 = vld [vmem:[#allocation12 + $0xb8] sm:$0xff]
    %v6170 = vld [vmem:[#allocation12 + $0xc0] sm:$0xff]
    %v6171 = vld [vmem:[#allocation12 + $0xc8] sm:$0xff]
    %v6172 = vld [vmem:[#allocation12 + $0xd0] sm:$0xff]
    %v6173 = vld [vmem:[#allocation12 + $0xd8] sm:$0xff]
    %v6174 = vld [vmem:[#allocation12 + $0xe0] sm:$0xff]
    %v6175 = vld [vmem:[#allocation12 + $0xe8] sm:$0xff]
    %v6176 = vld [vmem:[#allocation12 + $0xf0] sm:$0xff]
    %v6177 = vld [vmem:[#allocation12 + $0xf8] sm:$0xff]
    %v6178 = vld [vmem:[#allocation12 + $0x100] sm:$0xff]
    %v6179 = vld [vmem:[#allocation12 + $0x108] sm:$0xff]
    %v6180 = vld [vmem:[#allocation12 + $0x110] sm:$0xff]
    %v6181 = vld [vmem:[#allocation12 + $0x118] sm:$0xff]
    %v6182 = vld [vmem:[#allocation12 + $0x120] sm:$0xff]
    %v6183 = vld [vmem:[#allocation12 + $0x128] sm:$0xff]
    %v6184 = vld [vmem:[#allocation12 + $0x130] sm:$0xff]
    %v6185 = vld [vmem:[#allocation12 + $0x138] sm:$0xff]
    %v6186 = vld [vmem:[#allocation12 + $0x140] sm:$0xff]
    %v6187 = vld [vmem:[#allocation12 + $0x148] sm:$0xff]
    %v6188 = vld [vmem:[#allocation12 + $0x150] sm:$0xff]
    %v6189 = vld [vmem:[#allocation12 + $0x158] sm:$0xff]
    %v6190 = vld [vmem:[#allocation12 + $0x160] sm:$0xff]
    %v6191 = vld [vmem:[#allocation12 + $0x168] sm:$0xff]
    %v6192 = vld [vmem:[#allocation12 + $0x170] sm:$0xff]
    %v6193 = vld [vmem:[#allocation12 + $0x178] sm:$0xff]
    %v6194 = vld [vmem:[%s12] sm:$0x7]
    %v6196 = vlaneseq
    %v6197 = vshrl.u32 %v6196, 7
    %v6198 = vsub.s32 0, %v6197
    %v6199 = vrot.slane %v6194, %v6198
    %v6200 = vlaneseq
    %v6201 = vshrl.u32 %v6200, 7
    %v6202 = vsub.s32 1, %v6201
    %v6203 = vrot.slane %v6194, %v6202
    %v6204 = vlaneseq
    %v6205 = vshrl.u32 %v6204, 7
    %v6206 = vsub.s32 2, %v6205
    %v6207 = vrot.slane %v6194, %v6206
    %6211 = vmatprep.subr.mxu0 %v6192
    %6212 = vmatpush1.msra.mxu0 %v6191
    %6213 = vmatprep.subr.mxu0 %v6189
    %6214 = vmatpush1.msra.mxu0 %v6188
    %6215 = vmatprep.subr.mxu0 %v6186
    %6216 = vmatpush1.msra.mxu0 %v6185
    %6217 = vmatprep.subr.mxu0 %v6183
    %6218 = vmatpush1.msra.mxu0 %v6182
    %6219 = vmatprep.subr.mxu0 %v6180
    %6220 = vmatpush1.msra.mxu0 %v6179
    %6221 = vmatprep.subr.mxu0 %v6177
    %6222 = vmatpush1.msra.mxu0 %v6176
    %6223 = vmatprep.subr.mxu0 %v6174
    %6224 = vmatpush1.msra.mxu0 %v6173
    %6225 = vmatprep.subr.mxu0 %v6171
    %6226 = vmatpush1.msra.mxu0 %v6170
    %6227 = vmatprep.subr.mxu0 %v6168
    %6228 = vmatpush1.msra.mxu0 %v6167
    %6229 = vmatprep.subr.mxu0 %v6165
    %6230 = vmatpush1.msra.mxu0 %v6164
    %6231 = vmatprep.subr.mxu0 %v6162
    %6232 = vmatpush1.msra.mxu0 %v6161
    %6233 = vmatprep.subr.mxu0 %v6159
    %6234 = vmatpush1.msra.mxu0 %v6158
    %6235 = vmatprep.subr.mxu0 %v6156
    %6236 = vmatpush1.msra.mxu0 %v6155
    %6237 = vmatprep.subr.mxu0 %v6153
    %6238 = vmatpush1.msra.mxu0 %v6152
    %6239 = vmatprep.subr.mxu0 %v6150
    %6240 = vmatpush1.msra.mxu0 %v6149
    %6241 = vmatprep.subr.mxu0 %v6147
    %6242 = vmatpush1.msra.mxu0 %v6146
    %6243 = vmatprep.subr.mxu0 0.0
    %6244 = vmatpush2.msra.mxu0 0.0
    %6245 = vmatprep.subr.mxu0 0.0
    %6246 = vmatpush2.msra.mxu0 0.0
    %6247 = vmatprep.subr.mxu0 0.0
    %6248 = vmatpush2.msra.mxu0 0.0
    %6249 = vmatprep.subr.mxu0 0.0
    %6250 = vmatpush2.msra.mxu0 0.0
    %6251 = vmatprep.subr.mxu0 0.0
    %6252 = vmatpush2.msra.mxu0 0.0
    %6253 = vmatprep.subr.mxu0 0.0
    %6254 = vmatpush2.msra.mxu0 0.0
    %6255 = vmatprep.subr.mxu0 0.0
    %6256 = vmatpush2.msra.mxu0 0.0
    %6257 = vmatprep.subr.mxu0 0.0
    %6258 = vmatpush2.msra.mxu0 0.0
    %6259 = vmatprep.subr.mxu0 0.0
    %6260 = vmatpush2.msra.mxu0 0.0
    %6261 = vmatprep.subr.mxu0 0.0
    %6262 = vmatpush2.msra.mxu0 0.0
    %6263 = vmatprep.subr.mxu0 0.0
    %6264 = vmatpush2.msra.mxu0 0.0
    %6265 = vmatprep.subr.mxu0 0.0
    %6266 = vmatpush2.msra.mxu0 0.0
    %6267 = vmatprep.subr.mxu0 0.0
    %6268 = vmatpush2.msra.mxu0 0.0
    %6269 = vmatprep.subr.mxu0 0.0
    %6270 = vmatpush2.msra.mxu0 0.0
    %6271 = vmatprep.subr.mxu0 0.0
    %6272 = vmatpush2.msra.mxu0 0.0
    %6273 = vmatprep.subr.mxu0 0.0
    %6274 = vmatpush2.msra.mxu0 0.0
    %6275 = vmatprep.mubr.f32.mxu0 0.0
    %6276 = vmatmul.mubr.f32.gmra.mxu0 %v6141
    %v6277 = vpop.f32.mrf.mxu0
    %v6278 = vadd.f32 %v6199, %v6277
    %v6279 = vpop.f32.mrf.mxu0
    %v6280 = vadd.f32 %v6203, %v6279
    %6281 = vdwg.mxu0
    %6282 = vmatprep.subr.mxu0 0.0
    %6283 = vmatpush1.msra.mxu0 %v6193
    %6284 = vmatprep.subr.mxu0 0.0
    %6285 = vmatpush1.msra.mxu0 %v6190
    %6286 = vmatprep.subr.mxu0 0.0
    %6287 = vmatpush1.msra.mxu0 %v6187
    %6288 = vmatprep.subr.mxu0 0.0
    %6289 = vmatpush1.msra.mxu0 %v6184
    %6290 = vmatprep.subr.mxu0 0.0
    %6291 = vmatpush1.msra.mxu0 %v6181
    %6292 = vmatprep.subr.mxu0 0.0
    %6293 = vmatpush1.msra.mxu0 %v6178
    %6294 = vmatprep.subr.mxu0 0.0
    %6295 = vmatpush1.msra.mxu0 %v6175
    %6296 = vmatprep.subr.mxu0 0.0
    %6297 = vmatpush1.msra.mxu0 %v6172
    %6298 = vmatprep.subr.mxu0 0.0
    %6299 = vmatpush1.msra.mxu0 %v6169
    %6300 = vmatprep.subr.mxu0 0.0
    %6301 = vmatpush1.msra.mxu0 %v6166
    %6302 = vmatprep.subr.mxu0 0.0
    %6303 = vmatpush1.msra.mxu0 %v6163
    %6304 = vmatprep.subr.mxu0 0.0
    %6305 = vmatpush1.msra.mxu0 %v6160
    %6306 = vmatprep.subr.mxu0 0.0
    %6307 = vmatpush1.msra.mxu0 %v6157
    %6308 = vmatprep.subr.mxu0 0.0
    %6309 = vmatpush1.msra.mxu0 %v6154
    %6310 = vmatprep.subr.mxu0 0.0
    %6311 = vmatpush1.msra.mxu0 %v6151
    %6312 = vmatprep.subr.mxu0 0.0
    %6313 = vmatpush1.msra.mxu0 %v6148
    %6314 = vmatprep.subr.mxu0 0.0
    %6315 = vmatpush2.msra.mxu0 0.0
    %6316 = vmatprep.subr.mxu0 0.0
    %6317 = vmatpush2.msra.mxu0 0.0
    %6318 = vmatprep.subr.mxu0 0.0
    %6319 = vmatpush2.msra.mxu0 0.0
    %6320 = vmatprep.subr.mxu0 0.0
    %6321 = vmatpush2.msra.mxu0 0.0
    %6322 = vmatprep.subr.mxu0 0.0
    %6323 = vmatpush2.msra.mxu0 0.0
    %6324 = vmatprep.subr.mxu0 0.0
    %6325 = vmatpush2.msra.mxu0 0.0
    %6326 = vmatprep.subr.mxu0 0.0
    %6327 = vmatpush2.msra.mxu0 0.0
    %6328 = vmatprep.subr.mxu0 0.0
    %6329 = vmatpush2.msra.mxu0 0.0
    %6330 = vmatprep.subr.mxu0 0.0
    %6331 = vmatpush2.msra.mxu0 0.0
    %6332 = vmatprep.subr.mxu0 0.0
    %6333 = vmatpush2.msra.mxu0 0.0
    %6334 = vmatprep.subr.mxu0 0.0
    %6335 = vmatpush2.msra.mxu0 0.0
    %6336 = vmatprep.subr.mxu0 0.0
    %6337 = vmatpush2.msra.mxu0 0.0
    %6338 = vmatprep.subr.mxu0 0.0
    %6339 = vmatpush2.msra.mxu0 0.0
    %6340 = vmatprep.subr.mxu0 0.0
    %6341 = vmatpush2.msra.mxu0 0.0
    %6342 = vmatprep.subr.mxu0 0.0
    %6343 = vmatpush2.msra.mxu0 0.0
    %6344 = vmatprep.subr.mxu0 0.0
    %6345 = vmatpush2.msra.mxu0 0.0
    %6346 = vmatprep.mubr.f32.mxu0 0.0
    %6347 = vmatmul.mubr.f32.gmra.mxu0 %v6141
    %v6348 = vpop.f32.mrf.mxu0
    %v6349 = vadd.f32 %v6207, %v6348
    %v6350 = vpop.f32.mrf.mxu0
    %6351 = vdwg.mxu0
    %v6352 = vadd.f32 %v6143, %v6278
    %v6353 = vxor.u32 %v6352, 2147483648
    %v6354 = vmul.f32 %v6353, 1.442695
    %v6355 = vpow.pop %v6354
    %v6356 = vadd.f32 %v6355, 1.0
    %v6357 = vrcp.pop %v6356
    %v6358 = vmul.f32 1.0, %v6357
    %v6359 = vadd.f32 %v6144, %v6280
    %v6360 = vxor.u32 %v6359, 2147483648
    %v6361 = vmul.f32 %v6360, 1.442695
    %v6362 = vpow.pop %v6361
    %v6363 = vadd.f32 %v6362, 1.0
    %v6364 = vrcp.pop %v6363
    %v6365 = vmul.f32 1.0, %v6364
    %v6366 = vmul.f32 %v6358, %v6349
    %v6367 = vadd.f32 %v6145, %v6366
    %v6368 = vtanh.pop %v6367
    %v6369 = vsub.f32 1.0, %v6365
    %v6370 = vmul.f32 %v6369, %v6368
    %v6371 = vmul.f32 %v6365, %v6141
    %v6372 = vadd.f32 %v6370, %v6371
    %6373 = vst [vmem:[#allocation3 + $0x30] sm:$0xff] %v6372
    %v6374 = vld [vmem:[#allocation2 + $0xa8] sm:$0xff]
    %v6375 = vld [vmem:[#allocation2 + $0xb0] sm:$0xff]
    %v6376 = vld [vmem:[#allocation2 + $0xb8] sm:$0xff]
    %v6377 = vld [vmem:[#allocation12] sm:$0xff]
    %v6378 = vld [vmem:[#allocation12 + $0x8] sm:$0xff]
    %v6379 = vld [vmem:[#allocation12 + $0x10] sm:$0xff]
    %v6380 = vld [vmem:[#allocation12 + $0x18] sm:$0xff]
    %v6381 = vld [vmem:[#allocation12 + $0x20] sm:$0xff]
    %v6382 = vld [vmem:[#allocation12 + $0x28] sm:$0xff]
    %v6383 = vld [vmem:[#allocation12 + $0x30] sm:$0xff]
    %v6384 = vld [vmem:[#allocation12 + $0x38] sm:$0xff]
    %v6385 = vld [vmem:[#allocation12 + $0x40] sm:$0xff]
    %v6386 = vld [vmem:[#allocation12 + $0x48] sm:$0xff]
    %v6387 = vld [vmem:[#allocation12 + $0x50] sm:$0xff]
    %v6388 = vld [vmem:[#allocation12 + $0x58] sm:$0xff]
    %v6389 = vld [vmem:[#allocation12 + $0x60] sm:$0xff]
    %v6390 = vld [vmem:[#allocation12 + $0x68] sm:$0xff]
    %v6391 = vld [vmem:[#allocation12 + $0x70] sm:$0xff]
    %v6392 = vld [vmem:[#allocation12 + $0x78] sm:$0xff]
    %v6393 = vld [vmem:[#allocation12 + $0x80] sm:$0xff]
    %v6394 = vld [vmem:[#allocation12 + $0x88] sm:$0xff]
    %v6395 = vld [vmem:[#allocation12 + $0x90] sm:$0xff]
    %v6396 = vld [vmem:[#allocation12 + $0x98] sm:$0xff]
    %v6397 = vld [vmem:[#allocation12 + $0xa0] sm:$0xff]
    %v6398 = vld [vmem:[#allocation12 + $0xa8] sm:$0xff]
    %v6399 = vld [vmem:[#allocation12 + $0xb0] sm:$0xff]
    %v6400 = vld [vmem:[#allocation12 + $0xb8] sm:$0xff]
    %v6401 = vld [vmem:[#allocation12 + $0xc0] sm:$0xff]
    %v6402 = vld [vmem:[#allocation12 + $0xc8] sm:$0xff]
    %v6403 = vld [vmem:[#allocation12 + $0xd0] sm:$0xff]
    %v6404 = vld [vmem:[#allocation12 + $0xd8] sm:$0xff]
    %v6405 = vld [vmem:[#allocation12 + $0xe0] sm:$0xff]
    %v6406 = vld [vmem:[#allocation12 + $0xe8] sm:$0xff]
    %v6407 = vld [vmem:[#allocation12 + $0xf0] sm:$0xff]
    %v6408 = vld [vmem:[#allocation12 + $0xf8] sm:$0xff]
    %v6409 = vld [vmem:[#allocation12 + $0x100] sm:$0xff]
    %v6410 = vld [vmem:[#allocation12 + $0x108] sm:$0xff]
    %v6411 = vld [vmem:[#allocation12 + $0x110] sm:$0xff]
    %v6412 = vld [vmem:[#allocation12 + $0x118] sm:$0xff]
    %v6413 = vld [vmem:[#allocation12 + $0x120] sm:$0xff]
    %v6414 = vld [vmem:[#allocation12 + $0x128] sm:$0xff]
    %v6415 = vld [vmem:[#allocation12 + $0x130] sm:$0xff]
    %v6416 = vld [vmem:[#allocation12 + $0x138] sm:$0xff]
    %v6417 = vld [vmem:[#allocation12 + $0x140] sm:$0xff]
    %v6418 = vld [vmem:[#allocation12 + $0x148] sm:$0xff]
    %v6419 = vld [vmem:[#allocation12 + $0x150] sm:$0xff]
    %v6420 = vld [vmem:[#allocation12 + $0x158] sm:$0xff]
    %v6421 = vld [vmem:[#allocation12 + $0x160] sm:$0xff]
    %v6422 = vld [vmem:[#allocation12 + $0x168] sm:$0xff]
    %v6423 = vld [vmem:[#allocation12 + $0x170] sm:$0xff]
    %v6424 = vld [vmem:[#allocation12 + $0x178] sm:$0xff]
    %v6425 = vld [vmem:[%s12] sm:$0x7]
    %v6427 = vlaneseq
    %v6428 = vshrl.u32 %v6427, 7
    %v6429 = vsub.s32 0, %v6428
    %v6430 = vrot.slane %v6425, %v6429
    %v6431 = vlaneseq
    %v6432 = vshrl.u32 %v6431, 7
    %v6433 = vsub.s32 1, %v6432
    %v6434 = vrot.slane %v6425, %v6433
    %v6435 = vlaneseq
    %v6436 = vshrl.u32 %v6435, 7
    %v6437 = vsub.s32 2, %v6436
    %v6438 = vrot.slane %v6425, %v6437
    %6442 = vmatprep.subr.mxu0 %v6423
    %6443 = vmatpush1.msra.mxu0 %v6422
    %6444 = vmatprep.subr.mxu0 %v6420
    %6445 = vmatpush1.msra.mxu0 %v6419
    %6446 = vmatprep.subr.mxu0 %v6417
    %6447 = vmatpush1.msra.mxu0 %v6416
    %6448 = vmatprep.subr.mxu0 %v6414
    %6449 = vmatpush1.msra.mxu0 %v6413
    %6450 = vmatprep.subr.mxu0 %v6411
    %6451 = vmatpush1.msra.mxu0 %v6410
    %6452 = vmatprep.subr.mxu0 %v6408
    %6453 = vmatpush1.msra.mxu0 %v6407
    %6454 = vmatprep.subr.mxu0 %v6405
    %6455 = vmatpush1.msra.mxu0 %v6404
    %6456 = vmatprep.subr.mxu0 %v6402
    %6457 = vmatpush1.msra.mxu0 %v6401
    %6458 = vmatprep.subr.mxu0 %v6399
    %6459 = vmatpush1.msra.mxu0 %v6398
    %6460 = vmatprep.subr.mxu0 %v6396
    %6461 = vmatpush1.msra.mxu0 %v6395
    %6462 = vmatprep.subr.mxu0 %v6393
    %6463 = vmatpush1.msra.mxu0 %v6392
    %6464 = vmatprep.subr.mxu0 %v6390
    %6465 = vmatpush1.msra.mxu0 %v6389
    %6466 = vmatprep.subr.mxu0 %v6387
    %6467 = vmatpush1.msra.mxu0 %v6386
    %6468 = vmatprep.subr.mxu0 %v6384
    %6469 = vmatpush1.msra.mxu0 %v6383
    %6470 = vmatprep.subr.mxu0 %v6381
    %6471 = vmatpush1.msra.mxu0 %v6380
    %6472 = vmatprep.subr.mxu0 %v6378
    %6473 = vmatpush1.msra.mxu0 %v6377
    %6474 = vmatprep.subr.mxu0 0.0
    %6475 = vmatpush2.msra.mxu0 0.0
    %6476 = vmatprep.subr.mxu0 0.0
    %6477 = vmatpush2.msra.mxu0 0.0
    %6478 = vmatprep.subr.mxu0 0.0
    %6479 = vmatpush2.msra.mxu0 0.0
    %6480 = vmatprep.subr.mxu0 0.0
    %6481 = vmatpush2.msra.mxu0 0.0
    %6482 = vmatprep.subr.mxu0 0.0
    %6483 = vmatpush2.msra.mxu0 0.0
    %6484 = vmatprep.subr.mxu0 0.0
    %6485 = vmatpush2.msra.mxu0 0.0
    %6486 = vmatprep.subr.mxu0 0.0
    %6487 = vmatpush2.msra.mxu0 0.0
    %6488 = vmatprep.subr.mxu0 0.0
    %6489 = vmatpush2.msra.mxu0 0.0
    %6490 = vmatprep.subr.mxu0 0.0
    %6491 = vmatpush2.msra.mxu0 0.0
    %6492 = vmatprep.subr.mxu0 0.0
    %6493 = vmatpush2.msra.mxu0 0.0
    %6494 = vmatprep.subr.mxu0 0.0
    %6495 = vmatpush2.msra.mxu0 0.0
    %6496 = vmatprep.subr.mxu0 0.0
    %6497 = vmatpush2.msra.mxu0 0.0
    %6498 = vmatprep.subr.mxu0 0.0
    %6499 = vmatpush2.msra.mxu0 0.0
    %6500 = vmatprep.subr.mxu0 0.0
    %6501 = vmatpush2.msra.mxu0 0.0
    %6502 = vmatprep.subr.mxu0 0.0
    %6503 = vmatpush2.msra.mxu0 0.0
    %6504 = vmatprep.subr.mxu0 0.0
    %6505 = vmatpush2.msra.mxu0 0.0
    %6506 = vmatprep.mubr.f32.mxu0 0.0
    %6507 = vmatmul.mubr.f32.gmra.mxu0 %v6372
    %v6508 = vpop.f32.mrf.mxu0
    %v6509 = vadd.f32 %v6430, %v6508
    %v6510 = vpop.f32.mrf.mxu0
    %v6511 = vadd.f32 %v6434, %v6510
    %6512 = vdwg.mxu0
    %6513 = vmatprep.subr.mxu0 0.0
    %6514 = vmatpush1.msra.mxu0 %v6424
    %6515 = vmatprep.subr.mxu0 0.0
    %6516 = vmatpush1.msra.mxu0 %v6421
    %6517 = vmatprep.subr.mxu0 0.0
    %6518 = vmatpush1.msra.mxu0 %v6418
    %6519 = vmatprep.subr.mxu0 0.0
    %6520 = vmatpush1.msra.mxu0 %v6415
    %6521 = vmatprep.subr.mxu0 0.0
    %6522 = vmatpush1.msra.mxu0 %v6412
    %6523 = vmatprep.subr.mxu0 0.0
    %6524 = vmatpush1.msra.mxu0 %v6409
    %6525 = vmatprep.subr.mxu0 0.0
    %6526 = vmatpush1.msra.mxu0 %v6406
    %6527 = vmatprep.subr.mxu0 0.0
    %6528 = vmatpush1.msra.mxu0 %v6403
    %6529 = vmatprep.subr.mxu0 0.0
    %6530 = vmatpush1.msra.mxu0 %v6400
    %6531 = vmatprep.subr.mxu0 0.0
    %6532 = vmatpush1.msra.mxu0 %v6397
    %6533 = vmatprep.subr.mxu0 0.0
    %6534 = vmatpush1.msra.mxu0 %v6394
    %6535 = vmatprep.subr.mxu0 0.0
    %6536 = vmatpush1.msra.mxu0 %v6391
    %6537 = vmatprep.subr.mxu0 0.0
    %6538 = vmatpush1.msra.mxu0 %v6388
    %6539 = vmatprep.subr.mxu0 0.0
    %6540 = vmatpush1.msra.mxu0 %v6385
    %6541 = vmatprep.subr.mxu0 0.0
    %6542 = vmatpush1.msra.mxu0 %v6382
    %6543 = vmatprep.subr.mxu0 0.0
    %6544 = vmatpush1.msra.mxu0 %v6379
    %6545 = vmatprep.subr.mxu0 0.0
    %6546 = vmatpush2.msra.mxu0 0.0
    %6547 = vmatprep.subr.mxu0 0.0
    %6548 = vmatpush2.msra.mxu0 0.0
    %6549 = vmatprep.subr.mxu0 0.0
    %6550 = vmatpush2.msra.mxu0 0.0
    %6551 = vmatprep.subr.mxu0 0.0
    %6552 = vmatpush2.msra.mxu0 0.0
    %6553 = vmatprep.subr.mxu0 0.0
    %6554 = vmatpush2.msra.mxu0 0.0
    %6555 = vmatprep.subr.mxu0 0.0
    %6556 = vmatpush2.msra.mxu0 0.0
    %6557 = vmatprep.subr.mxu0 0.0
    %6558 = vmatpush2.msra.mxu0 0.0
    %6559 = vmatprep.subr.mxu0 0.0
    %6560 = vmatpush2.msra.mxu0 0.0
    %6561 = vmatprep.subr.mxu0 0.0
    %6562 = vmatpush2.msra.mxu0 0.0
    %6563 = vmatprep.subr.mxu0 0.0
    %6564 = vmatpush2.msra.mxu0 0.0
    %6565 = vmatprep.subr.mxu0 0.0
    %6566 = vmatpush2.msra.mxu0 0.0
    %6567 = vmatprep.subr.mxu0 0.0
    %6568 = vmatpush2.msra.mxu0 0.0
    %6569 = vmatprep.subr.mxu0 0.0
    %6570 = vmatpush2.msra.mxu0 0.0
    %6571 = vmatprep.subr.mxu0 0.0
    %6572 = vmatpush2.msra.mxu0 0.0
    %6573 = vmatprep.subr.mxu0 0.0
    %6574 = vmatpush2.msra.mxu0 0.0
    %6575 = vmatprep.subr.mxu0 0.0
    %6576 = vmatpush2.msra.mxu0 0.0
    %6577 = vmatprep.mubr.f32.mxu0 0.0
    %6578 = vmatmul.mubr.f32.gmra.mxu0 %v6372
    %v6579 = vpop.f32.mrf.mxu0
    %v6580 = vadd.f32 %v6438, %v6579
    %v6581 = vpop.f32.mrf.mxu0
    %6582 = vdwg.mxu0
    %v6583 = vadd.f32 %v6374, %v6509
    %v6584 = vxor.u32 %v6583, 2147483648
    %v6585 = vmul.f32 %v6584, 1.442695
    %v6586 = vpow.pop %v6585
    %v6587 = vadd.f32 %v6586, 1.0
    %v6588 = vrcp.pop %v6587
    %v6589 = vmul.f32 1.0, %v6588
    %v6590 = vadd.f32 %v6375, %v6511
    %v6591 = vxor.u32 %v6590, 2147483648
    %v6592 = vmul.f32 %v6591, 1.442695
    %v6593 = vpow.pop %v6592
    %v6594 = vadd.f32 %v6593, 1.0
    %v6595 = vrcp.pop %v6594
    %v6596 = vmul.f32 1.0, %v6595
    %v6597 = vmul.f32 %v6589, %v6580
    %v6598 = vadd.f32 %v6376, %v6597
    %v6599 = vtanh.pop %v6598
    %v6600 = vsub.f32 1.0, %v6596
    %v6601 = vmul.f32 %v6600, %v6599
    %v6602 = vmul.f32 %v6596, %v6372
    %v6603 = vadd.f32 %v6601, %v6602
    %6604 = vst [vmem:[#allocation3 + $0x38] sm:$0xff] %v6603
    %v6605 = vld [vmem:[#allocation3] sm:$0xff]
    %v6606 = vld [vmem:[#allocation3 + $0x8] sm:$0xff]
    %v6607 = vld [vmem:[#allocation3 + $0x10] sm:$0xff]
    %v6608 = vld [vmem:[#allocation3 + $0x18] sm:$0xff]
    %v6609 = vld [vmem:[#allocation3 + $0x20] sm:$0xff]
    %v6610 = vld [vmem:[#allocation3 + $0x28] sm:$0xff]
    %v6611 = vld [vmem:[#allocation3 + $0x30] sm:$0xff]
    %v6612 = vld [vmem:[#allocation3 + $0x38] sm:$0xff]
    %v6613 = vld [vmem:[%s13] sm:$0xff]
    %v6614 = vld [vmem:[%s13 + $0x8] sm:$0xff]
    %v6615 = vld [vmem:[%s13 + $0x10] sm:$0xff]
    %v6616 = vld [vmem:[%s13 + $0x18] sm:$0xff]
    %v6617 = vld [vmem:[%s13 + $0x20] sm:$0xff]
    %v6618 = vld [vmem:[%s13 + $0x28] sm:$0xff]
    %v6619 = vld [vmem:[%s13 + $0x30] sm:$0xff]
    %v6620 = vld [vmem:[%s13 + $0x38] sm:$0xff]
    %v6621 = vld [vmem:[%s13 + $0x40] sm:$0xff]
    %v6622 = vld [vmem:[%s13 + $0x48] sm:$0xff]
    %v6623 = vld [vmem:[%s13 + $0x50] sm:$0xff]
    %v6624 = vld [vmem:[%s13 + $0x58] sm:$0xff]
    %v6625 = vld [vmem:[%s13 + $0x60] sm:$0xff]
    %v6626 = vld [vmem:[%s13 + $0x68] sm:$0xff]
    %v6627 = vld [vmem:[%s13 + $0x70] sm:$0xff]
    %v6628 = vld [vmem:[%s13 + $0x78] sm:$0xff]
    %v6629 = vld [vmem:[%s14] sm:$0x1]
    %v6631 = vlaneseq
    %v6632 = vshrl.u32 %v6631, 7
    %v6633 = vsub.s32 0, %v6632
    %v6634 = vrot.slane %v6629, %v6633
    %6636 = vmatprep.subr.mxu0 0.0
    %6637 = vmatpush1.msra.mxu0 %v6628
    %6638 = vmatprep.subr.mxu0 0.0
    %6639 = vmatpush1.msra.mxu0 %v6627
    %6640 = vmatprep.subr.mxu0 0.0
    %6641 = vmatpush1.msra.mxu0 %v6626
    %6642 = vmatprep.subr.mxu0 0.0
    %6643 = vmatpush1.msra.mxu0 %v6625
    %6644 = vmatprep.subr.mxu0 0.0
    %6645 = vmatpush1.msra.mxu0 %v6624
    %6646 = vmatprep.subr.mxu0 0.0
    %6647 = vmatpush1.msra.mxu0 %v6623
    %6648 = vmatprep.subr.mxu0 0.0
    %6649 = vmatpush1.msra.mxu0 %v6622
    %6650 = vmatprep.subr.mxu0 0.0
    %6651 = vmatpush1.msra.mxu0 %v6621
    %6652 = vmatprep.subr.mxu0 0.0
    %6653 = vmatpush1.msra.mxu0 %v6620
    %6654 = vmatprep.subr.mxu0 0.0
    %6655 = vmatpush1.msra.mxu0 %v6619
    %6656 = vmatprep.subr.mxu0 0.0
    %6657 = vmatpush1.msra.mxu0 %v6618
    %6658 = vmatprep.subr.mxu0 0.0
    %6659 = vmatpush1.msra.mxu0 %v6617
    %6660 = vmatprep.subr.mxu0 0.0
    %6661 = vmatpush1.msra.mxu0 %v6616
    %6662 = vmatprep.subr.mxu0 0.0
    %6663 = vmatpush1.msra.mxu0 %v6615
    %6664 = vmatprep.subr.mxu0 0.0
    %6665 = vmatpush1.msra.mxu0 %v6614
    %6666 = vmatprep.subr.mxu0 0.0
    %6667 = vmatpush1.msra.mxu0 %v6613
    %6668 = vmatprep.subr.mxu0 0.0
    %6669 = vmatpush2.msra.mxu0 0.0
    %6670 = vmatprep.subr.mxu0 0.0
    %6671 = vmatpush2.msra.mxu0 0.0
    %6672 = vmatprep.subr.mxu0 0.0
    %6673 = vmatpush2.msra.mxu0 0.0
    %6674 = vmatprep.subr.mxu0 0.0
    %6675 = vmatpush2.msra.mxu0 0.0
    %6676 = vmatprep.subr.mxu0 0.0
    %6677 = vmatpush2.msra.mxu0 0.0
    %6678 = vmatprep.subr.mxu0 0.0
    %6679 = vmatpush2.msra.mxu0 0.0
    %6680 = vmatprep.subr.mxu0 0.0
    %6681 = vmatpush2.msra.mxu0 0.0
    %6682 = vmatprep.subr.mxu0 0.0
    %6683 = vmatpush2.msra.mxu0 0.0
    %6684 = vmatprep.subr.mxu0 0.0
    %6685 = vmatpush2.msra.mxu0 0.0
    %6686 = vmatprep.subr.mxu0 0.0
    %6687 = vmatpush2.msra.mxu0 0.0
    %6688 = vmatprep.subr.mxu0 0.0
    %6689 = vmatpush2.msra.mxu0 0.0
    %6690 = vmatprep.subr.mxu0 0.0
    %6691 = vmatpush2.msra.mxu0 0.0
    %6692 = vmatprep.subr.mxu0 0.0
    %6693 = vmatpush2.msra.mxu0 0.0
    %6694 = vmatprep.subr.mxu0 0.0
    %6695 = vmatpush2.msra.mxu0 0.0
    %6696 = vmatprep.subr.mxu0 0.0
    %6697 = vmatpush2.msra.mxu0 0.0
    %6698 = vmatprep.subr.mxu0 0.0
    %6699 = vmatpush2.msra.mxu0 0.0
    %6700 = vmatprep.mubr.f32.mxu0 0.0
    %6701 = vmatmul.mubr.f32.gmra.mxu0 %v6605
    %v6702 = vpop.f32.mrf.mxu0
    %v6703 = vadd.f32 %v6634, %v6702
    %v6704 = vpop.f32.mrf.mxu0
    %6705 = vmatprep.mubr.f32.mxu0 0.0
    %6706 = vmatmul.mubr.f32.gmra.mxu0 %v6606
    %v6707 = vpop.f32.mrf.mxu0
    %v6708 = vadd.f32 %v6634, %v6707
    %v6709 = vpop.f32.mrf.mxu0
    %6710 = vmatprep.mubr.f32.mxu0 0.0
    %6711 = vmatmul.mubr.f32.gmra.mxu0 %v6607
    %v6712 = vpop.f32.mrf.mxu0
    %v6713 = vadd.f32 %v6634, %v6712
    %v6714 = vpop.f32.mrf.mxu0
    %6715 = vmatprep.mubr.f32.mxu0 0.0
    %6716 = vmatmul.mubr.f32.gmra.mxu0 %v6608
    %v6717 = vpop.f32.mrf.mxu0
    %v6718 = vadd.f32 %v6634, %v6717
    %v6719 = vpop.f32.mrf.mxu0
    %6720 = vmatprep.mubr.f32.mxu0 0.0
    %6721 = vmatmul.mubr.f32.gmra.mxu0 %v6609
    %v6722 = vpop.f32.mrf.mxu0
    %v6723 = vadd.f32 %v6634, %v6722
    %v6724 = vpop.f32.mrf.mxu0
    %6725 = vmatprep.mubr.f32.mxu0 0.0
    %6726 = vmatmul.mubr.f32.gmra.mxu0 %v6610
    %v6727 = vpop.f32.mrf.mxu0
    %v6728 = vadd.f32 %v6634, %v6727
    %v6729 = vpop.f32.mrf.mxu0
    %6730 = vmatprep.mubr.f32.mxu0 0.0
    %6731 = vmatmul.mubr.f32.gmra.mxu0 %v6611
    %v6732 = vpop.f32.mrf.mxu0
    %v6733 = vadd.f32 %v6634, %v6732
    %v6734 = vpop.f32.mrf.mxu0
    %6735 = vmatprep.mubr.f32.mxu0 0.0
    %6736 = vmatmul.mubr.f32.gmra.mxu0 %v6612
    %v6737 = vpop.f32.mrf.mxu0
    %v6738 = vadd.f32 %v6634, %v6737
    %v6739 = vpop.f32.mrf.mxu0
    %6740 = vdwg.mxu0
    %vm6741 = vcmask 39936
    %6742 = vst.msk [vmem:[%s15] sm:$0xff] %vm6741, %v6703
    %6743 = vst.msk [vmem:[%s15 + $0x8] sm:$0xff] %vm6741, %v6708
    %6744 = vst.msk [vmem:[%s15 + $0x10] sm:$0xff] %vm6741, %v6713
    %6745 = vst.msk [vmem:[%s15 + $0x18] sm:$0xff] %vm6741, %v6718
    %6746 = vst.msk [vmem:[%s15 + $0x20] sm:$0xff] %vm6741, %v6723
    %6747 = vst.msk [vmem:[%s15 + $0x28] sm:$0xff] %vm6741, %v6728
    %6748 = vst.msk [vmem:[%s15 + $0x30] sm:$0xff] %vm6741, %v6733
    %6749 = vst.msk [vmem:[%s15 + $0x38] sm:$0xff] %vm6741, %v6738
    // Predicated region
    $region82: #{model_forward.1} parent=1 // pred_check
      _
    $region83: #{model_forward.1} parent=1 // pred_check_branch
      %6751 = sbr.rel (0) target = $region85
    $region84: #{model_forward.1} parent=1 // pred_region
      _
    $region85: #{model_forward.1} parent=1 // pred_fallthru
      _
    // Predicated region
    $region86: #{model_forward.1} parent=1 // pred_check
      _
    $region87: #{model_forward.1} parent=1 // pred_check_branch
      %6753 = sbr.rel (0) target = $region89
    $region88: #{model_forward.1} parent=1 // pred_region
      _
    $region89: #{model_forward.1} parent=1 // pred_fallthru
      _
    %6754 = vsyncpa [#allocation6], 1
    %6755 = vsyncpa [#allocation8], 1
    %6756 = vsyncpa [#allocation11], 1

</llo_original>
